<compile_context>
chip_gen: v5e
topology: v5e:2x2
jax: 0.10.0
libtpu: 0.0.40
codegen_flags: <defaults>
</compile_context>

<pallas_src>
import functools

import jax
import jax.numpy as jnp
from jax import lax
from jax.experimental import pallas as pl
from jax.experimental.pallas import tpu as pltpu

LANE = 128      # lane width: batch padding granularity
_NB_CAP = 512   # max batch lanes per grid step (keeps tiles ~3 MiB double-buffered)


def _conv5x5_kernel(x_ref, w_ref, b_ref, o_ref, *, K, CO, OH, OW, NB):
    """Direct KxK convolution, single input channel, batch on the lane axis.

    x_ref : VMEM (H, W, NB)        -- batch block on lanes (NB % 128 == 0)
    w_ref : SMEM (CO*K*K,)         -- flattened conv weights (scalar reads)
    b_ref : SMEM (CO,)             -- bias
    o_ref : VMEM (CO, OH, OW, NB)  -- output block, lane-dense stores
    """
    # Hoist all scalar parameter reads out of the unrolled loops.
    w = [w_ref[i] for i in range(CO * K * K)]
    b = [b_ref[co] for co in range(CO)]

    # One output row at a time keeps live vector state small:
    #   K input rows (K * W/8 vregs) + CO row accumulators (CO * ceil(OW/8))
    # stays well under the 64-vreg file, so nothing spills.
    for oh in range(OH):
        # kh tap = leading-dim addressing (free); single hoisted cast per row.
        rows = [x_ref[oh + kh, :, :].astype(jnp.float32) for kh in range(K)]
        # CO live accumulators, bias folded into the init.
        accs = [jnp.full((OW, NB), b[co], jnp.float32) for co in range(CO)]
        for kh in range(K):
            for kw in range(K):
                # kw tap = sublane slice, no lane crossing; reused for all CO.
                win = rows[kh][kw:kw + OW, :]                # (OW, NB)
                for co in range(CO):
                    accs[co] = accs[co] + w[co * K * K + kh * K + kw] * win
        for co in range(CO):
            # Full-lane (128-wide) unmasked stores.
            o_ref[co, oh, :, :] = accs[co].astype(o_ref.dtype)


def _choose_batch_block(n_pad):
    """Pick the per-grid-step batch block (a multiple of 128 lanes).

    Prefer big blocks (amortizes the ~0.35 us/step overhead), keep >=2 blocks
    when there is enough work (feeds both v7x TensorCores), and cap at 512 so
    double-buffered input+output tiles stay ~3 MiB -- comfortably inside the
    default scoped-VMEM limits (16 MiB v5e, 32 MiB v6e/v7x) and v7x's 64 MiB.
    """
    if n_pad <= _NB_CAP:
        if n_pad % (2 * LANE) == 0 and n_pad >= 2 * LANE:
            return n_pad // 2          # two blocks for v7x megacore
        return n_pad
    for nb in (_NB_CAP, 384, 256, LANE):
        if n_pad % nb == 0:
            return nb
    return LANE


def letter_net_forward(x, weight, bias):
    """Pallas implementation of LetterNet.forward (a single Conv2d(1, 3, 5))."""
    N, C, H, W = x.shape
    CO, CI, K, K2 = weight.shape
    assert C == 1 and CI == 1, "LetterNet uses a single input channel"
    assert K == K2
    OH, OW = H - K + 1, W - K + 1

    # Lane-dense relayout: batch goes on the last (lane) axis, padded to 128.
    n_pad = ((N + LANE - 1) // LANE) * LANE
    NB = _choose_batch_block(n_pad)
    num_blocks = n_pad // NB

    x_hwn = jnp.transpose(x[:, 0], (1, 2, 0))                 # (H, W, N)
    if n_pad != N:
        x_hwn = jnp.pad(x_hwn, ((0, 0), (0, 0), (0, n_pad - N)))

    w_flat = weight.reshape(CO * CI * K * K).astype(jnp.float32)
    b_flat = bias.astype(jnp.float32)

    kernel = functools.partial(_conv5x5_kernel, K=K, CO=CO, OH=OH, OW=OW, NB=NB)

    out_cown = pl.pallas_call(
        kernel,
        out_shape=jax.ShapeDtypeStruct((CO, OH, OW, n_pad), x.dtype),
        grid=(num_blocks,),
        in_specs=[
            # Full spatial extent per block; trailing dims (W, NB) satisfy the
            # (8, 128) tiling constraint (16 % 8 == 0, NB % 128 == 0).
            pl.BlockSpec((H, W, NB), lambda n: (0, 0, n)),
            # Tiny weight / bias tables live in SMEM for cheap scalar reads.
            pl.BlockSpec(memory_space=pltpu.MemorySpace.SMEM),
            pl.BlockSpec(memory_space=pltpu.MemorySpace.SMEM),
        ],
        out_specs=pl.BlockSpec((CO, OH, OW, NB), lambda n: (0, 0, 0, n)),
        compiler_params=pltpu.CompilerParams(
            dimension_semantics=("parallel",)),
    )(x_hwn, w_flat, b_flat)

    # Back to torch NCHW layout, dropping the lane padding (layout plumbing
    # only; stays outside the kernel).
    return jnp.transpose(out_cown, (3, 0, 1, 2))[:N]


def _reference_conv(x, weight, bias):
    """Pure-JAX reference (matches torch.nn.Conv2d semantics, NCHW, VALID)."""
    out = lax.conv_general_dilated(
        x, weight, window_strides=(1, 1), padding="VALID",
        dimension_numbers=("NCHW", "OIHW", "NCHW"),
    )
    return out + bias[None, :, None, None]


if __name__ == "__main__":
    key = jax.random.PRNGKey(0)
    kx, kw, kb = jax.random.split(key, 3)

    # Small shapes consistent with the module: batch=2, 1 input channel, 16x16.
    N, C, H, W = 2, 1, 16, 16
    CO, K = 3, 5

    x = jax.random.normal(kx, (N, C, H, W), dtype=jnp.float32)

    # Deterministic parameter init mimicking PyTorch Conv2d default
    # (uniform in [-1/sqrt(fan_in), 1/sqrt(fan_in)], fan_in = C*K*K = 25).
    bound = 1.0 / jnp.sqrt(jnp.float32(C * K * K))
    weight = jax.random.uniform(kw, (CO, C, K, K), jnp.float32, -bound, bound)
    bias = jax.random.uniform(kb, (CO,), jnp.float32, -bound, bound)

    out = letter_net_forward(x, weight, bias)
    out = jax.block_until_ready(out)

    ref = _reference_conv(x, weight, bias)
    assert out.shape == (N, CO, H - K + 1, W - K + 1), out.shape
    assert jnp.allclose(out, ref, atol=1e-5, rtol=1e-5), "mismatch vs reference conv"

    print("KERNEL_OK")
</pallas_src>

<mosaic_0001>
module attributes {stable_mosaic.version = 11 : i64} {
  func.func @_conv5x5_kernel(%arg0: i32, %arg1: memref<16x16x128xf32, #tpu.memory_space<vmem>>, %arg2: memref<75xf32, #tpu.memory_space<smem>>, %arg3: memref<3xf32, #tpu.memory_space<smem>>, %arg4: memref<3x12x12x128xf32, #tpu.memory_space<vmem>>) attributes {dimension_semantics = [#tpu.dimension_semantics<parallel>], iteration_bounds = array<i64: 1>, scalar_prefetch = 0 : i64, scratch_operands = 0 : i64, tpu.core_type = #tpu.core_type<tc>, window_params = [{transform_indices = @transform_0, window_bounds = array<i64: 16, 16, 128>}, {transform_indices = @transform_1, window_bounds = array<i64: 75>}, {transform_indices = @transform_2, window_bounds = array<i64: 3>}, {transform_indices = @transform_3, window_bounds = array<i64: 3, 12, 12, 128>}]} {
    %c0 = arith.constant 0 : index
    %0 = memref.load %arg2[%c0] : memref<75xf32, #tpu.memory_space<smem>>
    %c1 = arith.constant 1 : index
    %1 = memref.load %arg2[%c1] : memref<75xf32, #tpu.memory_space<smem>>
    %c2 = arith.constant 2 : index
    %2 = memref.load %arg2[%c2] : memref<75xf32, #tpu.memory_space<smem>>
    %c3 = arith.constant 3 : index
    %3 = memref.load %arg2[%c3] : memref<75xf32, #tpu.memory_space<smem>>
    %c4 = arith.constant 4 : index
    %4 = memref.load %arg2[%c4] : memref<75xf32, #tpu.memory_space<smem>>
    %c5 = arith.constant 5 : index
    %5 = memref.load %arg2[%c5] : memref<75xf32, #tpu.memory_space<smem>>
    %c6 = arith.constant 6 : index
    %6 = memref.load %arg2[%c6] : memref<75xf32, #tpu.memory_space<smem>>
    %c7 = arith.constant 7 : index
    %7 = memref.load %arg2[%c7] : memref<75xf32, #tpu.memory_space<smem>>
    %c8 = arith.constant 8 : index
    %8 = memref.load %arg2[%c8] : memref<75xf32, #tpu.memory_space<smem>>
    %c9 = arith.constant 9 : index
    %9 = memref.load %arg2[%c9] : memref<75xf32, #tpu.memory_space<smem>>
    %c10 = arith.constant 10 : index
    %10 = memref.load %arg2[%c10] : memref<75xf32, #tpu.memory_space<smem>>
    %c11 = arith.constant 11 : index
    %11 = memref.load %arg2[%c11] : memref<75xf32, #tpu.memory_space<smem>>
    %c12 = arith.constant 12 : index
    %12 = memref.load %arg2[%c12] : memref<75xf32, #tpu.memory_space<smem>>
    %c13 = arith.constant 13 : index
    %13 = memref.load %arg2[%c13] : memref<75xf32, #tpu.memory_space<smem>>
    %c14 = arith.constant 14 : index
    %14 = memref.load %arg2[%c14] : memref<75xf32, #tpu.memory_space<smem>>
    %c15 = arith.constant 15 : index
    %15 = memref.load %arg2[%c15] : memref<75xf32, #tpu.memory_space<smem>>
    %c16 = arith.constant 16 : index
    %16 = memref.load %arg2[%c16] : memref<75xf32, #tpu.memory_space<smem>>
    %c17 = arith.constant 17 : index
    %17 = memref.load %arg2[%c17] : memref<75xf32, #tpu.memory_space<smem>>
    %c18 = arith.constant 18 : index
    %18 = memref.load %arg2[%c18] : memref<75xf32, #tpu.memory_space<smem>>
    %c19 = arith.constant 19 : index
    %19 = memref.load %arg2[%c19] : memref<75xf32, #tpu.memory_space<smem>>
    %c20 = arith.constant 20 : index
    %20 = memref.load %arg2[%c20] : memref<75xf32, #tpu.memory_space<smem>>
    %c21 = arith.constant 21 : index
    %21 = memref.load %arg2[%c21] : memref<75xf32, #tpu.memory_space<smem>>
    %c22 = arith.constant 22 : index
    %22 = memref.load %arg2[%c22] : memref<75xf32, #tpu.memory_space<smem>>
    %c23 = arith.constant 23 : index
    %23 = memref.load %arg2[%c23] : memref<75xf32, #tpu.memory_space<smem>>
    %c24 = arith.constant 24 : index
    %24 = memref.load %arg2[%c24] : memref<75xf32, #tpu.memory_space<smem>>
    %c25 = arith.constant 25 : index
    %25 = memref.load %arg2[%c25] : memref<75xf32, #tpu.memory_space<smem>>
    %c26 = arith.constant 26 : index
    %26 = memref.load %arg2[%c26] : memref<75xf32, #tpu.memory_space<smem>>
    %c27 = arith.constant 27 : index
    %27 = memref.load %arg2[%c27] : memref<75xf32, #tpu.memory_space<smem>>
    %c28 = arith.constant 28 : index
    %28 = memref.load %arg2[%c28] : memref<75xf32, #tpu.memory_space<smem>>
    %c29 = arith.constant 29 : index
    %29 = memref.load %arg2[%c29] : memref<75xf32, #tpu.memory_space<smem>>
    %c30 = arith.constant 30 : index
    %30 = memref.load %arg2[%c30] : memref<75xf32, #tpu.memory_space<smem>>
    %c31 = arith.constant 31 : index
    %31 = memref.load %arg2[%c31] : memref<75xf32, #tpu.memory_space<smem>>
    %c32 = arith.constant 32 : index
    %32 = memref.load %arg2[%c32] : memref<75xf32, #tpu.memory_space<smem>>
    %c33 = arith.constant 33 : index
    %33 = memref.load %arg2[%c33] : memref<75xf32, #tpu.memory_space<smem>>
    %c34 = arith.constant 34 : index
    %34 = memref.load %arg2[%c34] : memref<75xf32, #tpu.memory_space<smem>>
    %c35 = arith.constant 35 : index
    %35 = memref.load %arg2[%c35] : memref<75xf32, #tpu.memory_space<smem>>
    %c36 = arith.constant 36 : index
    %36 = memref.load %arg2[%c36] : memref<75xf32, #tpu.memory_space<smem>>
    %c37 = arith.constant 37 : index
    %37 = memref.load %arg2[%c37] : memref<75xf32, #tpu.memory_space<smem>>
    %c38 = arith.constant 38 : index
    %38 = memref.load %arg2[%c38] : memref<75xf32, #tpu.memory_space<smem>>
    %c39 = arith.constant 39 : index
    %39 = memref.load %arg2[%c39] : memref<75xf32, #tpu.memory_space<smem>>
    %c40 = arith.constant 40 : index
    %40 = memref.load %arg2[%c40] : memref<75xf32, #tpu.memory_space<smem>>
    %c41 = arith.constant 41 : index
    %41 = memref.load %arg2[%c41] : memref<75xf32, #tpu.memory_space<smem>>
    %c42 = arith.constant 42 : index
    %42 = memref.load %arg2[%c42] : memref<75xf32, #tpu.memory_space<smem>>
    %c43 = arith.constant 43 : index
    %43 = memref.load %arg2[%c43] : memref<75xf32, #tpu.memory_space<smem>>
    %c44 = arith.constant 44 : index
    %44 = memref.load %arg2[%c44] : memref<75xf32, #tpu.memory_space<smem>>
    %c45 = arith.constant 45 : index
    %45 = memref.load %arg2[%c45] : memref<75xf32, #tpu.memory_space<smem>>
    %c46 = arith.constant 46 : index
    %46 = memref.load %arg2[%c46] : memref<75xf32, #tpu.memory_space<smem>>
    %c47 = arith.constant 47 : index
    %47 = memref.load %arg2[%c47] : memref<75xf32, #tpu.memory_space<smem>>
    %c48 = arith.constant 48 : index
    %48 = memref.load %arg2[%c48] : memref<75xf32, #tpu.memory_space<smem>>
    %c49 = arith.constant 49 : index
    %49 = memref.load %arg2[%c49] : memref<75xf32, #tpu.memory_space<smem>>
    %c50 = arith.constant 50 : index
    %50 = memref.load %arg2[%c50] : memref<75xf32, #tpu.memory_space<smem>>
    %c51 = arith.constant 51 : index
    %51 = memref.load %arg2[%c51] : memref<75xf32, #tpu.memory_space<smem>>
    %c52 = arith.constant 52 : index
    %52 = memref.load %arg2[%c52] : memref<75xf32, #tpu.memory_space<smem>>
    %c53 = arith.constant 53 : index
    %53 = memref.load %arg2[%c53] : memref<75xf32, #tpu.memory_space<smem>>
    %c54 = arith.constant 54 : index
    %54 = memref.load %arg2[%c54] : memref<75xf32, #tpu.memory_space<smem>>
    %c55 = arith.constant 55 : index
    %55 = memref.load %arg2[%c55] : memref<75xf32, #tpu.memory_space<smem>>
    %c56 = arith.constant 56 : index
    %56 = memref.load %arg2[%c56] : memref<75xf32, #tpu.memory_space<smem>>
    %c57 = arith.constant 57 : index
    %57 = memref.load %arg2[%c57] : memref<75xf32, #tpu.memory_space<smem>>
    %c58 = arith.constant 58 : index
    %58 = memref.load %arg2[%c58] : memref<75xf32, #tpu.memory_space<smem>>
    %c59 = arith.constant 59 : index
    %59 = memref.load %arg2[%c59] : memref<75xf32, #tpu.memory_space<smem>>
    %c60 = arith.constant 60 : index
    %60 = memref.load %arg2[%c60] : memref<75xf32, #tpu.memory_space<smem>>
    %c61 = arith.constant 61 : index
    %61 = memref.load %arg2[%c61] : memref<75xf32, #tpu.memory_space<smem>>
    %c62 = arith.constant 62 : index
    %62 = memref.load %arg2[%c62] : memref<75xf32, #tpu.memory_space<smem>>
    %c63 = arith.constant 63 : index
    %63 = memref.load %arg2[%c63] : memref<75xf32, #tpu.memory_space<smem>>
    %c64 = arith.constant 64 : index
    %64 = memref.load %arg2[%c64] : memref<75xf32, #tpu.memory_space<smem>>
    %c65 = arith.constant 65 : index
    %65 = memref.load %arg2[%c65] : memref<75xf32, #tpu.memory_space<smem>>
    %c66 = arith.constant 66 : index
    %66 = memref.load %arg2[%c66] : memref<75xf32, #tpu.memory_space<smem>>
    %c67 = arith.constant 67 : index
    %67 = memref.load %arg2[%c67] : memref<75xf32, #tpu.memory_space<smem>>
    %c68 = arith.constant 68 : index
    %68 = memref.load %arg2[%c68] : memref<75xf32, #tpu.memory_space<smem>>
    %c69 = arith.constant 69 : index
    %69 = memref.load %arg2[%c69] : memref<75xf32, #tpu.memory_space<smem>>
    %c70 = arith.constant 70 : index
    %70 = memref.load %arg2[%c70] : memref<75xf32, #tpu.memory_space<smem>>
    %c71 = arith.constant 71 : index
    %71 = memref.load %arg2[%c71] : memref<75xf32, #tpu.memory_space<smem>>
    %c72 = arith.constant 72 : index
    %72 = memref.load %arg2[%c72] : memref<75xf32, #tpu.memory_space<smem>>
    %c73 = arith.constant 73 : index
    %73 = memref.load %arg2[%c73] : memref<75xf32, #tpu.memory_space<smem>>
    %c74 = arith.constant 74 : index
    %74 = memref.load %arg2[%c74] : memref<75xf32, #tpu.memory_space<smem>>
    %c0_0 = arith.constant 0 : index
    %75 = memref.load %arg3[%c0_0] : memref<3xf32, #tpu.memory_space<smem>>
    %c1_1 = arith.constant 1 : index
    %76 = memref.load %arg3[%c1_1] : memref<3xf32, #tpu.memory_space<smem>>
    %c2_2 = arith.constant 2 : index
    %77 = memref.load %arg3[%c2_2] : memref<3xf32, #tpu.memory_space<smem>>
    %c0_3 = arith.constant 0 : index
    %c0_4 = arith.constant 0 : index
    %c0_5 = arith.constant 0 : index
    %78 = vector.load %arg1[%c0_3, %c0_4, %c0_5] : memref<16x16x128xf32, #tpu.memory_space<vmem>>, vector<1x16x128xf32>
    %79 = vector.shape_cast %78 : vector<1x16x128xf32> to vector<16x128xf32>
    %c1_6 = arith.constant 1 : index
    %c0_7 = arith.constant 0 : index
    %c0_8 = arith.constant 0 : index
    %80 = vector.load %arg1[%c1_6, %c0_7, %c0_8] : memref<16x16x128xf32, #tpu.memory_space<vmem>>, vector<1x16x128xf32>
    %81 = vector.shape_cast %80 : vector<1x16x128xf32> to vector<16x128xf32>
    %c2_9 = arith.constant 2 : index
    %c0_10 = arith.constant 0 : index
    %c0_11 = arith.constant 0 : index
    %82 = vector.load %arg1[%c2_9, %c0_10, %c0_11] : memref<16x16x128xf32, #tpu.memory_space<vmem>>, vector<1x16x128xf32>
    %83 = vector.shape_cast %82 : vector<1x16x128xf32> to vector<16x128xf32>
    %c3_12 = arith.constant 3 : index
    %c0_13 = arith.constant 0 : index
    %c0_14 = arith.constant 0 : index
    %84 = vector.load %arg1[%c3_12, %c0_13, %c0_14] : memref<16x16x128xf32, #tpu.memory_space<vmem>>, vector<1x16x128xf32>
    %85 = vector.shape_cast %84 : vector<1x16x128xf32> to vector<16x128xf32>
    %c4_15 = arith.constant 4 : index
    %c0_16 = arith.constant 0 : index
    %c0_17 = arith.constant 0 : index
    %86 = vector.load %arg1[%c4_15, %c0_16, %c0_17] : memref<16x16x128xf32, #tpu.memory_space<vmem>>, vector<1x16x128xf32>
    %87 = vector.shape_cast %86 : vector<1x16x128xf32> to vector<16x128xf32>
    %88 = vector.broadcast %75 : f32 to vector<12x128xf32>
    %89 = vector.broadcast %76 : f32 to vector<12x128xf32>
    %90 = vector.broadcast %77 : f32 to vector<12x128xf32>
    %91 = vector.extract_strided_slice %79 {offsets = [0, 0], sizes = [12, 128], strides = [1, 1]} : vector<16x128xf32> to vector<12x128xf32>
    %92 = vector.broadcast %0 : f32 to vector<12x128xf32>
    %93 = arith.mulf %92, %91 : vector<12x128xf32>
    %94 = arith.addf %88, %93 : vector<12x128xf32>
    %95 = vector.broadcast %25 : f32 to vector<12x128xf32>
    %96 = arith.mulf %95, %91 : vector<12x128xf32>
    %97 = arith.addf %89, %96 : vector<12x128xf32>
    %98 = vector.broadcast %50 : f32 to vector<12x128xf32>
    %99 = arith.mulf %98, %91 : vector<12x128xf32>
    %100 = arith.addf %90, %99 : vector<12x128xf32>
    %101 = vector.extract_strided_slice %79 {offsets = [1, 0], sizes = [12, 128], strides = [1, 1]} : vector<16x128xf32> to vector<12x128xf32>
    %102 = vector.broadcast %1 : f32 to vector<12x128xf32>
    %103 = arith.mulf %102, %101 : vector<12x128xf32>
    %104 = arith.addf %94, %103 : vector<12x128xf32>
    %105 = vector.broadcast %26 : f32 to vector<12x128xf32>
    %106 = arith.mulf %105, %101 : vector<12x128xf32>
    %107 = arith.addf %97, %106 : vector<12x128xf32>
    %108 = vector.broadcast %51 : f32 to vector<12x128xf32>
    %109 = arith.mulf %108, %101 : vector<12x128xf32>
    %110 = arith.addf %100, %109 : vector<12x128xf32>
    %111 = vector.extract_strided_slice %79 {offsets = [2, 0], sizes = [12, 128], strides = [1, 1]} : vector<16x128xf32> to vector<12x128xf32>
    %112 = vector.broadcast %2 : f32 to vector<12x128xf32>
    %113 = arith.mulf %112, %111 : vector<12x128xf32>
    %114 = arith.addf %104, %113 : vector<12x128xf32>
    %115 = vector.broadcast %27 : f32 to vector<12x128xf32>
    %116 = arith.mulf %115, %111 : vector<12x128xf32>
    %117 = arith.addf %107, %116 : vector<12x128xf32>
    %118 = vector.broadcast %52 : f32 to vector<12x128xf32>
    %119 = arith.mulf %118, %111 : vector<12x128xf32>
    %120 = arith.addf %110, %119 : vector<12x128xf32>
    %121 = vector.extract_strided_slice %79 {offsets = [3, 0], sizes = [12, 128], strides = [1, 1]} : vector<16x128xf32> to vector<12x128xf32>
    %122 = vector.broadcast %3 : f32 to vector<12x128xf32>
    %123 = arith.mulf %122, %121 : vector<12x128xf32>
    %124 = arith.addf %114, %123 : vector<12x128xf32>
    %125 = vector.broadcast %28 : f32 to vector<12x128xf32>
    %126 = arith.mulf %125, %121 : vector<12x128xf32>
    %127 = arith.addf %117, %126 : vector<12x128xf32>
    %128 = vector.broadcast %53 : f32 to vector<12x128xf32>
    %129 = arith.mulf %128, %121 : vector<12x128xf32>
    %130 = arith.addf %120, %129 : vector<12x128xf32>
    %131 = vector.extract_strided_slice %79 {offsets = [4, 0], sizes = [12, 128], strides = [1, 1]} : vector<16x128xf32> to vector<12x128xf32>
    %132 = vector.broadcast %4 : f32 to vector<12x128xf32>
    %133 = arith.mulf %132, %131 : vector<12x128xf32>
    %134 = arith.addf %124, %133 : vector<12x128xf32>
    %135 = vector.broadcast %29 : f32 to vector<12x128xf32>
    %136 = arith.mulf %135, %131 : vector<12x128xf32>
    %137 = arith.addf %127, %136 : vector<12x128xf32>
    %138 = vector.broadcast %54 : f32 to vector<12x128xf32>
    %139 = arith.mulf %138, %131 : vector<12x128xf32>
    %140 = arith.addf %130, %139 : vector<12x128xf32>
    %141 = vector.extract_strided_slice %81 {offsets = [0, 0], sizes = [12, 128], strides = [1, 1]} : vector<16x128xf32> to vector<12x128xf32>
    %142 = vector.broadcast %5 : f32 to vector<12x128xf32>
    %143 = arith.mulf %142, %141 : vector<12x128xf32>
    %144 = arith.addf %134, %143 : vector<12x128xf32>
    %145 = vector.broadcast %30 : f32 to vector<12x128xf32>
    %146 = arith.mulf %145, %141 : vector<12x128xf32>
    %147 = arith.addf %137, %146 : vector<12x128xf32>
    %148 = vector.broadcast %55 : f32 to vector<12x128xf32>
    %149 = arith.mulf %148, %141 : vector<12x128xf32>
    %150 = arith.addf %140, %149 : vector<12x128xf32>
    %151 = vector.extract_strided_slice %81 {offsets = [1, 0], sizes = [12, 128], strides = [1, 1]} : vector<16x128xf32> to vector<12x128xf32>
    %152 = vector.broadcast %6 : f32 to vector<12x128xf32>
    %153 = arith.mulf %152, %151 : vector<12x128xf32>
    %154 = arith.addf %144, %153 : vector<12x128xf32>
    %155 = vector.broadcast %31 : f32 to vector<12x128xf32>
    %156 = arith.mulf %155, %151 : vector<12x128xf32>
    %157 = arith.addf %147, %156 : vector<12x128xf32>
    %158 = vector.broadcast %56 : f32 to vector<12x128xf32>
    %159 = arith.mulf %158, %151 : vector<12x128xf32>
    %160 = arith.addf %150, %159 : vector<12x128xf32>
    %161 = vector.extract_strided_slice %81 {offsets = [2, 0], sizes = [12, 128], strides = [1, 1]} : vector<16x128xf32> to vector<12x128xf32>
    %162 = vector.broadcast %7 : f32 to vector<12x128xf32>
    %163 = arith.mulf %162, %161 : vector<12x128xf32>
    %164 = arith.addf %154, %163 : vector<12x128xf32>
    %165 = vector.broadcast %32 : f32 to vector<12x128xf32>
    %166 = arith.mulf %165, %161 : vector<12x128xf32>
    %167 = arith.addf %157, %166 : vector<12x128xf32>
    %168 = vector.broadcast %57 : f32 to vector<12x128xf32>
    %169 = arith.mulf %168, %161 : vector<12x128xf32>
    %170 = arith.addf %160, %169 : vector<12x128xf32>
    %171 = vector.extract_strided_slice %81 {offsets = [3, 0], sizes = [12, 128], strides = [1, 1]} : vector<16x128xf32> to vector<12x128xf32>
    %172 = vector.broadcast %8 : f32 to vector<12x128xf32>
    %173 = arith.mulf %172, %171 : vector<12x128xf32>
    %174 = arith.addf %164, %173 : vector<12x128xf32>
    %175 = vector.broadcast %33 : f32 to vector<12x128xf32>
    %176 = arith.mulf %175, %171 : vector<12x128xf32>
    %177 = arith.addf %167, %176 : vector<12x128xf32>
    %178 = vector.broadcast %58 : f32 to vector<12x128xf32>
    %179 = arith.mulf %178, %171 : vector<12x128xf32>
    %180 = arith.addf %170, %179 : vector<12x128xf32>
    %181 = vector.extract_strided_slice %81 {offsets = [4, 0], sizes = [12, 128], strides = [1, 1]} : vector<16x128xf32> to vector<12x128xf32>
    %182 = vector.broadcast %9 : f32 to vector<12x128xf32>
    %183 = arith.mulf %182, %181 : vector<12x128xf32>
    %184 = arith.addf %174, %183 : vector<12x128xf32>
    %185 = vector.broadcast %34 : f32 to vector<12x128xf32>
    %186 = arith.mulf %185, %181 : vector<12x128xf32>
    %187 = arith.addf %177, %186 : vector<12x128xf32>
    %188 = vector.broadcast %59 : f32 to vector<12x128xf32>
    %189 = arith.mulf %188, %181 : vector<12x128xf32>
    %190 = arith.addf %180, %189 : vector<12x128xf32>
    %191 = vector.extract_strided_slice %83 {offsets = [0, 0], sizes = [12, 128], strides = [1, 1]} : vector<16x128xf32> to vector<12x128xf32>
    %192 = vector.broadcast %10 : f32 to vector<12x128xf32>
    %193 = arith.mulf %192, %191 : vector<12x128xf32>
    %194 = arith.addf %184, %193 : vector<12x128xf32>
    %195 = vector.broadcast %35 : f32 to vector<12x128xf32>
    %196 = arith.mulf %195, %191 : vector<12x128xf32>
    %197 = arith.addf %187, %196 : vector<12x128xf32>
    %198 = vector.broadcast %60 : f32 to vector<12x128xf32>
    %199 = arith.mulf %198, %191 : vector<12x128xf32>
    %200 = arith.addf %190, %199 : vector<12x128xf32>
    %201 = vector.extract_strided_slice %83 {offsets = [1, 0], sizes = [12, 128], strides = [1, 1]} : vector<16x128xf32> to vector<12x128xf32>
    %202 = vector.broadcast %11 : f32 to vector<12x128xf32>
    %203 = arith.mulf %202, %201 : vector<12x128xf32>
    %204 = arith.addf %194, %203 : vector<12x128xf32>
    %205 = vector.broadcast %36 : f32 to vector<12x128xf32>
    %206 = arith.mulf %205, %201 : vector<12x128xf32>
    %207 = arith.addf %197, %206 : vector<12x128xf32>
    %208 = vector.broadcast %61 : f32 to vector<12x128xf32>
    %209 = arith.mulf %208, %201 : vector<12x128xf32>
    %210 = arith.addf %200, %209 : vector<12x128xf32>
    %211 = vector.extract_strided_slice %83 {offsets = [2, 0], sizes = [12, 128], strides = [1, 1]} : vector<16x128xf32> to vector<12x128xf32>
    %212 = vector.broadcast %12 : f32 to vector<12x128xf32>
    %213 = arith.mulf %212, %211 : vector<12x128xf32>
    %214 = arith.addf %204, %213 : vector<12x128xf32>
    %215 = vector.broadcast %37 : f32 to vector<12x128xf32>
    %216 = arith.mulf %215, %211 : vector<12x128xf32>
    %217 = arith.addf %207, %216 : vector<12x128xf32>
    %218 = vector.broadcast %62 : f32 to vector<12x128xf32>
    %219 = arith.mulf %218, %211 : vector<12x128xf32>
    %220 = arith.addf %210, %219 : vector<12x128xf32>
    %221 = vector.extract_strided_slice %83 {offsets = [3, 0], sizes = [12, 128], strides = [1, 1]} : vector<16x128xf32> to vector<12x128xf32>
    %222 = vector.broadcast %13 : f32 to vector<12x128xf32>
    %223 = arith.mulf %222, %221 : vector<12x128xf32>
    %224 = arith.addf %214, %223 : vector<12x128xf32>
    %225 = vector.broadcast %38 : f32 to vector<12x128xf32>
    %226 = arith.mulf %225, %221 : vector<12x128xf32>
    %227 = arith.addf %217, %226 : vector<12x128xf32>
    %228 = vector.broadcast %63 : f32 to vector<12x128xf32>
    %229 = arith.mulf %228, %221 : vector<12x128xf32>
    %230 = arith.addf %220, %229 : vector<12x128xf32>
    %231 = vector.extract_strided_slice %83 {offsets = [4, 0], sizes = [12, 128], strides = [1, 1]} : vector<16x128xf32> to vector<12x128xf32>
    %232 = vector.broadcast %14 : f32 to vector<12x128xf32>
    %233 = arith.mulf %232, %231 : vector<12x128xf32>
    %234 = arith.addf %224, %233 : vector<12x128xf32>
    %235 = vector.broadcast %39 : f32 to vector<12x128xf32>
    %236 = arith.mulf %235, %231 : vector<12x128xf32>
    %237 = arith.addf %227, %236 : vector<12x128xf32>
    %238 = vector.broadcast %64 : f32 to vector<12x128xf32>
    %239 = arith.mulf %238, %231 : vector<12x128xf32>
    %240 = arith.addf %230, %239 : vector<12x128xf32>
    %241 = vector.extract_strided_slice %85 {offsets = [0, 0], sizes = [12, 128], strides = [1, 1]} : vector<16x128xf32> to vector<12x128xf32>
    %242 = vector.broadcast %15 : f32 to vector<12x128xf32>
    %243 = arith.mulf %242, %241 : vector<12x128xf32>
    %244 = arith.addf %234, %243 : vector<12x128xf32>
    %245 = vector.broadcast %40 : f32 to vector<12x128xf32>
    %246 = arith.mulf %245, %241 : vector<12x128xf32>
    %247 = arith.addf %237, %246 : vector<12x128xf32>
    %248 = vector.broadcast %65 : f32 to vector<12x128xf32>
    %249 = arith.mulf %248, %241 : vector<12x128xf32>
    %250 = arith.addf %240, %249 : vector<12x128xf32>
    %251 = vector.extract_strided_slice %85 {offsets = [1, 0], sizes = [12, 128], strides = [1, 1]} : vector<16x128xf32> to vector<12x128xf32>
    %252 = vector.broadcast %16 : f32 to vector<12x128xf32>
    %253 = arith.mulf %252, %251 : vector<12x128xf32>
    %254 = arith.addf %244, %253 : vector<12x128xf32>
    %255 = vector.broadcast %41 : f32 to vector<12x128xf32>
    %256 = arith.mulf %255, %251 : vector<12x128xf32>
    %257 = arith.addf %247, %256 : vector<12x128xf32>
    %258 = vector.broadcast %66 : f32 to vector<12x128xf32>
    %259 = arith.mulf %258, %251 : vector<12x128xf32>
    %260 = arith.addf %250, %259 : vector<12x128xf32>
    %261 = vector.extract_strided_slice %85 {offsets = [2, 0], sizes = [12, 128], strides = [1, 1]} : vector<16x128xf32> to vector<12x128xf32>
    %262 = vector.broadcast %17 : f32 to vector<12x128xf32>
    %263 = arith.mulf %262, %261 : vector<12x128xf32>
    %264 = arith.addf %254, %263 : vector<12x128xf32>
    %265 = vector.broadcast %42 : f32 to vector<12x128xf32>
    %266 = arith.mulf %265, %261 : vector<12x128xf32>
    %267 = arith.addf %257, %266 : vector<12x128xf32>
    %268 = vector.broadcast %67 : f32 to vector<12x128xf32>
    %269 = arith.mulf %268, %261 : vector<12x128xf32>
    %270 = arith.addf %260, %269 : vector<12x128xf32>
    %271 = vector.extract_strided_slice %85 {offsets = [3, 0], sizes = [12, 128], strides = [1, 1]} : vector<16x128xf32> to vector<12x128xf32>
    %272 = vector.broadcast %18 : f32 to vector<12x128xf32>
    %273 = arith.mulf %272, %271 : vector<12x128xf32>
    %274 = arith.addf %264, %273 : vector<12x128xf32>
    %275 = vector.broadcast %43 : f32 to vector<12x128xf32>
    %276 = arith.mulf %275, %271 : vector<12x128xf32>
    %277 = arith.addf %267, %276 : vector<12x128xf32>
    %278 = vector.broadcast %68 : f32 to vector<12x128xf32>
    %279 = arith.mulf %278, %271 : vector<12x128xf32>
    %280 = arith.addf %270, %279 : vector<12x128xf32>
    %281 = vector.extract_strided_slice %85 {offsets = [4, 0], sizes = [12, 128], strides = [1, 1]} : vector<16x128xf32> to vector<12x128xf32>
    %282 = vector.broadcast %19 : f32 to vector<12x128xf32>
    %283 = arith.mulf %282, %281 : vector<12x128xf32>
    %284 = arith.addf %274, %283 : vector<12x128xf32>
    %285 = vector.broadcast %44 : f32 to vector<12x128xf32>
    %286 = arith.mulf %285, %281 : vector<12x128xf32>
    %287 = arith.addf %277, %286 : vector<12x128xf32>
    %288 = vector.broadcast %69 : f32 to vector<12x128xf32>
    %289 = arith.mulf %288, %281 : vector<12x128xf32>
    %290 = arith.addf %280, %289 : vector<12x128xf32>
    %291 = vector.extract_strided_slice %87 {offsets = [0, 0], sizes = [12, 128], strides = [1, 1]} : vector<16x128xf32> to vector<12x128xf32>
    %292 = vector.broadcast %20 : f32 to vector<12x128xf32>
    %293 = arith.mulf %292, %291 : vector<12x128xf32>
    %294 = arith.addf %284, %293 : vector<12x128xf32>
    %295 = vector.broadcast %45 : f32 to vector<12x128xf32>
    %296 = arith.mulf %295, %291 : vector<12x128xf32>
    %297 = arith.addf %287, %296 : vector<12x128xf32>
    %298 = vector.broadcast %70 : f32 to vector<12x128xf32>
    %299 = arith.mulf %298, %291 : vector<12x128xf32>
    %300 = arith.addf %290, %299 : vector<12x128xf32>
    %301 = vector.extract_strided_slice %87 {offsets = [1, 0], sizes = [12, 128], strides = [1, 1]} : vector<16x128xf32> to vector<12x128xf32>
    %302 = vector.broadcast %21 : f32 to vector<12x128xf32>
    %303 = arith.mulf %302, %301 : vector<12x128xf32>
    %304 = arith.addf %294, %303 : vector<12x128xf32>
    %305 = vector.broadcast %46 : f32 to vector<12x128xf32>
    %306 = arith.mulf %305, %301 : vector<12x128xf32>
    %307 = arith.addf %297, %306 : vector<12x128xf32>
    %308 = vector.broadcast %71 : f32 to vector<12x128xf32>
    %309 = arith.mulf %308, %301 : vector<12x128xf32>
    %310 = arith.addf %300, %309 : vector<12x128xf32>
    %311 = vector.extract_strided_slice %87 {offsets = [2, 0], sizes = [12, 128], strides = [1, 1]} : vector<16x128xf32> to vector<12x128xf32>
    %312 = vector.broadcast %22 : f32 to vector<12x128xf32>
    %313 = arith.mulf %312, %311 : vector<12x128xf32>
    %314 = arith.addf %304, %313 : vector<12x128xf32>
    %315 = vector.broadcast %47 : f32 to vector<12x128xf32>
    %316 = arith.mulf %315, %311 : vector<12x128xf32>
    %317 = arith.addf %307, %316 : vector<12x128xf32>
    %318 = vector.broadcast %72 : f32 to vector<12x128xf32>
    %319 = arith.mulf %318, %311 : vector<12x128xf32>
    %320 = arith.addf %310, %319 : vector<12x128xf32>
    %321 = vector.extract_strided_slice %87 {offsets = [3, 0], sizes = [12, 128], strides = [1, 1]} : vector<16x128xf32> to vector<12x128xf32>
    %322 = vector.broadcast %23 : f32 to vector<12x128xf32>
    %323 = arith.mulf %322, %321 : vector<12x128xf32>
    %324 = arith.addf %314, %323 : vector<12x128xf32>
    %325 = vector.broadcast %48 : f32 to vector<12x128xf32>
    %326 = arith.mulf %325, %321 : vector<12x128xf32>
    %327 = arith.addf %317, %326 : vector<12x128xf32>
    %328 = vector.broadcast %73 : f32 to vector<12x128xf32>
    %329 = arith.mulf %328, %321 : vector<12x128xf32>
    %330 = arith.addf %320, %329 : vector<12x128xf32>
    %331 = vector.extract_strided_slice %87 {offsets = [4, 0], sizes = [12, 128], strides = [1, 1]} : vector<16x128xf32> to vector<12x128xf32>
    %332 = vector.broadcast %24 : f32 to vector<12x128xf32>
    %333 = arith.mulf %332, %331 : vector<12x128xf32>
    %334 = arith.addf %324, %333 : vector<12x128xf32>
    %335 = vector.broadcast %49 : f32 to vector<12x128xf32>
    %336 = arith.mulf %335, %331 : vector<12x128xf32>
    %337 = arith.addf %327, %336 : vector<12x128xf32>
    %338 = vector.broadcast %74 : f32 to vector<12x128xf32>
    %339 = arith.mulf %338, %331 : vector<12x128xf32>
    %340 = arith.addf %330, %339 : vector<12x128xf32>
    %c0_18 = arith.constant 0 : index
    %c0_19 = arith.constant 0 : index
    %c0_20 = arith.constant 0 : index
    %c0_21 = arith.constant 0 : index
    %341 = vector.load %arg4[%c0_18, %c0_19, %c0_20, %c0_21] : memref<3x12x12x128xf32, #tpu.memory_space<vmem>>, vector<1x1x12x128xf32>
    %342 = vector.shape_cast %341 : vector<1x1x12x128xf32> to vector<12x128xf32>
    %343 = vector.shape_cast %334 : vector<12x128xf32> to vector<1x1x12x128xf32>
    tpu.vector_store %arg4[%c0_18, %c0_19, %c0_20, %c0_21], %343 {strides = array<i32>} : memref<3x12x12x128xf32, #tpu.memory_space<vmem>>, vector<1x1x12x128xf32>,
    %c1_22 = arith.constant 1 : index
    %c0_23 = arith.constant 0 : index
    %c0_24 = arith.constant 0 : index
    %c0_25 = arith.constant 0 : index
    %344 = vector.load %arg4[%c1_22, %c0_23, %c0_24, %c0_25] : memref<3x12x12x128xf32, #tpu.memory_space<vmem>>, vector<1x1x12x128xf32>
    %345 = vector.shape_cast %344 : vector<1x1x12x128xf32> to vector<12x128xf32>
    %346 = vector.shape_cast %337 : vector<12x128xf32> to vector<1x1x12x128xf32>
    tpu.vector_store %arg4[%c1_22, %c0_23, %c0_24, %c0_25], %346 {strides = array<i32>} : memref<3x12x12x128xf32, #tpu.memory_space<vmem>>, vector<1x1x12x128xf32>,
    %c2_26 = arith.constant 2 : index
    %c0_27 = arith.constant 0 : index
    %c0_28 = arith.constant 0 : index
    %c0_29 = arith.constant 0 : index
    %347 = vector.load %arg4[%c2_26, %c0_27, %c0_28, %c0_29] : memref<3x12x12x128xf32, #tpu.memory_space<vmem>>, vector<1x1x12x128xf32>
    %348 = vector.shape_cast %347 : vector<1x1x12x128xf32> to vector<12x128xf32>
    %349 = vector.shape_cast %340 : vector<12x128xf32> to vector<1x1x12x128xf32>
    tpu.vector_store %arg4[%c2_26, %c0_27, %c0_28, %c0_29], %349 {strides = array<i32>} : memref<3x12x12x128xf32, #tpu.memory_space<vmem>>, vector<1x1x12x128xf32>,
    %c1_30 = arith.constant 1 : index
    %c0_31 = arith.constant 0 : index
    %c0_32 = arith.constant 0 : index
    %350 = vector.load %arg1[%c1_30, %c0_31, %c0_32] : memref<16x16x128xf32, #tpu.memory_space<vmem>>, vector<1x16x128xf32>
    %351 = vector.shape_cast %350 : vector<1x16x128xf32> to vector<16x128xf32>
    %c2_33 = arith.constant 2 : index
    %c0_34 = arith.constant 0 : index
    %c0_35 = arith.constant 0 : index
    %352 = vector.load %arg1[%c2_33, %c0_34, %c0_35] : memref<16x16x128xf32, #tpu.memory_space<vmem>>, vector<1x16x128xf32>
    %353 = vector.shape_cast %352 : vector<1x16x128xf32> to vector<16x128xf32>
    %c3_36 = arith.constant 3 : index
    %c0_37 = arith.constant 0 : index
    %c0_38 = arith.constant 0 : index
    %354 = vector.load %arg1[%c3_36, %c0_37, %c0_38] : memref<16x16x128xf32, #tpu.memory_space<vmem>>, vector<1x16x128xf32>
    %355 = vector.shape_cast %354 : vector<1x16x128xf32> to vector<16x128xf32>
    %c4_39 = arith.constant 4 : index
    %c0_40 = arith.constant 0 : index
    %c0_41 = arith.constant 0 : index
    %356 = vector.load %arg1[%c4_39, %c0_40, %c0_41] : memref<16x16x128xf32, #tpu.memory_space<vmem>>, vector<1x16x128xf32>
    %357 = vector.shape_cast %356 : vector<1x16x128xf32> to vector<16x128xf32>
    %c5_42 = arith.constant 5 : index
    %c0_43 = arith.constant 0 : index
    %c0_44 = arith.constant 0 : index
    %358 = vector.load %arg1[%c5_42, %c0_43, %c0_44] : memref<16x16x128xf32, #tpu.memory_space<vmem>>, vector<1x16x128xf32>
    %359 = vector.shape_cast %358 : vector<1x16x128xf32> to vector<16x128xf32>
    %360 = vector.broadcast %75 : f32 to vector<12x128xf32>
    %361 = vector.broadcast %76 : f32 to vector<12x128xf32>
    %362 = vector.broadcast %77 : f32 to vector<12x128xf32>
    %363 = vector.extract_strided_slice %351 {offsets = [0, 0], sizes = [12, 128], strides = [1, 1]} : vector<16x128xf32> to vector<12x128xf32>
    %364 = vector.broadcast %0 : f32 to vector<12x128xf32>
    %365 = arith.mulf %364, %363 : vector<12x128xf32>
    %366 = arith.addf %360, %365 : vector<12x128xf32>
    %367 = vector.broadcast %25 : f32 to vector<12x128xf32>
    %368 = arith.mulf %367, %363 : vector<12x128xf32>
    %369 = arith.addf %361, %368 : vector<12x128xf32>
    %370 = vector.broadcast %50 : f32 to vector<12x128xf32>
    %371 = arith.mulf %370, %363 : vector<12x128xf32>
    %372 = arith.addf %362, %371 : vector<12x128xf32>
    %373 = vector.extract_strided_slice %351 {offsets = [1, 0], sizes = [12, 128], strides = [1, 1]} : vector<16x128xf32> to vector<12x128xf32>
    %374 = vector.broadcast %1 : f32 to vector<12x128xf32>
    %375 = arith.mulf %374, %373 : vector<12x128xf32>
    %376 = arith.addf %366, %375 : vector<12x128xf32>
    %377 = vector.broadcast %26 : f32 to vector<12x128xf32>
    %378 = arith.mulf %377, %373 : vector<12x128xf32>
    %379 = arith.addf %369, %378 : vector<12x128xf32>
    %380 = vector.broadcast %51 : f32 to vector<12x128xf32>
    %381 = arith.mulf %380, %373 : vector<12x128xf32>
    %382 = arith.addf %372, %381 : vector<12x128xf32>
    %383 = vector.extract_strided_slice %351 {offsets = [2, 0], sizes = [12, 128], strides = [1, 1]} : vector<16x128xf32> to vector<12x128xf32>
    %384 = vector.broadcast %2 : f32 to vector<12x128xf32>
    %385 = arith.mulf %384, %383 : vector<12x128xf32>
    %386 = arith.addf %376, %385 : vector<12x128xf32>
    %387 = vector.broadcast %27 : f32 to vector<12x128xf32>
    %388 = arith.mulf %387, %383 : vector<12x128xf32>
    %389 = arith.addf %379, %388 : vector<12x128xf32>
    %390 = vector.broadcast %52 : f32 to vector<12x128xf32>
    %391 = arith.mulf %390, %383 : vector<12x128xf32>
    %392 = arith.addf %382, %391 : vector<12x128xf32>
    %393 = vector.extract_strided_slice %351 {offsets = [3, 0], sizes = [12, 128], strides = [1, 1]} : vector<16x128xf32> to vector<12x128xf32>
    %394 = vector.broadcast %3 : f32 to vector<12x128xf32>
    %395 = arith.mulf %394, %393 : vector<12x128xf32>
    %396 = arith.addf %386, %395 : vector<12x128xf32>
    %397 = vector.broadcast %28 : f32 to vector<12x128xf32>
    %398 = arith.mulf %397, %393 : vector<12x128xf32>
    %399 = arith.addf %389, %398 : vector<12x128xf32>
    %400 = vector.broadcast %53 : f32 to vector<12x128xf32>
    %401 = arith.mulf %400, %393 : vector<12x128xf32>
    %402 = arith.addf %392, %401 : vector<12x128xf32>
    %403 = vector.extract_strided_slice %351 {offsets = [4, 0], sizes = [12, 128], strides = [1, 1]} : vector<16x128xf32> to vector<12x128xf32>
    %404 = vector.broadcast %4 : f32 to vector<12x128xf32>
    %405 = arith.mulf %404, %403 : vector<12x128xf32>
    %406 = arith.addf %396, %405 : vector<12x128xf32>
    %407 = vector.broadcast %29 : f32 to vector<12x128xf32>
    %408 = arith.mulf %407, %403 : vector<12x128xf32>
    %409 = arith.addf %399, %408 : vector<12x128xf32>
    %410 = vector.broadcast %54 : f32 to vector<12x128xf32>
    %411 = arith.mulf %410, %403 : vector<12x128xf32>
    %412 = arith.addf %402, %411 : vector<12x128xf32>
    %413 = vector.extract_strided_slice %353 {offsets = [0, 0], sizes = [12, 128], strides = [1, 1]} : vector<16x128xf32> to vector<12x128xf32>
    %414 = vector.broadcast %5 : f32 to vector<12x128xf32>
    %415 = arith.mulf %414, %413 : vector<12x128xf32>
    %416 = arith.addf %406, %415 : vector<12x128xf32>
    %417 = vector.broadcast %30 : f32 to vector<12x128xf32>
    %418 = arith.mulf %417, %413 : vector<12x128xf32>
    %419 = arith.addf %409, %418 : vector<12x128xf32>
    %420 = vector.broadcast %55 : f32 to vector<12x128xf32>
    %421 = arith.mulf %420, %413 : vector<12x128xf32>
    %422 = arith.addf %412, %421 : vector<12x128xf32>
    %423 = vector.extract_strided_slice %353 {offsets = [1, 0], sizes = [12, 128], strides = [1, 1]} : vector<16x128xf32> to vector<12x128xf32>
    %424 = vector.broadcast %6 : f32 to vector<12x128xf32>
    %425 = arith.mulf %424, %423 : vector<12x128xf32>
    %426 = arith.addf %416, %425 : vector<12x128xf32>
    %427 = vector.broadcast %31 : f32 to vector<12x128xf32>
    %428 = arith.mulf %427, %423 : vector<12x128xf32>
    %429 = arith.addf %419, %428 : vector<12x128xf32>
    %430 = vector.broadcast %56 : f32 to vector<12x128xf32>
    %431 = arith.mulf %430, %423 : vector<12x128xf32>
    %432 = arith.addf %422, %431 : vector<12x128xf32>
    %433 = vector.extract_strided_slice %353 {offsets = [2, 0], sizes = [12, 128], strides = [1, 1]} : vector<16x128xf32> to vector<12x128xf32>
    %434 = vector.broadcast %7 : f32 to vector<12x128xf32>
    %435 = arith.mulf %434, %433 : vector<12x128xf32>
    %436 = arith.addf %426, %435 : vector<12x128xf32>
    %437 = vector.broadcast %32 : f32 to vector<12x128xf32>
    %438 = arith.mulf %437, %433 : vector<12x128xf32>
    %439 = arith.addf %429, %438 : vector<12x128xf32>
    %440 = vector.broadcast %57 : f32 to vector<12x128xf32>
    %441 = arith.mulf %440, %433 : vector<12x128xf32>
    %442 = arith.addf %432, %441 : vector<12x128xf32>
    %443 = vector.extract_strided_slice %353 {offsets = [3, 0], sizes = [12, 128], strides = [1, 1]} : vector<16x128xf32> to vector<12x128xf32>
    %444 = vector.broadcast %8 : f32 to vector<12x128xf32>
    %445 = arith.mulf %444, %443 : vector<12x128xf32>
    %446 = arith.addf %436, %445 : vector<12x128xf32>
    %447 = vector.broadcast %33 : f32 to vector<12x128xf32>
    %448 = arith.mulf %447, %443 : vector<12x128xf32>
    %449 = arith.addf %439, %448 : vector<12x128xf32>
    %450 = vector.broadcast %58 : f32 to vector<12x128xf32>
    %451 = arith.mulf %450, %443 : vector<12x128xf32>
    %452 = arith.addf %442, %451 : vector<12x128xf32>
    %453 = vector.extract_strided_slice %353 {offsets = [4, 0], sizes = [12, 128], strides = [1, 1]} : vector<16x128xf32> to vector<12x128xf32>
    %454 = vector.broadcast %9 : f32 to vector<12x128xf32>
    %455 = arith.mulf %454, %453 : vector<12x128xf32>
    %456 = arith.addf %446, %455 : vector<12x128xf32>
    %457 = vector.broadcast %34 : f32 to vector<12x128xf32>
    %458 = arith.mulf %457, %453 : vector<12x128xf32>
    %459 = arith.addf %449, %458 : vector<12x128xf32>
    %460 = vector.broadcast %59 : f32 to vector<12x128xf32>
    %461 = arith.mulf %460, %453 : vector<12x128xf32>
    %462 = arith.addf %452, %461 : vector<12x128xf32>
    %463 = vector.extract_strided_slice %355 {offsets = [0, 0], sizes = [12, 128], strides = [1, 1]} : vector<16x128xf32> to vector<12x128xf32>
    %464 = vector.broadcast %10 : f32 to vector<12x128xf32>
    %465 = arith.mulf %464, %463 : vector<12x128xf32>
    %466 = arith.addf %456, %465 : vector<12x128xf32>
    %467 = vector.broadcast %35 : f32 to vector<12x128xf32>
    %468 = arith.mulf %467, %463 : vector<12x128xf32>
    %469 = arith.addf %459, %468 : vector<12x128xf32>
    %470 = vector.broadcast %60 : f32 to vector<12x128xf32>
    %471 = arith.mulf %470, %463 : vector<12x128xf32>
    %472 = arith.addf %462, %471 : vector<12x128xf32>
    %473 = vector.extract_strided_slice %355 {offsets = [1, 0], sizes = [12, 128], strides = [1, 1]} : vector<16x128xf32> to vector<12x128xf32>
    %474 = vector.broadcast %11 : f32 to vector<12x128xf32>
    %475 = arith.mulf %474, %473 : vector<12x128xf32>
    %476 = arith.addf %466, %475 : vector<12x128xf32>
    %477 = vector.broadcast %36 : f32 to vector<12x128xf32>
    %478 = arith.mulf %477, %473 : vector<12x128xf32>
    %479 = arith.addf %469, %478 : vector<12x128xf32>
    %480 = vector.broadcast %61 : f32 to vector<12x128xf32>
    %481 = arith.mulf %480, %473 : vector<12x128xf32>
    %482 = arith.addf %472, %481 : vector<12x128xf32>
    %483 = vector.extract_strided_slice %355 {offsets = [2, 0], sizes = [12, 128], strides = [1, 1]} : vector<16x128xf32> to vector<12x128xf32>
    %484 = vector.broadcast %12 : f32 to vector<12x128xf32>
    %485 = arith.mulf %484, %483 : vector<12x128xf32>
    %486 = arith.addf %476, %485 : vector<12x128xf32>
    %487 = vector.broadcast %37 : f32 to vector<12x128xf32>
    %488 = arith.mulf %487, %483 : vector<12x128xf32>
    %489 = arith.addf %479, %488 : vector<12x128xf32>
    %490 = vector.broadcast %62 : f32 to vector<12x128xf32>
    %491 = arith.mulf %490, %483 : vector<12x128xf32>
    %492 = arith.addf %482, %491 : vector<12x128xf32>
    %493 = vector.extract_strided_slice %355 {offsets = [3, 0], sizes = [12, 128], strides = [1, 1]} : vector<16x128xf32> to vector<12x128xf32>
    %494 = vector.broadcast %13 : f32 to vector<12x128xf32>
    %495 = arith.mulf %494, %493 : vector<12x128xf32>
    %496 = arith.addf %486, %495 : vector<12x128xf32>
    %497 = vector.broadcast %38 : f32 to vector<12x128xf32>
    %498 = arith.mulf %497, %493 : vector<12x128xf32>
    %499 = arith.addf %489, %498 : vector<12x128xf32>
    %500 = vector.broadcast %63 : f32 to vector<12x128xf32>
    %501 = arith.mulf %500, %493 : vector<12x128xf32>
    %502 = arith.addf %492, %501 : vector<12x128xf32>
    %503 = vector.extract_strided_slice %355 {offsets = [4, 0], sizes = [12, 128], strides = [1, 1]} : vector<16x128xf32> to vector<12x128xf32>
    %504 = vector.broadcast %14 : f32 to vector<12x128xf32>
    %505 = arith.mulf %504, %503 : vector<12x128xf32>
    %506 = arith.addf %496, %505 : vector<12x128xf32>
    %507 = vector.broadcast %39 : f32 to vector<12x128xf32>
    %508 = arith.mulf %507, %503 : vector<12x128xf32>
    %509 = arith.addf %499, %508 : vector<12x128xf32>
    %510 = vector.broadcast %64 : f32 to vector<12x128xf32>
    %511 = arith.mulf %510, %503 : vector<12x128xf32>
    %512 = arith.addf %502, %511 : vector<12x128xf32>
    %513 = vector.extract_strided_slice %357 {offsets = [0, 0], sizes = [12, 128], strides = [1, 1]} : vector<16x128xf32> to vector<12x128xf32>
    %514 = vector.broadcast %15 : f32 to vector<12x128xf32>
    %515 = arith.mulf %514, %513 : vector<12x128xf32>
    %516 = arith.addf %506, %515 : vector<12x128xf32>
    %517 = vector.broadcast %40 : f32 to vector<12x128xf32>
    %518 = arith.mulf %517, %513 : vector<12x128xf32>
    %519 = arith.addf %509, %518 : vector<12x128xf32>
    %520 = vector.broadcast %65 : f32 to vector<12x128xf32>
    %521 = arith.mulf %520, %513 : vector<12x128xf32>
    %522 = arith.addf %512, %521 : vector<12x128xf32>
    %523 = vector.extract_strided_slice %357 {offsets = [1, 0], sizes = [12, 128], strides = [1, 1]} : vector<16x128xf32> to vector<12x128xf32>
    %524 = vector.broadcast %16 : f32 to vector<12x128xf32>
    %525 = arith.mulf %524, %523 : vector<12x128xf32>
    %526 = arith.addf %516, %525 : vector<12x128xf32>
    %527 = vector.broadcast %41 : f32 to vector<12x128xf32>
    %528 = arith.mulf %527, %523 : vector<12x128xf32>
    %529 = arith.addf %519, %528 : vector<12x128xf32>
    %530 = vector.broadcast %66 : f32 to vector<12x128xf32>
    %531 = arith.mulf %530, %523 : vector<12x128xf32>
    %532 = arith.addf %522, %531 : vector<12x128xf32>
    %533 = vector.extract_strided_slice %357 {offsets = [2, 0], sizes = [12, 128], strides = [1, 1]} : vector<16x128xf32> to vector<12x128xf32>
    %534 = vector.broadcast %17 : f32 to vector<12x128xf32>
    %535 = arith.mulf %534, %533 : vector<12x128xf32>
    %536 = arith.addf %526, %535 : vector<12x128xf32>
    %537 = vector.broadcast %42 : f32 to vector<12x128xf32>
    %538 = arith.mulf %537, %533 : vector<12x128xf32>
    %539 = arith.addf %529, %538 : vector<12x128xf32>
    %540 = vector.broadcast %67 : f32 to vector<12x128xf32>
    %541 = arith.mulf %540, %533 : vector<12x128xf32>
    %542 = arith.addf %532, %541 : vector<12x128xf32>
    %543 = vector.extract_strided_slice %357 {offsets = [3, 0], sizes = [12, 128], strides = [1, 1]} : vector<16x128xf32> to vector<12x128xf32>
    %544 = vector.broadcast %18 : f32 to vector<12x128xf32>
    %545 = arith.mulf %544, %543 : vector<12x128xf32>
    %546 = arith.addf %536, %545 : vector<12x128xf32>
    %547 = vector.broadcast %43 : f32 to vector<12x128xf32>
    %548 = arith.mulf %547, %543 : vector<12x128xf32>
    %549 = arith.addf %539, %548 : vector<12x128xf32>
    %550 = vector.broadcast %68 : f32 to vector<12x128xf32>
    %551 = arith.mulf %550, %543 : vector<12x128xf32>
    %552 = arith.addf %542, %551 : vector<12x128xf32>
    %553 = vector.extract_strided_slice %357 {offsets = [4, 0], sizes = [12, 128], strides = [1, 1]} : vector<16x128xf32> to vector<12x128xf32>
    %554 = vector.broadcast %19 : f32 to vector<12x128xf32>
    %555 = arith.mulf %554, %553 : vector<12x128xf32>
    %556 = arith.addf %546, %555 : vector<12x128xf32>
    %557 = vector.broadcast %44 : f32 to vector<12x128xf32>
    %558 = arith.mulf %557, %553 : vector<12x128xf32>
    %559 = arith.addf %549, %558 : vector<12x128xf32>
    %560 = vector.broadcast %69 : f32 to vector<12x128xf32>
    %561 = arith.mulf %560, %553 : vector<12x128xf32>
    %562 = arith.addf %552, %561 : vector<12x128xf32>
    %563 = vector.extract_strided_slice %359 {offsets = [0, 0], sizes = [12, 128], strides = [1, 1]} : vector<16x128xf32> to vector<12x128xf32>
    %564 = vector.broadcast %20 : f32 to vector<12x128xf32>
    %565 = arith.mulf %564, %563 : vector<12x128xf32>
    %566 = arith.addf %556, %565 : vector<12x128xf32>
    %567 = vector.broadcast %45 : f32 to vector<12x128xf32>
    %568 = arith.mulf %567, %563 : vector<12x128xf32>
    %569 = arith.addf %559, %568 : vector<12x128xf32>
    %570 = vector.broadcast %70 : f32 to vector<12x128xf32>
    %571 = arith.mulf %570, %563 : vector<12x128xf32>
    %572 = arith.addf %562, %571 : vector<12x128xf32>
    %573 = vector.extract_strided_slice %359 {offsets = [1, 0], sizes = [12, 128], strides = [1, 1]} : vector<16x128xf32> to vector<12x128xf32>
    %574 = vector.broadcast %21 : f32 to vector<12x128xf32>
    %575 = arith.mulf %574, %573 : vector<12x128xf32>
    %576 = arith.addf %566, %575 : vector<12x128xf32>
    %577 = vector.broadcast %46 : f32 to vector<12x128xf32>
    %578 = arith.mulf %577, %573 : vector<12x128xf32>
    %579 = arith.addf %569, %578 : vector<12x128xf32>
    %580 = vector.broadcast %71 : f32 to vector<12x128xf32>
    %581 = arith.mulf %580, %573 : vector<12x128xf32>
    %582 = arith.addf %572, %581 : vector<12x128xf32>
    %583 = vector.extract_strided_slice %359 {offsets = [2, 0], sizes = [12, 128], strides = [1, 1]} : vector<16x128xf32> to vector<12x128xf32>
    %584 = vector.broadcast %22 : f32 to vector<12x128xf32>
    %585 = arith.mulf %584, %583 : vector<12x128xf32>
    %586 = arith.addf %576, %585 : vector<12x128xf32>
    %587 = vector.broadcast %47 : f32 to vector<12x128xf32>
    %588 = arith.mulf %587, %583 : vector<12x128xf32>
    %589 = arith.addf %579, %588 : vector<12x128xf32>
    %590 = vector.broadcast %72 : f32 to vector<12x128xf32>
    %591 = arith.mulf %590, %583 : vector<12x128xf32>
    %592 = arith.addf %582, %591 : vector<12x128xf32>
    %593 = vector.extract_strided_slice %359 {offsets = [3, 0], sizes = [12, 128], strides = [1, 1]} : vector<16x128xf32> to vector<12x128xf32>
    %594 = vector.broadcast %23 : f32 to vector<12x128xf32>
    %595 = arith.mulf %594, %593 : vector<12x128xf32>
    %596 = arith.addf %586, %595 : vector<12x128xf32>
    %597 = vector.broadcast %48 : f32 to vector<12x128xf32>
    %598 = arith.mulf %597, %593 : vector<12x128xf32>
    %599 = arith.addf %589, %598 : vector<12x128xf32>
    %600 = vector.broadcast %73 : f32 to vector<12x128xf32>
    %601 = arith.mulf %600, %593 : vector<12x128xf32>
    %602 = arith.addf %592, %601 : vector<12x128xf32>
    %603 = vector.extract_strided_slice %359 {offsets = [4, 0], sizes = [12, 128], strides = [1, 1]} : vector<16x128xf32> to vector<12x128xf32>
    %604 = vector.broadcast %24 : f32 to vector<12x128xf32>
    %605 = arith.mulf %604, %603 : vector<12x128xf32>
    %606 = arith.addf %596, %605 : vector<12x128xf32>
    %607 = vector.broadcast %49 : f32 to vector<12x128xf32>
    %608 = arith.mulf %607, %603 : vector<12x128xf32>
    %609 = arith.addf %599, %608 : vector<12x128xf32>
    %610 = vector.broadcast %74 : f32 to vector<12x128xf32>
    %611 = arith.mulf %610, %603 : vector<12x128xf32>
    %612 = arith.addf %602, %611 : vector<12x128xf32>
    %c0_45 = arith.constant 0 : index
    %c1_46 = arith.constant 1 : index
    %c0_47 = arith.constant 0 : index
    %c0_48 = arith.constant 0 : index
    %613 = vector.load %arg4[%c0_45, %c1_46, %c0_47, %c0_48] : memref<3x12x12x128xf32, #tpu.memory_space<vmem>>, vector<1x1x12x128xf32>
    %614 = vector.shape_cast %613 : vector<1x1x12x128xf32> to vector<12x128xf32>
    %615 = vector.shape_cast %606 : vector<12x128xf32> to vector<1x1x12x128xf32>
    tpu.vector_store %arg4[%c0_45, %c1_46, %c0_47, %c0_48], %615 {strides = array<i32>} : memref<3x12x12x128xf32, #tpu.memory_space<vmem>>, vector<1x1x12x128xf32>,
    %c1_49 = arith.constant 1 : index
    %c1_50 = arith.constant 1 : index
    %c0_51 = arith.constant 0 : index
    %c0_52 = arith.constant 0 : index
    %616 = vector.load %arg4[%c1_49, %c1_50, %c0_51, %c0_52] : memref<3x12x12x128xf32, #tpu.memory_space<vmem>>, vector<1x1x12x128xf32>
    %617 = vector.shape_cast %616 : vector<1x1x12x128xf32> to vector<12x128xf32>
    %618 = vector.shape_cast %609 : vector<12x128xf32> to vector<1x1x12x128xf32>
    tpu.vector_store %arg4[%c1_49, %c1_50, %c0_51, %c0_52], %618 {strides = array<i32>} : memref<3x12x12x128xf32, #tpu.memory_space<vmem>>, vector<1x1x12x128xf32>,
    %c2_53 = arith.constant 2 : index
    %c1_54 = arith.constant 1 : index
    %c0_55 = arith.constant 0 : index
    %c0_56 = arith.constant 0 : index
    %619 = vector.load %arg4[%c2_53, %c1_54, %c0_55, %c0_56] : memref<3x12x12x128xf32, #tpu.memory_space<vmem>>, vector<1x1x12x128xf32>
    %620 = vector.shape_cast %619 : vector<1x1x12x128xf32> to vector<12x128xf32>
    %621 = vector.shape_cast %612 : vector<12x128xf32> to vector<1x1x12x128xf32>
    tpu.vector_store %arg4[%c2_53, %c1_54, %c0_55, %c0_56], %621 {strides = array<i32>} : memref<3x12x12x128xf32, #tpu.memory_space<vmem>>, vector<1x1x12x128xf32>,
    %c2_57 = arith.constant 2 : index
    %c0_58 = arith.constant 0 : index
    %c0_59 = arith.constant 0 : index
    %622 = vector.load %arg1[%c2_57, %c0_58, %c0_59] : memref<16x16x128xf32, #tpu.memory_space<vmem>>, vector<1x16x128xf32>
    %623 = vector.shape_cast %622 : vector<1x16x128xf32> to vector<16x128xf32>
    %c3_60 = arith.constant 3 : index
    %c0_61 = arith.constant 0 : index
    %c0_62 = arith.constant 0 : index
    %624 = vector.load %arg1[%c3_60, %c0_61, %c0_62] : memref<16x16x128xf32, #tpu.memory_space<vmem>>, vector<1x16x128xf32>
    %625 = vector.shape_cast %624 : vector<1x16x128xf32> to vector<16x128xf32>
    %c4_63 = arith.constant 4 : index
    %c0_64 = arith.constant 0 : index
    %c0_65 = arith.constant 0 : index
    %626 = vector.load %arg1[%c4_63, %c0_64, %c0_65] : memref<16x16x128xf32, #tpu.memory_space<vmem>>, vector<1x16x128xf32>
    %627 = vector.shape_cast %626 : vector<1x16x128xf32> to vector<16x128xf32>
    %c5_66 = arith.constant 5 : index
    %c0_67 = arith.constant 0 : index
    %c0_68 = arith.constant 0 : index
    %628 = vector.load %arg1[%c5_66, %c0_67, %c0_68] : memref<16x16x128xf32, #tpu.memory_space<vmem>>, vector<1x16x128xf32>
    %629 = vector.shape_cast %628 : vector<1x16x128xf32> to vector<16x128xf32>
    %c6_69 = arith.constant 6 : index
    %c0_70 = arith.constant 0 : index
    %c0_71 = arith.constant 0 : index
    %630 = vector.load %arg1[%c6_69, %c0_70, %c0_71] : memref<16x16x128xf32, #tpu.memory_space<vmem>>, vector<1x16x128xf32>
    %631 = vector.shape_cast %630 : vector<1x16x128xf32> to vector<16x128xf32>
    %632 = vector.broadcast %75 : f32 to vector<12x128xf32>
    %633 = vector.broadcast %76 : f32 to vector<12x128xf32>
    %634 = vector.broadcast %77 : f32 to vector<12x128xf32>
    %635 = vector.extract_strided_slice %623 {offsets = [0, 0], sizes = [12, 128], strides = [1, 1]} : vector<16x128xf32> to vector<12x128xf32>
    %636 = vector.broadcast %0 : f32 to vector<12x128xf32>
    %637 = arith.mulf %636, %635 : vector<12x128xf32>
    %638 = arith.addf %632, %637 : vector<12x128xf32>
    %639 = vector.broadcast %25 : f32 to vector<12x128xf32>
    %640 = arith.mulf %639, %635 : vector<12x128xf32>
    %641 = arith.addf %633, %640 : vector<12x128xf32>
    %642 = vector.broadcast %50 : f32 to vector<12x128xf32>
    %643 = arith.mulf %642, %635 : vector<12x128xf32>
    %644 = arith.addf %634, %643 : vector<12x128xf32>
    %645 = vector.extract_strided_slice %623 {offsets = [1, 0], sizes = [12, 128], strides = [1, 1]} : vector<16x128xf32> to vector<12x128xf32>
    %646 = vector.broadcast %1 : f32 to vector<12x128xf32>
    %647 = arith.mulf %646, %645 : vector<12x128xf32>
    %648 = arith.addf %638, %647 : vector<12x128xf32>
    %649 = vector.broadcast %26 : f32 to vector<12x128xf32>
    %650 = arith.mulf %649, %645 : vector<12x128xf32>
    %651 = arith.addf %641, %650 : vector<12x128xf32>
    %652 = vector.broadcast %51 : f32 to vector<12x128xf32>
    %653 = arith.mulf %652, %645 : vector<12x128xf32>
    %654 = arith.addf %644, %653 : vector<12x128xf32>
    %655 = vector.extract_strided_slice %623 {offsets = [2, 0], sizes = [12, 128], strides = [1, 1]} : vector<16x128xf32> to vector<12x128xf32>
    %656 = vector.broadcast %2 : f32 to vector<12x128xf32>
    %657 = arith.mulf %656, %655 : vector<12x128xf32>
    %658 = arith.addf %648, %657 : vector<12x128xf32>
    %659 = vector.broadcast %27 : f32 to vector<12x128xf32>
    %660 = arith.mulf %659, %655 : vector<12x128xf32>
    %661 = arith.addf %651, %660 : vector<12x128xf32>
    %662 = vector.broadcast %52 : f32 to vector<12x128xf32>
    %663 = arith.mulf %662, %655 : vector<12x128xf32>
    %664 = arith.addf %654, %663 : vector<12x128xf32>
    %665 = vector.extract_strided_slice %623 {offsets = [3, 0], sizes = [12, 128], strides = [1, 1]} : vector<16x128xf32> to vector<12x128xf32>
    %666 = vector.broadcast %3 : f32 to vector<12x128xf32>
    %667 = arith.mulf %666, %665 : vector<12x128xf32>
    %668 = arith.addf %658, %667 : vector<12x128xf32>
    %669 = vector.broadcast %28 : f32 to vector<12x128xf32>
    %670 = arith.mulf %669, %665 : vector<12x128xf32>
    %671 = arith.addf %661, %670 : vector<12x128xf32>
    %672 = vector.broadcast %53 : f32 to vector<12x128xf32>
    %673 = arith.mulf %672, %665 : vector<12x128xf32>
    %674 = arith.addf %664, %673 : vector<12x128xf32>
    %675 = vector.extract_strided_slice %623 {offsets = [4, 0], sizes = [12, 128], strides = [1, 1]} : vector<16x128xf32> to vector<12x128xf32>
    %676 = vector.broadcast %4 : f32 to vector<12x128xf32>
    %677 = arith.mulf %676, %675 : vector<12x128xf32>
    %678 = arith.addf %668, %677 : vector<12x128xf32>
    %679 = vector.broadcast %29 : f32 to vector<12x128xf32>
    %680 = arith.mulf %679, %675 : vector<12x128xf32>
    %681 = arith.addf %671, %680 : vector<12x128xf32>
    %682 = vector.broadcast %54 : f32 to vector<12x128xf32>
    %683 = arith.mulf %682, %675 : vector<12x128xf32>
    %684 = arith.addf %674, %683 : vector<12x128xf32>
    %685 = vector.extract_strided_slice %625 {offsets = [0, 0], sizes = [12, 128], strides = [1, 1]} : vector<16x128xf32> to vector<12x128xf32>
    %686 = vector.broadcast %5 : f32 to vector<12x128xf32>
    %687 = arith.mulf %686, %685 : vector<12x128xf32>
    %688 = arith.addf %678, %687 : vector<12x128xf32>
    %689 = vector.broadcast %30 : f32 to vector<12x128xf32>
    %690 = arith.mulf %689, %685 : vector<12x128xf32>
    %691 = arith.addf %681, %690 : vector<12x128xf32>
    %692 = vector.broadcast %55 : f32 to vector<12x128xf32>
    %693 = arith.mulf %692, %685 : vector<12x128xf32>
    %694 = arith.addf %684, %693 : vector<12x128xf32>
    %695 = vector.extract_strided_slice %625 {offsets = [1, 0], sizes = [12, 128], strides = [1, 1]} : vector<16x128xf32> to vector<12x128xf32>
    %696 = vector.broadcast %6 : f32 to vector<12x128xf32>
    %697 = arith.mulf %696, %695 : vector<12x128xf32>
    %698 = arith.addf %688, %697 : vector<12x128xf32>
    %699 = vector.broadcast %31 : f32 to vector<12x128xf32>
    %700 = arith.mulf %699, %695 : vector<12x128xf32>
    %701 = arith.addf %691, %700 : vector<12x128xf32>
    %702 = vector.broadcast %56 : f32 to vector<12x128xf32>
    %703 = arith.mulf %702, %695 : vector<12x128xf32>
    %704 = arith.addf %694, %703 : vector<12x128xf32>
    %705 = vector.extract_strided_slice %625 {offsets = [2, 0], sizes = [12, 128], strides = [1, 1]} : vector<16x128xf32> to vector<12x128xf32>
    %706 = vector.broadcast %7 : f32 to vector<12x128xf32>
    %707 = arith.mulf %706, %705 : vector<12x128xf32>
    %708 = arith.addf %698, %707 : vector<12x128xf32>
    %709 = vector.broadcast %32 : f32 to vector<12x128xf32>
    %710 = arith.mulf %709, %705 : vector<12x128xf32>
    %711 = arith.addf %701, %710 : vector<12x128xf32>
    %712 = vector.broadcast %57 : f32 to vector<12x128xf32>
    %713 = arith.mulf %712, %705 : vector<12x128xf32>
    %714 = arith.addf %704, %713 : vector<12x128xf32>
    %715 = vector.extract_strided_slice %625 {offsets = [3, 0], sizes = [12, 128], strides = [1, 1]} : vector<16x128xf32> to vector<12x128xf32>
    %716 = vector.broadcast %8 : f32 to vector<12x128xf32>
    %717 = arith.mulf %716, %715 : vector<12x128xf32>
    %718 = arith.addf %708, %717 : vector<12x128xf32>
    %719 = vector.broadcast %33 : f32 to vector<12x128xf32>
    %720 = arith.mulf %719, %715 : vector<12x128xf32>
    %721 = arith.addf %711, %720 : vector<12x128xf32>
    %722 = vector.broadcast %58 : f32 to vector<12x128xf32>
    %723 = arith.mulf %722, %715 : vector<12x128xf32>
    %724 = arith.addf %714, %723 : vector<12x128xf32>
    %725 = vector.extract_strided_slice %625 {offsets = [4, 0], sizes = [12, 128], strides = [1, 1]} : vector<16x128xf32> to vector<12x128xf32>
    %726 = vector.broadcast %9 : f32 to vector<12x128xf32>
    %727 = arith.mulf %726, %725 : vector<12x128xf32>
    %728 = arith.addf %718, %727 : vector<12x128xf32>
    %729 = vector.broadcast %34 : f32 to vector<12x128xf32>
    %730 = arith.mulf %729, %725 : vector<12x128xf32>
    %731 = arith.addf %721, %730 : vector<12x128xf32>
    %732 = vector.broadcast %59 : f32 to vector<12x128xf32>
    %733 = arith.mulf %732, %725 : vector<12x128xf32>
    %734 = arith.addf %724, %733 : vector<12x128xf32>
    %735 = vector.extract_strided_slice %627 {offsets = [0, 0], sizes = [12, 128], strides = [1, 1]} : vector<16x128xf32> to vector<12x128xf32>
    %736 = vector.broadcast %10 : f32 to vector<12x128xf32>
    %737 = arith.mulf %736, %735 : vector<12x128xf32>
    %738 = arith.addf %728, %737 : vector<12x128xf32>
    %739 = vector.broadcast %35 : f32 to vector<12x128xf32>
    %740 = arith.mulf %739, %735 : vector<12x128xf32>
    %741 = arith.addf %731, %740 : vector<12x128xf32>
    %742 = vector.broadcast %60 : f32 to vector<12x128xf32>
    %743 = arith.mulf %742, %735 : vector<12x128xf32>
    %744 = arith.addf %734, %743 : vector<12x128xf32>
    %745 = vector.extract_strided_slice %627 {offsets = [1, 0], sizes = [12, 128], strides = [1, 1]} : vector<16x128xf32> to vector<12x128xf32>
    %746 = vector.broadcast %11 : f32 to vector<12x128xf32>
    %747 = arith.mulf %746, %745 : vector<12x128xf32>
    %748 = arith.addf %738, %747 : vector<12x128xf32>
    %749 = vector.broadcast %36 : f32 to vector<12x128xf32>
    %750 = arith.mulf %749, %745 : vector<12x128xf32>
    %751 = arith.addf %741, %750 : vector<12x128xf32>
    %752 = vector.broadcast %61 : f32 to vector<12x128xf32>
    %753 = arith.mulf %752, %745 : vector<12x128xf32>
    %754 = arith.addf %744, %753 : vector<12x128xf32>
    %755 = vector.extract_strided_slice %627 {offsets = [2, 0], sizes = [12, 128], strides = [1, 1]} : vector<16x128xf32> to vector<12x128xf32>
    %756 = vector.broadcast %12 : f32 to vector<12x128xf32>
    %757 = arith.mulf %756, %755 : vector<12x128xf32>
    %758 = arith.addf %748, %757 : vector<12x128xf32>
    %759 = vector.broadcast %37 : f32 to vector<12x128xf32>
    %760 = arith.mulf %759, %755 : vector<12x128xf32>
    %761 = arith.addf %751, %760 : vector<12x128xf32>
    %762 = vector.broadcast %62 : f32 to vector<12x128xf32>
    %763 = arith.mulf %762, %755 : vector<12x128xf32>
    %764 = arith.addf %754, %763 : vector<12x128xf32>
    %765 = vector.extract_strided_slice %627 {offsets = [3, 0], sizes = [12, 128], strides = [1, 1]} : vector<16x128xf32> to vector<12x128xf32>
    %766 = vector.broadcast %13 : f32 to vector<12x128xf32>
    %767 = arith.mulf %766, %765 : vector<12x128xf32>
    %768 = arith.addf %758, %767 : vector<12x128xf32>
    %769 = vector.broadcast %38 : f32 to vector<12x128xf32>
    %770 = arith.mulf %769, %765 : vector<12x128xf32>
    %771 = arith.addf %761, %770 : vector<12x128xf32>
    %772 = vector.broadcast %63 : f32 to vector<12x128xf32>
    %773 = arith.mulf %772, %765 : vector<12x128xf32>
    %774 = arith.addf %764, %773 : vector<12x128xf32>
    %775 = vector.extract_strided_slice %627 {offsets = [4, 0], sizes = [12, 128], strides = [1, 1]} : vector<16x128xf32> to vector<12x128xf32>
    %776 = vector.broadcast %14 : f32 to vector<12x128xf32>
    %777 = arith.mulf %776, %775 : vector<12x128xf32>
    %778 = arith.addf %768, %777 : vector<12x128xf32>
    %779 = vector.broadcast %39 : f32 to vector<12x128xf32>
    %780 = arith.mulf %779, %775 : vector<12x128xf32>
    %781 = arith.addf %771, %780 : vector<12x128xf32>
    %782 = vector.broadcast %64 : f32 to vector<12x128xf32>
    %783 = arith.mulf %782, %775 : vector<12x128xf32>
    %784 = arith.addf %774, %783 : vector<12x128xf32>
    %785 = vector.extract_strided_slice %629 {offsets = [0, 0], sizes = [12, 128], strides = [1, 1]} : vector<16x128xf32> to vector<12x128xf32>
    %786 = vector.broadcast %15 : f32 to vector<12x128xf32>
    %787 = arith.mulf %786, %785 : vector<12x128xf32>
    %788 = arith.addf %778, %787 : vector<12x128xf32>
    %789 = vector.broadcast %40 : f32 to vector<12x128xf32>
    %790 = arith.mulf %789, %785 : vector<12x128xf32>
    %791 = arith.addf %781, %790 : vector<12x128xf32>
    %792 = vector.broadcast %65 : f32 to vector<12x128xf32>
    %793 = arith.mulf %792, %785 : vector<12x128xf32>
    %794 = arith.addf %784, %793 : vector<12x128xf32>
    %795 = vector.extract_strided_slice %629 {offsets = [1, 0], sizes = [12, 128], strides = [1, 1]} : vector<16x128xf32> to vector<12x128xf32>
    %796 = vector.broadcast %16 : f32 to vector<12x128xf32>
    %797 = arith.mulf %796, %795 : vector<12x128xf32>
    %798 = arith.addf %788, %797 : vector<12x128xf32>
    %799 = vector.broadcast %41 : f32 to vector<12x128xf32>
    %800 = arith.mulf %799, %795 : vector<12x128xf32>
    %801 = arith.addf %791, %800 : vector<12x128xf32>
    %802 = vector.broadcast %66 : f32 to vector<12x128xf32>
    %803 = arith.mulf %802, %795 : vector<12x128xf32>
    %804 = arith.addf %794, %803 : vector<12x128xf32>
    %805 = vector.extract_strided_slice %629 {offsets = [2, 0], sizes = [12, 128], strides = [1, 1]} : vector<16x128xf32> to vector<12x128xf32>
    %806 = vector.broadcast %17 : f32 to vector<12x128xf32>
    %807 = arith.mulf %806, %805 : vector<12x128xf32>
    %808 = arith.addf %798, %807 : vector<12x128xf32>
    %809 = vector.broadcast %42 : f32 to vector<12x128xf32>
    %810 = arith.mulf %809, %805 : vector<12x128xf32>
    %811 = arith.addf %801, %810 : vector<12x128xf32>
    %812 = vector.broadcast %67 : f32 to vector<12x128xf32>
    %813 = arith.mulf %812, %805 : vector<12x128xf32>
    %814 = arith.addf %804, %813 : vector<12x128xf32>
    %815 = vector.extract_strided_slice %629 {offsets = [3, 0], sizes = [12, 128], strides = [1, 1]} : vector<16x128xf32> to vector<12x128xf32>
    %816 = vector.broadcast %18 : f32 to vector<12x128xf32>
    %817 = arith.mulf %816, %815 : vector<12x128xf32>
    %818 = arith.addf %808, %817 : vector<12x128xf32>
    %819 = vector.broadcast %43 : f32 to vector<12x128xf32>
    %820 = arith.mulf %819, %815 : vector<12x128xf32>
    %821 = arith.addf %811, %820 : vector<12x128xf32>
    %822 = vector.broadcast %68 : f32 to vector<12x128xf32>
    %823 = arith.mulf %822, %815 : vector<12x128xf32>
    %824 = arith.addf %814, %823 : vector<12x128xf32>
    %825 = vector.extract_strided_slice %629 {offsets = [4, 0], sizes = [12, 128], strides = [1, 1]} : vector<16x128xf32> to vector<12x128xf32>
    %826 = vector.broadcast %19 : f32 to vector<12x128xf32>
    %827 = arith.mulf %826, %825 : vector<12x128xf32>
    %828 = arith.addf %818, %827 : vector<12x128xf32>
    %829 = vector.broadcast %44 : f32 to vector<12x128xf32>
    %830 = arith.mulf %829, %825 : vector<12x128xf32>
    %831 = arith.addf %821, %830 : vector<12x128xf32>
    %832 = vector.broadcast %69 : f32 to vector<12x128xf32>
    %833 = arith.mulf %832, %825 : vector<12x128xf32>
    %834 = arith.addf %824, %833 : vector<12x128xf32>
    %835 = vector.extract_strided_slice %631 {offsets = [0, 0], sizes = [12, 128], strides = [1, 1]} : vector<16x128xf32> to vector<12x128xf32>
    %836 = vector.broadcast %20 : f32 to vector<12x128xf32>
    %837 = arith.mulf %836, %835 : vector<12x128xf32>
    %838 = arith.addf %828, %837 : vector<12x128xf32>
    %839 = vector.broadcast %45 : f32 to vector<12x128xf32>
    %840 = arith.mulf %839, %835 : vector<12x128xf32>
    %841 = arith.addf %831, %840 : vector<12x128xf32>
    %842 = vector.broadcast %70 : f32 to vector<12x128xf32>
    %843 = arith.mulf %842, %835 : vector<12x128xf32>
    %844 = arith.addf %834, %843 : vector<12x128xf32>
    %845 = vector.extract_strided_slice %631 {offsets = [1, 0], sizes = [12, 128], strides = [1, 1]} : vector<16x128xf32> to vector<12x128xf32>
    %846 = vector.broadcast %21 : f32 to vector<12x128xf32>
    %847 = arith.mulf %846, %845 : vector<12x128xf32>
    %848 = arith.addf %838, %847 : vector<12x128xf32>
    %849 = vector.broadcast %46 : f32 to vector<12x128xf32>
    %850 = arith.mulf %849, %845 : vector<12x128xf32>
    %851 = arith.addf %841, %850 : vector<12x128xf32>
    %852 = vector.broadcast %71 : f32 to vector<12x128xf32>
    %853 = arith.mulf %852, %845 : vector<12x128xf32>
    %854 = arith.addf %844, %853 : vector<12x128xf32>
    %855 = vector.extract_strided_slice %631 {offsets = [2, 0], sizes = [12, 128], strides = [1, 1]} : vector<16x128xf32> to vector<12x128xf32>
    %856 = vector.broadcast %22 : f32 to vector<12x128xf32>
    %857 = arith.mulf %856, %855 : vector<12x128xf32>
    %858 = arith.addf %848, %857 : vector<12x128xf32>
    %859 = vector.broadcast %47 : f32 to vector<12x128xf32>
    %860 = arith.mulf %859, %855 : vector<12x128xf32>
    %861 = arith.addf %851, %860 : vector<12x128xf32>
    %862 = vector.broadcast %72 : f32 to vector<12x128xf32>
    %863 = arith.mulf %862, %855 : vector<12x128xf32>
    %864 = arith.addf %854, %863 : vector<12x128xf32>
    %865 = vector.extract_strided_slice %631 {offsets = [3, 0], sizes = [12, 128], strides = [1, 1]} : vector<16x128xf32> to vector<12x128xf32>
    %866 = vector.broadcast %23 : f32 to vector<12x128xf32>
    %867 = arith.mulf %866, %865 : vector<12x128xf32>
    %868 = arith.addf %858, %867 : vector<12x128xf32>
    %869 = vector.broadcast %48 : f32 to vector<12x128xf32>
    %870 = arith.mulf %869, %865 : vector<12x128xf32>
    %871 = arith.addf %861, %870 : vector<12x128xf32>
    %872 = vector.broadcast %73 : f32 to vector<12x128xf32>
    %873 = arith.mulf %872, %865 : vector<12x128xf32>
    %874 = arith.addf %864, %873 : vector<12x128xf32>
    %875 = vector.extract_strided_slice %631 {offsets = [4, 0], sizes = [12, 128], strides = [1, 1]} : vector<16x128xf32> to vector<12x128xf32>
    %876 = vector.broadcast %24 : f32 to vector<12x128xf32>
    %877 = arith.mulf %876, %875 : vector<12x128xf32>
    %878 = arith.addf %868, %877 : vector<12x128xf32>
    %879 = vector.broadcast %49 : f32 to vector<12x128xf32>
    %880 = arith.mulf %879, %875 : vector<12x128xf32>
    %881 = arith.addf %871, %880 : vector<12x128xf32>
    %882 = vector.broadcast %74 : f32 to vector<12x128xf32>
    %883 = arith.mulf %882, %875 : vector<12x128xf32>
    %884 = arith.addf %874, %883 : vector<12x128xf32>
    %c0_72 = arith.constant 0 : index
    %c2_73 = arith.constant 2 : index
    %c0_74 = arith.constant 0 : index
    %c0_75 = arith.constant 0 : index
    %885 = vector.load %arg4[%c0_72, %c2_73, %c0_74, %c0_75] : memref<3x12x12x128xf32, #tpu.memory_space<vmem>>, vector<1x1x12x128xf32>
    %886 = vector.shape_cast %885 : vector<1x1x12x128xf32> to vector<12x128xf32>
    %887 = vector.shape_cast %878 : vector<12x128xf32> to vector<1x1x12x128xf32>
    tpu.vector_store %arg4[%c0_72, %c2_73, %c0_74, %c0_75], %887 {strides = array<i32>} : memref<3x12x12x128xf32, #tpu.memory_space<vmem>>, vector<1x1x12x128xf32>,
    %c1_76 = arith.constant 1 : index
    %c2_77 = arith.constant 2 : index
    %c0_78 = arith.constant 0 : index
    %c0_79 = arith.constant 0 : index
    %888 = vector.load %arg4[%c1_76, %c2_77, %c0_78, %c0_79] : memref<3x12x12x128xf32, #tpu.memory_space<vmem>>, vector<1x1x12x128xf32>
    %889 = vector.shape_cast %888 : vector<1x1x12x128xf32> to vector<12x128xf32>
    %890 = vector.shape_cast %881 : vector<12x128xf32> to vector<1x1x12x128xf32>
    tpu.vector_store %arg4[%c1_76, %c2_77, %c0_78, %c0_79], %890 {strides = array<i32>} : memref<3x12x12x128xf32, #tpu.memory_space<vmem>>, vector<1x1x12x128xf32>,
    %c2_80 = arith.constant 2 : index
    %c2_81 = arith.constant 2 : index
    %c0_82 = arith.constant 0 : index
    %c0_83 = arith.constant 0 : index
    %891 = vector.load %arg4[%c2_80, %c2_81, %c0_82, %c0_83] : memref<3x12x12x128xf32, #tpu.memory_space<vmem>>, vector<1x1x12x128xf32>
    %892 = vector.shape_cast %891 : vector<1x1x12x128xf32> to vector<12x128xf32>
    %893 = vector.shape_cast %884 : vector<12x128xf32> to vector<1x1x12x128xf32>
    tpu.vector_store %arg4[%c2_80, %c2_81, %c0_82, %c0_83], %893 {strides = array<i32>} : memref<3x12x12x128xf32, #tpu.memory_space<vmem>>, vector<1x1x12x128xf32>,
    %c3_84 = arith.constant 3 : index
    %c0_85 = arith.constant 0 : index
    %c0_86 = arith.constant 0 : index
    %894 = vector.load %arg1[%c3_84, %c0_85, %c0_86] : memref<16x16x128xf32, #tpu.memory_space<vmem>>, vector<1x16x128xf32>
    %895 = vector.shape_cast %894 : vector<1x16x128xf32> to vector<16x128xf32>
    %c4_87 = arith.constant 4 : index
    %c0_88 = arith.constant 0 : index
    %c0_89 = arith.constant 0 : index
    %896 = vector.load %arg1[%c4_87, %c0_88, %c0_89] : memref<16x16x128xf32, #tpu.memory_space<vmem>>, vector<1x16x128xf32>
    %897 = vector.shape_cast %896 : vector<1x16x128xf32> to vector<16x128xf32>
    %c5_90 = arith.constant 5 : index
    %c0_91 = arith.constant 0 : index
    %c0_92 = arith.constant 0 : index
    %898 = vector.load %arg1[%c5_90, %c0_91, %c0_92] : memref<16x16x128xf32, #tpu.memory_space<vmem>>, vector<1x16x128xf32>
    %899 = vector.shape_cast %898 : vector<1x16x128xf32> to vector<16x128xf32>
    %c6_93 = arith.constant 6 : index
    %c0_94 = arith.constant 0 : index
    %c0_95 = arith.constant 0 : index
    %900 = vector.load %arg1[%c6_93, %c0_94, %c0_95] : memref<16x16x128xf32, #tpu.memory_space<vmem>>, vector<1x16x128xf32>
    %901 = vector.shape_cast %900 : vector<1x16x128xf32> to vector<16x128xf32>
    %c7_96 = arith.constant 7 : index
    %c0_97 = arith.constant 0 : index
    %c0_98 = arith.constant 0 : index
    %902 = vector.load %arg1[%c7_96, %c0_97, %c0_98] : memref<16x16x128xf32, #tpu.memory_space<vmem>>, vector<1x16x128xf32>
    %903 = vector.shape_cast %902 : vector<1x16x128xf32> to vector<16x128xf32>
    %904 = vector.broadcast %75 : f32 to vector<12x128xf32>
    %905 = vector.broadcast %76 : f32 to vector<12x128xf32>
    %906 = vector.broadcast %77 : f32 to vector<12x128xf32>
    %907 = vector.extract_strided_slice %895 {offsets = [0, 0], sizes = [12, 128], strides = [1, 1]} : vector<16x128xf32> to vector<12x128xf32>
    %908 = vector.broadcast %0 : f32 to vector<12x128xf32>
    %909 = arith.mulf %908, %907 : vector<12x128xf32>
    %910 = arith.addf %904, %909 : vector<12x128xf32>
    %911 = vector.broadcast %25 : f32 to vector<12x128xf32>
    %912 = arith.mulf %911, %907 : vector<12x128xf32>
    %913 = arith.addf %905, %912 : vector<12x128xf32>
    %914 = vector.broadcast %50 : f32 to vector<12x128xf32>
    %915 = arith.mulf %914, %907 : vector<12x128xf32>
    %916 = arith.addf %906, %915 : vector<12x128xf32>
    %917 = vector.extract_strided_slice %895 {offsets = [1, 0], sizes = [12, 128], strides = [1, 1]} : vector<16x128xf32> to vector<12x128xf32>
    %918 = vector.broadcast %1 : f32 to vector<12x128xf32>
    %919 = arith.mulf %918, %917 : vector<12x128xf32>
    %920 = arith.addf %910, %919 : vector<12x128xf32>
    %921 = vector.broadcast %26 : f32 to vector<12x128xf32>
    %922 = arith.mulf %921, %917 : vector<12x128xf32>
    %923 = arith.addf %913, %922 : vector<12x128xf32>
    %924 = vector.broadcast %51 : f32 to vector<12x128xf32>
    %925 = arith.mulf %924, %917 : vector<12x128xf32>
    %926 = arith.addf %916, %925 : vector<12x128xf32>
    %927 = vector.extract_strided_slice %895 {offsets = [2, 0], sizes = [12, 128], strides = [1, 1]} : vector<16x128xf32> to vector<12x128xf32>
    %928 = vector.broadcast %2 : f32 to vector<12x128xf32>
    %929 = arith.mulf %928, %927 : vector<12x128xf32>
    %930 = arith.addf %920, %929 : vector<12x128xf32>
    %931 = vector.broadcast %27 : f32 to vector<12x128xf32>
    %932 = arith.mulf %931, %927 : vector<12x128xf32>
    %933 = arith.addf %923, %932 : vector<12x128xf32>
    %934 = vector.broadcast %52 : f32 to vector<12x128xf32>
    %935 = arith.mulf %934, %927 : vector<12x128xf32>
    %936 = arith.addf %926, %935 : vector<12x128xf32>
    %937 = vector.extract_strided_slice %895 {offsets = [3, 0], sizes = [12, 128], strides = [1, 1]} : vector<16x128xf32> to vector<12x128xf32>
    %938 = vector.broadcast %3 : f32 to vector<12x128xf32>
    %939 = arith.mulf %938, %937 : vector<12x128xf32>
    %940 = arith.addf %930, %939 : vector<12x128xf32>
    %941 = vector.broadcast %28 : f32 to vector<12x128xf32>
    %942 = arith.mulf %941, %937 : vector<12x128xf32>
    %943 = arith.addf %933, %942 : vector<12x128xf32>
    %944 = vector.broadcast %53 : f32 to vector<12x128xf32>
    %945 = arith.mulf %944, %937 : vector<12x128xf32>
    %946 = arith.addf %936, %945 : vector<12x128xf32>
    %947 = vector.extract_strided_slice %895 {offsets = [4, 0], sizes = [12, 128], strides = [1, 1]} : vector<16x128xf32> to vector<12x128xf32>
    %948 = vector.broadcast %4 : f32 to vector<12x128xf32>
    %949 = arith.mulf %948, %947 : vector<12x128xf32>
    %950 = arith.addf %940, %949 : vector<12x128xf32>
    %951 = vector.broadcast %29 : f32 to vector<12x128xf32>
    %952 = arith.mulf %951, %947 : vector<12x128xf32>
    %953 = arith.addf %943, %952 : vector<12x128xf32>
    %954 = vector.broadcast %54 : f32 to vector<12x128xf32>
    %955 = arith.mulf %954, %947 : vector<12x128xf32>
    %956 = arith.addf %946, %955 : vector<12x128xf32>
    %957 = vector.extract_strided_slice %897 {offsets = [0, 0], sizes = [12, 128], strides = [1, 1]} : vector<16x128xf32> to vector<12x128xf32>
    %958 = vector.broadcast %5 : f32 to vector<12x128xf32>
    %959 = arith.mulf %958, %957 : vector<12x128xf32>
    %960 = arith.addf %950, %959 : vector<12x128xf32>
    %961 = vector.broadcast %30 : f32 to vector<12x128xf32>
    %962 = arith.mulf %961, %957 : vector<12x128xf32>
    %963 = arith.addf %953, %962 : vector<12x128xf32>
    %964 = vector.broadcast %55 : f32 to vector<12x128xf32>
    %965 = arith.mulf %964, %957 : vector<12x128xf32>
    %966 = arith.addf %956, %965 : vector<12x128xf32>
    %967 = vector.extract_strided_slice %897 {offsets = [1, 0], sizes = [12, 128], strides = [1, 1]} : vector<16x128xf32> to vector<12x128xf32>
    %968 = vector.broadcast %6 : f32 to vector<12x128xf32>
    %969 = arith.mulf %968, %967 : vector<12x128xf32>
    %970 = arith.addf %960, %969 : vector<12x128xf32>
    %971 = vector.broadcast %31 : f32 to vector<12x128xf32>
    %972 = arith.mulf %971, %967 : vector<12x128xf32>
    %973 = arith.addf %963, %972 : vector<12x128xf32>
    %974 = vector.broadcast %56 : f32 to vector<12x128xf32>
    %975 = arith.mulf %974, %967 : vector<12x128xf32>
    %976 = arith.addf %966, %975 : vector<12x128xf32>
    %977 = vector.extract_strided_slice %897 {offsets = [2, 0], sizes = [12, 128], strides = [1, 1]} : vector<16x128xf32> to vector<12x128xf32>
    %978 = vector.broadcast %7 : f32 to vector<12x128xf32>
    %979 = arith.mulf %978, %977 : vector<12x128xf32>
    %980 = arith.addf %970, %979 : vector<12x128xf32>
    %981 = vector.broadcast %32 : f32 to vector<12x128xf32>
    %982 = arith.mulf %981, %977 : vector<12x128xf32>
    %983 = arith.addf %973, %982 : vector<12x128xf32>
    %984 = vector.broadcast %57 : f32 to vector<12x128xf32>
    %985 = arith.mulf %984, %977 : vector<12x128xf32>
    %986 = arith.addf %976, %985 : vector<12x128xf32>
    %987 = vector.extract_strided_slice %897 {offsets = [3, 0], sizes = [12, 128], strides = [1, 1]} : vector<16x128xf32> to vector<12x128xf32>
    %988 = vector.broadcast %8 : f32 to vector<12x128xf32>
    %989 = arith.mulf %988, %987 : vector<12x128xf32>
    %990 = arith.addf %980, %989 : vector<12x128xf32>
    %991 = vector.broadcast %33 : f32 to vector<12x128xf32>
    %992 = arith.mulf %991, %987 : vector<12x128xf32>
    %993 = arith.addf %983, %992 : vector<12x128xf32>
    %994 = vector.broadcast %58 : f32 to vector<12x128xf32>
    %995 = arith.mulf %994, %987 : vector<12x128xf32>
    %996 = arith.addf %986, %995 : vector<12x128xf32>
    %997 = vector.extract_strided_slice %897 {offsets = [4, 0], sizes = [12, 128], strides = [1, 1]} : vector<16x128xf32> to vector<12x128xf32>
    %998 = vector.broadcast %9 : f32 to vector<12x128xf32>
    %999 = arith.mulf %998, %997 : vector<12x128xf32>
    %1000 = arith.addf %990, %999 : vector<12x128xf32>
    %1001 = vector.broadcast %34 : f32 to vector<12x128xf32>
    %1002 = arith.mulf %1001, %997 : vector<12x128xf32>
    %1003 = arith.addf %993, %1002 : vector<12x128xf32>
    %1004 = vector.broadcast %59 : f32 to vector<12x128xf32>
    %1005 = arith.mulf %1004, %997 : vector<12x128xf32>
    %1006 = arith.addf %996, %1005 : vector<12x128xf32>
    %1007 = vector.extract_strided_slice %899 {offsets = [0, 0], sizes = [12, 128], strides = [1, 1]} : vector<16x128xf32> to vector<12x128xf32>
    %1008 = vector.broadcast %10 : f32 to vector<12x128xf32>
    %1009 = arith.mulf %1008, %1007 : vector<12x128xf32>
    %1010 = arith.addf %1000, %1009 : vector<12x128xf32>
    %1011 = vector.broadcast %35 : f32 to vector<12x128xf32>
    %1012 = arith.mulf %1011, %1007 : vector<12x128xf32>
    %1013 = arith.addf %1003, %1012 : vector<12x128xf32>
    %1014 = vector.broadcast %60 : f32 to vector<12x128xf32>
    %1015 = arith.mulf %1014, %1007 : vector<12x128xf32>
    %1016 = arith.addf %1006, %1015 : vector<12x128xf32>
    %1017 = vector.extract_strided_slice %899 {offsets = [1, 0], sizes = [12, 128], strides = [1, 1]} : vector<16x128xf32> to vector<12x128xf32>
    %1018 = vector.broadcast %11 : f32 to vector<12x128xf32>
    %1019 = arith.mulf %1018, %1017 : vector<12x128xf32>
    %1020 = arith.addf %1010, %1019 : vector<12x128xf32>
    %1021 = vector.broadcast %36 : f32 to vector<12x128xf32>
    %1022 = arith.mulf %1021, %1017 : vector<12x128xf32>
    %1023 = arith.addf %1013, %1022 : vector<12x128xf32>
    %1024 = vector.broadcast %61 : f32 to vector<12x128xf32>
    %1025 = arith.mulf %1024, %1017 : vector<12x128xf32>
    %1026 = arith.addf %1016, %1025 : vector<12x128xf32>
    %1027 = vector.extract_strided_slice %899 {offsets = [2, 0], sizes = [12, 128], strides = [1, 1]} : vector<16x128xf32> to vector<12x128xf32>
    %1028 = vector.broadcast %12 : f32 to vector<12x128xf32>
    %1029 = arith.mulf %1028, %1027 : vector<12x128xf32>
    %1030 = arith.addf %1020, %1029 : vector<12x128xf32>
    %1031 = vector.broadcast %37 : f32 to vector<12x128xf32>
    %1032 = arith.mulf %1031, %1027 : vector<12x128xf32>
    %1033 = arith.addf %1023, %1032 : vector<12x128xf32>
    %1034 = vector.broadcast %62 : f32 to vector<12x128xf32>
    %1035 = arith.mulf %1034, %1027 : vector<12x128xf32>
    %1036 = arith.addf %1026, %1035 : vector<12x128xf32>
    %1037 = vector.extract_strided_slice %899 {offsets = [3, 0], sizes = [12, 128], strides = [1, 1]} : vector<16x128xf32> to vector<12x128xf32>
    %1038 = vector.broadcast %13 : f32 to vector<12x128xf32>
    %1039 = arith.mulf %1038, %1037 : vector<12x128xf32>
    %1040 = arith.addf %1030, %1039 : vector<12x128xf32>
    %1041 = vector.broadcast %38 : f32 to vector<12x128xf32>
    %1042 = arith.mulf %1041, %1037 : vector<12x128xf32>
    %1043 = arith.addf %1033, %1042 : vector<12x128xf32>
    %1044 = vector.broadcast %63 : f32 to vector<12x128xf32>
    %1045 = arith.mulf %1044, %1037 : vector<12x128xf32>
    %1046 = arith.addf %1036, %1045 : vector<12x128xf32>
    %1047 = vector.extract_strided_slice %899 {offsets = [4, 0], sizes = [12, 128], strides = [1, 1]} : vector<16x128xf32> to vector<12x128xf32>
    %1048 = vector.broadcast %14 : f32 to vector<12x128xf32>
    %1049 = arith.mulf %1048, %1047 : vector<12x128xf32>
    %1050 = arith.addf %1040, %1049 : vector<12x128xf32>
    %1051 = vector.broadcast %39 : f32 to vector<12x128xf32>
    %1052 = arith.mulf %1051, %1047 : vector<12x128xf32>
    %1053 = arith.addf %1043, %1052 : vector<12x128xf32>
    %1054 = vector.broadcast %64 : f32 to vector<12x128xf32>
    %1055 = arith.mulf %1054, %1047 : vector<12x128xf32>
    %1056 = arith.addf %1046, %1055 : vector<12x128xf32>
    %1057 = vector.extract_strided_slice %901 {offsets = [0, 0], sizes = [12, 128], strides = [1, 1]} : vector<16x128xf32> to vector<12x128xf32>
    %1058 = vector.broadcast %15 : f32 to vector<12x128xf32>
    %1059 = arith.mulf %1058, %1057 : vector<12x128xf32>
    %1060 = arith.addf %1050, %1059 : vector<12x128xf32>
    %1061 = vector.broadcast %40 : f32 to vector<12x128xf32>
    %1062 = arith.mulf %1061, %1057 : vector<12x128xf32>
    %1063 = arith.addf %1053, %1062 : vector<12x128xf32>
    %1064 = vector.broadcast %65 : f32 to vector<12x128xf32>
    %1065 = arith.mulf %1064, %1057 : vector<12x128xf32>
    %1066 = arith.addf %1056, %1065 : vector<12x128xf32>
    %1067 = vector.extract_strided_slice %901 {offsets = [1, 0], sizes = [12, 128], strides = [1, 1]} : vector<16x128xf32> to vector<12x128xf32>
    %1068 = vector.broadcast %16 : f32 to vector<12x128xf32>
    %1069 = arith.mulf %1068, %1067 : vector<12x128xf32>
    %1070 = arith.addf %1060, %1069 : vector<12x128xf32>
    %1071 = vector.broadcast %41 : f32 to vector<12x128xf32>
    %1072 = arith.mulf %1071, %1067 : vector<12x128xf32>
    %1073 = arith.addf %1063, %1072 : vector<12x128xf32>
    %1074 = vector.broadcast %66 : f32 to vector<12x128xf32>
    %1075 = arith.mulf %1074, %1067 : vector<12x128xf32>
    %1076 = arith.addf %1066, %1075 : vector<12x128xf32>
    %1077 = vector.extract_strided_slice %901 {offsets = [2, 0], sizes = [12, 128], strides = [1, 1]} : vector<16x128xf32> to vector<12x128xf32>
    %1078 = vector.broadcast %17 : f32 to vector<12x128xf32>
    %1079 = arith.mulf %1078, %1077 : vector<12x128xf32>
    %1080 = arith.addf %1070, %1079 : vector<12x128xf32>
    %1081 = vector.broadcast %42 : f32 to vector<12x128xf32>
    %1082 = arith.mulf %1081, %1077 : vector<12x128xf32>
    %1083 = arith.addf %1073, %1082 : vector<12x128xf32>
    %1084 = vector.broadcast %67 : f32 to vector<12x128xf32>
    %1085 = arith.mulf %1084, %1077 : vector<12x128xf32>
    %1086 = arith.addf %1076, %1085 : vector<12x128xf32>
    %1087 = vector.extract_strided_slice %901 {offsets = [3, 0], sizes = [12, 128], strides = [1, 1]} : vector<16x128xf32> to vector<12x128xf32>
    %1088 = vector.broadcast %18 : f32 to vector<12x128xf32>
    %1089 = arith.mulf %1088, %1087 : vector<12x128xf32>
    %1090 = arith.addf %1080, %1089 : vector<12x128xf32>
    %1091 = vector.broadcast %43 : f32 to vector<12x128xf32>
    %1092 = arith.mulf %1091, %1087 : vector<12x128xf32>
    %1093 = arith.addf %1083, %1092 : vector<12x128xf32>
    %1094 = vector.broadcast %68 : f32 to vector<12x128xf32>
    %1095 = arith.mulf %1094, %1087 : vector<12x128xf32>
    %1096 = arith.addf %1086, %1095 : vector<12x128xf32>
    %1097 = vector.extract_strided_slice %901 {offsets = [4, 0], sizes = [12, 128], strides = [1, 1]} : vector<16x128xf32> to vector<12x128xf32>
    %1098 = vector.broadcast %19 : f32 to vector<12x128xf32>
    %1099 = arith.mulf %1098, %1097 : vector<12x128xf32>
    %1100 = arith.addf %1090, %1099 : vector<12x128xf32>
    %1101 = vector.broadcast %44 : f32 to vector<12x128xf32>
    %1102 = arith.mulf %1101, %1097 : vector<12x128xf32>
    %1103 = arith.addf %1093, %1102 : vector<12x128xf32>
    %1104 = vector.broadcast %69 : f32 to vector<12x128xf32>
    %1105 = arith.mulf %1104, %1097 : vector<12x128xf32>
    %1106 = arith.addf %1096, %1105 : vector<12x128xf32>
    %1107 = vector.extract_strided_slice %903 {offsets = [0, 0], sizes = [12, 128], strides = [1, 1]} : vector<16x128xf32> to vector<12x128xf32>
    %1108 = vector.broadcast %20 : f32 to vector<12x128xf32>
    %1109 = arith.mulf %1108, %1107 : vector<12x128xf32>
    %1110 = arith.addf %1100, %1109 : vector<12x128xf32>
    %1111 = vector.broadcast %45 : f32 to vector<12x128xf32>
    %1112 = arith.mulf %1111, %1107 : vector<12x128xf32>
    %1113 = arith.addf %1103, %1112 : vector<12x128xf32>
    %1114 = vector.broadcast %70 : f32 to vector<12x128xf32>
    %1115 = arith.mulf %1114, %1107 : vector<12x128xf32>
    %1116 = arith.addf %1106, %1115 : vector<12x128xf32>
    %1117 = vector.extract_strided_slice %903 {offsets = [1, 0], sizes = [12, 128], strides = [1, 1]} : vector<16x128xf32> to vector<12x128xf32>
    %1118 = vector.broadcast %21 : f32 to vector<12x128xf32>
    %1119 = arith.mulf %1118, %1117 : vector<12x128xf32>
    %1120 = arith.addf %1110, %1119 : vector<12x128xf32>
    %1121 = vector.broadcast %46 : f32 to vector<12x128xf32>
    %1122 = arith.mulf %1121, %1117 : vector<12x128xf32>
    %1123 = arith.addf %1113, %1122 : vector<12x128xf32>
    %1124 = vector.broadcast %71 : f32 to vector<12x128xf32>
    %1125 = arith.mulf %1124, %1117 : vector<12x128xf32>
    %1126 = arith.addf %1116, %1125 : vector<12x128xf32>
    %1127 = vector.extract_strided_slice %903 {offsets = [2, 0], sizes = [12, 128], strides = [1, 1]} : vector<16x128xf32> to vector<12x128xf32>
    %1128 = vector.broadcast %22 : f32 to vector<12x128xf32>
    %1129 = arith.mulf %1128, %1127 : vector<12x128xf32>
    %1130 = arith.addf %1120, %1129 : vector<12x128xf32>
    %1131 = vector.broadcast %47 : f32 to vector<12x128xf32>
    %1132 = arith.mulf %1131, %1127 : vector<12x128xf32>
    %1133 = arith.addf %1123, %1132 : vector<12x128xf32>
    %1134 = vector.broadcast %72 : f32 to vector<12x128xf32>
    %1135 = arith.mulf %1134, %1127 : vector<12x128xf32>
    %1136 = arith.addf %1126, %1135 : vector<12x128xf32>
    %1137 = vector.extract_strided_slice %903 {offsets = [3, 0], sizes = [12, 128], strides = [1, 1]} : vector<16x128xf32> to vector<12x128xf32>
    %1138 = vector.broadcast %23 : f32 to vector<12x128xf32>
    %1139 = arith.mulf %1138, %1137 : vector<12x128xf32>
    %1140 = arith.addf %1130, %1139 : vector<12x128xf32>
    %1141 = vector.broadcast %48 : f32 to vector<12x128xf32>
    %1142 = arith.mulf %1141, %1137 : vector<12x128xf32>
    %1143 = arith.addf %1133, %1142 : vector<12x128xf32>
    %1144 = vector.broadcast %73 : f32 to vector<12x128xf32>
    %1145 = arith.mulf %1144, %1137 : vector<12x128xf32>
    %1146 = arith.addf %1136, %1145 : vector<12x128xf32>
    %1147 = vector.extract_strided_slice %903 {offsets = [4, 0], sizes = [12, 128], strides = [1, 1]} : vector<16x128xf32> to vector<12x128xf32>
    %1148 = vector.broadcast %24 : f32 to vector<12x128xf32>
    %1149 = arith.mulf %1148, %1147 : vector<12x128xf32>
    %1150 = arith.addf %1140, %1149 : vector<12x128xf32>
    %1151 = vector.broadcast %49 : f32 to vector<12x128xf32>
    %1152 = arith.mulf %1151, %1147 : vector<12x128xf32>
    %1153 = arith.addf %1143, %1152 : vector<12x128xf32>
    %1154 = vector.broadcast %74 : f32 to vector<12x128xf32>
    %1155 = arith.mulf %1154, %1147 : vector<12x128xf32>
    %1156 = arith.addf %1146, %1155 : vector<12x128xf32>
    %c0_99 = arith.constant 0 : index
    %c3_100 = arith.constant 3 : index
    %c0_101 = arith.constant 0 : index
    %c0_102 = arith.constant 0 : index
    %1157 = vector.load %arg4[%c0_99, %c3_100, %c0_101, %c0_102] : memref<3x12x12x128xf32, #tpu.memory_space<vmem>>, vector<1x1x12x128xf32>
    %1158 = vector.shape_cast %1157 : vector<1x1x12x128xf32> to vector<12x128xf32>
    %1159 = vector.shape_cast %1150 : vector<12x128xf32> to vector<1x1x12x128xf32>
    tpu.vector_store %arg4[%c0_99, %c3_100, %c0_101, %c0_102], %1159 {strides = array<i32>} : memref<3x12x12x128xf32, #tpu.memory_space<vmem>>, vector<1x1x12x128xf32>,
    %c1_103 = arith.constant 1 : index
    %c3_104 = arith.constant 3 : index
    %c0_105 = arith.constant 0 : index
    %c0_106 = arith.constant 0 : index
    %1160 = vector.load %arg4[%c1_103, %c3_104, %c0_105, %c0_106] : memref<3x12x12x128xf32, #tpu.memory_space<vmem>>, vector<1x1x12x128xf32>
    %1161 = vector.shape_cast %1160 : vector<1x1x12x128xf32> to vector<12x128xf32>
    %1162 = vector.shape_cast %1153 : vector<12x128xf32> to vector<1x1x12x128xf32>
    tpu.vector_store %arg4[%c1_103, %c3_104, %c0_105, %c0_106], %1162 {strides = array<i32>} : memref<3x12x12x128xf32, #tpu.memory_space<vmem>>, vector<1x1x12x128xf32>,
    %c2_107 = arith.constant 2 : index
    %c3_108 = arith.constant 3 : index
    %c0_109 = arith.constant 0 : index
    %c0_110 = arith.constant 0 : index
    %1163 = vector.load %arg4[%c2_107, %c3_108, %c0_109, %c0_110] : memref<3x12x12x128xf32, #tpu.memory_space<vmem>>, vector<1x1x12x128xf32>
    %1164 = vector.shape_cast %1163 : vector<1x1x12x128xf32> to vector<12x128xf32>
    %1165 = vector.shape_cast %1156 : vector<12x128xf32> to vector<1x1x12x128xf32>
    tpu.vector_store %arg4[%c2_107, %c3_108, %c0_109, %c0_110], %1165 {strides = array<i32>} : memref<3x12x12x128xf32, #tpu.memory_space<vmem>>, vector<1x1x12x128xf32>,
    %c4_111 = arith.constant 4 : index
    %c0_112 = arith.constant 0 : index
    %c0_113 = arith.constant 0 : index
    %1166 = vector.load %arg1[%c4_111, %c0_112, %c0_113] : memref<16x16x128xf32, #tpu.memory_space<vmem>>, vector<1x16x128xf32>
    %1167 = vector.shape_cast %1166 : vector<1x16x128xf32> to vector<16x128xf32>
    %c5_114 = arith.constant 5 : index
    %c0_115 = arith.constant 0 : index
    %c0_116 = arith.constant 0 : index
    %1168 = vector.load %arg1[%c5_114, %c0_115, %c0_116] : memref<16x16x128xf32, #tpu.memory_space<vmem>>, vector<1x16x128xf32>
    %1169 = vector.shape_cast %1168 : vector<1x16x128xf32> to vector<16x128xf32>
    %c6_117 = arith.constant 6 : index
    %c0_118 = arith.constant 0 : index
    %c0_119 = arith.constant 0 : index
    %1170 = vector.load %arg1[%c6_117, %c0_118, %c0_119] : memref<16x16x128xf32, #tpu.memory_space<vmem>>, vector<1x16x128xf32>
    %1171 = vector.shape_cast %1170 : vector<1x16x128xf32> to vector<16x128xf32>
    %c7_120 = arith.constant 7 : index
    %c0_121 = arith.constant 0 : index
    %c0_122 = arith.constant 0 : index
    %1172 = vector.load %arg1[%c7_120, %c0_121, %c0_122] : memref<16x16x128xf32, #tpu.memory_space<vmem>>, vector<1x16x128xf32>
    %1173 = vector.shape_cast %1172 : vector<1x16x128xf32> to vector<16x128xf32>
    %c8_123 = arith.constant 8 : index
    %c0_124 = arith.constant 0 : index
    %c0_125 = arith.constant 0 : index
    %1174 = vector.load %arg1[%c8_123, %c0_124, %c0_125] : memref<16x16x128xf32, #tpu.memory_space<vmem>>, vector<1x16x128xf32>
    %1175 = vector.shape_cast %1174 : vector<1x16x128xf32> to vector<16x128xf32>
    %1176 = vector.broadcast %75 : f32 to vector<12x128xf32>
    %1177 = vector.broadcast %76 : f32 to vector<12x128xf32>
    %1178 = vector.broadcast %77 : f32 to vector<12x128xf32>
    %1179 = vector.extract_strided_slice %1167 {offsets = [0, 0], sizes = [12, 128], strides = [1, 1]} : vector<16x128xf32> to vector<12x128xf32>
    %1180 = vector.broadcast %0 : f32 to vector<12x128xf32>
    %1181 = arith.mulf %1180, %1179 : vector<12x128xf32>
    %1182 = arith.addf %1176, %1181 : vector<12x128xf32>
    %1183 = vector.broadcast %25 : f32 to vector<12x128xf32>
    %1184 = arith.mulf %1183, %1179 : vector<12x128xf32>
    %1185 = arith.addf %1177, %1184 : vector<12x128xf32>
    %1186 = vector.broadcast %50 : f32 to vector<12x128xf32>
    %1187 = arith.mulf %1186, %1179 : vector<12x128xf32>
    %1188 = arith.addf %1178, %1187 : vector<12x128xf32>
    %1189 = vector.extract_strided_slice %1167 {offsets = [1, 0], sizes = [12, 128], strides = [1, 1]} : vector<16x128xf32> to vector<12x128xf32>
    %1190 = vector.broadcast %1 : f32 to vector<12x128xf32>
    %1191 = arith.mulf %1190, %1189 : vector<12x128xf32>
    %1192 = arith.addf %1182, %1191 : vector<12x128xf32>
    %1193 = vector.broadcast %26 : f32 to vector<12x128xf32>
    %1194 = arith.mulf %1193, %1189 : vector<12x128xf32>
    %1195 = arith.addf %1185, %1194 : vector<12x128xf32>
    %1196 = vector.broadcast %51 : f32 to vector<12x128xf32>
    %1197 = arith.mulf %1196, %1189 : vector<12x128xf32>
    %1198 = arith.addf %1188, %1197 : vector<12x128xf32>
    %1199 = vector.extract_strided_slice %1167 {offsets = [2, 0], sizes = [12, 128], strides = [1, 1]} : vector<16x128xf32> to vector<12x128xf32>
    %1200 = vector.broadcast %2 : f32 to vector<12x128xf32>
    %1201 = arith.mulf %1200, %1199 : vector<12x128xf32>
    %1202 = arith.addf %1192, %1201 : vector<12x128xf32>
    %1203 = vector.broadcast %27 : f32 to vector<12x128xf32>
    %1204 = arith.mulf %1203, %1199 : vector<12x128xf32>
    %1205 = arith.addf %1195, %1204 : vector<12x128xf32>
    %1206 = vector.broadcast %52 : f32 to vector<12x128xf32>
    %1207 = arith.mulf %1206, %1199 : vector<12x128xf32>
    %1208 = arith.addf %1198, %1207 : vector<12x128xf32>
    %1209 = vector.extract_strided_slice %1167 {offsets = [3, 0], sizes = [12, 128], strides = [1, 1]} : vector<16x128xf32> to vector<12x128xf32>
    %1210 = vector.broadcast %3 : f32 to vector<12x128xf32>
    %1211 = arith.mulf %1210, %1209 : vector<12x128xf32>
    %1212 = arith.addf %1202, %1211 : vector<12x128xf32>
    %1213 = vector.broadcast %28 : f32 to vector<12x128xf32>
    %1214 = arith.mulf %1213, %1209 : vector<12x128xf32>
    %1215 = arith.addf %1205, %1214 : vector<12x128xf32>
    %1216 = vector.broadcast %53 : f32 to vector<12x128xf32>
    %1217 = arith.mulf %1216, %1209 : vector<12x128xf32>
    %1218 = arith.addf %1208, %1217 : vector<12x128xf32>
    %1219 = vector.extract_strided_slice %1167 {offsets = [4, 0], sizes = [12, 128], strides = [1, 1]} : vector<16x128xf32> to vector<12x128xf32>
    %1220 = vector.broadcast %4 : f32 to vector<12x128xf32>
    %1221 = arith.mulf %1220, %1219 : vector<12x128xf32>
    %1222 = arith.addf %1212, %1221 : vector<12x128xf32>
    %1223 = vector.broadcast %29 : f32 to vector<12x128xf32>
    %1224 = arith.mulf %1223, %1219 : vector<12x128xf32>
    %1225 = arith.addf %1215, %1224 : vector<12x128xf32>
    %1226 = vector.broadcast %54 : f32 to vector<12x128xf32>
    %1227 = arith.mulf %1226, %1219 : vector<12x128xf32>
    %1228 = arith.addf %1218, %1227 : vector<12x128xf32>
    %1229 = vector.extract_strided_slice %1169 {offsets = [0, 0], sizes = [12, 128], strides = [1, 1]} : vector<16x128xf32> to vector<12x128xf32>
    %1230 = vector.broadcast %5 : f32 to vector<12x128xf32>
    %1231 = arith.mulf %1230, %1229 : vector<12x128xf32>
    %1232 = arith.addf %1222, %1231 : vector<12x128xf32>
    %1233 = vector.broadcast %30 : f32 to vector<12x128xf32>
    %1234 = arith.mulf %1233, %1229 : vector<12x128xf32>
    %1235 = arith.addf %1225, %1234 : vector<12x128xf32>
    %1236 = vector.broadcast %55 : f32 to vector<12x128xf32>
    %1237 = arith.mulf %1236, %1229 : vector<12x128xf32>
    %1238 = arith.addf %1228, %1237 : vector<12x128xf32>
    %1239 = vector.extract_strided_slice %1169 {offsets = [1, 0], sizes = [12, 128], strides = [1, 1]} : vector<16x128xf32> to vector<12x128xf32>
    %1240 = vector.broadcast %6 : f32 to vector<12x128xf32>
    %1241 = arith.mulf %1240, %1239 : vector<12x128xf32>
    %1242 = arith.addf %1232, %1241 : vector<12x128xf32>
    %1243 = vector.broadcast %31 : f32 to vector<12x128xf32>
    %1244 = arith.mulf %1243, %1239 : vector<12x128xf32>
    %1245 = arith.addf %1235, %1244 : vector<12x128xf32>
    %1246 = vector.broadcast %56 : f32 to vector<12x128xf32>
    %1247 = arith.mulf %1246, %1239 : vector<12x128xf32>
    %1248 = arith.addf %1238, %1247 : vector<12x128xf32>
    %1249 = vector.extract_strided_slice %1169 {offsets = [2, 0], sizes = [12, 128], strides = [1, 1]} : vector<16x128xf32> to vector<12x128xf32>
    %1250 = vector.broadcast %7 : f32 to vector<12x128xf32>
    %1251 = arith.mulf %1250, %1249 : vector<12x128xf32>
    %1252 = arith.addf %1242, %1251 : vector<12x128xf32>
    %1253 = vector.broadcast %32 : f32 to vector<12x128xf32>
    %1254 = arith.mulf %1253, %1249 : vector<12x128xf32>
    %1255 = arith.addf %1245, %1254 : vector<12x128xf32>
    %1256 = vector.broadcast %57 : f32 to vector<12x128xf32>
    %1257 = arith.mulf %1256, %1249 : vector<12x128xf32>
    %1258 = arith.addf %1248, %1257 : vector<12x128xf32>
    %1259 = vector.extract_strided_slice %1169 {offsets = [3, 0], sizes = [12, 128], strides = [1, 1]} : vector<16x128xf32> to vector<12x128xf32>
    %1260 = vector.broadcast %8 : f32 to vector<12x128xf32>
    %1261 = arith.mulf %1260, %1259 : vector<12x128xf32>
    %1262 = arith.addf %1252, %1261 : vector<12x128xf32>
    %1263 = vector.broadcast %33 : f32 to vector<12x128xf32>
    %1264 = arith.mulf %1263, %1259 : vector<12x128xf32>
    %1265 = arith.addf %1255, %1264 : vector<12x128xf32>
    %1266 = vector.broadcast %58 : f32 to vector<12x128xf32>
    %1267 = arith.mulf %1266, %1259 : vector<12x128xf32>
    %1268 = arith.addf %1258, %1267 : vector<12x128xf32>
    %1269 = vector.extract_strided_slice %1169 {offsets = [4, 0], sizes = [12, 128], strides = [1, 1]} : vector<16x128xf32> to vector<12x128xf32>
    %1270 = vector.broadcast %9 : f32 to vector<12x128xf32>
    %1271 = arith.mulf %1270, %1269 : vector<12x128xf32>
    %1272 = arith.addf %1262, %1271 : vector<12x128xf32>
    %1273 = vector.broadcast %34 : f32 to vector<12x128xf32>
    %1274 = arith.mulf %1273, %1269 : vector<12x128xf32>
    %1275 = arith.addf %1265, %1274 : vector<12x128xf32>
    %1276 = vector.broadcast %59 : f32 to vector<12x128xf32>
    %1277 = arith.mulf %1276, %1269 : vector<12x128xf32>
    %1278 = arith.addf %1268, %1277 : vector<12x128xf32>
    %1279 = vector.extract_strided_slice %1171 {offsets = [0, 0], sizes = [12, 128], strides = [1, 1]} : vector<16x128xf32> to vector<12x128xf32>
    %1280 = vector.broadcast %10 : f32 to vector<12x128xf32>
    %1281 = arith.mulf %1280, %1279 : vector<12x128xf32>
    %1282 = arith.addf %1272, %1281 : vector<12x128xf32>
    %1283 = vector.broadcast %35 : f32 to vector<12x128xf32>
    %1284 = arith.mulf %1283, %1279 : vector<12x128xf32>
    %1285 = arith.addf %1275, %1284 : vector<12x128xf32>
    %1286 = vector.broadcast %60 : f32 to vector<12x128xf32>
    %1287 = arith.mulf %1286, %1279 : vector<12x128xf32>
    %1288 = arith.addf %1278, %1287 : vector<12x128xf32>
    %1289 = vector.extract_strided_slice %1171 {offsets = [1, 0], sizes = [12, 128], strides = [1, 1]} : vector<16x128xf32> to vector<12x128xf32>
    %1290 = vector.broadcast %11 : f32 to vector<12x128xf32>
    %1291 = arith.mulf %1290, %1289 : vector<12x128xf32>
    %1292 = arith.addf %1282, %1291 : vector<12x128xf32>
    %1293 = vector.broadcast %36 : f32 to vector<12x128xf32>
    %1294 = arith.mulf %1293, %1289 : vector<12x128xf32>
    %1295 = arith.addf %1285, %1294 : vector<12x128xf32>
    %1296 = vector.broadcast %61 : f32 to vector<12x128xf32>
    %1297 = arith.mulf %1296, %1289 : vector<12x128xf32>
    %1298 = arith.addf %1288, %1297 : vector<12x128xf32>
    %1299 = vector.extract_strided_slice %1171 {offsets = [2, 0], sizes = [12, 128], strides = [1, 1]} : vector<16x128xf32> to vector<12x128xf32>
    %1300 = vector.broadcast %12 : f32 to vector<12x128xf32>
    %1301 = arith.mulf %1300, %1299 : vector<12x128xf32>
    %1302 = arith.addf %1292, %1301 : vector<12x128xf32>
    %1303 = vector.broadcast %37 : f32 to vector<12x128xf32>
    %1304 = arith.mulf %1303, %1299 : vector<12x128xf32>
    %1305 = arith.addf %1295, %1304 : vector<12x128xf32>
    %1306 = vector.broadcast %62 : f32 to vector<12x128xf32>
    %1307 = arith.mulf %1306, %1299 : vector<12x128xf32>
    %1308 = arith.addf %1298, %1307 : vector<12x128xf32>
    %1309 = vector.extract_strided_slice %1171 {offsets = [3, 0], sizes = [12, 128], strides = [1, 1]} : vector<16x128xf32> to vector<12x128xf32>
    %1310 = vector.broadcast %13 : f32 to vector<12x128xf32>
    %1311 = arith.mulf %1310, %1309 : vector<12x128xf32>
    %1312 = arith.addf %1302, %1311 : vector<12x128xf32>
    %1313 = vector.broadcast %38 : f32 to vector<12x128xf32>
    %1314 = arith.mulf %1313, %1309 : vector<12x128xf32>
    %1315 = arith.addf %1305, %1314 : vector<12x128xf32>
    %1316 = vector.broadcast %63 : f32 to vector<12x128xf32>
    %1317 = arith.mulf %1316, %1309 : vector<12x128xf32>
    %1318 = arith.addf %1308, %1317 : vector<12x128xf32>
    %1319 = vector.extract_strided_slice %1171 {offsets = [4, 0], sizes = [12, 128], strides = [1, 1]} : vector<16x128xf32> to vector<12x128xf32>
    %1320 = vector.broadcast %14 : f32 to vector<12x128xf32>
    %1321 = arith.mulf %1320, %1319 : vector<12x128xf32>
    %1322 = arith.addf %1312, %1321 : vector<12x128xf32>
    %1323 = vector.broadcast %39 : f32 to vector<12x128xf32>
    %1324 = arith.mulf %1323, %1319 : vector<12x128xf32>
    %1325 = arith.addf %1315, %1324 : vector<12x128xf32>
    %1326 = vector.broadcast %64 : f32 to vector<12x128xf32>
    %1327 = arith.mulf %1326, %1319 : vector<12x128xf32>
    %1328 = arith.addf %1318, %1327 : vector<12x128xf32>
    %1329 = vector.extract_strided_slice %1173 {offsets = [0, 0], sizes = [12, 128], strides = [1, 1]} : vector<16x128xf32> to vector<12x128xf32>
    %1330 = vector.broadcast %15 : f32 to vector<12x128xf32>
    %1331 = arith.mulf %1330, %1329 : vector<12x128xf32>
    %1332 = arith.addf %1322, %1331 : vector<12x128xf32>
    %1333 = vector.broadcast %40 : f32 to vector<12x128xf32>
    %1334 = arith.mulf %1333, %1329 : vector<12x128xf32>
    %1335 = arith.addf %1325, %1334 : vector<12x128xf32>
    %1336 = vector.broadcast %65 : f32 to vector<12x128xf32>
    %1337 = arith.mulf %1336, %1329 : vector<12x128xf32>
    %1338 = arith.addf %1328, %1337 : vector<12x128xf32>
    %1339 = vector.extract_strided_slice %1173 {offsets = [1, 0], sizes = [12, 128], strides = [1, 1]} : vector<16x128xf32> to vector<12x128xf32>
    %1340 = vector.broadcast %16 : f32 to vector<12x128xf32>
    %1341 = arith.mulf %1340, %1339 : vector<12x128xf32>
    %1342 = arith.addf %1332, %1341 : vector<12x128xf32>
    %1343 = vector.broadcast %41 : f32 to vector<12x128xf32>
    %1344 = arith.mulf %1343, %1339 : vector<12x128xf32>
    %1345 = arith.addf %1335, %1344 : vector<12x128xf32>
    %1346 = vector.broadcast %66 : f32 to vector<12x128xf32>
    %1347 = arith.mulf %1346, %1339 : vector<12x128xf32>
    %1348 = arith.addf %1338, %1347 : vector<12x128xf32>
    %1349 = vector.extract_strided_slice %1173 {offsets = [2, 0], sizes = [12, 128], strides = [1, 1]} : vector<16x128xf32> to vector<12x128xf32>
    %1350 = vector.broadcast %17 : f32 to vector<12x128xf32>
    %1351 = arith.mulf %1350, %1349 : vector<12x128xf32>
    %1352 = arith.addf %1342, %1351 : vector<12x128xf32>
    %1353 = vector.broadcast %42 : f32 to vector<12x128xf32>
    %1354 = arith.mulf %1353, %1349 : vector<12x128xf32>
    %1355 = arith.addf %1345, %1354 : vector<12x128xf32>
    %1356 = vector.broadcast %67 : f32 to vector<12x128xf32>
    %1357 = arith.mulf %1356, %1349 : vector<12x128xf32>
    %1358 = arith.addf %1348, %1357 : vector<12x128xf32>
    %1359 = vector.extract_strided_slice %1173 {offsets = [3, 0], sizes = [12, 128], strides = [1, 1]} : vector<16x128xf32> to vector<12x128xf32>
    %1360 = vector.broadcast %18 : f32 to vector<12x128xf32>
    %1361 = arith.mulf %1360, %1359 : vector<12x128xf32>
    %1362 = arith.addf %1352, %1361 : vector<12x128xf32>
    %1363 = vector.broadcast %43 : f32 to vector<12x128xf32>
    %1364 = arith.mulf %1363, %1359 : vector<12x128xf32>
    %1365 = arith.addf %1355, %1364 : vector<12x128xf32>
    %1366 = vector.broadcast %68 : f32 to vector<12x128xf32>
    %1367 = arith.mulf %1366, %1359 : vector<12x128xf32>
    %1368 = arith.addf %1358, %1367 : vector<12x128xf32>
    %1369 = vector.extract_strided_slice %1173 {offsets = [4, 0], sizes = [12, 128], strides = [1, 1]} : vector<16x128xf32> to vector<12x128xf32>
    %1370 = vector.broadcast %19 : f32 to vector<12x128xf32>
    %1371 = arith.mulf %1370, %1369 : vector<12x128xf32>
    %1372 = arith.addf %1362, %1371 : vector<12x128xf32>
    %1373 = vector.broadcast %44 : f32 to vector<12x128xf32>
    %1374 = arith.mulf %1373, %1369 : vector<12x128xf32>
    %1375 = arith.addf %1365, %1374 : vector<12x128xf32>
    %1376 = vector.broadcast %69 : f32 to vector<12x128xf32>
    %1377 = arith.mulf %1376, %1369 : vector<12x128xf32>
    %1378 = arith.addf %1368, %1377 : vector<12x128xf32>
    %1379 = vector.extract_strided_slice %1175 {offsets = [0, 0], sizes = [12, 128], strides = [1, 1]} : vector<16x128xf32> to vector<12x128xf32>
    %1380 = vector.broadcast %20 : f32 to vector<12x128xf32>
    %1381 = arith.mulf %1380, %1379 : vector<12x128xf32>
    %1382 = arith.addf %1372, %1381 : vector<12x128xf32>
    %1383 = vector.broadcast %45 : f32 to vector<12x128xf32>
    %1384 = arith.mulf %1383, %1379 : vector<12x128xf32>
    %1385 = arith.addf %1375, %1384 : vector<12x128xf32>
    %1386 = vector.broadcast %70 : f32 to vector<12x128xf32>
    %1387 = arith.mulf %1386, %1379 : vector<12x128xf32>
    %1388 = arith.addf %1378, %1387 : vector<12x128xf32>
    %1389 = vector.extract_strided_slice %1175 {offsets = [1, 0], sizes = [12, 128], strides = [1, 1]} : vector<16x128xf32> to vector<12x128xf32>
    %1390 = vector.broadcast %21 : f32 to vector<12x128xf32>
    %1391 = arith.mulf %1390, %1389 : vector<12x128xf32>
    %1392 = arith.addf %1382, %1391 : vector<12x128xf32>
    %1393 = vector.broadcast %46 : f32 to vector<12x128xf32>
    %1394 = arith.mulf %1393, %1389 : vector<12x128xf32>
    %1395 = arith.addf %1385, %1394 : vector<12x128xf32>
    %1396 = vector.broadcast %71 : f32 to vector<12x128xf32>
    %1397 = arith.mulf %1396, %1389 : vector<12x128xf32>
    %1398 = arith.addf %1388, %1397 : vector<12x128xf32>
    %1399 = vector.extract_strided_slice %1175 {offsets = [2, 0], sizes = [12, 128], strides = [1, 1]} : vector<16x128xf32> to vector<12x128xf32>
    %1400 = vector.broadcast %22 : f32 to vector<12x128xf32>
    %1401 = arith.mulf %1400, %1399 : vector<12x128xf32>
    %1402 = arith.addf %1392, %1401 : vector<12x128xf32>
    %1403 = vector.broadcast %47 : f32 to vector<12x128xf32>
    %1404 = arith.mulf %1403, %1399 : vector<12x128xf32>
    %1405 = arith.addf %1395, %1404 : vector<12x128xf32>
    %1406 = vector.broadcast %72 : f32 to vector<12x128xf32>
    %1407 = arith.mulf %1406, %1399 : vector<12x128xf32>
    %1408 = arith.addf %1398, %1407 : vector<12x128xf32>
    %1409 = vector.extract_strided_slice %1175 {offsets = [3, 0], sizes = [12, 128], strides = [1, 1]} : vector<16x128xf32> to vector<12x128xf32>
    %1410 = vector.broadcast %23 : f32 to vector<12x128xf32>
    %1411 = arith.mulf %1410, %1409 : vector<12x128xf32>
    %1412 = arith.addf %1402, %1411 : vector<12x128xf32>
    %1413 = vector.broadcast %48 : f32 to vector<12x128xf32>
    %1414 = arith.mulf %1413, %1409 : vector<12x128xf32>
    %1415 = arith.addf %1405, %1414 : vector<12x128xf32>
    %1416 = vector.broadcast %73 : f32 to vector<12x128xf32>
    %1417 = arith.mulf %1416, %1409 : vector<12x128xf32>
    %1418 = arith.addf %1408, %1417 : vector<12x128xf32>
    %1419 = vector.extract_strided_slice %1175 {offsets = [4, 0], sizes = [12, 128], strides = [1, 1]} : vector<16x128xf32> to vector<12x128xf32>
    %1420 = vector.broadcast %24 : f32 to vector<12x128xf32>
    %1421 = arith.mulf %1420, %1419 : vector<12x128xf32>
    %1422 = arith.addf %1412, %1421 : vector<12x128xf32>
    %1423 = vector.broadcast %49 : f32 to vector<12x128xf32>
    %1424 = arith.mulf %1423, %1419 : vector<12x128xf32>
    %1425 = arith.addf %1415, %1424 : vector<12x128xf32>
    %1426 = vector.broadcast %74 : f32 to vector<12x128xf32>
    %1427 = arith.mulf %1426, %1419 : vector<12x128xf32>
    %1428 = arith.addf %1418, %1427 : vector<12x128xf32>
    %c0_126 = arith.constant 0 : index
    %c4_127 = arith.constant 4 : index
    %c0_128 = arith.constant 0 : index
    %c0_129 = arith.constant 0 : index
    %1429 = vector.load %arg4[%c0_126, %c4_127, %c0_128, %c0_129] : memref<3x12x12x128xf32, #tpu.memory_space<vmem>>, vector<1x1x12x128xf32>
    %1430 = vector.shape_cast %1429 : vector<1x1x12x128xf32> to vector<12x128xf32>
    %1431 = vector.shape_cast %1422 : vector<12x128xf32> to vector<1x1x12x128xf32>
    tpu.vector_store %arg4[%c0_126, %c4_127, %c0_128, %c0_129], %1431 {strides = array<i32>} : memref<3x12x12x128xf32, #tpu.memory_space<vmem>>, vector<1x1x12x128xf32>,
    %c1_130 = arith.constant 1 : index
    %c4_131 = arith.constant 4 : index
    %c0_132 = arith.constant 0 : index
    %c0_133 = arith.constant 0 : index
    %1432 = vector.load %arg4[%c1_130, %c4_131, %c0_132, %c0_133] : memref<3x12x12x128xf32, #tpu.memory_space<vmem>>, vector<1x1x12x128xf32>
    %1433 = vector.shape_cast %1432 : vector<1x1x12x128xf32> to vector<12x128xf32>
    %1434 = vector.shape_cast %1425 : vector<12x128xf32> to vector<1x1x12x128xf32>
    tpu.vector_store %arg4[%c1_130, %c4_131, %c0_132, %c0_133], %1434 {strides = array<i32>} : memref<3x12x12x128xf32, #tpu.memory_space<vmem>>, vector<1x1x12x128xf32>,
    %c2_134 = arith.constant 2 : index
    %c4_135 = arith.constant 4 : index
    %c0_136 = arith.constant 0 : index
    %c0_137 = arith.constant 0 : index
    %1435 = vector.load %arg4[%c2_134, %c4_135, %c0_136, %c0_137] : memref<3x12x12x128xf32, #tpu.memory_space<vmem>>, vector<1x1x12x128xf32>
    %1436 = vector.shape_cast %1435 : vector<1x1x12x128xf32> to vector<12x128xf32>
    %1437 = vector.shape_cast %1428 : vector<12x128xf32> to vector<1x1x12x128xf32>
    tpu.vector_store %arg4[%c2_134, %c4_135, %c0_136, %c0_137], %1437 {strides = array<i32>} : memref<3x12x12x128xf32, #tpu.memory_space<vmem>>, vector<1x1x12x128xf32>,
    %c5_138 = arith.constant 5 : index
    %c0_139 = arith.constant 0 : index
    %c0_140 = arith.constant 0 : index
    %1438 = vector.load %arg1[%c5_138, %c0_139, %c0_140] : memref<16x16x128xf32, #tpu.memory_space<vmem>>, vector<1x16x128xf32>
    %1439 = vector.shape_cast %1438 : vector<1x16x128xf32> to vector<16x128xf32>
    %c6_141 = arith.constant 6 : index
    %c0_142 = arith.constant 0 : index
    %c0_143 = arith.constant 0 : index
    %1440 = vector.load %arg1[%c6_141, %c0_142, %c0_143] : memref<16x16x128xf32, #tpu.memory_space<vmem>>, vector<1x16x128xf32>
    %1441 = vector.shape_cast %1440 : vector<1x16x128xf32> to vector<16x128xf32>
    %c7_144 = arith.constant 7 : index
    %c0_145 = arith.constant 0 : index
    %c0_146 = arith.constant 0 : index
    %1442 = vector.load %arg1[%c7_144, %c0_145, %c0_146] : memref<16x16x128xf32, #tpu.memory_space<vmem>>, vector<1x16x128xf32>
    %1443 = vector.shape_cast %1442 : vector<1x16x128xf32> to vector<16x128xf32>
    %c8_147 = arith.constant 8 : index
    %c0_148 = arith.constant 0 : index
    %c0_149 = arith.constant 0 : index
    %1444 = vector.load %arg1[%c8_147, %c0_148, %c0_149] : memref<16x16x128xf32, #tpu.memory_space<vmem>>, vector<1x16x128xf32>
    %1445 = vector.shape_cast %1444 : vector<1x16x128xf32> to vector<16x128xf32>
    %c9_150 = arith.constant 9 : index
    %c0_151 = arith.constant 0 : index
    %c0_152 = arith.constant 0 : index
    %1446 = vector.load %arg1[%c9_150, %c0_151, %c0_152] : memref<16x16x128xf32, #tpu.memory_space<vmem>>, vector<1x16x128xf32>
    %1447 = vector.shape_cast %1446 : vector<1x16x128xf32> to vector<16x128xf32>
    %1448 = vector.broadcast %75 : f32 to vector<12x128xf32>
    %1449 = vector.broadcast %76 : f32 to vector<12x128xf32>
    %1450 = vector.broadcast %77 : f32 to vector<12x128xf32>
    %1451 = vector.extract_strided_slice %1439 {offsets = [0, 0], sizes = [12, 128], strides = [1, 1]} : vector<16x128xf32> to vector<12x128xf32>
    %1452 = vector.broadcast %0 : f32 to vector<12x128xf32>
    %1453 = arith.mulf %1452, %1451 : vector<12x128xf32>
    %1454 = arith.addf %1448, %1453 : vector<12x128xf32>
    %1455 = vector.broadcast %25 : f32 to vector<12x128xf32>
    %1456 = arith.mulf %1455, %1451 : vector<12x128xf32>
    %1457 = arith.addf %1449, %1456 : vector<12x128xf32>
    %1458 = vector.broadcast %50 : f32 to vector<12x128xf32>
    %1459 = arith.mulf %1458, %1451 : vector<12x128xf32>
    %1460 = arith.addf %1450, %1459 : vector<12x128xf32>
    %1461 = vector.extract_strided_slice %1439 {offsets = [1, 0], sizes = [12, 128], strides = [1, 1]} : vector<16x128xf32> to vector<12x128xf32>
    %1462 = vector.broadcast %1 : f32 to vector<12x128xf32>
    %1463 = arith.mulf %1462, %1461 : vector<12x128xf32>
    %1464 = arith.addf %1454, %1463 : vector<12x128xf32>
    %1465 = vector.broadcast %26 : f32 to vector<12x128xf32>
    %1466 = arith.mulf %1465, %1461 : vector<12x128xf32>
    %1467 = arith.addf %1457, %1466 : vector<12x128xf32>
    %1468 = vector.broadcast %51 : f32 to vector<12x128xf32>
    %1469 = arith.mulf %1468, %1461 : vector<12x128xf32>
    %1470 = arith.addf %1460, %1469 : vector<12x128xf32>
    %1471 = vector.extract_strided_slice %1439 {offsets = [2, 0], sizes = [12, 128], strides = [1, 1]} : vector<16x128xf32> to vector<12x128xf32>
    %1472 = vector.broadcast %2 : f32 to vector<12x128xf32>
    %1473 = arith.mulf %1472, %1471 : vector<12x128xf32>
    %1474 = arith.addf %1464, %1473 : vector<12x128xf32>
    %1475 = vector.broadcast %27 : f32 to vector<12x128xf32>
    %1476 = arith.mulf %1475, %1471 : vector<12x128xf32>
    %1477 = arith.addf %1467, %1476 : vector<12x128xf32>
    %1478 = vector.broadcast %52 : f32 to vector<12x128xf32>
    %1479 = arith.mulf %1478, %1471 : vector<12x128xf32>
    %1480 = arith.addf %1470, %1479 : vector<12x128xf32>
    %1481 = vector.extract_strided_slice %1439 {offsets = [3, 0], sizes = [12, 128], strides = [1, 1]} : vector<16x128xf32> to vector<12x128xf32>
    %1482 = vector.broadcast %3 : f32 to vector<12x128xf32>
    %1483 = arith.mulf %1482, %1481 : vector<12x128xf32>
    %1484 = arith.addf %1474, %1483 : vector<12x128xf32>
    %1485 = vector.broadcast %28 : f32 to vector<12x128xf32>
    %1486 = arith.mulf %1485, %1481 : vector<12x128xf32>
    %1487 = arith.addf %1477, %1486 : vector<12x128xf32>
    %1488 = vector.broadcast %53 : f32 to vector<12x128xf32>
    %1489 = arith.mulf %1488, %1481 : vector<12x128xf32>
    %1490 = arith.addf %1480, %1489 : vector<12x128xf32>
    %1491 = vector.extract_strided_slice %1439 {offsets = [4, 0], sizes = [12, 128], strides = [1, 1]} : vector<16x128xf32> to vector<12x128xf32>
    %1492 = vector.broadcast %4 : f32 to vector<12x128xf32>
    %1493 = arith.mulf %1492, %1491 : vector<12x128xf32>
    %1494 = arith.addf %1484, %1493 : vector<12x128xf32>
    %1495 = vector.broadcast %29 : f32 to vector<12x128xf32>
    %1496 = arith.mulf %1495, %1491 : vector<12x128xf32>
    %1497 = arith.addf %1487, %1496 : vector<12x128xf32>
    %1498 = vector.broadcast %54 : f32 to vector<12x128xf32>
    %1499 = arith.mulf %1498, %1491 : vector<12x128xf32>
    %1500 = arith.addf %1490, %1499 : vector<12x128xf32>
    %1501 = vector.extract_strided_slice %1441 {offsets = [0, 0], sizes = [12, 128], strides = [1, 1]} : vector<16x128xf32> to vector<12x128xf32>
    %1502 = vector.broadcast %5 : f32 to vector<12x128xf32>
    %1503 = arith.mulf %1502, %1501 : vector<12x128xf32>
    %1504 = arith.addf %1494, %1503 : vector<12x128xf32>
    %1505 = vector.broadcast %30 : f32 to vector<12x128xf32>
    %1506 = arith.mulf %1505, %1501 : vector<12x128xf32>
    %1507 = arith.addf %1497, %1506 : vector<12x128xf32>
    %1508 = vector.broadcast %55 : f32 to vector<12x128xf32>
    %1509 = arith.mulf %1508, %1501 : vector<12x128xf32>
    %1510 = arith.addf %1500, %1509 : vector<12x128xf32>
    %1511 = vector.extract_strided_slice %1441 {offsets = [1, 0], sizes = [12, 128], strides = [1, 1]} : vector<16x128xf32> to vector<12x128xf32>
    %1512 = vector.broadcast %6 : f32 to vector<12x128xf32>
    %1513 = arith.mulf %1512, %1511 : vector<12x128xf32>
    %1514 = arith.addf %1504, %1513 : vector<12x128xf32>
    %1515 = vector.broadcast %31 : f32 to vector<12x128xf32>
    %1516 = arith.mulf %1515, %1511 : vector<12x128xf32>
    %1517 = arith.addf %1507, %1516 : vector<12x128xf32>
    %1518 = vector.broadcast %56 : f32 to vector<12x128xf32>
    %1519 = arith.mulf %1518, %1511 : vector<12x128xf32>
    %1520 = arith.addf %1510, %1519 : vector<12x128xf32>
    %1521 = vector.extract_strided_slice %1441 {offsets = [2, 0], sizes = [12, 128], strides = [1, 1]} : vector<16x128xf32> to vector<12x128xf32>
    %1522 = vector.broadcast %7 : f32 to vector<12x128xf32>
    %1523 = arith.mulf %1522, %1521 : vector<12x128xf32>
    %1524 = arith.addf %1514, %1523 : vector<12x128xf32>
    %1525 = vector.broadcast %32 : f32 to vector<12x128xf32>
    %1526 = arith.mulf %1525, %1521 : vector<12x128xf32>
    %1527 = arith.addf %1517, %1526 : vector<12x128xf32>
    %1528 = vector.broadcast %57 : f32 to vector<12x128xf32>
    %1529 = arith.mulf %1528, %1521 : vector<12x128xf32>
    %1530 = arith.addf %1520, %1529 : vector<12x128xf32>
    %1531 = vector.extract_strided_slice %1441 {offsets = [3, 0], sizes = [12, 128], strides = [1, 1]} : vector<16x128xf32> to vector<12x128xf32>
    %1532 = vector.broadcast %8 : f32 to vector<12x128xf32>
    %1533 = arith.mulf %1532, %1531 : vector<12x128xf32>
    %1534 = arith.addf %1524, %1533 : vector<12x128xf32>
    %1535 = vector.broadcast %33 : f32 to vector<12x128xf32>
    %1536 = arith.mulf %1535, %1531 : vector<12x128xf32>
    %1537 = arith.addf %1527, %1536 : vector<12x128xf32>
    %1538 = vector.broadcast %58 : f32 to vector<12x128xf32>
    %1539 = arith.mulf %1538, %1531 : vector<12x128xf32>
    %1540 = arith.addf %1530, %1539 : vector<12x128xf32>
    %1541 = vector.extract_strided_slice %1441 {offsets = [4, 0], sizes = [12, 128], strides = [1, 1]} : vector<16x128xf32> to vector<12x128xf32>
    %1542 = vector.broadcast %9 : f32 to vector<12x128xf32>
    %1543 = arith.mulf %1542, %1541 : vector<12x128xf32>
    %1544 = arith.addf %1534, %1543 : vector<12x128xf32>
    %1545 = vector.broadcast %34 : f32 to vector<12x128xf32>
    %1546 = arith.mulf %1545, %1541 : vector<12x128xf32>
    %1547 = arith.addf %1537, %1546 : vector<12x128xf32>
    %1548 = vector.broadcast %59 : f32 to vector<12x128xf32>
    %1549 = arith.mulf %1548, %1541 : vector<12x128xf32>
    %1550 = arith.addf %1540, %1549 : vector<12x128xf32>
    %1551 = vector.extract_strided_slice %1443 {offsets = [0, 0], sizes = [12, 128], strides = [1, 1]} : vector<16x128xf32> to vector<12x128xf32>
    %1552 = vector.broadcast %10 : f32 to vector<12x128xf32>
    %1553 = arith.mulf %1552, %1551 : vector<12x128xf32>
    %1554 = arith.addf %1544, %1553 : vector<12x128xf32>
    %1555 = vector.broadcast %35 : f32 to vector<12x128xf32>
    %1556 = arith.mulf %1555, %1551 : vector<12x128xf32>
    %1557 = arith.addf %1547, %1556 : vector<12x128xf32>
    %1558 = vector.broadcast %60 : f32 to vector<12x128xf32>
    %1559 = arith.mulf %1558, %1551 : vector<12x128xf32>
    %1560 = arith.addf %1550, %1559 : vector<12x128xf32>
    %1561 = vector.extract_strided_slice %1443 {offsets = [1, 0], sizes = [12, 128], strides = [1, 1]} : vector<16x128xf32> to vector<12x128xf32>
    %1562 = vector.broadcast %11 : f32 to vector<12x128xf32>
    %1563 = arith.mulf %1562, %1561 : vector<12x128xf32>
    %1564 = arith.addf %1554, %1563 : vector<12x128xf32>
    %1565 = vector.broadcast %36 : f32 to vector<12x128xf32>
    %1566 = arith.mulf %1565, %1561 : vector<12x128xf32>
    %1567 = arith.addf %1557, %1566 : vector<12x128xf32>
    %1568 = vector.broadcast %61 : f32 to vector<12x128xf32>
    %1569 = arith.mulf %1568, %1561 : vector<12x128xf32>
    %1570 = arith.addf %1560, %1569 : vector<12x128xf32>
    %1571 = vector.extract_strided_slice %1443 {offsets = [2, 0], sizes = [12, 128], strides = [1, 1]} : vector<16x128xf32> to vector<12x128xf32>
    %1572 = vector.broadcast %12 : f32 to vector<12x128xf32>
    %1573 = arith.mulf %1572, %1571 : vector<12x128xf32>
    %1574 = arith.addf %1564, %1573 : vector<12x128xf32>
    %1575 = vector.broadcast %37 : f32 to vector<12x128xf32>
    %1576 = arith.mulf %1575, %1571 : vector<12x128xf32>
    %1577 = arith.addf %1567, %1576 : vector<12x128xf32>
    %1578 = vector.broadcast %62 : f32 to vector<12x128xf32>
    %1579 = arith.mulf %1578, %1571 : vector<12x128xf32>
    %1580 = arith.addf %1570, %1579 : vector<12x128xf32>
    %1581 = vector.extract_strided_slice %1443 {offsets = [3, 0], sizes = [12, 128], strides = [1, 1]} : vector<16x128xf32> to vector<12x128xf32>
    %1582 = vector.broadcast %13 : f32 to vector<12x128xf32>
    %1583 = arith.mulf %1582, %1581 : vector<12x128xf32>
    %1584 = arith.addf %1574, %1583 : vector<12x128xf32>
    %1585 = vector.broadcast %38 : f32 to vector<12x128xf32>
    %1586 = arith.mulf %1585, %1581 : vector<12x128xf32>
    %1587 = arith.addf %1577, %1586 : vector<12x128xf32>
    %1588 = vector.broadcast %63 : f32 to vector<12x128xf32>
    %1589 = arith.mulf %1588, %1581 : vector<12x128xf32>
    %1590 = arith.addf %1580, %1589 : vector<12x128xf32>
    %1591 = vector.extract_strided_slice %1443 {offsets = [4, 0], sizes = [12, 128], strides = [1, 1]} : vector<16x128xf32> to vector<12x128xf32>
    %1592 = vector.broadcast %14 : f32 to vector<12x128xf32>
    %1593 = arith.mulf %1592, %1591 : vector<12x128xf32>
    %1594 = arith.addf %1584, %1593 : vector<12x128xf32>
    %1595 = vector.broadcast %39 : f32 to vector<12x128xf32>
    %1596 = arith.mulf %1595, %1591 : vector<12x128xf32>
    %1597 = arith.addf %1587, %1596 : vector<12x128xf32>
    %1598 = vector.broadcast %64 : f32 to vector<12x128xf32>
    %1599 = arith.mulf %1598, %1591 : vector<12x128xf32>
    %1600 = arith.addf %1590, %1599 : vector<12x128xf32>
    %1601 = vector.extract_strided_slice %1445 {offsets = [0, 0], sizes = [12, 128], strides = [1, 1]} : vector<16x128xf32> to vector<12x128xf32>
    %1602 = vector.broadcast %15 : f32 to vector<12x128xf32>
    %1603 = arith.mulf %1602, %1601 : vector<12x128xf32>
    %1604 = arith.addf %1594, %1603 : vector<12x128xf32>
    %1605 = vector.broadcast %40 : f32 to vector<12x128xf32>
    %1606 = arith.mulf %1605, %1601 : vector<12x128xf32>
    %1607 = arith.addf %1597, %1606 : vector<12x128xf32>
    %1608 = vector.broadcast %65 : f32 to vector<12x128xf32>
    %1609 = arith.mulf %1608, %1601 : vector<12x128xf32>
    %1610 = arith.addf %1600, %1609 : vector<12x128xf32>
    %1611 = vector.extract_strided_slice %1445 {offsets = [1, 0], sizes = [12, 128], strides = [1, 1]} : vector<16x128xf32> to vector<12x128xf32>
    %1612 = vector.broadcast %16 : f32 to vector<12x128xf32>
    %1613 = arith.mulf %1612, %1611 : vector<12x128xf32>
    %1614 = arith.addf %1604, %1613 : vector<12x128xf32>
    %1615 = vector.broadcast %41 : f32 to vector<12x128xf32>
    %1616 = arith.mulf %1615, %1611 : vector<12x128xf32>
    %1617 = arith.addf %1607, %1616 : vector<12x128xf32>
    %1618 = vector.broadcast %66 : f32 to vector<12x128xf32>
    %1619 = arith.mulf %1618, %1611 : vector<12x128xf32>
    %1620 = arith.addf %1610, %1619 : vector<12x128xf32>
    %1621 = vector.extract_strided_slice %1445 {offsets = [2, 0], sizes = [12, 128], strides = [1, 1]} : vector<16x128xf32> to vector<12x128xf32>
    %1622 = vector.broadcast %17 : f32 to vector<12x128xf32>
    %1623 = arith.mulf %1622, %1621 : vector<12x128xf32>
    %1624 = arith.addf %1614, %1623 : vector<12x128xf32>
    %1625 = vector.broadcast %42 : f32 to vector<12x128xf32>
    %1626 = arith.mulf %1625, %1621 : vector<12x128xf32>
    %1627 = arith.addf %1617, %1626 : vector<12x128xf32>
    %1628 = vector.broadcast %67 : f32 to vector<12x128xf32>
    %1629 = arith.mulf %1628, %1621 : vector<12x128xf32>
    %1630 = arith.addf %1620, %1629 : vector<12x128xf32>
    %1631 = vector.extract_strided_slice %1445 {offsets = [3, 0], sizes = [12, 128], strides = [1, 1]} : vector<16x128xf32> to vector<12x128xf32>
    %1632 = vector.broadcast %18 : f32 to vector<12x128xf32>
    %1633 = arith.mulf %1632, %1631 : vector<12x128xf32>
    %1634 = arith.addf %1624, %1633 : vector<12x128xf32>
    %1635 = vector.broadcast %43 : f32 to vector<12x128xf32>
    %1636 = arith.mulf %1635, %1631 : vector<12x128xf32>
    %1637 = arith.addf %1627, %1636 : vector<12x128xf32>
    %1638 = vector.broadcast %68 : f32 to vector<12x128xf32>
    %1639 = arith.mulf %1638, %1631 : vector<12x128xf32>
    %1640 = arith.addf %1630, %1639 : vector<12x128xf32>
    %1641 = vector.extract_strided_slice %1445 {offsets = [4, 0], sizes = [12, 128], strides = [1, 1]} : vector<16x128xf32> to vector<12x128xf32>
    %1642 = vector.broadcast %19 : f32 to vector<12x128xf32>
    %1643 = arith.mulf %1642, %1641 : vector<12x128xf32>
    %1644 = arith.addf %1634, %1643 : vector<12x128xf32>
    %1645 = vector.broadcast %44 : f32 to vector<12x128xf32>
    %1646 = arith.mulf %1645, %1641 : vector<12x128xf32>
    %1647 = arith.addf %1637, %1646 : vector<12x128xf32>
    %1648 = vector.broadcast %69 : f32 to vector<12x128xf32>
    %1649 = arith.mulf %1648, %1641 : vector<12x128xf32>
    %1650 = arith.addf %1640, %1649 : vector<12x128xf32>
    %1651 = vector.extract_strided_slice %1447 {offsets = [0, 0], sizes = [12, 128], strides = [1, 1]} : vector<16x128xf32> to vector<12x128xf32>
    %1652 = vector.broadcast %20 : f32 to vector<12x128xf32>
    %1653 = arith.mulf %1652, %1651 : vector<12x128xf32>
    %1654 = arith.addf %1644, %1653 : vector<12x128xf32>
    %1655 = vector.broadcast %45 : f32 to vector<12x128xf32>
    %1656 = arith.mulf %1655, %1651 : vector<12x128xf32>
    %1657 = arith.addf %1647, %1656 : vector<12x128xf32>
    %1658 = vector.broadcast %70 : f32 to vector<12x128xf32>
    %1659 = arith.mulf %1658, %1651 : vector<12x128xf32>
    %1660 = arith.addf %1650, %1659 : vector<12x128xf32>
    %1661 = vector.extract_strided_slice %1447 {offsets = [1, 0], sizes = [12, 128], strides = [1, 1]} : vector<16x128xf32> to vector<12x128xf32>
    %1662 = vector.broadcast %21 : f32 to vector<12x128xf32>
    %1663 = arith.mulf %1662, %1661 : vector<12x128xf32>
    %1664 = arith.addf %1654, %1663 : vector<12x128xf32>
    %1665 = vector.broadcast %46 : f32 to vector<12x128xf32>
    %1666 = arith.mulf %1665, %1661 : vector<12x128xf32>
    %1667 = arith.addf %1657, %1666 : vector<12x128xf32>
    %1668 = vector.broadcast %71 : f32 to vector<12x128xf32>
    %1669 = arith.mulf %1668, %1661 : vector<12x128xf32>
    %1670 = arith.addf %1660, %1669 : vector<12x128xf32>
    %1671 = vector.extract_strided_slice %1447 {offsets = [2, 0], sizes = [12, 128], strides = [1, 1]} : vector<16x128xf32> to vector<12x128xf32>
    %1672 = vector.broadcast %22 : f32 to vector<12x128xf32>
    %1673 = arith.mulf %1672, %1671 : vector<12x128xf32>
    %1674 = arith.addf %1664, %1673 : vector<12x128xf32>
    %1675 = vector.broadcast %47 : f32 to vector<12x128xf32>
    %1676 = arith.mulf %1675, %1671 : vector<12x128xf32>
    %1677 = arith.addf %1667, %1676 : vector<12x128xf32>
    %1678 = vector.broadcast %72 : f32 to vector<12x128xf32>
    %1679 = arith.mulf %1678, %1671 : vector<12x128xf32>
    %1680 = arith.addf %1670, %1679 : vector<12x128xf32>
    %1681 = vector.extract_strided_slice %1447 {offsets = [3, 0], sizes = [12, 128], strides = [1, 1]} : vector<16x128xf32> to vector<12x128xf32>
    %1682 = vector.broadcast %23 : f32 to vector<12x128xf32>
    %1683 = arith.mulf %1682, %1681 : vector<12x128xf32>
    %1684 = arith.addf %1674, %1683 : vector<12x128xf32>
    %1685 = vector.broadcast %48 : f32 to vector<12x128xf32>
    %1686 = arith.mulf %1685, %1681 : vector<12x128xf32>
    %1687 = arith.addf %1677, %1686 : vector<12x128xf32>
    %1688 = vector.broadcast %73 : f32 to vector<12x128xf32>
    %1689 = arith.mulf %1688, %1681 : vector<12x128xf32>
    %1690 = arith.addf %1680, %1689 : vector<12x128xf32>
    %1691 = vector.extract_strided_slice %1447 {offsets = [4, 0], sizes = [12, 128], strides = [1, 1]} : vector<16x128xf32> to vector<12x128xf32>
    %1692 = vector.broadcast %24 : f32 to vector<12x128xf32>
    %1693 = arith.mulf %1692, %1691 : vector<12x128xf32>
    %1694 = arith.addf %1684, %1693 : vector<12x128xf32>
    %1695 = vector.broadcast %49 : f32 to vector<12x128xf32>
    %1696 = arith.mulf %1695, %1691 : vector<12x128xf32>
    %1697 = arith.addf %1687, %1696 : vector<12x128xf32>
    %1698 = vector.broadcast %74 : f32 to vector<12x128xf32>
    %1699 = arith.mulf %1698, %1691 : vector<12x128xf32>
    %1700 = arith.addf %1690, %1699 : vector<12x128xf32>
    %c0_153 = arith.constant 0 : index
    %c5_154 = arith.constant 5 : index
    %c0_155 = arith.constant 0 : index
    %c0_156 = arith.constant 0 : index
    %1701 = vector.load %arg4[%c0_153, %c5_154, %c0_155, %c0_156] : memref<3x12x12x128xf32, #tpu.memory_space<vmem>>, vector<1x1x12x128xf32>
    %1702 = vector.shape_cast %1701 : vector<1x1x12x128xf32> to vector<12x128xf32>
    %1703 = vector.shape_cast %1694 : vector<12x128xf32> to vector<1x1x12x128xf32>
    tpu.vector_store %arg4[%c0_153, %c5_154, %c0_155, %c0_156], %1703 {strides = array<i32>} : memref<3x12x12x128xf32, #tpu.memory_space<vmem>>, vector<1x1x12x128xf32>,
    %c1_157 = arith.constant 1 : index
    %c5_158 = arith.constant 5 : index
    %c0_159 = arith.constant 0 : index
    %c0_160 = arith.constant 0 : index
    %1704 = vector.load %arg4[%c1_157, %c5_158, %c0_159, %c0_160] : memref<3x12x12x128xf32, #tpu.memory_space<vmem>>, vector<1x1x12x128xf32>
    %1705 = vector.shape_cast %1704 : vector<1x1x12x128xf32> to vector<12x128xf32>
    %1706 = vector.shape_cast %1697 : vector<12x128xf32> to vector<1x1x12x128xf32>
    tpu.vector_store %arg4[%c1_157, %c5_158, %c0_159, %c0_160], %1706 {strides = array<i32>} : memref<3x12x12x128xf32, #tpu.memory_space<vmem>>, vector<1x1x12x128xf32>,
    %c2_161 = arith.constant 2 : index
    %c5_162 = arith.constant 5 : index
    %c0_163 = arith.constant 0 : index
    %c0_164 = arith.constant 0 : index
    %1707 = vector.load %arg4[%c2_161, %c5_162, %c0_163, %c0_164] : memref<3x12x12x128xf32, #tpu.memory_space<vmem>>, vector<1x1x12x128xf32>
    %1708 = vector.shape_cast %1707 : vector<1x1x12x128xf32> to vector<12x128xf32>
    %1709 = vector.shape_cast %1700 : vector<12x128xf32> to vector<1x1x12x128xf32>
    tpu.vector_store %arg4[%c2_161, %c5_162, %c0_163, %c0_164], %1709 {strides = array<i32>} : memref<3x12x12x128xf32, #tpu.memory_space<vmem>>, vector<1x1x12x128xf32>,
    %c6_165 = arith.constant 6 : index
    %c0_166 = arith.constant 0 : index
    %c0_167 = arith.constant 0 : index
    %1710 = vector.load %arg1[%c6_165, %c0_166, %c0_167] : memref<16x16x128xf32, #tpu.memory_space<vmem>>, vector<1x16x128xf32>
    %1711 = vector.shape_cast %1710 : vector<1x16x128xf32> to vector<16x128xf32>
    %c7_168 = arith.constant 7 : index
    %c0_169 = arith.constant 0 : index
    %c0_170 = arith.constant 0 : index
    %1712 = vector.load %arg1[%c7_168, %c0_169, %c0_170] : memref<16x16x128xf32, #tpu.memory_space<vmem>>, vector<1x16x128xf32>
    %1713 = vector.shape_cast %1712 : vector<1x16x128xf32> to vector<16x128xf32>
    %c8_171 = arith.constant 8 : index
    %c0_172 = arith.constant 0 : index
    %c0_173 = arith.constant 0 : index
    %1714 = vector.load %arg1[%c8_171, %c0_172, %c0_173] : memref<16x16x128xf32, #tpu.memory_space<vmem>>, vector<1x16x128xf32>
    %1715 = vector.shape_cast %1714 : vector<1x16x128xf32> to vector<16x128xf32>
    %c9_174 = arith.constant 9 : index
    %c0_175 = arith.constant 0 : index
    %c0_176 = arith.constant 0 : index
    %1716 = vector.load %arg1[%c9_174, %c0_175, %c0_176] : memref<16x16x128xf32, #tpu.memory_space<vmem>>, vector<1x16x128xf32>
    %1717 = vector.shape_cast %1716 : vector<1x16x128xf32> to vector<16x128xf32>
    %c10_177 = arith.constant 10 : index
    %c0_178 = arith.constant 0 : index
    %c0_179 = arith.constant 0 : index
    %1718 = vector.load %arg1[%c10_177, %c0_178, %c0_179] : memref<16x16x128xf32, #tpu.memory_space<vmem>>, vector<1x16x128xf32>
    %1719 = vector.shape_cast %1718 : vector<1x16x128xf32> to vector<16x128xf32>
    %1720 = vector.broadcast %75 : f32 to vector<12x128xf32>
    %1721 = vector.broadcast %76 : f32 to vector<12x128xf32>
    %1722 = vector.broadcast %77 : f32 to vector<12x128xf32>
    %1723 = vector.extract_strided_slice %1711 {offsets = [0, 0], sizes = [12, 128], strides = [1, 1]} : vector<16x128xf32> to vector<12x128xf32>
    %1724 = vector.broadcast %0 : f32 to vector<12x128xf32>
    %1725 = arith.mulf %1724, %1723 : vector<12x128xf32>
    %1726 = arith.addf %1720, %1725 : vector<12x128xf32>
    %1727 = vector.broadcast %25 : f32 to vector<12x128xf32>
    %1728 = arith.mulf %1727, %1723 : vector<12x128xf32>
    %1729 = arith.addf %1721, %1728 : vector<12x128xf32>
    %1730 = vector.broadcast %50 : f32 to vector<12x128xf32>
    %1731 = arith.mulf %1730, %1723 : vector<12x128xf32>
    %1732 = arith.addf %1722, %1731 : vector<12x128xf32>
    %1733 = vector.extract_strided_slice %1711 {offsets = [1, 0], sizes = [12, 128], strides = [1, 1]} : vector<16x128xf32> to vector<12x128xf32>
    %1734 = vector.broadcast %1 : f32 to vector<12x128xf32>
    %1735 = arith.mulf %1734, %1733 : vector<12x128xf32>
    %1736 = arith.addf %1726, %1735 : vector<12x128xf32>
    %1737 = vector.broadcast %26 : f32 to vector<12x128xf32>
    %1738 = arith.mulf %1737, %1733 : vector<12x128xf32>
    %1739 = arith.addf %1729, %1738 : vector<12x128xf32>
    %1740 = vector.broadcast %51 : f32 to vector<12x128xf32>
    %1741 = arith.mulf %1740, %1733 : vector<12x128xf32>
    %1742 = arith.addf %1732, %1741 : vector<12x128xf32>
    %1743 = vector.extract_strided_slice %1711 {offsets = [2, 0], sizes = [12, 128], strides = [1, 1]} : vector<16x128xf32> to vector<12x128xf32>
    %1744 = vector.broadcast %2 : f32 to vector<12x128xf32>
    %1745 = arith.mulf %1744, %1743 : vector<12x128xf32>
    %1746 = arith.addf %1736, %1745 : vector<12x128xf32>
    %1747 = vector.broadcast %27 : f32 to vector<12x128xf32>
    %1748 = arith.mulf %1747, %1743 : vector<12x128xf32>
    %1749 = arith.addf %1739, %1748 : vector<12x128xf32>
    %1750 = vector.broadcast %52 : f32 to vector<12x128xf32>
    %1751 = arith.mulf %1750, %1743 : vector<12x128xf32>
    %1752 = arith.addf %1742, %1751 : vector<12x128xf32>
    %1753 = vector.extract_strided_slice %1711 {offsets = [3, 0], sizes = [12, 128], strides = [1, 1]} : vector<16x128xf32> to vector<12x128xf32>
    %1754 = vector.broadcast %3 : f32 to vector<12x128xf32>
    %1755 = arith.mulf %1754, %1753 : vector<12x128xf32>
    %1756 = arith.addf %1746, %1755 : vector<12x128xf32>
    %1757 = vector.broadcast %28 : f32 to vector<12x128xf32>
    %1758 = arith.mulf %1757, %1753 : vector<12x128xf32>
    %1759 = arith.addf %1749, %1758 : vector<12x128xf32>
    %1760 = vector.broadcast %53 : f32 to vector<12x128xf32>
    %1761 = arith.mulf %1760, %1753 : vector<12x128xf32>
    %1762 = arith.addf %1752, %1761 : vector<12x128xf32>
    %1763 = vector.extract_strided_slice %1711 {offsets = [4, 0], sizes = [12, 128], strides = [1, 1]} : vector<16x128xf32> to vector<12x128xf32>
    %1764 = vector.broadcast %4 : f32 to vector<12x128xf32>
    %1765 = arith.mulf %1764, %1763 : vector<12x128xf32>
    %1766 = arith.addf %1756, %1765 : vector<12x128xf32>
    %1767 = vector.broadcast %29 : f32 to vector<12x128xf32>
    %1768 = arith.mulf %1767, %1763 : vector<12x128xf32>
    %1769 = arith.addf %1759, %1768 : vector<12x128xf32>
    %1770 = vector.broadcast %54 : f32 to vector<12x128xf32>
    %1771 = arith.mulf %1770, %1763 : vector<12x128xf32>
    %1772 = arith.addf %1762, %1771 : vector<12x128xf32>
    %1773 = vector.extract_strided_slice %1713 {offsets = [0, 0], sizes = [12, 128], strides = [1, 1]} : vector<16x128xf32> to vector<12x128xf32>
    %1774 = vector.broadcast %5 : f32 to vector<12x128xf32>
    %1775 = arith.mulf %1774, %1773 : vector<12x128xf32>
    %1776 = arith.addf %1766, %1775 : vector<12x128xf32>
    %1777 = vector.broadcast %30 : f32 to vector<12x128xf32>
    %1778 = arith.mulf %1777, %1773 : vector<12x128xf32>
    %1779 = arith.addf %1769, %1778 : vector<12x128xf32>
    %1780 = vector.broadcast %55 : f32 to vector<12x128xf32>
    %1781 = arith.mulf %1780, %1773 : vector<12x128xf32>
    %1782 = arith.addf %1772, %1781 : vector<12x128xf32>
    %1783 = vector.extract_strided_slice %1713 {offsets = [1, 0], sizes = [12, 128], strides = [1, 1]} : vector<16x128xf32> to vector<12x128xf32>
    %1784 = vector.broadcast %6 : f32 to vector<12x128xf32>
    %1785 = arith.mulf %1784, %1783 : vector<12x128xf32>
    %1786 = arith.addf %1776, %1785 : vector<12x128xf32>
    %1787 = vector.broadcast %31 : f32 to vector<12x128xf32>
    %1788 = arith.mulf %1787, %1783 : vector<12x128xf32>
    %1789 = arith.addf %1779, %1788 : vector<12x128xf32>
    %1790 = vector.broadcast %56 : f32 to vector<12x128xf32>
    %1791 = arith.mulf %1790, %1783 : vector<12x128xf32>
    %1792 = arith.addf %1782, %1791 : vector<12x128xf32>
    %1793 = vector.extract_strided_slice %1713 {offsets = [2, 0], sizes = [12, 128], strides = [1, 1]} : vector<16x128xf32> to vector<12x128xf32>
    %1794 = vector.broadcast %7 : f32 to vector<12x128xf32>
    %1795 = arith.mulf %1794, %1793 : vector<12x128xf32>
    %1796 = arith.addf %1786, %1795 : vector<12x128xf32>
    %1797 = vector.broadcast %32 : f32 to vector<12x128xf32>
    %1798 = arith.mulf %1797, %1793 : vector<12x128xf32>
    %1799 = arith.addf %1789, %1798 : vector<12x128xf32>
    %1800 = vector.broadcast %57 : f32 to vector<12x128xf32>
    %1801 = arith.mulf %1800, %1793 : vector<12x128xf32>
    %1802 = arith.addf %1792, %1801 : vector<12x128xf32>
    %1803 = vector.extract_strided_slice %1713 {offsets = [3, 0], sizes = [12, 128], strides = [1, 1]} : vector<16x128xf32> to vector<12x128xf32>
    %1804 = vector.broadcast %8 : f32 to vector<12x128xf32>
    %1805 = arith.mulf %1804, %1803 : vector<12x128xf32>
    %1806 = arith.addf %1796, %1805 : vector<12x128xf32>
    %1807 = vector.broadcast %33 : f32 to vector<12x128xf32>
    %1808 = arith.mulf %1807, %1803 : vector<12x128xf32>
    %1809 = arith.addf %1799, %1808 : vector<12x128xf32>
    %1810 = vector.broadcast %58 : f32 to vector<12x128xf32>
    %1811 = arith.mulf %1810, %1803 : vector<12x128xf32>
    %1812 = arith.addf %1802, %1811 : vector<12x128xf32>
    %1813 = vector.extract_strided_slice %1713 {offsets = [4, 0], sizes = [12, 128], strides = [1, 1]} : vector<16x128xf32> to vector<12x128xf32>
    %1814 = vector.broadcast %9 : f32 to vector<12x128xf32>
    %1815 = arith.mulf %1814, %1813 : vector<12x128xf32>
    %1816 = arith.addf %1806, %1815 : vector<12x128xf32>
    %1817 = vector.broadcast %34 : f32 to vector<12x128xf32>
    %1818 = arith.mulf %1817, %1813 : vector<12x128xf32>
    %1819 = arith.addf %1809, %1818 : vector<12x128xf32>
    %1820 = vector.broadcast %59 : f32 to vector<12x128xf32>
    %1821 = arith.mulf %1820, %1813 : vector<12x128xf32>
    %1822 = arith.addf %1812, %1821 : vector<12x128xf32>
    %1823 = vector.extract_strided_slice %1715 {offsets = [0, 0], sizes = [12, 128], strides = [1, 1]} : vector<16x128xf32> to vector<12x128xf32>
    %1824 = vector.broadcast %10 : f32 to vector<12x128xf32>
    %1825 = arith.mulf %1824, %1823 : vector<12x128xf32>
    %1826 = arith.addf %1816, %1825 : vector<12x128xf32>
    %1827 = vector.broadcast %35 : f32 to vector<12x128xf32>
    %1828 = arith.mulf %1827, %1823 : vector<12x128xf32>
    %1829 = arith.addf %1819, %1828 : vector<12x128xf32>
    %1830 = vector.broadcast %60 : f32 to vector<12x128xf32>
    %1831 = arith.mulf %1830, %1823 : vector<12x128xf32>
    %1832 = arith.addf %1822, %1831 : vector<12x128xf32>
    %1833 = vector.extract_strided_slice %1715 {offsets = [1, 0], sizes = [12, 128], strides = [1, 1]} : vector<16x128xf32> to vector<12x128xf32>
    %1834 = vector.broadcast %11 : f32 to vector<12x128xf32>
    %1835 = arith.mulf %1834, %1833 : vector<12x128xf32>
    %1836 = arith.addf %1826, %1835 : vector<12x128xf32>
    %1837 = vector.broadcast %36 : f32 to vector<12x128xf32>
    %1838 = arith.mulf %1837, %1833 : vector<12x128xf32>
    %1839 = arith.addf %1829, %1838 : vector<12x128xf32>
    %1840 = vector.broadcast %61 : f32 to vector<12x128xf32>
    %1841 = arith.mulf %1840, %1833 : vector<12x128xf32>
    %1842 = arith.addf %1832, %1841 : vector<12x128xf32>
    %1843 = vector.extract_strided_slice %1715 {offsets = [2, 0], sizes = [12, 128], strides = [1, 1]} : vector<16x128xf32> to vector<12x128xf32>
    %1844 = vector.broadcast %12 : f32 to vector<12x128xf32>
    %1845 = arith.mulf %1844, %1843 : vector<12x128xf32>
    %1846 = arith.addf %1836, %1845 : vector<12x128xf32>
    %1847 = vector.broadcast %37 : f32 to vector<12x128xf32>
    %1848 = arith.mulf %1847, %1843 : vector<12x128xf32>
    %1849 = arith.addf %1839, %1848 : vector<12x128xf32>
    %1850 = vector.broadcast %62 : f32 to vector<12x128xf32>
    %1851 = arith.mulf %1850, %1843 : vector<12x128xf32>
    %1852 = arith.addf %1842, %1851 : vector<12x128xf32>
    %1853 = vector.extract_strided_slice %1715 {offsets = [3, 0], sizes = [12, 128], strides = [1, 1]} : vector<16x128xf32> to vector<12x128xf32>
    %1854 = vector.broadcast %13 : f32 to vector<12x128xf32>
    %1855 = arith.mulf %1854, %1853 : vector<12x128xf32>
    %1856 = arith.addf %1846, %1855 : vector<12x128xf32>
    %1857 = vector.broadcast %38 : f32 to vector<12x128xf32>
    %1858 = arith.mulf %1857, %1853 : vector<12x128xf32>
    %1859 = arith.addf %1849, %1858 : vector<12x128xf32>
    %1860 = vector.broadcast %63 : f32 to vector<12x128xf32>
    %1861 = arith.mulf %1860, %1853 : vector<12x128xf32>
    %1862 = arith.addf %1852, %1861 : vector<12x128xf32>
    %1863 = vector.extract_strided_slice %1715 {offsets = [4, 0], sizes = [12, 128], strides = [1, 1]} : vector<16x128xf32> to vector<12x128xf32>
    %1864 = vector.broadcast %14 : f32 to vector<12x128xf32>
    %1865 = arith.mulf %1864, %1863 : vector<12x128xf32>
    %1866 = arith.addf %1856, %1865 : vector<12x128xf32>
    %1867 = vector.broadcast %39 : f32 to vector<12x128xf32>
    %1868 = arith.mulf %1867, %1863 : vector<12x128xf32>
    %1869 = arith.addf %1859, %1868 : vector<12x128xf32>
    %1870 = vector.broadcast %64 : f32 to vector<12x128xf32>
    %1871 = arith.mulf %1870, %1863 : vector<12x128xf32>
    %1872 = arith.addf %1862, %1871 : vector<12x128xf32>
    %1873 = vector.extract_strided_slice %1717 {offsets = [0, 0], sizes = [12, 128], strides = [1, 1]} : vector<16x128xf32> to vector<12x128xf32>
    %1874 = vector.broadcast %15 : f32 to vector<12x128xf32>
    %1875 = arith.mulf %1874, %1873 : vector<12x128xf32>
    %1876 = arith.addf %1866, %1875 : vector<12x128xf32>
    %1877 = vector.broadcast %40 : f32 to vector<12x128xf32>
    %1878 = arith.mulf %1877, %1873 : vector<12x128xf32>
    %1879 = arith.addf %1869, %1878 : vector<12x128xf32>
    %1880 = vector.broadcast %65 : f32 to vector<12x128xf32>
    %1881 = arith.mulf %1880, %1873 : vector<12x128xf32>
    %1882 = arith.addf %1872, %1881 : vector<12x128xf32>
    %1883 = vector.extract_strided_slice %1717 {offsets = [1, 0], sizes = [12, 128], strides = [1, 1]} : vector<16x128xf32> to vector<12x128xf32>
    %1884 = vector.broadcast %16 : f32 to vector<12x128xf32>
    %1885 = arith.mulf %1884, %1883 : vector<12x128xf32>
    %1886 = arith.addf %1876, %1885 : vector<12x128xf32>
    %1887 = vector.broadcast %41 : f32 to vector<12x128xf32>
    %1888 = arith.mulf %1887, %1883 : vector<12x128xf32>
    %1889 = arith.addf %1879, %1888 : vector<12x128xf32>
    %1890 = vector.broadcast %66 : f32 to vector<12x128xf32>
    %1891 = arith.mulf %1890, %1883 : vector<12x128xf32>
    %1892 = arith.addf %1882, %1891 : vector<12x128xf32>
    %1893 = vector.extract_strided_slice %1717 {offsets = [2, 0], sizes = [12, 128], strides = [1, 1]} : vector<16x128xf32> to vector<12x128xf32>
    %1894 = vector.broadcast %17 : f32 to vector<12x128xf32>
    %1895 = arith.mulf %1894, %1893 : vector<12x128xf32>
    %1896 = arith.addf %1886, %1895 : vector<12x128xf32>
    %1897 = vector.broadcast %42 : f32 to vector<12x128xf32>
    %1898 = arith.mulf %1897, %1893 : vector<12x128xf32>
    %1899 = arith.addf %1889, %1898 : vector<12x128xf32>
    %1900 = vector.broadcast %67 : f32 to vector<12x128xf32>
    %1901 = arith.mulf %1900, %1893 : vector<12x128xf32>
    %1902 = arith.addf %1892, %1901 : vector<12x128xf32>
    %1903 = vector.extract_strided_slice %1717 {offsets = [3, 0], sizes = [12, 128], strides = [1, 1]} : vector<16x128xf32> to vector<12x128xf32>
    %1904 = vector.broadcast %18 : f32 to vector<12x128xf32>
    %1905 = arith.mulf %1904, %1903 : vector<12x128xf32>
    %1906 = arith.addf %1896, %1905 : vector<12x128xf32>
    %1907 = vector.broadcast %43 : f32 to vector<12x128xf32>
    %1908 = arith.mulf %1907, %1903 : vector<12x128xf32>
    %1909 = arith.addf %1899, %1908 : vector<12x128xf32>
    %1910 = vector.broadcast %68 : f32 to vector<12x128xf32>
    %1911 = arith.mulf %1910, %1903 : vector<12x128xf32>
    %1912 = arith.addf %1902, %1911 : vector<12x128xf32>
    %1913 = vector.extract_strided_slice %1717 {offsets = [4, 0], sizes = [12, 128], strides = [1, 1]} : vector<16x128xf32> to vector<12x128xf32>
    %1914 = vector.broadcast %19 : f32 to vector<12x128xf32>
    %1915 = arith.mulf %1914, %1913 : vector<12x128xf32>
    %1916 = arith.addf %1906, %1915 : vector<12x128xf32>
    %1917 = vector.broadcast %44 : f32 to vector<12x128xf32>
    %1918 = arith.mulf %1917, %1913 : vector<12x128xf32>
    %1919 = arith.addf %1909, %1918 : vector<12x128xf32>
    %1920 = vector.broadcast %69 : f32 to vector<12x128xf32>
    %1921 = arith.mulf %1920, %1913 : vector<12x128xf32>
    %1922 = arith.addf %1912, %1921 : vector<12x128xf32>
    %1923 = vector.extract_strided_slice %1719 {offsets = [0, 0], sizes = [12, 128], strides = [1, 1]} : vector<16x128xf32> to vector<12x128xf32>
    %1924 = vector.broadcast %20 : f32 to vector<12x128xf32>
    %1925 = arith.mulf %1924, %1923 : vector<12x128xf32>
    %1926 = arith.addf %1916, %1925 : vector<12x128xf32>
    %1927 = vector.broadcast %45 : f32 to vector<12x128xf32>
    %1928 = arith.mulf %1927, %1923 : vector<12x128xf32>
    %1929 = arith.addf %1919, %1928 : vector<12x128xf32>
    %1930 = vector.broadcast %70 : f32 to vector<12x128xf32>
    %1931 = arith.mulf %1930, %1923 : vector<12x128xf32>
    %1932 = arith.addf %1922, %1931 : vector<12x128xf32>
    %1933 = vector.extract_strided_slice %1719 {offsets = [1, 0], sizes = [12, 128], strides = [1, 1]} : vector<16x128xf32> to vector<12x128xf32>
    %1934 = vector.broadcast %21 : f32 to vector<12x128xf32>
    %1935 = arith.mulf %1934, %1933 : vector<12x128xf32>
    %1936 = arith.addf %1926, %1935 : vector<12x128xf32>
    %1937 = vector.broadcast %46 : f32 to vector<12x128xf32>
    %1938 = arith.mulf %1937, %1933 : vector<12x128xf32>
    %1939 = arith.addf %1929, %1938 : vector<12x128xf32>
    %1940 = vector.broadcast %71 : f32 to vector<12x128xf32>
    %1941 = arith.mulf %1940, %1933 : vector<12x128xf32>
    %1942 = arith.addf %1932, %1941 : vector<12x128xf32>
    %1943 = vector.extract_strided_slice %1719 {offsets = [2, 0], sizes = [12, 128], strides = [1, 1]} : vector<16x128xf32> to vector<12x128xf32>
    %1944 = vector.broadcast %22 : f32 to vector<12x128xf32>
    %1945 = arith.mulf %1944, %1943 : vector<12x128xf32>
    %1946 = arith.addf %1936, %1945 : vector<12x128xf32>
    %1947 = vector.broadcast %47 : f32 to vector<12x128xf32>
    %1948 = arith.mulf %1947, %1943 : vector<12x128xf32>
    %1949 = arith.addf %1939, %1948 : vector<12x128xf32>
    %1950 = vector.broadcast %72 : f32 to vector<12x128xf32>
    %1951 = arith.mulf %1950, %1943 : vector<12x128xf32>
    %1952 = arith.addf %1942, %1951 : vector<12x128xf32>
    %1953 = vector.extract_strided_slice %1719 {offsets = [3, 0], sizes = [12, 128], strides = [1, 1]} : vector<16x128xf32> to vector<12x128xf32>
    %1954 = vector.broadcast %23 : f32 to vector<12x128xf32>
    %1955 = arith.mulf %1954, %1953 : vector<12x128xf32>
    %1956 = arith.addf %1946, %1955 : vector<12x128xf32>
    %1957 = vector.broadcast %48 : f32 to vector<12x128xf32>
    %1958 = arith.mulf %1957, %1953 : vector<12x128xf32>
    %1959 = arith.addf %1949, %1958 : vector<12x128xf32>
    %1960 = vector.broadcast %73 : f32 to vector<12x128xf32>
    %1961 = arith.mulf %1960, %1953 : vector<12x128xf32>
    %1962 = arith.addf %1952, %1961 : vector<12x128xf32>
    %1963 = vector.extract_strided_slice %1719 {offsets = [4, 0], sizes = [12, 128], strides = [1, 1]} : vector<16x128xf32> to vector<12x128xf32>
    %1964 = vector.broadcast %24 : f32 to vector<12x128xf32>
    %1965 = arith.mulf %1964, %1963 : vector<12x128xf32>
    %1966 = arith.addf %1956, %1965 : vector<12x128xf32>
    %1967 = vector.broadcast %49 : f32 to vector<12x128xf32>
    %1968 = arith.mulf %1967, %1963 : vector<12x128xf32>
    %1969 = arith.addf %1959, %1968 : vector<12x128xf32>
    %1970 = vector.broadcast %74 : f32 to vector<12x128xf32>
    %1971 = arith.mulf %1970, %1963 : vector<12x128xf32>
    %1972 = arith.addf %1962, %1971 : vector<12x128xf32>
    %c0_180 = arith.constant 0 : index
    %c6_181 = arith.constant 6 : index
    %c0_182 = arith.constant 0 : index
    %c0_183 = arith.constant 0 : index
    %1973 = vector.load %arg4[%c0_180, %c6_181, %c0_182, %c0_183] : memref<3x12x12x128xf32, #tpu.memory_space<vmem>>, vector<1x1x12x128xf32>
    %1974 = vector.shape_cast %1973 : vector<1x1x12x128xf32> to vector<12x128xf32>
    %1975 = vector.shape_cast %1966 : vector<12x128xf32> to vector<1x1x12x128xf32>
    tpu.vector_store %arg4[%c0_180, %c6_181, %c0_182, %c0_183], %1975 {strides = array<i32>} : memref<3x12x12x128xf32, #tpu.memory_space<vmem>>, vector<1x1x12x128xf32>,
    %c1_184 = arith.constant 1 : index
    %c6_185 = arith.constant 6 : index
    %c0_186 = arith.constant 0 : index
    %c0_187 = arith.constant 0 : index
    %1976 = vector.load %arg4[%c1_184, %c6_185, %c0_186, %c0_187] : memref<3x12x12x128xf32, #tpu.memory_space<vmem>>, vector<1x1x12x128xf32>
    %1977 = vector.shape_cast %1976 : vector<1x1x12x128xf32> to vector<12x128xf32>
    %1978 = vector.shape_cast %1969 : vector<12x128xf32> to vector<1x1x12x128xf32>
    tpu.vector_store %arg4[%c1_184, %c6_185, %c0_186, %c0_187], %1978 {strides = array<i32>} : memref<3x12x12x128xf32, #tpu.memory_space<vmem>>, vector<1x1x12x128xf32>,
    %c2_188 = arith.constant 2 : index
    %c6_189 = arith.constant 6 : index
    %c0_190 = arith.constant 0 : index
    %c0_191 = arith.constant 0 : index
    %1979 = vector.load %arg4[%c2_188, %c6_189, %c0_190, %c0_191] : memref<3x12x12x128xf32, #tpu.memory_space<vmem>>, vector<1x1x12x128xf32>
    %1980 = vector.shape_cast %1979 : vector<1x1x12x128xf32> to vector<12x128xf32>
    %1981 = vector.shape_cast %1972 : vector<12x128xf32> to vector<1x1x12x128xf32>
    tpu.vector_store %arg4[%c2_188, %c6_189, %c0_190, %c0_191], %1981 {strides = array<i32>} : memref<3x12x12x128xf32, #tpu.memory_space<vmem>>, vector<1x1x12x128xf32>,
    %c7_192 = arith.constant 7 : index
    %c0_193 = arith.constant 0 : index
    %c0_194 = arith.constant 0 : index
    %1982 = vector.load %arg1[%c7_192, %c0_193, %c0_194] : memref<16x16x128xf32, #tpu.memory_space<vmem>>, vector<1x16x128xf32>
    %1983 = vector.shape_cast %1982 : vector<1x16x128xf32> to vector<16x128xf32>
    %c8_195 = arith.constant 8 : index
    %c0_196 = arith.constant 0 : index
    %c0_197 = arith.constant 0 : index
    %1984 = vector.load %arg1[%c8_195, %c0_196, %c0_197] : memref<16x16x128xf32, #tpu.memory_space<vmem>>, vector<1x16x128xf32>
    %1985 = vector.shape_cast %1984 : vector<1x16x128xf32> to vector<16x128xf32>
    %c9_198 = arith.constant 9 : index
    %c0_199 = arith.constant 0 : index
    %c0_200 = arith.constant 0 : index
    %1986 = vector.load %arg1[%c9_198, %c0_199, %c0_200] : memref<16x16x128xf32, #tpu.memory_space<vmem>>, vector<1x16x128xf32>
    %1987 = vector.shape_cast %1986 : vector<1x16x128xf32> to vector<16x128xf32>
    %c10_201 = arith.constant 10 : index
    %c0_202 = arith.constant 0 : index
    %c0_203 = arith.constant 0 : index
    %1988 = vector.load %arg1[%c10_201, %c0_202, %c0_203] : memref<16x16x128xf32, #tpu.memory_space<vmem>>, vector<1x16x128xf32>
    %1989 = vector.shape_cast %1988 : vector<1x16x128xf32> to vector<16x128xf32>
    %c11_204 = arith.constant 11 : index
    %c0_205 = arith.constant 0 : index
    %c0_206 = arith.constant 0 : index
    %1990 = vector.load %arg1[%c11_204, %c0_205, %c0_206] : memref<16x16x128xf32, #tpu.memory_space<vmem>>, vector<1x16x128xf32>
    %1991 = vector.shape_cast %1990 : vector<1x16x128xf32> to vector<16x128xf32>
    %1992 = vector.broadcast %75 : f32 to vector<12x128xf32>
    %1993 = vector.broadcast %76 : f32 to vector<12x128xf32>
    %1994 = vector.broadcast %77 : f32 to vector<12x128xf32>
    %1995 = vector.extract_strided_slice %1983 {offsets = [0, 0], sizes = [12, 128], strides = [1, 1]} : vector<16x128xf32> to vector<12x128xf32>
    %1996 = vector.broadcast %0 : f32 to vector<12x128xf32>
    %1997 = arith.mulf %1996, %1995 : vector<12x128xf32>
    %1998 = arith.addf %1992, %1997 : vector<12x128xf32>
    %1999 = vector.broadcast %25 : f32 to vector<12x128xf32>
    %2000 = arith.mulf %1999, %1995 : vector<12x128xf32>
    %2001 = arith.addf %1993, %2000 : vector<12x128xf32>
    %2002 = vector.broadcast %50 : f32 to vector<12x128xf32>
    %2003 = arith.mulf %2002, %1995 : vector<12x128xf32>
    %2004 = arith.addf %1994, %2003 : vector<12x128xf32>
    %2005 = vector.extract_strided_slice %1983 {offsets = [1, 0], sizes = [12, 128], strides = [1, 1]} : vector<16x128xf32> to vector<12x128xf32>
    %2006 = vector.broadcast %1 : f32 to vector<12x128xf32>
    %2007 = arith.mulf %2006, %2005 : vector<12x128xf32>
    %2008 = arith.addf %1998, %2007 : vector<12x128xf32>
    %2009 = vector.broadcast %26 : f32 to vector<12x128xf32>
    %2010 = arith.mulf %2009, %2005 : vector<12x128xf32>
    %2011 = arith.addf %2001, %2010 : vector<12x128xf32>
    %2012 = vector.broadcast %51 : f32 to vector<12x128xf32>
    %2013 = arith.mulf %2012, %2005 : vector<12x128xf32>
    %2014 = arith.addf %2004, %2013 : vector<12x128xf32>
    %2015 = vector.extract_strided_slice %1983 {offsets = [2, 0], sizes = [12, 128], strides = [1, 1]} : vector<16x128xf32> to vector<12x128xf32>
    %2016 = vector.broadcast %2 : f32 to vector<12x128xf32>
    %2017 = arith.mulf %2016, %2015 : vector<12x128xf32>
    %2018 = arith.addf %2008, %2017 : vector<12x128xf32>
    %2019 = vector.broadcast %27 : f32 to vector<12x128xf32>
    %2020 = arith.mulf %2019, %2015 : vector<12x128xf32>
    %2021 = arith.addf %2011, %2020 : vector<12x128xf32>
    %2022 = vector.broadcast %52 : f32 to vector<12x128xf32>
    %2023 = arith.mulf %2022, %2015 : vector<12x128xf32>
    %2024 = arith.addf %2014, %2023 : vector<12x128xf32>
    %2025 = vector.extract_strided_slice %1983 {offsets = [3, 0], sizes = [12, 128], strides = [1, 1]} : vector<16x128xf32> to vector<12x128xf32>
    %2026 = vector.broadcast %3 : f32 to vector<12x128xf32>
    %2027 = arith.mulf %2026, %2025 : vector<12x128xf32>
    %2028 = arith.addf %2018, %2027 : vector<12x128xf32>
    %2029 = vector.broadcast %28 : f32 to vector<12x128xf32>
    %2030 = arith.mulf %2029, %2025 : vector<12x128xf32>
    %2031 = arith.addf %2021, %2030 : vector<12x128xf32>
    %2032 = vector.broadcast %53 : f32 to vector<12x128xf32>
    %2033 = arith.mulf %2032, %2025 : vector<12x128xf32>
    %2034 = arith.addf %2024, %2033 : vector<12x128xf32>
    %2035 = vector.extract_strided_slice %1983 {offsets = [4, 0], sizes = [12, 128], strides = [1, 1]} : vector<16x128xf32> to vector<12x128xf32>
    %2036 = vector.broadcast %4 : f32 to vector<12x128xf32>
    %2037 = arith.mulf %2036, %2035 : vector<12x128xf32>
    %2038 = arith.addf %2028, %2037 : vector<12x128xf32>
    %2039 = vector.broadcast %29 : f32 to vector<12x128xf32>
    %2040 = arith.mulf %2039, %2035 : vector<12x128xf32>
    %2041 = arith.addf %2031, %2040 : vector<12x128xf32>
    %2042 = vector.broadcast %54 : f32 to vector<12x128xf32>
    %2043 = arith.mulf %2042, %2035 : vector<12x128xf32>
    %2044 = arith.addf %2034, %2043 : vector<12x128xf32>
    %2045 = vector.extract_strided_slice %1985 {offsets = [0, 0], sizes = [12, 128], strides = [1, 1]} : vector<16x128xf32> to vector<12x128xf32>
    %2046 = vector.broadcast %5 : f32 to vector<12x128xf32>
    %2047 = arith.mulf %2046, %2045 : vector<12x128xf32>
    %2048 = arith.addf %2038, %2047 : vector<12x128xf32>
    %2049 = vector.broadcast %30 : f32 to vector<12x128xf32>
    %2050 = arith.mulf %2049, %2045 : vector<12x128xf32>
    %2051 = arith.addf %2041, %2050 : vector<12x128xf32>
    %2052 = vector.broadcast %55 : f32 to vector<12x128xf32>
    %2053 = arith.mulf %2052, %2045 : vector<12x128xf32>
    %2054 = arith.addf %2044, %2053 : vector<12x128xf32>
    %2055 = vector.extract_strided_slice %1985 {offsets = [1, 0], sizes = [12, 128], strides = [1, 1]} : vector<16x128xf32> to vector<12x128xf32>
    %2056 = vector.broadcast %6 : f32 to vector<12x128xf32>
    %2057 = arith.mulf %2056, %2055 : vector<12x128xf32>
    %2058 = arith.addf %2048, %2057 : vector<12x128xf32>
    %2059 = vector.broadcast %31 : f32 to vector<12x128xf32>
    %2060 = arith.mulf %2059, %2055 : vector<12x128xf32>
    %2061 = arith.addf %2051, %2060 : vector<12x128xf32>
    %2062 = vector.broadcast %56 : f32 to vector<12x128xf32>
    %2063 = arith.mulf %2062, %2055 : vector<12x128xf32>
    %2064 = arith.addf %2054, %2063 : vector<12x128xf32>
    %2065 = vector.extract_strided_slice %1985 {offsets = [2, 0], sizes = [12, 128], strides = [1, 1]} : vector<16x128xf32> to vector<12x128xf32>
    %2066 = vector.broadcast %7 : f32 to vector<12x128xf32>
    %2067 = arith.mulf %2066, %2065 : vector<12x128xf32>
    %2068 = arith.addf %2058, %2067 : vector<12x128xf32>
    %2069 = vector.broadcast %32 : f32 to vector<12x128xf32>
    %2070 = arith.mulf %2069, %2065 : vector<12x128xf32>
    %2071 = arith.addf %2061, %2070 : vector<12x128xf32>
    %2072 = vector.broadcast %57 : f32 to vector<12x128xf32>
    %2073 = arith.mulf %2072, %2065 : vector<12x128xf32>
    %2074 = arith.addf %2064, %2073 : vector<12x128xf32>
    %2075 = vector.extract_strided_slice %1985 {offsets = [3, 0], sizes = [12, 128], strides = [1, 1]} : vector<16x128xf32> to vector<12x128xf32>
    %2076 = vector.broadcast %8 : f32 to vector<12x128xf32>
    %2077 = arith.mulf %2076, %2075 : vector<12x128xf32>
    %2078 = arith.addf %2068, %2077 : vector<12x128xf32>
    %2079 = vector.broadcast %33 : f32 to vector<12x128xf32>
    %2080 = arith.mulf %2079, %2075 : vector<12x128xf32>
    %2081 = arith.addf %2071, %2080 : vector<12x128xf32>
    %2082 = vector.broadcast %58 : f32 to vector<12x128xf32>
    %2083 = arith.mulf %2082, %2075 : vector<12x128xf32>
    %2084 = arith.addf %2074, %2083 : vector<12x128xf32>
    %2085 = vector.extract_strided_slice %1985 {offsets = [4, 0], sizes = [12, 128], strides = [1, 1]} : vector<16x128xf32> to vector<12x128xf32>
    %2086 = vector.broadcast %9 : f32 to vector<12x128xf32>
    %2087 = arith.mulf %2086, %2085 : vector<12x128xf32>
    %2088 = arith.addf %2078, %2087 : vector<12x128xf32>
    %2089 = vector.broadcast %34 : f32 to vector<12x128xf32>
    %2090 = arith.mulf %2089, %2085 : vector<12x128xf32>
    %2091 = arith.addf %2081, %2090 : vector<12x128xf32>
    %2092 = vector.broadcast %59 : f32 to vector<12x128xf32>
    %2093 = arith.mulf %2092, %2085 : vector<12x128xf32>
    %2094 = arith.addf %2084, %2093 : vector<12x128xf32>
    %2095 = vector.extract_strided_slice %1987 {offsets = [0, 0], sizes = [12, 128], strides = [1, 1]} : vector<16x128xf32> to vector<12x128xf32>
    %2096 = vector.broadcast %10 : f32 to vector<12x128xf32>
    %2097 = arith.mulf %2096, %2095 : vector<12x128xf32>
    %2098 = arith.addf %2088, %2097 : vector<12x128xf32>
    %2099 = vector.broadcast %35 : f32 to vector<12x128xf32>
    %2100 = arith.mulf %2099, %2095 : vector<12x128xf32>
    %2101 = arith.addf %2091, %2100 : vector<12x128xf32>
    %2102 = vector.broadcast %60 : f32 to vector<12x128xf32>
    %2103 = arith.mulf %2102, %2095 : vector<12x128xf32>
    %2104 = arith.addf %2094, %2103 : vector<12x128xf32>
    %2105 = vector.extract_strided_slice %1987 {offsets = [1, 0], sizes = [12, 128], strides = [1, 1]} : vector<16x128xf32> to vector<12x128xf32>
    %2106 = vector.broadcast %11 : f32 to vector<12x128xf32>
    %2107 = arith.mulf %2106, %2105 : vector<12x128xf32>
    %2108 = arith.addf %2098, %2107 : vector<12x128xf32>
    %2109 = vector.broadcast %36 : f32 to vector<12x128xf32>
    %2110 = arith.mulf %2109, %2105 : vector<12x128xf32>
    %2111 = arith.addf %2101, %2110 : vector<12x128xf32>
    %2112 = vector.broadcast %61 : f32 to vector<12x128xf32>
    %2113 = arith.mulf %2112, %2105 : vector<12x128xf32>
    %2114 = arith.addf %2104, %2113 : vector<12x128xf32>
    %2115 = vector.extract_strided_slice %1987 {offsets = [2, 0], sizes = [12, 128], strides = [1, 1]} : vector<16x128xf32> to vector<12x128xf32>
    %2116 = vector.broadcast %12 : f32 to vector<12x128xf32>
    %2117 = arith.mulf %2116, %2115 : vector<12x128xf32>
    %2118 = arith.addf %2108, %2117 : vector<12x128xf32>
    %2119 = vector.broadcast %37 : f32 to vector<12x128xf32>
    %2120 = arith.mulf %2119, %2115 : vector<12x128xf32>
    %2121 = arith.addf %2111, %2120 : vector<12x128xf32>
    %2122 = vector.broadcast %62 : f32 to vector<12x128xf32>
    %2123 = arith.mulf %2122, %2115 : vector<12x128xf32>
    %2124 = arith.addf %2114, %2123 : vector<12x128xf32>
    %2125 = vector.extract_strided_slice %1987 {offsets = [3, 0], sizes = [12, 128], strides = [1, 1]} : vector<16x128xf32> to vector<12x128xf32>
    %2126 = vector.broadcast %13 : f32 to vector<12x128xf32>
    %2127 = arith.mulf %2126, %2125 : vector<12x128xf32>
    %2128 = arith.addf %2118, %2127 : vector<12x128xf32>
    %2129 = vector.broadcast %38 : f32 to vector<12x128xf32>
    %2130 = arith.mulf %2129, %2125 : vector<12x128xf32>
    %2131 = arith.addf %2121, %2130 : vector<12x128xf32>
    %2132 = vector.broadcast %63 : f32 to vector<12x128xf32>
    %2133 = arith.mulf %2132, %2125 : vector<12x128xf32>
    %2134 = arith.addf %2124, %2133 : vector<12x128xf32>
    %2135 = vector.extract_strided_slice %1987 {offsets = [4, 0], sizes = [12, 128], strides = [1, 1]} : vector<16x128xf32> to vector<12x128xf32>
    %2136 = vector.broadcast %14 : f32 to vector<12x128xf32>
    %2137 = arith.mulf %2136, %2135 : vector<12x128xf32>
    %2138 = arith.addf %2128, %2137 : vector<12x128xf32>
    %2139 = vector.broadcast %39 : f32 to vector<12x128xf32>
    %2140 = arith.mulf %2139, %2135 : vector<12x128xf32>
    %2141 = arith.addf %2131, %2140 : vector<12x128xf32>
    %2142 = vector.broadcast %64 : f32 to vector<12x128xf32>
    %2143 = arith.mulf %2142, %2135 : vector<12x128xf32>
    %2144 = arith.addf %2134, %2143 : vector<12x128xf32>
    %2145 = vector.extract_strided_slice %1989 {offsets = [0, 0], sizes = [12, 128], strides = [1, 1]} : vector<16x128xf32> to vector<12x128xf32>
    %2146 = vector.broadcast %15 : f32 to vector<12x128xf32>
    %2147 = arith.mulf %2146, %2145 : vector<12x128xf32>
    %2148 = arith.addf %2138, %2147 : vector<12x128xf32>
    %2149 = vector.broadcast %40 : f32 to vector<12x128xf32>
    %2150 = arith.mulf %2149, %2145 : vector<12x128xf32>
    %2151 = arith.addf %2141, %2150 : vector<12x128xf32>
    %2152 = vector.broadcast %65 : f32 to vector<12x128xf32>
    %2153 = arith.mulf %2152, %2145 : vector<12x128xf32>
    %2154 = arith.addf %2144, %2153 : vector<12x128xf32>
    %2155 = vector.extract_strided_slice %1989 {offsets = [1, 0], sizes = [12, 128], strides = [1, 1]} : vector<16x128xf32> to vector<12x128xf32>
    %2156 = vector.broadcast %16 : f32 to vector<12x128xf32>
    %2157 = arith.mulf %2156, %2155 : vector<12x128xf32>
    %2158 = arith.addf %2148, %2157 : vector<12x128xf32>
    %2159 = vector.broadcast %41 : f32 to vector<12x128xf32>
    %2160 = arith.mulf %2159, %2155 : vector<12x128xf32>
    %2161 = arith.addf %2151, %2160 : vector<12x128xf32>
    %2162 = vector.broadcast %66 : f32 to vector<12x128xf32>
    %2163 = arith.mulf %2162, %2155 : vector<12x128xf32>
    %2164 = arith.addf %2154, %2163 : vector<12x128xf32>
    %2165 = vector.extract_strided_slice %1989 {offsets = [2, 0], sizes = [12, 128], strides = [1, 1]} : vector<16x128xf32> to vector<12x128xf32>
    %2166 = vector.broadcast %17 : f32 to vector<12x128xf32>
    %2167 = arith.mulf %2166, %2165 : vector<12x128xf32>
    %2168 = arith.addf %2158, %2167 : vector<12x128xf32>
    %2169 = vector.broadcast %42 : f32 to vector<12x128xf32>
    %2170 = arith.mulf %2169, %2165 : vector<12x128xf32>
    %2171 = arith.addf %2161, %2170 : vector<12x128xf32>
    %2172 = vector.broadcast %67 : f32 to vector<12x128xf32>
    %2173 = arith.mulf %2172, %2165 : vector<12x128xf32>
    %2174 = arith.addf %2164, %2173 : vector<12x128xf32>
    %2175 = vector.extract_strided_slice %1989 {offsets = [3, 0], sizes = [12, 128], strides = [1, 1]} : vector<16x128xf32> to vector<12x128xf32>
    %2176 = vector.broadcast %18 : f32 to vector<12x128xf32>
    %2177 = arith.mulf %2176, %2175 : vector<12x128xf32>
    %2178 = arith.addf %2168, %2177 : vector<12x128xf32>
    %2179 = vector.broadcast %43 : f32 to vector<12x128xf32>
    %2180 = arith.mulf %2179, %2175 : vector<12x128xf32>
    %2181 = arith.addf %2171, %2180 : vector<12x128xf32>
    %2182 = vector.broadcast %68 : f32 to vector<12x128xf32>
    %2183 = arith.mulf %2182, %2175 : vector<12x128xf32>
    %2184 = arith.addf %2174, %2183 : vector<12x128xf32>
    %2185 = vector.extract_strided_slice %1989 {offsets = [4, 0], sizes = [12, 128], strides = [1, 1]} : vector<16x128xf32> to vector<12x128xf32>
    %2186 = vector.broadcast %19 : f32 to vector<12x128xf32>
    %2187 = arith.mulf %2186, %2185 : vector<12x128xf32>
    %2188 = arith.addf %2178, %2187 : vector<12x128xf32>
    %2189 = vector.broadcast %44 : f32 to vector<12x128xf32>
    %2190 = arith.mulf %2189, %2185 : vector<12x128xf32>
    %2191 = arith.addf %2181, %2190 : vector<12x128xf32>
    %2192 = vector.broadcast %69 : f32 to vector<12x128xf32>
    %2193 = arith.mulf %2192, %2185 : vector<12x128xf32>
    %2194 = arith.addf %2184, %2193 : vector<12x128xf32>
    %2195 = vector.extract_strided_slice %1991 {offsets = [0, 0], sizes = [12, 128], strides = [1, 1]} : vector<16x128xf32> to vector<12x128xf32>
    %2196 = vector.broadcast %20 : f32 to vector<12x128xf32>
    %2197 = arith.mulf %2196, %2195 : vector<12x128xf32>
    %2198 = arith.addf %2188, %2197 : vector<12x128xf32>
    %2199 = vector.broadcast %45 : f32 to vector<12x128xf32>
    %2200 = arith.mulf %2199, %2195 : vector<12x128xf32>
    %2201 = arith.addf %2191, %2200 : vector<12x128xf32>
    %2202 = vector.broadcast %70 : f32 to vector<12x128xf32>
    %2203 = arith.mulf %2202, %2195 : vector<12x128xf32>
    %2204 = arith.addf %2194, %2203 : vector<12x128xf32>
    %2205 = vector.extract_strided_slice %1991 {offsets = [1, 0], sizes = [12, 128], strides = [1, 1]} : vector<16x128xf32> to vector<12x128xf32>
    %2206 = vector.broadcast %21 : f32 to vector<12x128xf32>
    %2207 = arith.mulf %2206, %2205 : vector<12x128xf32>
    %2208 = arith.addf %2198, %2207 : vector<12x128xf32>
    %2209 = vector.broadcast %46 : f32 to vector<12x128xf32>
    %2210 = arith.mulf %2209, %2205 : vector<12x128xf32>
    %2211 = arith.addf %2201, %2210 : vector<12x128xf32>
    %2212 = vector.broadcast %71 : f32 to vector<12x128xf32>
    %2213 = arith.mulf %2212, %2205 : vector<12x128xf32>
    %2214 = arith.addf %2204, %2213 : vector<12x128xf32>
    %2215 = vector.extract_strided_slice %1991 {offsets = [2, 0], sizes = [12, 128], strides = [1, 1]} : vector<16x128xf32> to vector<12x128xf32>
    %2216 = vector.broadcast %22 : f32 to vector<12x128xf32>
    %2217 = arith.mulf %2216, %2215 : vector<12x128xf32>
    %2218 = arith.addf %2208, %2217 : vector<12x128xf32>
    %2219 = vector.broadcast %47 : f32 to vector<12x128xf32>
    %2220 = arith.mulf %2219, %2215 : vector<12x128xf32>
    %2221 = arith.addf %2211, %2220 : vector<12x128xf32>
    %2222 = vector.broadcast %72 : f32 to vector<12x128xf32>
    %2223 = arith.mulf %2222, %2215 : vector<12x128xf32>
    %2224 = arith.addf %2214, %2223 : vector<12x128xf32>
    %2225 = vector.extract_strided_slice %1991 {offsets = [3, 0], sizes = [12, 128], strides = [1, 1]} : vector<16x128xf32> to vector<12x128xf32>
    %2226 = vector.broadcast %23 : f32 to vector<12x128xf32>
    %2227 = arith.mulf %2226, %2225 : vector<12x128xf32>
    %2228 = arith.addf %2218, %2227 : vector<12x128xf32>
    %2229 = vector.broadcast %48 : f32 to vector<12x128xf32>
    %2230 = arith.mulf %2229, %2225 : vector<12x128xf32>
    %2231 = arith.addf %2221, %2230 : vector<12x128xf32>
    %2232 = vector.broadcast %73 : f32 to vector<12x128xf32>
    %2233 = arith.mulf %2232, %2225 : vector<12x128xf32>
    %2234 = arith.addf %2224, %2233 : vector<12x128xf32>
    %2235 = vector.extract_strided_slice %1991 {offsets = [4, 0], sizes = [12, 128], strides = [1, 1]} : vector<16x128xf32> to vector<12x128xf32>
    %2236 = vector.broadcast %24 : f32 to vector<12x128xf32>
    %2237 = arith.mulf %2236, %2235 : vector<12x128xf32>
    %2238 = arith.addf %2228, %2237 : vector<12x128xf32>
    %2239 = vector.broadcast %49 : f32 to vector<12x128xf32>
    %2240 = arith.mulf %2239, %2235 : vector<12x128xf32>
    %2241 = arith.addf %2231, %2240 : vector<12x128xf32>
    %2242 = vector.broadcast %74 : f32 to vector<12x128xf32>
    %2243 = arith.mulf %2242, %2235 : vector<12x128xf32>
    %2244 = arith.addf %2234, %2243 : vector<12x128xf32>
    %c0_207 = arith.constant 0 : index
    %c7_208 = arith.constant 7 : index
    %c0_209 = arith.constant 0 : index
    %c0_210 = arith.constant 0 : index
    %2245 = vector.load %arg4[%c0_207, %c7_208, %c0_209, %c0_210] : memref<3x12x12x128xf32, #tpu.memory_space<vmem>>, vector<1x1x12x128xf32>
    %2246 = vector.shape_cast %2245 : vector<1x1x12x128xf32> to vector<12x128xf32>
    %2247 = vector.shape_cast %2238 : vector<12x128xf32> to vector<1x1x12x128xf32>
    tpu.vector_store %arg4[%c0_207, %c7_208, %c0_209, %c0_210], %2247 {strides = array<i32>} : memref<3x12x12x128xf32, #tpu.memory_space<vmem>>, vector<1x1x12x128xf32>,
    %c1_211 = arith.constant 1 : index
    %c7_212 = arith.constant 7 : index
    %c0_213 = arith.constant 0 : index
    %c0_214 = arith.constant 0 : index
    %2248 = vector.load %arg4[%c1_211, %c7_212, %c0_213, %c0_214] : memref<3x12x12x128xf32, #tpu.memory_space<vmem>>, vector<1x1x12x128xf32>
    %2249 = vector.shape_cast %2248 : vector<1x1x12x128xf32> to vector<12x128xf32>
    %2250 = vector.shape_cast %2241 : vector<12x128xf32> to vector<1x1x12x128xf32>
    tpu.vector_store %arg4[%c1_211, %c7_212, %c0_213, %c0_214], %2250 {strides = array<i32>} : memref<3x12x12x128xf32, #tpu.memory_space<vmem>>, vector<1x1x12x128xf32>,
    %c2_215 = arith.constant 2 : index
    %c7_216 = arith.constant 7 : index
    %c0_217 = arith.constant 0 : index
    %c0_218 = arith.constant 0 : index
    %2251 = vector.load %arg4[%c2_215, %c7_216, %c0_217, %c0_218] : memref<3x12x12x128xf32, #tpu.memory_space<vmem>>, vector<1x1x12x128xf32>
    %2252 = vector.shape_cast %2251 : vector<1x1x12x128xf32> to vector<12x128xf32>
    %2253 = vector.shape_cast %2244 : vector<12x128xf32> to vector<1x1x12x128xf32>
    tpu.vector_store %arg4[%c2_215, %c7_216, %c0_217, %c0_218], %2253 {strides = array<i32>} : memref<3x12x12x128xf32, #tpu.memory_space<vmem>>, vector<1x1x12x128xf32>,
    %c8_219 = arith.constant 8 : index
    %c0_220 = arith.constant 0 : index
    %c0_221 = arith.constant 0 : index
    %2254 = vector.load %arg1[%c8_219, %c0_220, %c0_221] : memref<16x16x128xf32, #tpu.memory_space<vmem>>, vector<1x16x128xf32>
    %2255 = vector.shape_cast %2254 : vector<1x16x128xf32> to vector<16x128xf32>
    %c9_222 = arith.constant 9 : index
    %c0_223 = arith.constant 0 : index
    %c0_224 = arith.constant 0 : index
    %2256 = vector.load %arg1[%c9_222, %c0_223, %c0_224] : memref<16x16x128xf32, #tpu.memory_space<vmem>>, vector<1x16x128xf32>
    %2257 = vector.shape_cast %2256 : vector<1x16x128xf32> to vector<16x128xf32>
    %c10_225 = arith.constant 10 : index
    %c0_226 = arith.constant 0 : index
    %c0_227 = arith.constant 0 : index
    %2258 = vector.load %arg1[%c10_225, %c0_226, %c0_227] : memref<16x16x128xf32, #tpu.memory_space<vmem>>, vector<1x16x128xf32>
    %2259 = vector.shape_cast %2258 : vector<1x16x128xf32> to vector<16x128xf32>
    %c11_228 = arith.constant 11 : index
    %c0_229 = arith.constant 0 : index
    %c0_230 = arith.constant 0 : index
    %2260 = vector.load %arg1[%c11_228, %c0_229, %c0_230] : memref<16x16x128xf32, #tpu.memory_space<vmem>>, vector<1x16x128xf32>
    %2261 = vector.shape_cast %2260 : vector<1x16x128xf32> to vector<16x128xf32>
    %c12_231 = arith.constant 12 : index
    %c0_232 = arith.constant 0 : index
    %c0_233 = arith.constant 0 : index
    %2262 = vector.load %arg1[%c12_231, %c0_232, %c0_233] : memref<16x16x128xf32, #tpu.memory_space<vmem>>, vector<1x16x128xf32>
    %2263 = vector.shape_cast %2262 : vector<1x16x128xf32> to vector<16x128xf32>
    %2264 = vector.broadcast %75 : f32 to vector<12x128xf32>
    %2265 = vector.broadcast %76 : f32 to vector<12x128xf32>
    %2266 = vector.broadcast %77 : f32 to vector<12x128xf32>
    %2267 = vector.extract_strided_slice %2255 {offsets = [0, 0], sizes = [12, 128], strides = [1, 1]} : vector<16x128xf32> to vector<12x128xf32>
    %2268 = vector.broadcast %0 : f32 to vector<12x128xf32>
    %2269 = arith.mulf %2268, %2267 : vector<12x128xf32>
    %2270 = arith.addf %2264, %2269 : vector<12x128xf32>
    %2271 = vector.broadcast %25 : f32 to vector<12x128xf32>
    %2272 = arith.mulf %2271, %2267 : vector<12x128xf32>
    %2273 = arith.addf %2265, %2272 : vector<12x128xf32>
    %2274 = vector.broadcast %50 : f32 to vector<12x128xf32>
    %2275 = arith.mulf %2274, %2267 : vector<12x128xf32>
    %2276 = arith.addf %2266, %2275 : vector<12x128xf32>
    %2277 = vector.extract_strided_slice %2255 {offsets = [1, 0], sizes = [12, 128], strides = [1, 1]} : vector<16x128xf32> to vector<12x128xf32>
    %2278 = vector.broadcast %1 : f32 to vector<12x128xf32>
    %2279 = arith.mulf %2278, %2277 : vector<12x128xf32>
    %2280 = arith.addf %2270, %2279 : vector<12x128xf32>
    %2281 = vector.broadcast %26 : f32 to vector<12x128xf32>
    %2282 = arith.mulf %2281, %2277 : vector<12x128xf32>
    %2283 = arith.addf %2273, %2282 : vector<12x128xf32>
    %2284 = vector.broadcast %51 : f32 to vector<12x128xf32>
    %2285 = arith.mulf %2284, %2277 : vector<12x128xf32>
    %2286 = arith.addf %2276, %2285 : vector<12x128xf32>
    %2287 = vector.extract_strided_slice %2255 {offsets = [2, 0], sizes = [12, 128], strides = [1, 1]} : vector<16x128xf32> to vector<12x128xf32>
    %2288 = vector.broadcast %2 : f32 to vector<12x128xf32>
    %2289 = arith.mulf %2288, %2287 : vector<12x128xf32>
    %2290 = arith.addf %2280, %2289 : vector<12x128xf32>
    %2291 = vector.broadcast %27 : f32 to vector<12x128xf32>
    %2292 = arith.mulf %2291, %2287 : vector<12x128xf32>
    %2293 = arith.addf %2283, %2292 : vector<12x128xf32>
    %2294 = vector.broadcast %52 : f32 to vector<12x128xf32>
    %2295 = arith.mulf %2294, %2287 : vector<12x128xf32>
    %2296 = arith.addf %2286, %2295 : vector<12x128xf32>
    %2297 = vector.extract_strided_slice %2255 {offsets = [3, 0], sizes = [12, 128], strides = [1, 1]} : vector<16x128xf32> to vector<12x128xf32>
    %2298 = vector.broadcast %3 : f32 to vector<12x128xf32>
    %2299 = arith.mulf %2298, %2297 : vector<12x128xf32>
    %2300 = arith.addf %2290, %2299 : vector<12x128xf32>
    %2301 = vector.broadcast %28 : f32 to vector<12x128xf32>
    %2302 = arith.mulf %2301, %2297 : vector<12x128xf32>
    %2303 = arith.addf %2293, %2302 : vector<12x128xf32>
    %2304 = vector.broadcast %53 : f32 to vector<12x128xf32>
    %2305 = arith.mulf %2304, %2297 : vector<12x128xf32>
    %2306 = arith.addf %2296, %2305 : vector<12x128xf32>
    %2307 = vector.extract_strided_slice %2255 {offsets = [4, 0], sizes = [12, 128], strides = [1, 1]} : vector<16x128xf32> to vector<12x128xf32>
    %2308 = vector.broadcast %4 : f32 to vector<12x128xf32>
    %2309 = arith.mulf %2308, %2307 : vector<12x128xf32>
    %2310 = arith.addf %2300, %2309 : vector<12x128xf32>
    %2311 = vector.broadcast %29 : f32 to vector<12x128xf32>
    %2312 = arith.mulf %2311, %2307 : vector<12x128xf32>
    %2313 = arith.addf %2303, %2312 : vector<12x128xf32>
    %2314 = vector.broadcast %54 : f32 to vector<12x128xf32>
    %2315 = arith.mulf %2314, %2307 : vector<12x128xf32>
    %2316 = arith.addf %2306, %2315 : vector<12x128xf32>
    %2317 = vector.extract_strided_slice %2257 {offsets = [0, 0], sizes = [12, 128], strides = [1, 1]} : vector<16x128xf32> to vector<12x128xf32>
    %2318 = vector.broadcast %5 : f32 to vector<12x128xf32>
    %2319 = arith.mulf %2318, %2317 : vector<12x128xf32>
    %2320 = arith.addf %2310, %2319 : vector<12x128xf32>
    %2321 = vector.broadcast %30 : f32 to vector<12x128xf32>
    %2322 = arith.mulf %2321, %2317 : vector<12x128xf32>
    %2323 = arith.addf %2313, %2322 : vector<12x128xf32>
    %2324 = vector.broadcast %55 : f32 to vector<12x128xf32>
    %2325 = arith.mulf %2324, %2317 : vector<12x128xf32>
    %2326 = arith.addf %2316, %2325 : vector<12x128xf32>
    %2327 = vector.extract_strided_slice %2257 {offsets = [1, 0], sizes = [12, 128], strides = [1, 1]} : vector<16x128xf32> to vector<12x128xf32>
    %2328 = vector.broadcast %6 : f32 to vector<12x128xf32>
    %2329 = arith.mulf %2328, %2327 : vector<12x128xf32>
    %2330 = arith.addf %2320, %2329 : vector<12x128xf32>
    %2331 = vector.broadcast %31 : f32 to vector<12x128xf32>
    %2332 = arith.mulf %2331, %2327 : vector<12x128xf32>
    %2333 = arith.addf %2323, %2332 : vector<12x128xf32>
    %2334 = vector.broadcast %56 : f32 to vector<12x128xf32>
    %2335 = arith.mulf %2334, %2327 : vector<12x128xf32>
    %2336 = arith.addf %2326, %2335 : vector<12x128xf32>
    %2337 = vector.extract_strided_slice %2257 {offsets = [2, 0], sizes = [12, 128], strides = [1, 1]} : vector<16x128xf32> to vector<12x128xf32>
    %2338 = vector.broadcast %7 : f32 to vector<12x128xf32>
    %2339 = arith.mulf %2338, %2337 : vector<12x128xf32>
    %2340 = arith.addf %2330, %2339 : vector<12x128xf32>
    %2341 = vector.broadcast %32 : f32 to vector<12x128xf32>
    %2342 = arith.mulf %2341, %2337 : vector<12x128xf32>
    %2343 = arith.addf %2333, %2342 : vector<12x128xf32>
    %2344 = vector.broadcast %57 : f32 to vector<12x128xf32>
    %2345 = arith.mulf %2344, %2337 : vector<12x128xf32>
    %2346 = arith.addf %2336, %2345 : vector<12x128xf32>
    %2347 = vector.extract_strided_slice %2257 {offsets = [3, 0], sizes = [12, 128], strides = [1, 1]} : vector<16x128xf32> to vector<12x128xf32>
    %2348 = vector.broadcast %8 : f32 to vector<12x128xf32>
    %2349 = arith.mulf %2348, %2347 : vector<12x128xf32>
    %2350 = arith.addf %2340, %2349 : vector<12x128xf32>
    %2351 = vector.broadcast %33 : f32 to vector<12x128xf32>
    %2352 = arith.mulf %2351, %2347 : vector<12x128xf32>
    %2353 = arith.addf %2343, %2352 : vector<12x128xf32>
    %2354 = vector.broadcast %58 : f32 to vector<12x128xf32>
    %2355 = arith.mulf %2354, %2347 : vector<12x128xf32>
    %2356 = arith.addf %2346, %2355 : vector<12x128xf32>
    %2357 = vector.extract_strided_slice %2257 {offsets = [4, 0], sizes = [12, 128], strides = [1, 1]} : vector<16x128xf32> to vector<12x128xf32>
    %2358 = vector.broadcast %9 : f32 to vector<12x128xf32>
    %2359 = arith.mulf %2358, %2357 : vector<12x128xf32>
    %2360 = arith.addf %2350, %2359 : vector<12x128xf32>
    %2361 = vector.broadcast %34 : f32 to vector<12x128xf32>
    %2362 = arith.mulf %2361, %2357 : vector<12x128xf32>
    %2363 = arith.addf %2353, %2362 : vector<12x128xf32>
    %2364 = vector.broadcast %59 : f32 to vector<12x128xf32>
    %2365 = arith.mulf %2364, %2357 : vector<12x128xf32>
    %2366 = arith.addf %2356, %2365 : vector<12x128xf32>
    %2367 = vector.extract_strided_slice %2259 {offsets = [0, 0], sizes = [12, 128], strides = [1, 1]} : vector<16x128xf32> to vector<12x128xf32>
    %2368 = vector.broadcast %10 : f32 to vector<12x128xf32>
    %2369 = arith.mulf %2368, %2367 : vector<12x128xf32>
    %2370 = arith.addf %2360, %2369 : vector<12x128xf32>
    %2371 = vector.broadcast %35 : f32 to vector<12x128xf32>
    %2372 = arith.mulf %2371, %2367 : vector<12x128xf32>
    %2373 = arith.addf %2363, %2372 : vector<12x128xf32>
    %2374 = vector.broadcast %60 : f32 to vector<12x128xf32>
    %2375 = arith.mulf %2374, %2367 : vector<12x128xf32>
    %2376 = arith.addf %2366, %2375 : vector<12x128xf32>
    %2377 = vector.extract_strided_slice %2259 {offsets = [1, 0], sizes = [12, 128], strides = [1, 1]} : vector<16x128xf32> to vector<12x128xf32>
    %2378 = vector.broadcast %11 : f32 to vector<12x128xf32>
    %2379 = arith.mulf %2378, %2377 : vector<12x128xf32>
    %2380 = arith.addf %2370, %2379 : vector<12x128xf32>
    %2381 = vector.broadcast %36 : f32 to vector<12x128xf32>
    %2382 = arith.mulf %2381, %2377 : vector<12x128xf32>
    %2383 = arith.addf %2373, %2382 : vector<12x128xf32>
    %2384 = vector.broadcast %61 : f32 to vector<12x128xf32>
    %2385 = arith.mulf %2384, %2377 : vector<12x128xf32>
    %2386 = arith.addf %2376, %2385 : vector<12x128xf32>
    %2387 = vector.extract_strided_slice %2259 {offsets = [2, 0], sizes = [12, 128], strides = [1, 1]} : vector<16x128xf32> to vector<12x128xf32>
    %2388 = vector.broadcast %12 : f32 to vector<12x128xf32>
    %2389 = arith.mulf %2388, %2387 : vector<12x128xf32>
    %2390 = arith.addf %2380, %2389 : vector<12x128xf32>
    %2391 = vector.broadcast %37 : f32 to vector<12x128xf32>
    %2392 = arith.mulf %2391, %2387 : vector<12x128xf32>
    %2393 = arith.addf %2383, %2392 : vector<12x128xf32>
    %2394 = vector.broadcast %62 : f32 to vector<12x128xf32>
    %2395 = arith.mulf %2394, %2387 : vector<12x128xf32>
    %2396 = arith.addf %2386, %2395 : vector<12x128xf32>
    %2397 = vector.extract_strided_slice %2259 {offsets = [3, 0], sizes = [12, 128], strides = [1, 1]} : vector<16x128xf32> to vector<12x128xf32>
    %2398 = vector.broadcast %13 : f32 to vector<12x128xf32>
    %2399 = arith.mulf %2398, %2397 : vector<12x128xf32>
    %2400 = arith.addf %2390, %2399 : vector<12x128xf32>
    %2401 = vector.broadcast %38 : f32 to vector<12x128xf32>
    %2402 = arith.mulf %2401, %2397 : vector<12x128xf32>
    %2403 = arith.addf %2393, %2402 : vector<12x128xf32>
    %2404 = vector.broadcast %63 : f32 to vector<12x128xf32>
    %2405 = arith.mulf %2404, %2397 : vector<12x128xf32>
    %2406 = arith.addf %2396, %2405 : vector<12x128xf32>
    %2407 = vector.extract_strided_slice %2259 {offsets = [4, 0], sizes = [12, 128], strides = [1, 1]} : vector<16x128xf32> to vector<12x128xf32>
    %2408 = vector.broadcast %14 : f32 to vector<12x128xf32>
    %2409 = arith.mulf %2408, %2407 : vector<12x128xf32>
    %2410 = arith.addf %2400, %2409 : vector<12x128xf32>
    %2411 = vector.broadcast %39 : f32 to vector<12x128xf32>
    %2412 = arith.mulf %2411, %2407 : vector<12x128xf32>
    %2413 = arith.addf %2403, %2412 : vector<12x128xf32>
    %2414 = vector.broadcast %64 : f32 to vector<12x128xf32>
    %2415 = arith.mulf %2414, %2407 : vector<12x128xf32>
    %2416 = arith.addf %2406, %2415 : vector<12x128xf32>
    %2417 = vector.extract_strided_slice %2261 {offsets = [0, 0], sizes = [12, 128], strides = [1, 1]} : vector<16x128xf32> to vector<12x128xf32>
    %2418 = vector.broadcast %15 : f32 to vector<12x128xf32>
    %2419 = arith.mulf %2418, %2417 : vector<12x128xf32>
    %2420 = arith.addf %2410, %2419 : vector<12x128xf32>
    %2421 = vector.broadcast %40 : f32 to vector<12x128xf32>
    %2422 = arith.mulf %2421, %2417 : vector<12x128xf32>
    %2423 = arith.addf %2413, %2422 : vector<12x128xf32>
    %2424 = vector.broadcast %65 : f32 to vector<12x128xf32>
    %2425 = arith.mulf %2424, %2417 : vector<12x128xf32>
    %2426 = arith.addf %2416, %2425 : vector<12x128xf32>
    %2427 = vector.extract_strided_slice %2261 {offsets = [1, 0], sizes = [12, 128], strides = [1, 1]} : vector<16x128xf32> to vector<12x128xf32>
    %2428 = vector.broadcast %16 : f32 to vector<12x128xf32>
    %2429 = arith.mulf %2428, %2427 : vector<12x128xf32>
    %2430 = arith.addf %2420, %2429 : vector<12x128xf32>
    %2431 = vector.broadcast %41 : f32 to vector<12x128xf32>
    %2432 = arith.mulf %2431, %2427 : vector<12x128xf32>
    %2433 = arith.addf %2423, %2432 : vector<12x128xf32>
    %2434 = vector.broadcast %66 : f32 to vector<12x128xf32>
    %2435 = arith.mulf %2434, %2427 : vector<12x128xf32>
    %2436 = arith.addf %2426, %2435 : vector<12x128xf32>
    %2437 = vector.extract_strided_slice %2261 {offsets = [2, 0], sizes = [12, 128], strides = [1, 1]} : vector<16x128xf32> to vector<12x128xf32>
    %2438 = vector.broadcast %17 : f32 to vector<12x128xf32>
    %2439 = arith.mulf %2438, %2437 : vector<12x128xf32>
    %2440 = arith.addf %2430, %2439 : vector<12x128xf32>
    %2441 = vector.broadcast %42 : f32 to vector<12x128xf32>
    %2442 = arith.mulf %2441, %2437 : vector<12x128xf32>
    %2443 = arith.addf %2433, %2442 : vector<12x128xf32>
    %2444 = vector.broadcast %67 : f32 to vector<12x128xf32>
    %2445 = arith.mulf %2444, %2437 : vector<12x128xf32>
    %2446 = arith.addf %2436, %2445 : vector<12x128xf32>
    %2447 = vector.extract_strided_slice %2261 {offsets = [3, 0], sizes = [12, 128], strides = [1, 1]} : vector<16x128xf32> to vector<12x128xf32>
    %2448 = vector.broadcast %18 : f32 to vector<12x128xf32>
    %2449 = arith.mulf %2448, %2447 : vector<12x128xf32>
    %2450 = arith.addf %2440, %2449 : vector<12x128xf32>
    %2451 = vector.broadcast %43 : f32 to vector<12x128xf32>
    %2452 = arith.mulf %2451, %2447 : vector<12x128xf32>
    %2453 = arith.addf %2443, %2452 : vector<12x128xf32>
    %2454 = vector.broadcast %68 : f32 to vector<12x128xf32>
    %2455 = arith.mulf %2454, %2447 : vector<12x128xf32>
    %2456 = arith.addf %2446, %2455 : vector<12x128xf32>
    %2457 = vector.extract_strided_slice %2261 {offsets = [4, 0], sizes = [12, 128], strides = [1, 1]} : vector<16x128xf32> to vector<12x128xf32>
    %2458 = vector.broadcast %19 : f32 to vector<12x128xf32>
    %2459 = arith.mulf %2458, %2457 : vector<12x128xf32>
    %2460 = arith.addf %2450, %2459 : vector<12x128xf32>
    %2461 = vector.broadcast %44 : f32 to vector<12x128xf32>
    %2462 = arith.mulf %2461, %2457 : vector<12x128xf32>
    %2463 = arith.addf %2453, %2462 : vector<12x128xf32>
    %2464 = vector.broadcast %69 : f32 to vector<12x128xf32>
    %2465 = arith.mulf %2464, %2457 : vector<12x128xf32>
    %2466 = arith.addf %2456, %2465 : vector<12x128xf32>
    %2467 = vector.extract_strided_slice %2263 {offsets = [0, 0], sizes = [12, 128], strides = [1, 1]} : vector<16x128xf32> to vector<12x128xf32>
    %2468 = vector.broadcast %20 : f32 to vector<12x128xf32>
    %2469 = arith.mulf %2468, %2467 : vector<12x128xf32>
    %2470 = arith.addf %2460, %2469 : vector<12x128xf32>
    %2471 = vector.broadcast %45 : f32 to vector<12x128xf32>
    %2472 = arith.mulf %2471, %2467 : vector<12x128xf32>
    %2473 = arith.addf %2463, %2472 : vector<12x128xf32>
    %2474 = vector.broadcast %70 : f32 to vector<12x128xf32>
    %2475 = arith.mulf %2474, %2467 : vector<12x128xf32>
    %2476 = arith.addf %2466, %2475 : vector<12x128xf32>
    %2477 = vector.extract_strided_slice %2263 {offsets = [1, 0], sizes = [12, 128], strides = [1, 1]} : vector<16x128xf32> to vector<12x128xf32>
    %2478 = vector.broadcast %21 : f32 to vector<12x128xf32>
    %2479 = arith.mulf %2478, %2477 : vector<12x128xf32>
    %2480 = arith.addf %2470, %2479 : vector<12x128xf32>
    %2481 = vector.broadcast %46 : f32 to vector<12x128xf32>
    %2482 = arith.mulf %2481, %2477 : vector<12x128xf32>
    %2483 = arith.addf %2473, %2482 : vector<12x128xf32>
    %2484 = vector.broadcast %71 : f32 to vector<12x128xf32>
    %2485 = arith.mulf %2484, %2477 : vector<12x128xf32>
    %2486 = arith.addf %2476, %2485 : vector<12x128xf32>
    %2487 = vector.extract_strided_slice %2263 {offsets = [2, 0], sizes = [12, 128], strides = [1, 1]} : vector<16x128xf32> to vector<12x128xf32>
    %2488 = vector.broadcast %22 : f32 to vector<12x128xf32>
    %2489 = arith.mulf %2488, %2487 : vector<12x128xf32>
    %2490 = arith.addf %2480, %2489 : vector<12x128xf32>
    %2491 = vector.broadcast %47 : f32 to vector<12x128xf32>
    %2492 = arith.mulf %2491, %2487 : vector<12x128xf32>
    %2493 = arith.addf %2483, %2492 : vector<12x128xf32>
    %2494 = vector.broadcast %72 : f32 to vector<12x128xf32>
    %2495 = arith.mulf %2494, %2487 : vector<12x128xf32>
    %2496 = arith.addf %2486, %2495 : vector<12x128xf32>
    %2497 = vector.extract_strided_slice %2263 {offsets = [3, 0], sizes = [12, 128], strides = [1, 1]} : vector<16x128xf32> to vector<12x128xf32>
    %2498 = vector.broadcast %23 : f32 to vector<12x128xf32>
    %2499 = arith.mulf %2498, %2497 : vector<12x128xf32>
    %2500 = arith.addf %2490, %2499 : vector<12x128xf32>
    %2501 = vector.broadcast %48 : f32 to vector<12x128xf32>
    %2502 = arith.mulf %2501, %2497 : vector<12x128xf32>
    %2503 = arith.addf %2493, %2502 : vector<12x128xf32>
    %2504 = vector.broadcast %73 : f32 to vector<12x128xf32>
    %2505 = arith.mulf %2504, %2497 : vector<12x128xf32>
    %2506 = arith.addf %2496, %2505 : vector<12x128xf32>
    %2507 = vector.extract_strided_slice %2263 {offsets = [4, 0], sizes = [12, 128], strides = [1, 1]} : vector<16x128xf32> to vector<12x128xf32>
    %2508 = vector.broadcast %24 : f32 to vector<12x128xf32>
    %2509 = arith.mulf %2508, %2507 : vector<12x128xf32>
    %2510 = arith.addf %2500, %2509 : vector<12x128xf32>
    %2511 = vector.broadcast %49 : f32 to vector<12x128xf32>
    %2512 = arith.mulf %2511, %2507 : vector<12x128xf32>
    %2513 = arith.addf %2503, %2512 : vector<12x128xf32>
    %2514 = vector.broadcast %74 : f32 to vector<12x128xf32>
    %2515 = arith.mulf %2514, %2507 : vector<12x128xf32>
    %2516 = arith.addf %2506, %2515 : vector<12x128xf32>
    %c0_234 = arith.constant 0 : index
    %c8_235 = arith.constant 8 : index
    %c0_236 = arith.constant 0 : index
    %c0_237 = arith.constant 0 : index
    %2517 = vector.load %arg4[%c0_234, %c8_235, %c0_236, %c0_237] : memref<3x12x12x128xf32, #tpu.memory_space<vmem>>, vector<1x1x12x128xf32>
    %2518 = vector.shape_cast %2517 : vector<1x1x12x128xf32> to vector<12x128xf32>
    %2519 = vector.shape_cast %2510 : vector<12x128xf32> to vector<1x1x12x128xf32>
    tpu.vector_store %arg4[%c0_234, %c8_235, %c0_236, %c0_237], %2519 {strides = array<i32>} : memref<3x12x12x128xf32, #tpu.memory_space<vmem>>, vector<1x1x12x128xf32>,
    %c1_238 = arith.constant 1 : index
    %c8_239 = arith.constant 8 : index
    %c0_240 = arith.constant 0 : index
    %c0_241 = arith.constant 0 : index
    %2520 = vector.load %arg4[%c1_238, %c8_239, %c0_240, %c0_241] : memref<3x12x12x128xf32, #tpu.memory_space<vmem>>, vector<1x1x12x128xf32>
    %2521 = vector.shape_cast %2520 : vector<1x1x12x128xf32> to vector<12x128xf32>
    %2522 = vector.shape_cast %2513 : vector<12x128xf32> to vector<1x1x12x128xf32>
    tpu.vector_store %arg4[%c1_238, %c8_239, %c0_240, %c0_241], %2522 {strides = array<i32>} : memref<3x12x12x128xf32, #tpu.memory_space<vmem>>, vector<1x1x12x128xf32>,
    %c2_242 = arith.constant 2 : index
    %c8_243 = arith.constant 8 : index
    %c0_244 = arith.constant 0 : index
    %c0_245 = arith.constant 0 : index
    %2523 = vector.load %arg4[%c2_242, %c8_243, %c0_244, %c0_245] : memref<3x12x12x128xf32, #tpu.memory_space<vmem>>, vector<1x1x12x128xf32>
    %2524 = vector.shape_cast %2523 : vector<1x1x12x128xf32> to vector<12x128xf32>
    %2525 = vector.shape_cast %2516 : vector<12x128xf32> to vector<1x1x12x128xf32>
    tpu.vector_store %arg4[%c2_242, %c8_243, %c0_244, %c0_245], %2525 {strides = array<i32>} : memref<3x12x12x128xf32, #tpu.memory_space<vmem>>, vector<1x1x12x128xf32>,
    %c9_246 = arith.constant 9 : index
    %c0_247 = arith.constant 0 : index
    %c0_248 = arith.constant 0 : index
    %2526 = vector.load %arg1[%c9_246, %c0_247, %c0_248] : memref<16x16x128xf32, #tpu.memory_space<vmem>>, vector<1x16x128xf32>
    %2527 = vector.shape_cast %2526 : vector<1x16x128xf32> to vector<16x128xf32>
    %c10_249 = arith.constant 10 : index
    %c0_250 = arith.constant 0 : index
    %c0_251 = arith.constant 0 : index
    %2528 = vector.load %arg1[%c10_249, %c0_250, %c0_251] : memref<16x16x128xf32, #tpu.memory_space<vmem>>, vector<1x16x128xf32>
    %2529 = vector.shape_cast %2528 : vector<1x16x128xf32> to vector<16x128xf32>
    %c11_252 = arith.constant 11 : index
    %c0_253 = arith.constant 0 : index
    %c0_254 = arith.constant 0 : index
    %2530 = vector.load %arg1[%c11_252, %c0_253, %c0_254] : memref<16x16x128xf32, #tpu.memory_space<vmem>>, vector<1x16x128xf32>
    %2531 = vector.shape_cast %2530 : vector<1x16x128xf32> to vector<16x128xf32>
    %c12_255 = arith.constant 12 : index
    %c0_256 = arith.constant 0 : index
    %c0_257 = arith.constant 0 : index
    %2532 = vector.load %arg1[%c12_255, %c0_256, %c0_257] : memref<16x16x128xf32, #tpu.memory_space<vmem>>, vector<1x16x128xf32>
    %2533 = vector.shape_cast %2532 : vector<1x16x128xf32> to vector<16x128xf32>
    %c13_258 = arith.constant 13 : index
    %c0_259 = arith.constant 0 : index
    %c0_260 = arith.constant 0 : index
    %2534 = vector.load %arg1[%c13_258, %c0_259, %c0_260] : memref<16x16x128xf32, #tpu.memory_space<vmem>>, vector<1x16x128xf32>
    %2535 = vector.shape_cast %2534 : vector<1x16x128xf32> to vector<16x128xf32>
    %2536 = vector.broadcast %75 : f32 to vector<12x128xf32>
    %2537 = vector.broadcast %76 : f32 to vector<12x128xf32>
    %2538 = vector.broadcast %77 : f32 to vector<12x128xf32>
    %2539 = vector.extract_strided_slice %2527 {offsets = [0, 0], sizes = [12, 128], strides = [1, 1]} : vector<16x128xf32> to vector<12x128xf32>
    %2540 = vector.broadcast %0 : f32 to vector<12x128xf32>
    %2541 = arith.mulf %2540, %2539 : vector<12x128xf32>
    %2542 = arith.addf %2536, %2541 : vector<12x128xf32>
    %2543 = vector.broadcast %25 : f32 to vector<12x128xf32>
    %2544 = arith.mulf %2543, %2539 : vector<12x128xf32>
    %2545 = arith.addf %2537, %2544 : vector<12x128xf32>
    %2546 = vector.broadcast %50 : f32 to vector<12x128xf32>
    %2547 = arith.mulf %2546, %2539 : vector<12x128xf32>
    %2548 = arith.addf %2538, %2547 : vector<12x128xf32>
    %2549 = vector.extract_strided_slice %2527 {offsets = [1, 0], sizes = [12, 128], strides = [1, 1]} : vector<16x128xf32> to vector<12x128xf32>
    %2550 = vector.broadcast %1 : f32 to vector<12x128xf32>
    %2551 = arith.mulf %2550, %2549 : vector<12x128xf32>
    %2552 = arith.addf %2542, %2551 : vector<12x128xf32>
    %2553 = vector.broadcast %26 : f32 to vector<12x128xf32>
    %2554 = arith.mulf %2553, %2549 : vector<12x128xf32>
    %2555 = arith.addf %2545, %2554 : vector<12x128xf32>
    %2556 = vector.broadcast %51 : f32 to vector<12x128xf32>
    %2557 = arith.mulf %2556, %2549 : vector<12x128xf32>
    %2558 = arith.addf %2548, %2557 : vector<12x128xf32>
    %2559 = vector.extract_strided_slice %2527 {offsets = [2, 0], sizes = [12, 128], strides = [1, 1]} : vector<16x128xf32> to vector<12x128xf32>
    %2560 = vector.broadcast %2 : f32 to vector<12x128xf32>
    %2561 = arith.mulf %2560, %2559 : vector<12x128xf32>
    %2562 = arith.addf %2552, %2561 : vector<12x128xf32>
    %2563 = vector.broadcast %27 : f32 to vector<12x128xf32>
    %2564 = arith.mulf %2563, %2559 : vector<12x128xf32>
    %2565 = arith.addf %2555, %2564 : vector<12x128xf32>
    %2566 = vector.broadcast %52 : f32 to vector<12x128xf32>
    %2567 = arith.mulf %2566, %2559 : vector<12x128xf32>
    %2568 = arith.addf %2558, %2567 : vector<12x128xf32>
    %2569 = vector.extract_strided_slice %2527 {offsets = [3, 0], sizes = [12, 128], strides = [1, 1]} : vector<16x128xf32> to vector<12x128xf32>
    %2570 = vector.broadcast %3 : f32 to vector<12x128xf32>
    %2571 = arith.mulf %2570, %2569 : vector<12x128xf32>
    %2572 = arith.addf %2562, %2571 : vector<12x128xf32>
    %2573 = vector.broadcast %28 : f32 to vector<12x128xf32>
    %2574 = arith.mulf %2573, %2569 : vector<12x128xf32>
    %2575 = arith.addf %2565, %2574 : vector<12x128xf32>
    %2576 = vector.broadcast %53 : f32 to vector<12x128xf32>
    %2577 = arith.mulf %2576, %2569 : vector<12x128xf32>
    %2578 = arith.addf %2568, %2577 : vector<12x128xf32>
    %2579 = vector.extract_strided_slice %2527 {offsets = [4, 0], sizes = [12, 128], strides = [1, 1]} : vector<16x128xf32> to vector<12x128xf32>
    %2580 = vector.broadcast %4 : f32 to vector<12x128xf32>
    %2581 = arith.mulf %2580, %2579 : vector<12x128xf32>
    %2582 = arith.addf %2572, %2581 : vector<12x128xf32>
    %2583 = vector.broadcast %29 : f32 to vector<12x128xf32>
    %2584 = arith.mulf %2583, %2579 : vector<12x128xf32>
    %2585 = arith.addf %2575, %2584 : vector<12x128xf32>
    %2586 = vector.broadcast %54 : f32 to vector<12x128xf32>
    %2587 = arith.mulf %2586, %2579 : vector<12x128xf32>
    %2588 = arith.addf %2578, %2587 : vector<12x128xf32>
    %2589 = vector.extract_strided_slice %2529 {offsets = [0, 0], sizes = [12, 128], strides = [1, 1]} : vector<16x128xf32> to vector<12x128xf32>
    %2590 = vector.broadcast %5 : f32 to vector<12x128xf32>
    %2591 = arith.mulf %2590, %2589 : vector<12x128xf32>
    %2592 = arith.addf %2582, %2591 : vector<12x128xf32>
    %2593 = vector.broadcast %30 : f32 to vector<12x128xf32>
    %2594 = arith.mulf %2593, %2589 : vector<12x128xf32>
    %2595 = arith.addf %2585, %2594 : vector<12x128xf32>
    %2596 = vector.broadcast %55 : f32 to vector<12x128xf32>
    %2597 = arith.mulf %2596, %2589 : vector<12x128xf32>
    %2598 = arith.addf %2588, %2597 : vector<12x128xf32>
    %2599 = vector.extract_strided_slice %2529 {offsets = [1, 0], sizes = [12, 128], strides = [1, 1]} : vector<16x128xf32> to vector<12x128xf32>
    %2600 = vector.broadcast %6 : f32 to vector<12x128xf32>
    %2601 = arith.mulf %2600, %2599 : vector<12x128xf32>
    %2602 = arith.addf %2592, %2601 : vector<12x128xf32>
    %2603 = vector.broadcast %31 : f32 to vector<12x128xf32>
    %2604 = arith.mulf %2603, %2599 : vector<12x128xf32>
    %2605 = arith.addf %2595, %2604 : vector<12x128xf32>
    %2606 = vector.broadcast %56 : f32 to vector<12x128xf32>
    %2607 = arith.mulf %2606, %2599 : vector<12x128xf32>
    %2608 = arith.addf %2598, %2607 : vector<12x128xf32>
    %2609 = vector.extract_strided_slice %2529 {offsets = [2, 0], sizes = [12, 128], strides = [1, 1]} : vector<16x128xf32> to vector<12x128xf32>
    %2610 = vector.broadcast %7 : f32 to vector<12x128xf32>
    %2611 = arith.mulf %2610, %2609 : vector<12x128xf32>
    %2612 = arith.addf %2602, %2611 : vector<12x128xf32>
    %2613 = vector.broadcast %32 : f32 to vector<12x128xf32>
    %2614 = arith.mulf %2613, %2609 : vector<12x128xf32>
    %2615 = arith.addf %2605, %2614 : vector<12x128xf32>
    %2616 = vector.broadcast %57 : f32 to vector<12x128xf32>
    %2617 = arith.mulf %2616, %2609 : vector<12x128xf32>
    %2618 = arith.addf %2608, %2617 : vector<12x128xf32>
    %2619 = vector.extract_strided_slice %2529 {offsets = [3, 0], sizes = [12, 128], strides = [1, 1]} : vector<16x128xf32> to vector<12x128xf32>
    %2620 = vector.broadcast %8 : f32 to vector<12x128xf32>
    %2621 = arith.mulf %2620, %2619 : vector<12x128xf32>
    %2622 = arith.addf %2612, %2621 : vector<12x128xf32>
    %2623 = vector.broadcast %33 : f32 to vector<12x128xf32>
    %2624 = arith.mulf %2623, %2619 : vector<12x128xf32>
    %2625 = arith.addf %2615, %2624 : vector<12x128xf32>
    %2626 = vector.broadcast %58 : f32 to vector<12x128xf32>
    %2627 = arith.mulf %2626, %2619 : vector<12x128xf32>
    %2628 = arith.addf %2618, %2627 : vector<12x128xf32>
    %2629 = vector.extract_strided_slice %2529 {offsets = [4, 0], sizes = [12, 128], strides = [1, 1]} : vector<16x128xf32> to vector<12x128xf32>
    %2630 = vector.broadcast %9 : f32 to vector<12x128xf32>
    %2631 = arith.mulf %2630, %2629 : vector<12x128xf32>
    %2632 = arith.addf %2622, %2631 : vector<12x128xf32>
    %2633 = vector.broadcast %34 : f32 to vector<12x128xf32>
    %2634 = arith.mulf %2633, %2629 : vector<12x128xf32>
    %2635 = arith.addf %2625, %2634 : vector<12x128xf32>
    %2636 = vector.broadcast %59 : f32 to vector<12x128xf32>
    %2637 = arith.mulf %2636, %2629 : vector<12x128xf32>
    %2638 = arith.addf %2628, %2637 : vector<12x128xf32>
    %2639 = vector.extract_strided_slice %2531 {offsets = [0, 0], sizes = [12, 128], strides = [1, 1]} : vector<16x128xf32> to vector<12x128xf32>
    %2640 = vector.broadcast %10 : f32 to vector<12x128xf32>
    %2641 = arith.mulf %2640, %2639 : vector<12x128xf32>
    %2642 = arith.addf %2632, %2641 : vector<12x128xf32>
    %2643 = vector.broadcast %35 : f32 to vector<12x128xf32>
    %2644 = arith.mulf %2643, %2639 : vector<12x128xf32>
    %2645 = arith.addf %2635, %2644 : vector<12x128xf32>
    %2646 = vector.broadcast %60 : f32 to vector<12x128xf32>
    %2647 = arith.mulf %2646, %2639 : vector<12x128xf32>
    %2648 = arith.addf %2638, %2647 : vector<12x128xf32>
    %2649 = vector.extract_strided_slice %2531 {offsets = [1, 0], sizes = [12, 128], strides = [1, 1]} : vector<16x128xf32> to vector<12x128xf32>
    %2650 = vector.broadcast %11 : f32 to vector<12x128xf32>
    %2651 = arith.mulf %2650, %2649 : vector<12x128xf32>
    %2652 = arith.addf %2642, %2651 : vector<12x128xf32>
    %2653 = vector.broadcast %36 : f32 to vector<12x128xf32>
    %2654 = arith.mulf %2653, %2649 : vector<12x128xf32>
    %2655 = arith.addf %2645, %2654 : vector<12x128xf32>
    %2656 = vector.broadcast %61 : f32 to vector<12x128xf32>
    %2657 = arith.mulf %2656, %2649 : vector<12x128xf32>
    %2658 = arith.addf %2648, %2657 : vector<12x128xf32>
    %2659 = vector.extract_strided_slice %2531 {offsets = [2, 0], sizes = [12, 128], strides = [1, 1]} : vector<16x128xf32> to vector<12x128xf32>
    %2660 = vector.broadcast %12 : f32 to vector<12x128xf32>
    %2661 = arith.mulf %2660, %2659 : vector<12x128xf32>
    %2662 = arith.addf %2652, %2661 : vector<12x128xf32>
    %2663 = vector.broadcast %37 : f32 to vector<12x128xf32>
    %2664 = arith.mulf %2663, %2659 : vector<12x128xf32>
    %2665 = arith.addf %2655, %2664 : vector<12x128xf32>
    %2666 = vector.broadcast %62 : f32 to vector<12x128xf32>
    %2667 = arith.mulf %2666, %2659 : vector<12x128xf32>
    %2668 = arith.addf %2658, %2667 : vector<12x128xf32>
    %2669 = vector.extract_strided_slice %2531 {offsets = [3, 0], sizes = [12, 128], strides = [1, 1]} : vector<16x128xf32> to vector<12x128xf32>
    %2670 = vector.broadcast %13 : f32 to vector<12x128xf32>
    %2671 = arith.mulf %2670, %2669 : vector<12x128xf32>
    %2672 = arith.addf %2662, %2671 : vector<12x128xf32>
    %2673 = vector.broadcast %38 : f32 to vector<12x128xf32>
    %2674 = arith.mulf %2673, %2669 : vector<12x128xf32>
    %2675 = arith.addf %2665, %2674 : vector<12x128xf32>
    %2676 = vector.broadcast %63 : f32 to vector<12x128xf32>
    %2677 = arith.mulf %2676, %2669 : vector<12x128xf32>
    %2678 = arith.addf %2668, %2677 : vector<12x128xf32>
    %2679 = vector.extract_strided_slice %2531 {offsets = [4, 0], sizes = [12, 128], strides = [1, 1]} : vector<16x128xf32> to vector<12x128xf32>
    %2680 = vector.broadcast %14 : f32 to vector<12x128xf32>
    %2681 = arith.mulf %2680, %2679 : vector<12x128xf32>
    %2682 = arith.addf %2672, %2681 : vector<12x128xf32>
    %2683 = vector.broadcast %39 : f32 to vector<12x128xf32>
    %2684 = arith.mulf %2683, %2679 : vector<12x128xf32>
    %2685 = arith.addf %2675, %2684 : vector<12x128xf32>
    %2686 = vector.broadcast %64 : f32 to vector<12x128xf32>
    %2687 = arith.mulf %2686, %2679 : vector<12x128xf32>
    %2688 = arith.addf %2678, %2687 : vector<12x128xf32>
    %2689 = vector.extract_strided_slice %2533 {offsets = [0, 0], sizes = [12, 128], strides = [1, 1]} : vector<16x128xf32> to vector<12x128xf32>
    %2690 = vector.broadcast %15 : f32 to vector<12x128xf32>
    %2691 = arith.mulf %2690, %2689 : vector<12x128xf32>
    %2692 = arith.addf %2682, %2691 : vector<12x128xf32>
    %2693 = vector.broadcast %40 : f32 to vector<12x128xf32>
    %2694 = arith.mulf %2693, %2689 : vector<12x128xf32>
    %2695 = arith.addf %2685, %2694 : vector<12x128xf32>
    %2696 = vector.broadcast %65 : f32 to vector<12x128xf32>
    %2697 = arith.mulf %2696, %2689 : vector<12x128xf32>
    %2698 = arith.addf %2688, %2697 : vector<12x128xf32>
    %2699 = vector.extract_strided_slice %2533 {offsets = [1, 0], sizes = [12, 128], strides = [1, 1]} : vector<16x128xf32> to vector<12x128xf32>
    %2700 = vector.broadcast %16 : f32 to vector<12x128xf32>
    %2701 = arith.mulf %2700, %2699 : vector<12x128xf32>
    %2702 = arith.addf %2692, %2701 : vector<12x128xf32>
    %2703 = vector.broadcast %41 : f32 to vector<12x128xf32>
    %2704 = arith.mulf %2703, %2699 : vector<12x128xf32>
    %2705 = arith.addf %2695, %2704 : vector<12x128xf32>
    %2706 = vector.broadcast %66 : f32 to vector<12x128xf32>
    %2707 = arith.mulf %2706, %2699 : vector<12x128xf32>
    %2708 = arith.addf %2698, %2707 : vector<12x128xf32>
    %2709 = vector.extract_strided_slice %2533 {offsets = [2, 0], sizes = [12, 128], strides = [1, 1]} : vector<16x128xf32> to vector<12x128xf32>
    %2710 = vector.broadcast %17 : f32 to vector<12x128xf32>
    %2711 = arith.mulf %2710, %2709 : vector<12x128xf32>
    %2712 = arith.addf %2702, %2711 : vector<12x128xf32>
    %2713 = vector.broadcast %42 : f32 to vector<12x128xf32>
    %2714 = arith.mulf %2713, %2709 : vector<12x128xf32>
    %2715 = arith.addf %2705, %2714 : vector<12x128xf32>
    %2716 = vector.broadcast %67 : f32 to vector<12x128xf32>
    %2717 = arith.mulf %2716, %2709 : vector<12x128xf32>
    %2718 = arith.addf %2708, %2717 : vector<12x128xf32>
    %2719 = vector.extract_strided_slice %2533 {offsets = [3, 0], sizes = [12, 128], strides = [1, 1]} : vector<16x128xf32> to vector<12x128xf32>
    %2720 = vector.broadcast %18 : f32 to vector<12x128xf32>
    %2721 = arith.mulf %2720, %2719 : vector<12x128xf32>
    %2722 = arith.addf %2712, %2721 : vector<12x128xf32>
    %2723 = vector.broadcast %43 : f32 to vector<12x128xf32>
    %2724 = arith.mulf %2723, %2719 : vector<12x128xf32>
    %2725 = arith.addf %2715, %2724 : vector<12x128xf32>
    %2726 = vector.broadcast %68 : f32 to vector<12x128xf32>
    %2727 = arith.mulf %2726, %2719 : vector<12x128xf32>
    %2728 = arith.addf %2718, %2727 : vector<12x128xf32>
    %2729 = vector.extract_strided_slice %2533 {offsets = [4, 0], sizes = [12, 128], strides = [1, 1]} : vector<16x128xf32> to vector<12x128xf32>
    %2730 = vector.broadcast %19 : f32 to vector<12x128xf32>
    %2731 = arith.mulf %2730, %2729 : vector<12x128xf32>
    %2732 = arith.addf %2722, %2731 : vector<12x128xf32>
    %2733 = vector.broadcast %44 : f32 to vector<12x128xf32>
    %2734 = arith.mulf %2733, %2729 : vector<12x128xf32>
    %2735 = arith.addf %2725, %2734 : vector<12x128xf32>
    %2736 = vector.broadcast %69 : f32 to vector<12x128xf32>
    %2737 = arith.mulf %2736, %2729 : vector<12x128xf32>
    %2738 = arith.addf %2728, %2737 : vector<12x128xf32>
    %2739 = vector.extract_strided_slice %2535 {offsets = [0, 0], sizes = [12, 128], strides = [1, 1]} : vector<16x128xf32> to vector<12x128xf32>
    %2740 = vector.broadcast %20 : f32 to vector<12x128xf32>
    %2741 = arith.mulf %2740, %2739 : vector<12x128xf32>
    %2742 = arith.addf %2732, %2741 : vector<12x128xf32>
    %2743 = vector.broadcast %45 : f32 to vector<12x128xf32>
    %2744 = arith.mulf %2743, %2739 : vector<12x128xf32>
    %2745 = arith.addf %2735, %2744 : vector<12x128xf32>
    %2746 = vector.broadcast %70 : f32 to vector<12x128xf32>
    %2747 = arith.mulf %2746, %2739 : vector<12x128xf32>
    %2748 = arith.addf %2738, %2747 : vector<12x128xf32>
    %2749 = vector.extract_strided_slice %2535 {offsets = [1, 0], sizes = [12, 128], strides = [1, 1]} : vector<16x128xf32> to vector<12x128xf32>
    %2750 = vector.broadcast %21 : f32 to vector<12x128xf32>
    %2751 = arith.mulf %2750, %2749 : vector<12x128xf32>
    %2752 = arith.addf %2742, %2751 : vector<12x128xf32>
    %2753 = vector.broadcast %46 : f32 to vector<12x128xf32>
    %2754 = arith.mulf %2753, %2749 : vector<12x128xf32>
    %2755 = arith.addf %2745, %2754 : vector<12x128xf32>
    %2756 = vector.broadcast %71 : f32 to vector<12x128xf32>
    %2757 = arith.mulf %2756, %2749 : vector<12x128xf32>
    %2758 = arith.addf %2748, %2757 : vector<12x128xf32>
    %2759 = vector.extract_strided_slice %2535 {offsets = [2, 0], sizes = [12, 128], strides = [1, 1]} : vector<16x128xf32> to vector<12x128xf32>
    %2760 = vector.broadcast %22 : f32 to vector<12x128xf32>
    %2761 = arith.mulf %2760, %2759 : vector<12x128xf32>
    %2762 = arith.addf %2752, %2761 : vector<12x128xf32>
    %2763 = vector.broadcast %47 : f32 to vector<12x128xf32>
    %2764 = arith.mulf %2763, %2759 : vector<12x128xf32>
    %2765 = arith.addf %2755, %2764 : vector<12x128xf32>
    %2766 = vector.broadcast %72 : f32 to vector<12x128xf32>
    %2767 = arith.mulf %2766, %2759 : vector<12x128xf32>
    %2768 = arith.addf %2758, %2767 : vector<12x128xf32>
    %2769 = vector.extract_strided_slice %2535 {offsets = [3, 0], sizes = [12, 128], strides = [1, 1]} : vector<16x128xf32> to vector<12x128xf32>
    %2770 = vector.broadcast %23 : f32 to vector<12x128xf32>
    %2771 = arith.mulf %2770, %2769 : vector<12x128xf32>
    %2772 = arith.addf %2762, %2771 : vector<12x128xf32>
    %2773 = vector.broadcast %48 : f32 to vector<12x128xf32>
    %2774 = arith.mulf %2773, %2769 : vector<12x128xf32>
    %2775 = arith.addf %2765, %2774 : vector<12x128xf32>
    %2776 = vector.broadcast %73 : f32 to vector<12x128xf32>
    %2777 = arith.mulf %2776, %2769 : vector<12x128xf32>
    %2778 = arith.addf %2768, %2777 : vector<12x128xf32>
    %2779 = vector.extract_strided_slice %2535 {offsets = [4, 0], sizes = [12, 128], strides = [1, 1]} : vector<16x128xf32> to vector<12x128xf32>
    %2780 = vector.broadcast %24 : f32 to vector<12x128xf32>
    %2781 = arith.mulf %2780, %2779 : vector<12x128xf32>
    %2782 = arith.addf %2772, %2781 : vector<12x128xf32>
    %2783 = vector.broadcast %49 : f32 to vector<12x128xf32>
    %2784 = arith.mulf %2783, %2779 : vector<12x128xf32>
    %2785 = arith.addf %2775, %2784 : vector<12x128xf32>
    %2786 = vector.broadcast %74 : f32 to vector<12x128xf32>
    %2787 = arith.mulf %2786, %2779 : vector<12x128xf32>
    %2788 = arith.addf %2778, %2787 : vector<12x128xf32>
    %c0_261 = arith.constant 0 : index
    %c9_262 = arith.constant 9 : index
    %c0_263 = arith.constant 0 : index
    %c0_264 = arith.constant 0 : index
    %2789 = vector.load %arg4[%c0_261, %c9_262, %c0_263, %c0_264] : memref<3x12x12x128xf32, #tpu.memory_space<vmem>>, vector<1x1x12x128xf32>
    %2790 = vector.shape_cast %2789 : vector<1x1x12x128xf32> to vector<12x128xf32>
    %2791 = vector.shape_cast %2782 : vector<12x128xf32> to vector<1x1x12x128xf32>
    tpu.vector_store %arg4[%c0_261, %c9_262, %c0_263, %c0_264], %2791 {strides = array<i32>} : memref<3x12x12x128xf32, #tpu.memory_space<vmem>>, vector<1x1x12x128xf32>,
    %c1_265 = arith.constant 1 : index
    %c9_266 = arith.constant 9 : index
    %c0_267 = arith.constant 0 : index
    %c0_268 = arith.constant 0 : index
    %2792 = vector.load %arg4[%c1_265, %c9_266, %c0_267, %c0_268] : memref<3x12x12x128xf32, #tpu.memory_space<vmem>>, vector<1x1x12x128xf32>
    %2793 = vector.shape_cast %2792 : vector<1x1x12x128xf32> to vector<12x128xf32>
    %2794 = vector.shape_cast %2785 : vector<12x128xf32> to vector<1x1x12x128xf32>
    tpu.vector_store %arg4[%c1_265, %c9_266, %c0_267, %c0_268], %2794 {strides = array<i32>} : memref<3x12x12x128xf32, #tpu.memory_space<vmem>>, vector<1x1x12x128xf32>,
    %c2_269 = arith.constant 2 : index
    %c9_270 = arith.constant 9 : index
    %c0_271 = arith.constant 0 : index
    %c0_272 = arith.constant 0 : index
    %2795 = vector.load %arg4[%c2_269, %c9_270, %c0_271, %c0_272] : memref<3x12x12x128xf32, #tpu.memory_space<vmem>>, vector<1x1x12x128xf32>
    %2796 = vector.shape_cast %2795 : vector<1x1x12x128xf32> to vector<12x128xf32>
    %2797 = vector.shape_cast %2788 : vector<12x128xf32> to vector<1x1x12x128xf32>
    tpu.vector_store %arg4[%c2_269, %c9_270, %c0_271, %c0_272], %2797 {strides = array<i32>} : memref<3x12x12x128xf32, #tpu.memory_space<vmem>>, vector<1x1x12x128xf32>,
    %c10_273 = arith.constant 10 : index
    %c0_274 = arith.constant 0 : index
    %c0_275 = arith.constant 0 : index
    %2798 = vector.load %arg1[%c10_273, %c0_274, %c0_275] : memref<16x16x128xf32, #tpu.memory_space<vmem>>, vector<1x16x128xf32>
    %2799 = vector.shape_cast %2798 : vector<1x16x128xf32> to vector<16x128xf32>
    %c11_276 = arith.constant 11 : index
    %c0_277 = arith.constant 0 : index
    %c0_278 = arith.constant 0 : index
    %2800 = vector.load %arg1[%c11_276, %c0_277, %c0_278] : memref<16x16x128xf32, #tpu.memory_space<vmem>>, vector<1x16x128xf32>
    %2801 = vector.shape_cast %2800 : vector<1x16x128xf32> to vector<16x128xf32>
    %c12_279 = arith.constant 12 : index
    %c0_280 = arith.constant 0 : index
    %c0_281 = arith.constant 0 : index
    %2802 = vector.load %arg1[%c12_279, %c0_280, %c0_281] : memref<16x16x128xf32, #tpu.memory_space<vmem>>, vector<1x16x128xf32>
    %2803 = vector.shape_cast %2802 : vector<1x16x128xf32> to vector<16x128xf32>
    %c13_282 = arith.constant 13 : index
    %c0_283 = arith.constant 0 : index
    %c0_284 = arith.constant 0 : index
    %2804 = vector.load %arg1[%c13_282, %c0_283, %c0_284] : memref<16x16x128xf32, #tpu.memory_space<vmem>>, vector<1x16x128xf32>
    %2805 = vector.shape_cast %2804 : vector<1x16x128xf32> to vector<16x128xf32>
    %c14_285 = arith.constant 14 : index
    %c0_286 = arith.constant 0 : index
    %c0_287 = arith.constant 0 : index
    %2806 = vector.load %arg1[%c14_285, %c0_286, %c0_287] : memref<16x16x128xf32, #tpu.memory_space<vmem>>, vector<1x16x128xf32>
    %2807 = vector.shape_cast %2806 : vector<1x16x128xf32> to vector<16x128xf32>
    %2808 = vector.broadcast %75 : f32 to vector<12x128xf32>
    %2809 = vector.broadcast %76 : f32 to vector<12x128xf32>
    %2810 = vector.broadcast %77 : f32 to vector<12x128xf32>
    %2811 = vector.extract_strided_slice %2799 {offsets = [0, 0], sizes = [12, 128], strides = [1, 1]} : vector<16x128xf32> to vector<12x128xf32>
    %2812 = vector.broadcast %0 : f32 to vector<12x128xf32>
    %2813 = arith.mulf %2812, %2811 : vector<12x128xf32>
    %2814 = arith.addf %2808, %2813 : vector<12x128xf32>
    %2815 = vector.broadcast %25 : f32 to vector<12x128xf32>
    %2816 = arith.mulf %2815, %2811 : vector<12x128xf32>
    %2817 = arith.addf %2809, %2816 : vector<12x128xf32>
    %2818 = vector.broadcast %50 : f32 to vector<12x128xf32>
    %2819 = arith.mulf %2818, %2811 : vector<12x128xf32>
    %2820 = arith.addf %2810, %2819 : vector<12x128xf32>
    %2821 = vector.extract_strided_slice %2799 {offsets = [1, 0], sizes = [12, 128], strides = [1, 1]} : vector<16x128xf32> to vector<12x128xf32>
    %2822 = vector.broadcast %1 : f32 to vector<12x128xf32>
    %2823 = arith.mulf %2822, %2821 : vector<12x128xf32>
    %2824 = arith.addf %2814, %2823 : vector<12x128xf32>
    %2825 = vector.broadcast %26 : f32 to vector<12x128xf32>
    %2826 = arith.mulf %2825, %2821 : vector<12x128xf32>
    %2827 = arith.addf %2817, %2826 : vector<12x128xf32>
    %2828 = vector.broadcast %51 : f32 to vector<12x128xf32>
    %2829 = arith.mulf %2828, %2821 : vector<12x128xf32>
    %2830 = arith.addf %2820, %2829 : vector<12x128xf32>
    %2831 = vector.extract_strided_slice %2799 {offsets = [2, 0], sizes = [12, 128], strides = [1, 1]} : vector<16x128xf32> to vector<12x128xf32>
    %2832 = vector.broadcast %2 : f32 to vector<12x128xf32>
    %2833 = arith.mulf %2832, %2831 : vector<12x128xf32>
    %2834 = arith.addf %2824, %2833 : vector<12x128xf32>
    %2835 = vector.broadcast %27 : f32 to vector<12x128xf32>
    %2836 = arith.mulf %2835, %2831 : vector<12x128xf32>
    %2837 = arith.addf %2827, %2836 : vector<12x128xf32>
    %2838 = vector.broadcast %52 : f32 to vector<12x128xf32>
    %2839 = arith.mulf %2838, %2831 : vector<12x128xf32>
    %2840 = arith.addf %2830, %2839 : vector<12x128xf32>
    %2841 = vector.extract_strided_slice %2799 {offsets = [3, 0], sizes = [12, 128], strides = [1, 1]} : vector<16x128xf32> to vector<12x128xf32>
    %2842 = vector.broadcast %3 : f32 to vector<12x128xf32>
    %2843 = arith.mulf %2842, %2841 : vector<12x128xf32>
    %2844 = arith.addf %2834, %2843 : vector<12x128xf32>
    %2845 = vector.broadcast %28 : f32 to vector<12x128xf32>
    %2846 = arith.mulf %2845, %2841 : vector<12x128xf32>
    %2847 = arith.addf %2837, %2846 : vector<12x128xf32>
    %2848 = vector.broadcast %53 : f32 to vector<12x128xf32>
    %2849 = arith.mulf %2848, %2841 : vector<12x128xf32>
    %2850 = arith.addf %2840, %2849 : vector<12x128xf32>
    %2851 = vector.extract_strided_slice %2799 {offsets = [4, 0], sizes = [12, 128], strides = [1, 1]} : vector<16x128xf32> to vector<12x128xf32>
    %2852 = vector.broadcast %4 : f32 to vector<12x128xf32>
    %2853 = arith.mulf %2852, %2851 : vector<12x128xf32>
    %2854 = arith.addf %2844, %2853 : vector<12x128xf32>
    %2855 = vector.broadcast %29 : f32 to vector<12x128xf32>
    %2856 = arith.mulf %2855, %2851 : vector<12x128xf32>
    %2857 = arith.addf %2847, %2856 : vector<12x128xf32>
    %2858 = vector.broadcast %54 : f32 to vector<12x128xf32>
    %2859 = arith.mulf %2858, %2851 : vector<12x128xf32>
    %2860 = arith.addf %2850, %2859 : vector<12x128xf32>
    %2861 = vector.extract_strided_slice %2801 {offsets = [0, 0], sizes = [12, 128], strides = [1, 1]} : vector<16x128xf32> to vector<12x128xf32>
    %2862 = vector.broadcast %5 : f32 to vector<12x128xf32>
    %2863 = arith.mulf %2862, %2861 : vector<12x128xf32>
    %2864 = arith.addf %2854, %2863 : vector<12x128xf32>
    %2865 = vector.broadcast %30 : f32 to vector<12x128xf32>
    %2866 = arith.mulf %2865, %2861 : vector<12x128xf32>
    %2867 = arith.addf %2857, %2866 : vector<12x128xf32>
    %2868 = vector.broadcast %55 : f32 to vector<12x128xf32>
    %2869 = arith.mulf %2868, %2861 : vector<12x128xf32>
    %2870 = arith.addf %2860, %2869 : vector<12x128xf32>
    %2871 = vector.extract_strided_slice %2801 {offsets = [1, 0], sizes = [12, 128], strides = [1, 1]} : vector<16x128xf32> to vector<12x128xf32>
    %2872 = vector.broadcast %6 : f32 to vector<12x128xf32>
    %2873 = arith.mulf %2872, %2871 : vector<12x128xf32>
    %2874 = arith.addf %2864, %2873 : vector<12x128xf32>
    %2875 = vector.broadcast %31 : f32 to vector<12x128xf32>
    %2876 = arith.mulf %2875, %2871 : vector<12x128xf32>
    %2877 = arith.addf %2867, %2876 : vector<12x128xf32>
    %2878 = vector.broadcast %56 : f32 to vector<12x128xf32>
    %2879 = arith.mulf %2878, %2871 : vector<12x128xf32>
    %2880 = arith.addf %2870, %2879 : vector<12x128xf32>
    %2881 = vector.extract_strided_slice %2801 {offsets = [2, 0], sizes = [12, 128], strides = [1, 1]} : vector<16x128xf32> to vector<12x128xf32>
    %2882 = vector.broadcast %7 : f32 to vector<12x128xf32>
    %2883 = arith.mulf %2882, %2881 : vector<12x128xf32>
    %2884 = arith.addf %2874, %2883 : vector<12x128xf32>
    %2885 = vector.broadcast %32 : f32 to vector<12x128xf32>
    %2886 = arith.mulf %2885, %2881 : vector<12x128xf32>
    %2887 = arith.addf %2877, %2886 : vector<12x128xf32>
    %2888 = vector.broadcast %57 : f32 to vector<12x128xf32>
    %2889 = arith.mulf %2888, %2881 : vector<12x128xf32>
    %2890 = arith.addf %2880, %2889 : vector<12x128xf32>
    %2891 = vector.extract_strided_slice %2801 {offsets = [3, 0], sizes = [12, 128], strides = [1, 1]} : vector<16x128xf32> to vector<12x128xf32>
    %2892 = vector.broadcast %8 : f32 to vector<12x128xf32>
    %2893 = arith.mulf %2892, %2891 : vector<12x128xf32>
    %2894 = arith.addf %2884, %2893 : vector<12x128xf32>
    %2895 = vector.broadcast %33 : f32 to vector<12x128xf32>
    %2896 = arith.mulf %2895, %2891 : vector<12x128xf32>
    %2897 = arith.addf %2887, %2896 : vector<12x128xf32>
    %2898 = vector.broadcast %58 : f32 to vector<12x128xf32>
    %2899 = arith.mulf %2898, %2891 : vector<12x128xf32>
    %2900 = arith.addf %2890, %2899 : vector<12x128xf32>
    %2901 = vector.extract_strided_slice %2801 {offsets = [4, 0], sizes = [12, 128], strides = [1, 1]} : vector<16x128xf32> to vector<12x128xf32>
    %2902 = vector.broadcast %9 : f32 to vector<12x128xf32>
    %2903 = arith.mulf %2902, %2901 : vector<12x128xf32>
    %2904 = arith.addf %2894, %2903 : vector<12x128xf32>
    %2905 = vector.broadcast %34 : f32 to vector<12x128xf32>
    %2906 = arith.mulf %2905, %2901 : vector<12x128xf32>
    %2907 = arith.addf %2897, %2906 : vector<12x128xf32>
    %2908 = vector.broadcast %59 : f32 to vector<12x128xf32>
    %2909 = arith.mulf %2908, %2901 : vector<12x128xf32>
    %2910 = arith.addf %2900, %2909 : vector<12x128xf32>
    %2911 = vector.extract_strided_slice %2803 {offsets = [0, 0], sizes = [12, 128], strides = [1, 1]} : vector<16x128xf32> to vector<12x128xf32>
    %2912 = vector.broadcast %10 : f32 to vector<12x128xf32>
    %2913 = arith.mulf %2912, %2911 : vector<12x128xf32>
    %2914 = arith.addf %2904, %2913 : vector<12x128xf32>
    %2915 = vector.broadcast %35 : f32 to vector<12x128xf32>
    %2916 = arith.mulf %2915, %2911 : vector<12x128xf32>
    %2917 = arith.addf %2907, %2916 : vector<12x128xf32>
    %2918 = vector.broadcast %60 : f32 to vector<12x128xf32>
    %2919 = arith.mulf %2918, %2911 : vector<12x128xf32>
    %2920 = arith.addf %2910, %2919 : vector<12x128xf32>
    %2921 = vector.extract_strided_slice %2803 {offsets = [1, 0], sizes = [12, 128], strides = [1, 1]} : vector<16x128xf32> to vector<12x128xf32>
    %2922 = vector.broadcast %11 : f32 to vector<12x128xf32>
    %2923 = arith.mulf %2922, %2921 : vector<12x128xf32>
    %2924 = arith.addf %2914, %2923 : vector<12x128xf32>
    %2925 = vector.broadcast %36 : f32 to vector<12x128xf32>
    %2926 = arith.mulf %2925, %2921 : vector<12x128xf32>
    %2927 = arith.addf %2917, %2926 : vector<12x128xf32>
    %2928 = vector.broadcast %61 : f32 to vector<12x128xf32>
    %2929 = arith.mulf %2928, %2921 : vector<12x128xf32>
    %2930 = arith.addf %2920, %2929 : vector<12x128xf32>
    %2931 = vector.extract_strided_slice %2803 {offsets = [2, 0], sizes = [12, 128], strides = [1, 1]} : vector<16x128xf32> to vector<12x128xf32>
    %2932 = vector.broadcast %12 : f32 to vector<12x128xf32>
    %2933 = arith.mulf %2932, %2931 : vector<12x128xf32>
    %2934 = arith.addf %2924, %2933 : vector<12x128xf32>
    %2935 = vector.broadcast %37 : f32 to vector<12x128xf32>
    %2936 = arith.mulf %2935, %2931 : vector<12x128xf32>
    %2937 = arith.addf %2927, %2936 : vector<12x128xf32>
    %2938 = vector.broadcast %62 : f32 to vector<12x128xf32>
    %2939 = arith.mulf %2938, %2931 : vector<12x128xf32>
    %2940 = arith.addf %2930, %2939 : vector<12x128xf32>
    %2941 = vector.extract_strided_slice %2803 {offsets = [3, 0], sizes = [12, 128], strides = [1, 1]} : vector<16x128xf32> to vector<12x128xf32>
    %2942 = vector.broadcast %13 : f32 to vector<12x128xf32>
    %2943 = arith.mulf %2942, %2941 : vector<12x128xf32>
    %2944 = arith.addf %2934, %2943 : vector<12x128xf32>
    %2945 = vector.broadcast %38 : f32 to vector<12x128xf32>
    %2946 = arith.mulf %2945, %2941 : vector<12x128xf32>
    %2947 = arith.addf %2937, %2946 : vector<12x128xf32>
    %2948 = vector.broadcast %63 : f32 to vector<12x128xf32>
    %2949 = arith.mulf %2948, %2941 : vector<12x128xf32>
    %2950 = arith.addf %2940, %2949 : vector<12x128xf32>
    %2951 = vector.extract_strided_slice %2803 {offsets = [4, 0], sizes = [12, 128], strides = [1, 1]} : vector<16x128xf32> to vector<12x128xf32>
    %2952 = vector.broadcast %14 : f32 to vector<12x128xf32>
    %2953 = arith.mulf %2952, %2951 : vector<12x128xf32>
    %2954 = arith.addf %2944, %2953 : vector<12x128xf32>
    %2955 = vector.broadcast %39 : f32 to vector<12x128xf32>
    %2956 = arith.mulf %2955, %2951 : vector<12x128xf32>
    %2957 = arith.addf %2947, %2956 : vector<12x128xf32>
    %2958 = vector.broadcast %64 : f32 to vector<12x128xf32>
    %2959 = arith.mulf %2958, %2951 : vector<12x128xf32>
    %2960 = arith.addf %2950, %2959 : vector<12x128xf32>
    %2961 = vector.extract_strided_slice %2805 {offsets = [0, 0], sizes = [12, 128], strides = [1, 1]} : vector<16x128xf32> to vector<12x128xf32>
    %2962 = vector.broadcast %15 : f32 to vector<12x128xf32>
    %2963 = arith.mulf %2962, %2961 : vector<12x128xf32>
    %2964 = arith.addf %2954, %2963 : vector<12x128xf32>
    %2965 = vector.broadcast %40 : f32 to vector<12x128xf32>
    %2966 = arith.mulf %2965, %2961 : vector<12x128xf32>
    %2967 = arith.addf %2957, %2966 : vector<12x128xf32>
    %2968 = vector.broadcast %65 : f32 to vector<12x128xf32>
    %2969 = arith.mulf %2968, %2961 : vector<12x128xf32>
    %2970 = arith.addf %2960, %2969 : vector<12x128xf32>
    %2971 = vector.extract_strided_slice %2805 {offsets = [1, 0], sizes = [12, 128], strides = [1, 1]} : vector<16x128xf32> to vector<12x128xf32>
    %2972 = vector.broadcast %16 : f32 to vector<12x128xf32>
    %2973 = arith.mulf %2972, %2971 : vector<12x128xf32>
    %2974 = arith.addf %2964, %2973 : vector<12x128xf32>
    %2975 = vector.broadcast %41 : f32 to vector<12x128xf32>
    %2976 = arith.mulf %2975, %2971 : vector<12x128xf32>
    %2977 = arith.addf %2967, %2976 : vector<12x128xf32>
    %2978 = vector.broadcast %66 : f32 to vector<12x128xf32>
    %2979 = arith.mulf %2978, %2971 : vector<12x128xf32>
    %2980 = arith.addf %2970, %2979 : vector<12x128xf32>
    %2981 = vector.extract_strided_slice %2805 {offsets = [2, 0], sizes = [12, 128], strides = [1, 1]} : vector<16x128xf32> to vector<12x128xf32>
    %2982 = vector.broadcast %17 : f32 to vector<12x128xf32>
    %2983 = arith.mulf %2982, %2981 : vector<12x128xf32>
    %2984 = arith.addf %2974, %2983 : vector<12x128xf32>
    %2985 = vector.broadcast %42 : f32 to vector<12x128xf32>
    %2986 = arith.mulf %2985, %2981 : vector<12x128xf32>
    %2987 = arith.addf %2977, %2986 : vector<12x128xf32>
    %2988 = vector.broadcast %67 : f32 to vector<12x128xf32>
    %2989 = arith.mulf %2988, %2981 : vector<12x128xf32>
    %2990 = arith.addf %2980, %2989 : vector<12x128xf32>
    %2991 = vector.extract_strided_slice %2805 {offsets = [3, 0], sizes = [12, 128], strides = [1, 1]} : vector<16x128xf32> to vector<12x128xf32>
    %2992 = vector.broadcast %18 : f32 to vector<12x128xf32>
    %2993 = arith.mulf %2992, %2991 : vector<12x128xf32>
    %2994 = arith.addf %2984, %2993 : vector<12x128xf32>
    %2995 = vector.broadcast %43 : f32 to vector<12x128xf32>
    %2996 = arith.mulf %2995, %2991 : vector<12x128xf32>
    %2997 = arith.addf %2987, %2996 : vector<12x128xf32>
    %2998 = vector.broadcast %68 : f32 to vector<12x128xf32>
    %2999 = arith.mulf %2998, %2991 : vector<12x128xf32>
    %3000 = arith.addf %2990, %2999 : vector<12x128xf32>
    %3001 = vector.extract_strided_slice %2805 {offsets = [4, 0], sizes = [12, 128], strides = [1, 1]} : vector<16x128xf32> to vector<12x128xf32>
    %3002 = vector.broadcast %19 : f32 to vector<12x128xf32>
    %3003 = arith.mulf %3002, %3001 : vector<12x128xf32>
    %3004 = arith.addf %2994, %3003 : vector<12x128xf32>
    %3005 = vector.broadcast %44 : f32 to vector<12x128xf32>
    %3006 = arith.mulf %3005, %3001 : vector<12x128xf32>
    %3007 = arith.addf %2997, %3006 : vector<12x128xf32>
    %3008 = vector.broadcast %69 : f32 to vector<12x128xf32>
    %3009 = arith.mulf %3008, %3001 : vector<12x128xf32>
    %3010 = arith.addf %3000, %3009 : vector<12x128xf32>
    %3011 = vector.extract_strided_slice %2807 {offsets = [0, 0], sizes = [12, 128], strides = [1, 1]} : vector<16x128xf32> to vector<12x128xf32>
    %3012 = vector.broadcast %20 : f32 to vector<12x128xf32>
    %3013 = arith.mulf %3012, %3011 : vector<12x128xf32>
    %3014 = arith.addf %3004, %3013 : vector<12x128xf32>
    %3015 = vector.broadcast %45 : f32 to vector<12x128xf32>
    %3016 = arith.mulf %3015, %3011 : vector<12x128xf32>
    %3017 = arith.addf %3007, %3016 : vector<12x128xf32>
    %3018 = vector.broadcast %70 : f32 to vector<12x128xf32>
    %3019 = arith.mulf %3018, %3011 : vector<12x128xf32>
    %3020 = arith.addf %3010, %3019 : vector<12x128xf32>
    %3021 = vector.extract_strided_slice %2807 {offsets = [1, 0], sizes = [12, 128], strides = [1, 1]} : vector<16x128xf32> to vector<12x128xf32>
    %3022 = vector.broadcast %21 : f32 to vector<12x128xf32>
    %3023 = arith.mulf %3022, %3021 : vector<12x128xf32>
    %3024 = arith.addf %3014, %3023 : vector<12x128xf32>
    %3025 = vector.broadcast %46 : f32 to vector<12x128xf32>
    %3026 = arith.mulf %3025, %3021 : vector<12x128xf32>
    %3027 = arith.addf %3017, %3026 : vector<12x128xf32>
    %3028 = vector.broadcast %71 : f32 to vector<12x128xf32>
    %3029 = arith.mulf %3028, %3021 : vector<12x128xf32>
    %3030 = arith.addf %3020, %3029 : vector<12x128xf32>
    %3031 = vector.extract_strided_slice %2807 {offsets = [2, 0], sizes = [12, 128], strides = [1, 1]} : vector<16x128xf32> to vector<12x128xf32>
    %3032 = vector.broadcast %22 : f32 to vector<12x128xf32>
    %3033 = arith.mulf %3032, %3031 : vector<12x128xf32>
    %3034 = arith.addf %3024, %3033 : vector<12x128xf32>
    %3035 = vector.broadcast %47 : f32 to vector<12x128xf32>
    %3036 = arith.mulf %3035, %3031 : vector<12x128xf32>
    %3037 = arith.addf %3027, %3036 : vector<12x128xf32>
    %3038 = vector.broadcast %72 : f32 to vector<12x128xf32>
    %3039 = arith.mulf %3038, %3031 : vector<12x128xf32>
    %3040 = arith.addf %3030, %3039 : vector<12x128xf32>
    %3041 = vector.extract_strided_slice %2807 {offsets = [3, 0], sizes = [12, 128], strides = [1, 1]} : vector<16x128xf32> to vector<12x128xf32>
    %3042 = vector.broadcast %23 : f32 to vector<12x128xf32>
    %3043 = arith.mulf %3042, %3041 : vector<12x128xf32>
    %3044 = arith.addf %3034, %3043 : vector<12x128xf32>
    %3045 = vector.broadcast %48 : f32 to vector<12x128xf32>
    %3046 = arith.mulf %3045, %3041 : vector<12x128xf32>
    %3047 = arith.addf %3037, %3046 : vector<12x128xf32>
    %3048 = vector.broadcast %73 : f32 to vector<12x128xf32>
    %3049 = arith.mulf %3048, %3041 : vector<12x128xf32>
    %3050 = arith.addf %3040, %3049 : vector<12x128xf32>
    %3051 = vector.extract_strided_slice %2807 {offsets = [4, 0], sizes = [12, 128], strides = [1, 1]} : vector<16x128xf32> to vector<12x128xf32>
    %3052 = vector.broadcast %24 : f32 to vector<12x128xf32>
    %3053 = arith.mulf %3052, %3051 : vector<12x128xf32>
    %3054 = arith.addf %3044, %3053 : vector<12x128xf32>
    %3055 = vector.broadcast %49 : f32 to vector<12x128xf32>
    %3056 = arith.mulf %3055, %3051 : vector<12x128xf32>
    %3057 = arith.addf %3047, %3056 : vector<12x128xf32>
    %3058 = vector.broadcast %74 : f32 to vector<12x128xf32>
    %3059 = arith.mulf %3058, %3051 : vector<12x128xf32>
    %3060 = arith.addf %3050, %3059 : vector<12x128xf32>
    %c0_288 = arith.constant 0 : index
    %c10_289 = arith.constant 10 : index
    %c0_290 = arith.constant 0 : index
    %c0_291 = arith.constant 0 : index
    %3061 = vector.load %arg4[%c0_288, %c10_289, %c0_290, %c0_291] : memref<3x12x12x128xf32, #tpu.memory_space<vmem>>, vector<1x1x12x128xf32>
    %3062 = vector.shape_cast %3061 : vector<1x1x12x128xf32> to vector<12x128xf32>
    %3063 = vector.shape_cast %3054 : vector<12x128xf32> to vector<1x1x12x128xf32>
    tpu.vector_store %arg4[%c0_288, %c10_289, %c0_290, %c0_291], %3063 {strides = array<i32>} : memref<3x12x12x128xf32, #tpu.memory_space<vmem>>, vector<1x1x12x128xf32>,
    %c1_292 = arith.constant 1 : index
    %c10_293 = arith.constant 10 : index
    %c0_294 = arith.constant 0 : index
    %c0_295 = arith.constant 0 : index
    %3064 = vector.load %arg4[%c1_292, %c10_293, %c0_294, %c0_295] : memref<3x12x12x128xf32, #tpu.memory_space<vmem>>, vector<1x1x12x128xf32>
    %3065 = vector.shape_cast %3064 : vector<1x1x12x128xf32> to vector<12x128xf32>
    %3066 = vector.shape_cast %3057 : vector<12x128xf32> to vector<1x1x12x128xf32>
    tpu.vector_store %arg4[%c1_292, %c10_293, %c0_294, %c0_295], %3066 {strides = array<i32>} : memref<3x12x12x128xf32, #tpu.memory_space<vmem>>, vector<1x1x12x128xf32>,
    %c2_296 = arith.constant 2 : index
    %c10_297 = arith.constant 10 : index
    %c0_298 = arith.constant 0 : index
    %c0_299 = arith.constant 0 : index
    %3067 = vector.load %arg4[%c2_296, %c10_297, %c0_298, %c0_299] : memref<3x12x12x128xf32, #tpu.memory_space<vmem>>, vector<1x1x12x128xf32>
    %3068 = vector.shape_cast %3067 : vector<1x1x12x128xf32> to vector<12x128xf32>
    %3069 = vector.shape_cast %3060 : vector<12x128xf32> to vector<1x1x12x128xf32>
    tpu.vector_store %arg4[%c2_296, %c10_297, %c0_298, %c0_299], %3069 {strides = array<i32>} : memref<3x12x12x128xf32, #tpu.memory_space<vmem>>, vector<1x1x12x128xf32>,
    %c11_300 = arith.constant 11 : index
    %c0_301 = arith.constant 0 : index
    %c0_302 = arith.constant 0 : index
    %3070 = vector.load %arg1[%c11_300, %c0_301, %c0_302] : memref<16x16x128xf32, #tpu.memory_space<vmem>>, vector<1x16x128xf32>
    %3071 = vector.shape_cast %3070 : vector<1x16x128xf32> to vector<16x128xf32>
    %c12_303 = arith.constant 12 : index
    %c0_304 = arith.constant 0 : index
    %c0_305 = arith.constant 0 : index
    %3072 = vector.load %arg1[%c12_303, %c0_304, %c0_305] : memref<16x16x128xf32, #tpu.memory_space<vmem>>, vector<1x16x128xf32>
    %3073 = vector.shape_cast %3072 : vector<1x16x128xf32> to vector<16x128xf32>
    %c13_306 = arith.constant 13 : index
    %c0_307 = arith.constant 0 : index
    %c0_308 = arith.constant 0 : index
    %3074 = vector.load %arg1[%c13_306, %c0_307, %c0_308] : memref<16x16x128xf32, #tpu.memory_space<vmem>>, vector<1x16x128xf32>
    %3075 = vector.shape_cast %3074 : vector<1x16x128xf32> to vector<16x128xf32>
    %c14_309 = arith.constant 14 : index
    %c0_310 = arith.constant 0 : index
    %c0_311 = arith.constant 0 : index
    %3076 = vector.load %arg1[%c14_309, %c0_310, %c0_311] : memref<16x16x128xf32, #tpu.memory_space<vmem>>, vector<1x16x128xf32>
    %3077 = vector.shape_cast %3076 : vector<1x16x128xf32> to vector<16x128xf32>
    %c15_312 = arith.constant 15 : index
    %c0_313 = arith.constant 0 : index
    %c0_314 = arith.constant 0 : index
    %3078 = vector.load %arg1[%c15_312, %c0_313, %c0_314] : memref<16x16x128xf32, #tpu.memory_space<vmem>>, vector<1x16x128xf32>
    %3079 = vector.shape_cast %3078 : vector<1x16x128xf32> to vector<16x128xf32>
    %3080 = vector.broadcast %75 : f32 to vector<12x128xf32>
    %3081 = vector.broadcast %76 : f32 to vector<12x128xf32>
    %3082 = vector.broadcast %77 : f32 to vector<12x128xf32>
    %3083 = vector.extract_strided_slice %3071 {offsets = [0, 0], sizes = [12, 128], strides = [1, 1]} : vector<16x128xf32> to vector<12x128xf32>
    %3084 = vector.broadcast %0 : f32 to vector<12x128xf32>
    %3085 = arith.mulf %3084, %3083 : vector<12x128xf32>
    %3086 = arith.addf %3080, %3085 : vector<12x128xf32>
    %3087 = vector.broadcast %25 : f32 to vector<12x128xf32>
    %3088 = arith.mulf %3087, %3083 : vector<12x128xf32>
    %3089 = arith.addf %3081, %3088 : vector<12x128xf32>
    %3090 = vector.broadcast %50 : f32 to vector<12x128xf32>
    %3091 = arith.mulf %3090, %3083 : vector<12x128xf32>
    %3092 = arith.addf %3082, %3091 : vector<12x128xf32>
    %3093 = vector.extract_strided_slice %3071 {offsets = [1, 0], sizes = [12, 128], strides = [1, 1]} : vector<16x128xf32> to vector<12x128xf32>
    %3094 = vector.broadcast %1 : f32 to vector<12x128xf32>
    %3095 = arith.mulf %3094, %3093 : vector<12x128xf32>
    %3096 = arith.addf %3086, %3095 : vector<12x128xf32>
    %3097 = vector.broadcast %26 : f32 to vector<12x128xf32>
    %3098 = arith.mulf %3097, %3093 : vector<12x128xf32>
    %3099 = arith.addf %3089, %3098 : vector<12x128xf32>
    %3100 = vector.broadcast %51 : f32 to vector<12x128xf32>
    %3101 = arith.mulf %3100, %3093 : vector<12x128xf32>
    %3102 = arith.addf %3092, %3101 : vector<12x128xf32>
    %3103 = vector.extract_strided_slice %3071 {offsets = [2, 0], sizes = [12, 128], strides = [1, 1]} : vector<16x128xf32> to vector<12x128xf32>
    %3104 = vector.broadcast %2 : f32 to vector<12x128xf32>
    %3105 = arith.mulf %3104, %3103 : vector<12x128xf32>
    %3106 = arith.addf %3096, %3105 : vector<12x128xf32>
    %3107 = vector.broadcast %27 : f32 to vector<12x128xf32>
    %3108 = arith.mulf %3107, %3103 : vector<12x128xf32>
    %3109 = arith.addf %3099, %3108 : vector<12x128xf32>
    %3110 = vector.broadcast %52 : f32 to vector<12x128xf32>
    %3111 = arith.mulf %3110, %3103 : vector<12x128xf32>
    %3112 = arith.addf %3102, %3111 : vector<12x128xf32>
    %3113 = vector.extract_strided_slice %3071 {offsets = [3, 0], sizes = [12, 128], strides = [1, 1]} : vector<16x128xf32> to vector<12x128xf32>
    %3114 = vector.broadcast %3 : f32 to vector<12x128xf32>
    %3115 = arith.mulf %3114, %3113 : vector<12x128xf32>
    %3116 = arith.addf %3106, %3115 : vector<12x128xf32>
    %3117 = vector.broadcast %28 : f32 to vector<12x128xf32>
    %3118 = arith.mulf %3117, %3113 : vector<12x128xf32>
    %3119 = arith.addf %3109, %3118 : vector<12x128xf32>
    %3120 = vector.broadcast %53 : f32 to vector<12x128xf32>
    %3121 = arith.mulf %3120, %3113 : vector<12x128xf32>
    %3122 = arith.addf %3112, %3121 : vector<12x128xf32>
    %3123 = vector.extract_strided_slice %3071 {offsets = [4, 0], sizes = [12, 128], strides = [1, 1]} : vector<16x128xf32> to vector<12x128xf32>
    %3124 = vector.broadcast %4 : f32 to vector<12x128xf32>
    %3125 = arith.mulf %3124, %3123 : vector<12x128xf32>
    %3126 = arith.addf %3116, %3125 : vector<12x128xf32>
    %3127 = vector.broadcast %29 : f32 to vector<12x128xf32>
    %3128 = arith.mulf %3127, %3123 : vector<12x128xf32>
    %3129 = arith.addf %3119, %3128 : vector<12x128xf32>
    %3130 = vector.broadcast %54 : f32 to vector<12x128xf32>
    %3131 = arith.mulf %3130, %3123 : vector<12x128xf32>
    %3132 = arith.addf %3122, %3131 : vector<12x128xf32>
    %3133 = vector.extract_strided_slice %3073 {offsets = [0, 0], sizes = [12, 128], strides = [1, 1]} : vector<16x128xf32> to vector<12x128xf32>
    %3134 = vector.broadcast %5 : f32 to vector<12x128xf32>
    %3135 = arith.mulf %3134, %3133 : vector<12x128xf32>
    %3136 = arith.addf %3126, %3135 : vector<12x128xf32>
    %3137 = vector.broadcast %30 : f32 to vector<12x128xf32>
    %3138 = arith.mulf %3137, %3133 : vector<12x128xf32>
    %3139 = arith.addf %3129, %3138 : vector<12x128xf32>
    %3140 = vector.broadcast %55 : f32 to vector<12x128xf32>
    %3141 = arith.mulf %3140, %3133 : vector<12x128xf32>
    %3142 = arith.addf %3132, %3141 : vector<12x128xf32>
    %3143 = vector.extract_strided_slice %3073 {offsets = [1, 0], sizes = [12, 128], strides = [1, 1]} : vector<16x128xf32> to vector<12x128xf32>
    %3144 = vector.broadcast %6 : f32 to vector<12x128xf32>
    %3145 = arith.mulf %3144, %3143 : vector<12x128xf32>
    %3146 = arith.addf %3136, %3145 : vector<12x128xf32>
    %3147 = vector.broadcast %31 : f32 to vector<12x128xf32>
    %3148 = arith.mulf %3147, %3143 : vector<12x128xf32>
    %3149 = arith.addf %3139, %3148 : vector<12x128xf32>
    %3150 = vector.broadcast %56 : f32 to vector<12x128xf32>
    %3151 = arith.mulf %3150, %3143 : vector<12x128xf32>
    %3152 = arith.addf %3142, %3151 : vector<12x128xf32>
    %3153 = vector.extract_strided_slice %3073 {offsets = [2, 0], sizes = [12, 128], strides = [1, 1]} : vector<16x128xf32> to vector<12x128xf32>
    %3154 = vector.broadcast %7 : f32 to vector<12x128xf32>
    %3155 = arith.mulf %3154, %3153 : vector<12x128xf32>
    %3156 = arith.addf %3146, %3155 : vector<12x128xf32>
    %3157 = vector.broadcast %32 : f32 to vector<12x128xf32>
    %3158 = arith.mulf %3157, %3153 : vector<12x128xf32>
    %3159 = arith.addf %3149, %3158 : vector<12x128xf32>
    %3160 = vector.broadcast %57 : f32 to vector<12x128xf32>
    %3161 = arith.mulf %3160, %3153 : vector<12x128xf32>
    %3162 = arith.addf %3152, %3161 : vector<12x128xf32>
    %3163 = vector.extract_strided_slice %3073 {offsets = [3, 0], sizes = [12, 128], strides = [1, 1]} : vector<16x128xf32> to vector<12x128xf32>
    %3164 = vector.broadcast %8 : f32 to vector<12x128xf32>
    %3165 = arith.mulf %3164, %3163 : vector<12x128xf32>
    %3166 = arith.addf %3156, %3165 : vector<12x128xf32>
    %3167 = vector.broadcast %33 : f32 to vector<12x128xf32>
    %3168 = arith.mulf %3167, %3163 : vector<12x128xf32>
    %3169 = arith.addf %3159, %3168 : vector<12x128xf32>
    %3170 = vector.broadcast %58 : f32 to vector<12x128xf32>
    %3171 = arith.mulf %3170, %3163 : vector<12x128xf32>
    %3172 = arith.addf %3162, %3171 : vector<12x128xf32>
    %3173 = vector.extract_strided_slice %3073 {offsets = [4, 0], sizes = [12, 128], strides = [1, 1]} : vector<16x128xf32> to vector<12x128xf32>
    %3174 = vector.broadcast %9 : f32 to vector<12x128xf32>
    %3175 = arith.mulf %3174, %3173 : vector<12x128xf32>
    %3176 = arith.addf %3166, %3175 : vector<12x128xf32>
    %3177 = vector.broadcast %34 : f32 to vector<12x128xf32>
    %3178 = arith.mulf %3177, %3173 : vector<12x128xf32>
    %3179 = arith.addf %3169, %3178 : vector<12x128xf32>
    %3180 = vector.broadcast %59 : f32 to vector<12x128xf32>
    %3181 = arith.mulf %3180, %3173 : vector<12x128xf32>
    %3182 = arith.addf %3172, %3181 : vector<12x128xf32>
    %3183 = vector.extract_strided_slice %3075 {offsets = [0, 0], sizes = [12, 128], strides = [1, 1]} : vector<16x128xf32> to vector<12x128xf32>
    %3184 = vector.broadcast %10 : f32 to vector<12x128xf32>
    %3185 = arith.mulf %3184, %3183 : vector<12x128xf32>
    %3186 = arith.addf %3176, %3185 : vector<12x128xf32>
    %3187 = vector.broadcast %35 : f32 to vector<12x128xf32>
    %3188 = arith.mulf %3187, %3183 : vector<12x128xf32>
    %3189 = arith.addf %3179, %3188 : vector<12x128xf32>
    %3190 = vector.broadcast %60 : f32 to vector<12x128xf32>
    %3191 = arith.mulf %3190, %3183 : vector<12x128xf32>
    %3192 = arith.addf %3182, %3191 : vector<12x128xf32>
    %3193 = vector.extract_strided_slice %3075 {offsets = [1, 0], sizes = [12, 128], strides = [1, 1]} : vector<16x128xf32> to vector<12x128xf32>
    %3194 = vector.broadcast %11 : f32 to vector<12x128xf32>
    %3195 = arith.mulf %3194, %3193 : vector<12x128xf32>
    %3196 = arith.addf %3186, %3195 : vector<12x128xf32>
    %3197 = vector.broadcast %36 : f32 to vector<12x128xf32>
    %3198 = arith.mulf %3197, %3193 : vector<12x128xf32>
    %3199 = arith.addf %3189, %3198 : vector<12x128xf32>
    %3200 = vector.broadcast %61 : f32 to vector<12x128xf32>
    %3201 = arith.mulf %3200, %3193 : vector<12x128xf32>
    %3202 = arith.addf %3192, %3201 : vector<12x128xf32>
    %3203 = vector.extract_strided_slice %3075 {offsets = [2, 0], sizes = [12, 128], strides = [1, 1]} : vector<16x128xf32> to vector<12x128xf32>
    %3204 = vector.broadcast %12 : f32 to vector<12x128xf32>
    %3205 = arith.mulf %3204, %3203 : vector<12x128xf32>
    %3206 = arith.addf %3196, %3205 : vector<12x128xf32>
    %3207 = vector.broadcast %37 : f32 to vector<12x128xf32>
    %3208 = arith.mulf %3207, %3203 : vector<12x128xf32>
    %3209 = arith.addf %3199, %3208 : vector<12x128xf32>
    %3210 = vector.broadcast %62 : f32 to vector<12x128xf32>
    %3211 = arith.mulf %3210, %3203 : vector<12x128xf32>
    %3212 = arith.addf %3202, %3211 : vector<12x128xf32>
    %3213 = vector.extract_strided_slice %3075 {offsets = [3, 0], sizes = [12, 128], strides = [1, 1]} : vector<16x128xf32> to vector<12x128xf32>
    %3214 = vector.broadcast %13 : f32 to vector<12x128xf32>
    %3215 = arith.mulf %3214, %3213 : vector<12x128xf32>
    %3216 = arith.addf %3206, %3215 : vector<12x128xf32>
    %3217 = vector.broadcast %38 : f32 to vector<12x128xf32>
    %3218 = arith.mulf %3217, %3213 : vector<12x128xf32>
    %3219 = arith.addf %3209, %3218 : vector<12x128xf32>
    %3220 = vector.broadcast %63 : f32 to vector<12x128xf32>
    %3221 = arith.mulf %3220, %3213 : vector<12x128xf32>
    %3222 = arith.addf %3212, %3221 : vector<12x128xf32>
    %3223 = vector.extract_strided_slice %3075 {offsets = [4, 0], sizes = [12, 128], strides = [1, 1]} : vector<16x128xf32> to vector<12x128xf32>
    %3224 = vector.broadcast %14 : f32 to vector<12x128xf32>
    %3225 = arith.mulf %3224, %3223 : vector<12x128xf32>
    %3226 = arith.addf %3216, %3225 : vector<12x128xf32>
    %3227 = vector.broadcast %39 : f32 to vector<12x128xf32>
    %3228 = arith.mulf %3227, %3223 : vector<12x128xf32>
    %3229 = arith.addf %3219, %3228 : vector<12x128xf32>
    %3230 = vector.broadcast %64 : f32 to vector<12x128xf32>
    %3231 = arith.mulf %3230, %3223 : vector<12x128xf32>
    %3232 = arith.addf %3222, %3231 : vector<12x128xf32>
    %3233 = vector.extract_strided_slice %3077 {offsets = [0, 0], sizes = [12, 128], strides = [1, 1]} : vector<16x128xf32> to vector<12x128xf32>
    %3234 = vector.broadcast %15 : f32 to vector<12x128xf32>
    %3235 = arith.mulf %3234, %3233 : vector<12x128xf32>
    %3236 = arith.addf %3226, %3235 : vector<12x128xf32>
    %3237 = vector.broadcast %40 : f32 to vector<12x128xf32>
    %3238 = arith.mulf %3237, %3233 : vector<12x128xf32>
    %3239 = arith.addf %3229, %3238 : vector<12x128xf32>
    %3240 = vector.broadcast %65 : f32 to vector<12x128xf32>
    %3241 = arith.mulf %3240, %3233 : vector<12x128xf32>
    %3242 = arith.addf %3232, %3241 : vector<12x128xf32>
    %3243 = vector.extract_strided_slice %3077 {offsets = [1, 0], sizes = [12, 128], strides = [1, 1]} : vector<16x128xf32> to vector<12x128xf32>
    %3244 = vector.broadcast %16 : f32 to vector<12x128xf32>
    %3245 = arith.mulf %3244, %3243 : vector<12x128xf32>
    %3246 = arith.addf %3236, %3245 : vector<12x128xf32>
    %3247 = vector.broadcast %41 : f32 to vector<12x128xf32>
    %3248 = arith.mulf %3247, %3243 : vector<12x128xf32>
    %3249 = arith.addf %3239, %3248 : vector<12x128xf32>
    %3250 = vector.broadcast %66 : f32 to vector<12x128xf32>
    %3251 = arith.mulf %3250, %3243 : vector<12x128xf32>
    %3252 = arith.addf %3242, %3251 : vector<12x128xf32>
    %3253 = vector.extract_strided_slice %3077 {offsets = [2, 0], sizes = [12, 128], strides = [1, 1]} : vector<16x128xf32> to vector<12x128xf32>
    %3254 = vector.broadcast %17 : f32 to vector<12x128xf32>
    %3255 = arith.mulf %3254, %3253 : vector<12x128xf32>
    %3256 = arith.addf %3246, %3255 : vector<12x128xf32>
    %3257 = vector.broadcast %42 : f32 to vector<12x128xf32>
    %3258 = arith.mulf %3257, %3253 : vector<12x128xf32>
    %3259 = arith.addf %3249, %3258 : vector<12x128xf32>
    %3260 = vector.broadcast %67 : f32 to vector<12x128xf32>
    %3261 = arith.mulf %3260, %3253 : vector<12x128xf32>
    %3262 = arith.addf %3252, %3261 : vector<12x128xf32>
    %3263 = vector.extract_strided_slice %3077 {offsets = [3, 0], sizes = [12, 128], strides = [1, 1]} : vector<16x128xf32> to vector<12x128xf32>
    %3264 = vector.broadcast %18 : f32 to vector<12x128xf32>
    %3265 = arith.mulf %3264, %3263 : vector<12x128xf32>
    %3266 = arith.addf %3256, %3265 : vector<12x128xf32>
    %3267 = vector.broadcast %43 : f32 to vector<12x128xf32>
    %3268 = arith.mulf %3267, %3263 : vector<12x128xf32>
    %3269 = arith.addf %3259, %3268 : vector<12x128xf32>
    %3270 = vector.broadcast %68 : f32 to vector<12x128xf32>
    %3271 = arith.mulf %3270, %3263 : vector<12x128xf32>
    %3272 = arith.addf %3262, %3271 : vector<12x128xf32>
    %3273 = vector.extract_strided_slice %3077 {offsets = [4, 0], sizes = [12, 128], strides = [1, 1]} : vector<16x128xf32> to vector<12x128xf32>
    %3274 = vector.broadcast %19 : f32 to vector<12x128xf32>
    %3275 = arith.mulf %3274, %3273 : vector<12x128xf32>
    %3276 = arith.addf %3266, %3275 : vector<12x128xf32>
    %3277 = vector.broadcast %44 : f32 to vector<12x128xf32>
    %3278 = arith.mulf %3277, %3273 : vector<12x128xf32>
    %3279 = arith.addf %3269, %3278 : vector<12x128xf32>
    %3280 = vector.broadcast %69 : f32 to vector<12x128xf32>
    %3281 = arith.mulf %3280, %3273 : vector<12x128xf32>
    %3282 = arith.addf %3272, %3281 : vector<12x128xf32>
    %3283 = vector.extract_strided_slice %3079 {offsets = [0, 0], sizes = [12, 128], strides = [1, 1]} : vector<16x128xf32> to vector<12x128xf32>
    %3284 = vector.broadcast %20 : f32 to vector<12x128xf32>
    %3285 = arith.mulf %3284, %3283 : vector<12x128xf32>
    %3286 = arith.addf %3276, %3285 : vector<12x128xf32>
    %3287 = vector.broadcast %45 : f32 to vector<12x128xf32>
    %3288 = arith.mulf %3287, %3283 : vector<12x128xf32>
    %3289 = arith.addf %3279, %3288 : vector<12x128xf32>
    %3290 = vector.broadcast %70 : f32 to vector<12x128xf32>
    %3291 = arith.mulf %3290, %3283 : vector<12x128xf32>
    %3292 = arith.addf %3282, %3291 : vector<12x128xf32>
    %3293 = vector.extract_strided_slice %3079 {offsets = [1, 0], sizes = [12, 128], strides = [1, 1]} : vector<16x128xf32> to vector<12x128xf32>
    %3294 = vector.broadcast %21 : f32 to vector<12x128xf32>
    %3295 = arith.mulf %3294, %3293 : vector<12x128xf32>
    %3296 = arith.addf %3286, %3295 : vector<12x128xf32>
    %3297 = vector.broadcast %46 : f32 to vector<12x128xf32>
    %3298 = arith.mulf %3297, %3293 : vector<12x128xf32>
    %3299 = arith.addf %3289, %3298 : vector<12x128xf32>
    %3300 = vector.broadcast %71 : f32 to vector<12x128xf32>
    %3301 = arith.mulf %3300, %3293 : vector<12x128xf32>
    %3302 = arith.addf %3292, %3301 : vector<12x128xf32>
    %3303 = vector.extract_strided_slice %3079 {offsets = [2, 0], sizes = [12, 128], strides = [1, 1]} : vector<16x128xf32> to vector<12x128xf32>
    %3304 = vector.broadcast %22 : f32 to vector<12x128xf32>
    %3305 = arith.mulf %3304, %3303 : vector<12x128xf32>
    %3306 = arith.addf %3296, %3305 : vector<12x128xf32>
    %3307 = vector.broadcast %47 : f32 to vector<12x128xf32>
    %3308 = arith.mulf %3307, %3303 : vector<12x128xf32>
    %3309 = arith.addf %3299, %3308 : vector<12x128xf32>
    %3310 = vector.broadcast %72 : f32 to vector<12x128xf32>
    %3311 = arith.mulf %3310, %3303 : vector<12x128xf32>
    %3312 = arith.addf %3302, %3311 : vector<12x128xf32>
    %3313 = vector.extract_strided_slice %3079 {offsets = [3, 0], sizes = [12, 128], strides = [1, 1]} : vector<16x128xf32> to vector<12x128xf32>
    %3314 = vector.broadcast %23 : f32 to vector<12x128xf32>
    %3315 = arith.mulf %3314, %3313 : vector<12x128xf32>
    %3316 = arith.addf %3306, %3315 : vector<12x128xf32>
    %3317 = vector.broadcast %48 : f32 to vector<12x128xf32>
    %3318 = arith.mulf %3317, %3313 : vector<12x128xf32>
    %3319 = arith.addf %3309, %3318 : vector<12x128xf32>
    %3320 = vector.broadcast %73 : f32 to vector<12x128xf32>
    %3321 = arith.mulf %3320, %3313 : vector<12x128xf32>
    %3322 = arith.addf %3312, %3321 : vector<12x128xf32>
    %3323 = vector.extract_strided_slice %3079 {offsets = [4, 0], sizes = [12, 128], strides = [1, 1]} : vector<16x128xf32> to vector<12x128xf32>
    %3324 = vector.broadcast %24 : f32 to vector<12x128xf32>
    %3325 = arith.mulf %3324, %3323 : vector<12x128xf32>
    %3326 = arith.addf %3316, %3325 : vector<12x128xf32>
    %3327 = vector.broadcast %49 : f32 to vector<12x128xf32>
    %3328 = arith.mulf %3327, %3323 : vector<12x128xf32>
    %3329 = arith.addf %3319, %3328 : vector<12x128xf32>
    %3330 = vector.broadcast %74 : f32 to vector<12x128xf32>
    %3331 = arith.mulf %3330, %3323 : vector<12x128xf32>
    %3332 = arith.addf %3322, %3331 : vector<12x128xf32>
    %c0_315 = arith.constant 0 : index
    %c11_316 = arith.constant 11 : index
    %c0_317 = arith.constant 0 : index
    %c0_318 = arith.constant 0 : index
    %3333 = vector.load %arg4[%c0_315, %c11_316, %c0_317, %c0_318] : memref<3x12x12x128xf32, #tpu.memory_space<vmem>>, vector<1x1x12x128xf32>
    %3334 = vector.shape_cast %3333 : vector<1x1x12x128xf32> to vector<12x128xf32>
    %3335 = vector.shape_cast %3326 : vector<12x128xf32> to vector<1x1x12x128xf32>
    tpu.vector_store %arg4[%c0_315, %c11_316, %c0_317, %c0_318], %3335 {strides = array<i32>} : memref<3x12x12x128xf32, #tpu.memory_space<vmem>>, vector<1x1x12x128xf32>,
    %c1_319 = arith.constant 1 : index
    %c11_320 = arith.constant 11 : index
    %c0_321 = arith.constant 0 : index
    %c0_322 = arith.constant 0 : index
    %3336 = vector.load %arg4[%c1_319, %c11_320, %c0_321, %c0_322] : memref<3x12x12x128xf32, #tpu.memory_space<vmem>>, vector<1x1x12x128xf32>
    %3337 = vector.shape_cast %3336 : vector<1x1x12x128xf32> to vector<12x128xf32>
    %3338 = vector.shape_cast %3329 : vector<12x128xf32> to vector<1x1x12x128xf32>
    tpu.vector_store %arg4[%c1_319, %c11_320, %c0_321, %c0_322], %3338 {strides = array<i32>} : memref<3x12x12x128xf32, #tpu.memory_space<vmem>>, vector<1x1x12x128xf32>,
    %c2_323 = arith.constant 2 : index
    %c11_324 = arith.constant 11 : index
    %c0_325 = arith.constant 0 : index
    %c0_326 = arith.constant 0 : index
    %3339 = vector.load %arg4[%c2_323, %c11_324, %c0_325, %c0_326] : memref<3x12x12x128xf32, #tpu.memory_space<vmem>>, vector<1x1x12x128xf32>
    %3340 = vector.shape_cast %3339 : vector<1x1x12x128xf32> to vector<12x128xf32>
    %3341 = vector.shape_cast %3332 : vector<12x128xf32> to vector<1x1x12x128xf32>
    tpu.vector_store %arg4[%c2_323, %c11_324, %c0_325, %c0_326], %3341 {strides = array<i32>} : memref<3x12x12x128xf32, #tpu.memory_space<vmem>>, vector<1x1x12x128xf32>,
    return
  }
  func.func @transform_0(%arg0: i32) -> (i32, i32, i32) {
    %c0_i32 = arith.constant 0 : i32
    %c0_i32_0 = arith.constant 0 : i32
    %c0_i32_1 = arith.constant 0 : i32
    return %c0_i32, %c0_i32_0, %arg0 : i32, i32, i32
  }
  func.func @transform_1(%arg0: i32) -> i32 {
    %c0_i32 = arith.constant 0 : i32
    %c0_i32_0 = arith.constant 0 : i32
    return %c0_i32 : i32
  }
  func.func @transform_2(%arg0: i32) -> i32 {
    %c0_i32 = arith.constant 0 : i32
    %c0_i32_0 = arith.constant 0 : i32
    return %c0_i32 : i32
  }
  func.func @transform_3(%arg0: i32) -> (i32, i32, i32, i32) {
    %c0_i32 = arith.constant 0 : i32
    %c0_i32_0 = arith.constant 0 : i32
    %c0_i32_1 = arith.constant 0 : i32
    %c0_i32_2 = arith.constant 0 : i32
    return %c0_i32, %c0_i32_0, %c0_i32_1, %arg0 : i32, i32, i32, i32
  }
}

</mosaic_0001>

<llo_original>
// kernel: tpu_custom_call.1
$region0: #{tpu_custom_call.1}
  #allocation0 [shape = 'u32[]', space=smem, size = 0x4, offset = 0x4, fixed_abs, tag = 'smem constant byte address 0x4 - core index']
  #allocation1 [shape = 'u32[72,128]{1,0:T(1,128)}', space=vmem, size = 0x9000, scoped, tag = 'internal scratch']
  %s0 = inlined_call_operand.hbm [shape: f32[16,16,128], index: 0, kind: input, shape index: {}]
  %s1 = inlined_call_operand.hbm [shape: f32[75], index: 1, kind: input, shape index: {}]
  %s2 = inlined_call_operand.vmem [shape: f32[3], index: 2, kind: input, shape index: {}]
  %s3 = inlined_call_operand.hbm [shape: f32[3,12,12,128], index: 3, kind: output, shape index: {}]
  %s4 = sld [smem:[#allocation0]]
  $region34: #{tpu_custom_call.1} parent=0
    _
  %s6 = ssub.s32 1, %s4
  %s7 = scalar_select 0, %s6, %s4
  $region1: #{tpu_custom_call.1} parent=0
    #allocation2 [shape = 'u8[131072]{0}', space=vmem, size = 0x20000, scoped, tag = 'input window, operand 0, single buffered']
    #allocation3 [shape = 's32[1]{0}', space=sflag, size = 0x4, scoped, tag = 'scoped memory for tpu_custom_call.1']
    #allocation4 [shape = 's32[1]{0}', space=sflag, size = 0x4, scoped, tag = 'scoped memory for tpu_custom_call.1']
    #allocation5 [shape = 's32[1]{0}', space=sflag, size = 0x4, scoped, tag = 'scoped memory for tpu_custom_call.1']
    #allocation6 [shape = 's32[1]{0}', space=sflag, size = 0x4, scoped, tag = 'scoped memory for tpu_custom_call.1']
    #allocation7 [shape = 'u8[512]{0}', space=smem, size = 0x200, scoped, tag = 'input window, operand 1, single buffered']
    #allocation8 [shape = 'u8[512]{0}', space=smem, size = 0x200, scoped, tag = 'input window, operand 2, single buffered']
    #allocation9 [shape = 'u8[294912]{0}', space=vmem, size = 0x48000, scoped, tag = 'output window, operand 0, single buffered']
    %8 = vsyncpa [#allocation3], 0
    %9 = vsyncpa [#allocation5], 0
    %10 = vsyncpa [#allocation6], 0
    %11 = vsyncpa [#allocation4], 0
    // Predicated region
    $region2: #{tpu_custom_call.1} parent=1 // pred_check
      _
    $region3: #{tpu_custom_call.1} parent=1 // pred_check_branch
      %13 = sbr.rel (0) target = $region5
    $region4: #{tpu_custom_call.1} parent=1 // pred_region
      %15 = vsyncadd [#allocation3], 0
      %s16 = sshll.u32 %s0, 4
      %s17 = int_to_ptr.hbm [resolvable:$true] %s16
      %s18 = sshll.u32 [#allocation2], 4
      %s19 = int_to_ptr.vmem [resolvable:$true] %s18
      %24 = dma.hbm_to_vmem [thread:$0]  %s17, 4096, %s19, [#allocation3], 128, 128, 8
    $region5: #{tpu_custom_call.1} parent=1 // pred_fallthru
      _
    // Predicated region
    $region6: #{tpu_custom_call.1} parent=1 // pred_check
      _
    $region7: #{tpu_custom_call.1} parent=1 // pred_check_branch
      %26 = sbr.rel (0) target = $region9
    $region8: #{tpu_custom_call.1} parent=1 // pred_region
      %28 = vsyncadd [#allocation5], 0
      %s30 = sshll.u32 %s1, 4
      %s31 = int_to_ptr.hbm [resolvable:$true] %s30
      %33 = dma.hbm_to_smem %s31, 16, [#allocation7], [#allocation5]
    $region9: #{tpu_custom_call.1} parent=1 // pred_fallthru
      _
    // Predicated region
    $region10: #{tpu_custom_call.1} parent=1 // pred_check
      _
    $region11: #{tpu_custom_call.1} parent=1 // pred_check_branch
      %35 = sbr.rel (0) target = $region13
    $region12: #{tpu_custom_call.1} parent=1 // pred_region
      %37 = vsyncadd [#allocation6], 0
      %s39 = sshll.u32 %s2, 4
      %s40 = int_to_ptr.vmem [resolvable:$true] %s39
      %42 = dma.vmem_to_smem %s40, 16, [#allocation8], [#allocation6]
    $region13: #{tpu_custom_call.1} parent=1 // pred_fallthru
      _
    // Predicated region
    $region14: #{tpu_custom_call.1} parent=1 // pred_check
      _
    $region15: #{tpu_custom_call.1} parent=1 // pred_check_branch
      %44 = sbr.rel (0) target = $region17
    $region16: #{tpu_custom_call.1} parent=1 // pred_region
      %46 = dma.done [#allocation3], 4096
    $region17: #{tpu_custom_call.1} parent=1 // pred_fallthru
      _
    // Predicated region
    $region18: #{tpu_custom_call.1} parent=1 // pred_check
      _
    $region19: #{tpu_custom_call.1} parent=1 // pred_check_branch
      %48 = sbr.rel (0) target = $region21
    $region20: #{tpu_custom_call.1} parent=1 // pred_region
      %50 = dma.done [#allocation5], 16
    $region21: #{tpu_custom_call.1} parent=1 // pred_fallthru
      _
    // Predicated region
    $region22: #{tpu_custom_call.1} parent=1 // pred_check
      _
    $region23: #{tpu_custom_call.1} parent=1 // pred_check_branch
      %52 = sbr.rel (0) target = $region25
    $region24: #{tpu_custom_call.1} parent=1 // pred_region
      %54 = dma.done [#allocation6], 16
    $region25: #{tpu_custom_call.1} parent=1 // pred_fallthru
      _
    %55 = sfence
    %s56 = sld [smem:[#allocation7]]
    %s57 = sld [smem:[#allocation7 + $0x1]]
    %s58 = sld [smem:[#allocation7 + $0x2]]
    %s59 = sld [smem:[#allocation7 + $0x3]]
    %s60 = sld [smem:[#allocation7 + $0x4]]
    %s61 = sld [smem:[#allocation7 + $0x5]]
    %s62 = sld [smem:[#allocation7 + $0x6]]
    %s63 = sld [smem:[#allocation7 + $0x7]]
    %s64 = sld [smem:[#allocation7 + $0x8]]
    %s65 = sld [smem:[#allocation7 + $0x9]]
    %s66 = sld [smem:[#allocation7 + $0xa]]
    %s67 = sld [smem:[#allocation7 + $0xb]]
    %s68 = sld [smem:[#allocation7 + $0xc]]
    %s69 = sld [smem:[#allocation7 + $0xd]]
    %s70 = sld [smem:[#allocation7 + $0xe]]
    %s71 = sld [smem:[#allocation7 + $0xf]]
    %s72 = sld [smem:[#allocation7 + $0x10]]
    %s73 = sld [smem:[#allocation7 + $0x11]]
    %s74 = sld [smem:[#allocation7 + $0x12]]
    %s75 = sld [smem:[#allocation7 + $0x13]]
    %s76 = sld [smem:[#allocation7 + $0x14]]
    %s77 = sld [smem:[#allocation7 + $0x15]]
    %s78 = sld [smem:[#allocation7 + $0x16]]
    %s79 = sld [smem:[#allocation7 + $0x17]]
    %s80 = sld [smem:[#allocation7 + $0x18]]
    %s81 = sld [smem:[#allocation7 + $0x19]]
    %s82 = sld [smem:[#allocation7 + $0x1a]]
    %s83 = sld [smem:[#allocation7 + $0x1b]]
    %s84 = sld [smem:[#allocation7 + $0x1c]]
    %s85 = sld [smem:[#allocation7 + $0x1d]]
    %s86 = sld [smem:[#allocation7 + $0x1e]]
    %s87 = sld [smem:[#allocation7 + $0x1f]]
    %s88 = sld [smem:[#allocation7 + $0x20]]
    %s89 = sld [smem:[#allocation7 + $0x21]]
    %s90 = sld [smem:[#allocation7 + $0x22]]
    %s91 = sld [smem:[#allocation7 + $0x23]]
    %s92 = sld [smem:[#allocation7 + $0x24]]
    %s93 = sld [smem:[#allocation7 + $0x25]]
    %s94 = sld [smem:[#allocation7 + $0x26]]
    %s95 = sld [smem:[#allocation7 + $0x27]]
    %s96 = sld [smem:[#allocation7 + $0x28]]
    %s97 = sld [smem:[#allocation7 + $0x29]]
    %s98 = sld [smem:[#allocation7 + $0x2a]]
    %s99 = sld [smem:[#allocation7 + $0x2b]]
    %s100 = sld [smem:[#allocation7 + $0x2c]]
    %s101 = sld [smem:[#allocation7 + $0x2d]]
    %s102 = sld [smem:[#allocation7 + $0x2e]]
    %s103 = sld [smem:[#allocation7 + $0x2f]]
    %s104 = sld [smem:[#allocation7 + $0x30]]
    %s105 = sld [smem:[#allocation7 + $0x31]]
    %s106 = sld [smem:[#allocation7 + $0x32]]
    %s107 = sld [smem:[#allocation7 + $0x33]]
    %s108 = sld [smem:[#allocation7 + $0x34]]
    %s109 = sld [smem:[#allocation7 + $0x35]]
    %s110 = sld [smem:[#allocation7 + $0x36]]
    %s111 = sld [smem:[#allocation7 + $0x37]]
    %s112 = sld [smem:[#allocation7 + $0x38]]
    %s113 = sld [smem:[#allocation7 + $0x39]]
    %s114 = sld [smem:[#allocation7 + $0x3a]]
    %s115 = sld [smem:[#allocation7 + $0x3b]]
    %s116 = sld [smem:[#allocation7 + $0x3c]]
    %s117 = sld [smem:[#allocation7 + $0x3d]]
    %s118 = sld [smem:[#allocation7 + $0x3e]]
    %s119 = sld [smem:[#allocation7 + $0x3f]]
    %s120 = sld [smem:[#allocation7 + $0x40]]
    %s121 = sld [smem:[#allocation7 + $0x41]]
    %s122 = sld [smem:[#allocation7 + $0x42]]
    %s123 = sld [smem:[#allocation7 + $0x43]]
    %s124 = sld [smem:[#allocation7 + $0x44]]
    %s125 = sld [smem:[#allocation7 + $0x45]]
    %s126 = sld [smem:[#allocation7 + $0x46]]
    %s127 = sld [smem:[#allocation7 + $0x47]]
    %s128 = sld [smem:[#allocation7 + $0x48]]
    %s129 = sld [smem:[#allocation7 + $0x49]]
    %s130 = sld [smem:[#allocation7 + $0x4a]]
    %s131 = sld [smem:[#allocation8]]
    %s132 = sld [smem:[#allocation8 + $0x1]]
    %s133 = sld [smem:[#allocation8 + $0x2]]
    %v134 = vld [vmem:[#allocation2] sm:$0xff]
    %v135 = vld [vmem:[#allocation2 + $0x8] sm:$0xff]
    %s136 = scalar_lea.vmem [#allocation2], 16
    %v137 = vld [vmem:[%s136] sm:$0xff]
    %v138 = vld [vmem:[%s136 + $0x8] sm:$0xff]
    %s139 = scalar_lea.vmem [#allocation2], 32
    %v140 = vld [vmem:[%s139] sm:$0xff]
    %v141 = vld [vmem:[%s139 + $0x8] sm:$0xff]
    %s142 = scalar_lea.vmem [#allocation2], 48
    %v143 = vld [vmem:[%s142] sm:$0xff]
    %v144 = vld [vmem:[%s142 + $0x8] sm:$0xff]
    %s145 = scalar_lea.vmem [#allocation2], 64
    %v146 = vld [vmem:[%s145] sm:$0xff]
    %v147 = vld [vmem:[%s145 + $0x8] sm:$0xff]
    %v148 = vstv %s131
    %v149 = vstv %s132
    %v150 = vstv %s133
    %v151 = vstv %s56
    %v152 = vmul.f32 %v151, %v134
    %v153 = vmul.f32 %v151, %v135
    %v154 = vadd.f32 %v148, %v152
    %v155 = vadd.f32 %v148, %v153
    %v156 = vstv %s81
    %v157 = vmul.f32 %v156, %v134
    %v158 = vmul.f32 %v156, %v135
    %v159 = vadd.f32 %v149, %v157
    %v160 = vadd.f32 %v149, %v158
    %v161 = vstv %s106
    %v162 = vmul.f32 %v161, %v134
    %v163 = vmul.f32 %v161, %v135
    %v164 = vadd.f32 %v150, %v162
    %v165 = vadd.f32 %v150, %v163
    %v166 = vstv %s57
    %v167 = vmul.f32 %v166, %v134
    %v168 = vmul.f32 %v166, %v135
    %vm171 = vcmask 1046528
    %v172 = vrot.slane %v167, 1
    %v173 = vrot.slane %v168, 1
    %v174 = vsel %vm171, %v172, %v173
    %v177 = vadd.f32 %v154, %v174
    %v178 = vadd.f32 %v155, %v173
    %v179 = vstv %s82
    %v180 = vmul.f32 %v179, %v134
    %v181 = vmul.f32 %v179, %v135
    %v184 = vrot.slane %v180, 1
    %v185 = vrot.slane %v181, 1
    %v186 = vsel %vm171, %v184, %v185
    %v189 = vadd.f32 %v159, %v186
    %v190 = vadd.f32 %v160, %v185
    %v191 = vstv %s107
    %v192 = vmul.f32 %v191, %v134
    %v193 = vmul.f32 %v191, %v135
    %v196 = vrot.slane %v192, 1
    %v197 = vrot.slane %v193, 1
    %v198 = vsel %vm171, %v196, %v197
    %v201 = vadd.f32 %v164, %v198
    %v202 = vadd.f32 %v165, %v197
    %v203 = vstv %s58
    %v204 = vmul.f32 %v203, %v134
    %v205 = vmul.f32 %v203, %v135
    %vm208 = vcmask 1045504
    %v209 = vrot.slane %v204, 2
    %v210 = vrot.slane %v205, 2
    %v211 = vsel %vm208, %v209, %v210
    %v214 = vadd.f32 %v177, %v211
    %v215 = vadd.f32 %v178, %v210
    %v216 = vstv %s83
    %v217 = vmul.f32 %v216, %v134
    %v218 = vmul.f32 %v216, %v135
    %v221 = vrot.slane %v217, 2
    %v222 = vrot.slane %v218, 2
    %v223 = vsel %vm208, %v221, %v222
    %v226 = vadd.f32 %v189, %v223
    %v227 = vadd.f32 %v190, %v222
    %v228 = vstv %s108
    %v229 = vmul.f32 %v228, %v134
    %v230 = vmul.f32 %v228, %v135
    %v233 = vrot.slane %v229, 2
    %v234 = vrot.slane %v230, 2
    %v235 = vsel %vm208, %v233, %v234
    %v238 = vadd.f32 %v201, %v235
    %v239 = vadd.f32 %v202, %v234
    %v240 = vstv %s59
    %v241 = vmul.f32 %v240, %v134
    %v242 = vmul.f32 %v240, %v135
    %vm245 = vcmask 1044480
    %v246 = vrot.slane %v241, 3
    %v247 = vrot.slane %v242, 3
    %v248 = vsel %vm245, %v246, %v247
    %v251 = vadd.f32 %v214, %v248
    %v252 = vadd.f32 %v215, %v247
    %v253 = vstv %s84
    %v254 = vmul.f32 %v253, %v134
    %v255 = vmul.f32 %v253, %v135
    %v258 = vrot.slane %v254, 3
    %v259 = vrot.slane %v255, 3
    %v260 = vsel %vm245, %v258, %v259
    %v263 = vadd.f32 %v226, %v260
    %v264 = vadd.f32 %v227, %v259
    %v265 = vstv %s109
    %v266 = vmul.f32 %v265, %v134
    %v267 = vmul.f32 %v265, %v135
    %v270 = vrot.slane %v266, 3
    %v271 = vrot.slane %v267, 3
    %v272 = vsel %vm245, %v270, %v271
    %v275 = vadd.f32 %v238, %v272
    %v276 = vadd.f32 %v239, %v271
    %v277 = vstv %s60
    %v278 = vmul.f32 %v277, %v134
    %v279 = vmul.f32 %v277, %v135
    %vm282 = vcmask 1043456
    %v283 = vrot.slane %v278, 4
    %v284 = vrot.slane %v279, 4
    %v285 = vsel %vm282, %v283, %v284
    %v288 = vadd.f32 %v251, %v285
    %v289 = vadd.f32 %v252, %v284
    %v290 = vstv %s85
    %v291 = vmul.f32 %v290, %v134
    %v292 = vmul.f32 %v290, %v135
    %v295 = vrot.slane %v291, 4
    %v296 = vrot.slane %v292, 4
    %v297 = vsel %vm282, %v295, %v296
    %v300 = vadd.f32 %v263, %v297
    %v301 = vadd.f32 %v264, %v296
    %v302 = vstv %s110
    %v303 = vmul.f32 %v302, %v134
    %v304 = vmul.f32 %v302, %v135
    %v307 = vrot.slane %v303, 4
    %v308 = vrot.slane %v304, 4
    %v309 = vsel %vm282, %v307, %v308
    %v312 = vadd.f32 %v275, %v309
    %v313 = vadd.f32 %v276, %v308
    %v314 = vstv %s61
    %v315 = vmul.f32 %v314, %v137
    %v316 = vmul.f32 %v314, %v138
    %v317 = vadd.f32 %v288, %v315
    %v318 = vadd.f32 %v289, %v316
    %v319 = vstv %s86
    %v320 = vmul.f32 %v319, %v137
    %v321 = vmul.f32 %v319, %v138
    %v322 = vadd.f32 %v300, %v320
    %v323 = vadd.f32 %v301, %v321
    %v324 = vstv %s111
    %v325 = vmul.f32 %v324, %v137
    %v326 = vmul.f32 %v324, %v138
    %v327 = vadd.f32 %v312, %v325
    %v328 = vadd.f32 %v313, %v326
    %v329 = vstv %s62
    %v330 = vmul.f32 %v329, %v137
    %v331 = vmul.f32 %v329, %v138
    %v334 = vrot.slane %v330, 1
    %v335 = vrot.slane %v331, 1
    %v336 = vsel %vm171, %v334, %v335
    %v339 = vadd.f32 %v317, %v336
    %v340 = vadd.f32 %v318, %v335
    %v341 = vstv %s87
    %v342 = vmul.f32 %v341, %v137
    %v343 = vmul.f32 %v341, %v138
    %v346 = vrot.slane %v342, 1
    %v347 = vrot.slane %v343, 1
    %v348 = vsel %vm171, %v346, %v347
    %v351 = vadd.f32 %v322, %v348
    %v352 = vadd.f32 %v323, %v347
    %v353 = vstv %s112
    %v354 = vmul.f32 %v353, %v137
    %v355 = vmul.f32 %v353, %v138
    %v358 = vrot.slane %v354, 1
    %v359 = vrot.slane %v355, 1
    %v360 = vsel %vm171, %v358, %v359
    %v363 = vadd.f32 %v327, %v360
    %v364 = vadd.f32 %v328, %v359
    %v365 = vstv %s63
    %v366 = vmul.f32 %v365, %v137
    %v367 = vmul.f32 %v365, %v138
    %v370 = vrot.slane %v366, 2
    %v371 = vrot.slane %v367, 2
    %v372 = vsel %vm208, %v370, %v371
    %v375 = vadd.f32 %v339, %v372
    %v376 = vadd.f32 %v340, %v371
    %v377 = vstv %s88
    %v378 = vmul.f32 %v377, %v137
    %v379 = vmul.f32 %v377, %v138
    %v382 = vrot.slane %v378, 2
    %v383 = vrot.slane %v379, 2
    %v384 = vsel %vm208, %v382, %v383
    %v387 = vadd.f32 %v351, %v384
    %v388 = vadd.f32 %v352, %v383
    %v389 = vstv %s113
    %v390 = vmul.f32 %v389, %v137
    %v391 = vmul.f32 %v389, %v138
    %v394 = vrot.slane %v390, 2
    %v395 = vrot.slane %v391, 2
    %v396 = vsel %vm208, %v394, %v395
    %v399 = vadd.f32 %v363, %v396
    %v400 = vadd.f32 %v364, %v395
    %v401 = vstv %s64
    %v402 = vmul.f32 %v401, %v137
    %v403 = vmul.f32 %v401, %v138
    %v406 = vrot.slane %v402, 3
    %v407 = vrot.slane %v403, 3
    %v408 = vsel %vm245, %v406, %v407
    %v411 = vadd.f32 %v375, %v408
    %v412 = vadd.f32 %v376, %v407
    %v413 = vstv %s89
    %v414 = vmul.f32 %v413, %v137
    %v415 = vmul.f32 %v413, %v138
    %v418 = vrot.slane %v414, 3
    %v419 = vrot.slane %v415, 3
    %v420 = vsel %vm245, %v418, %v419
    %v423 = vadd.f32 %v387, %v420
    %v424 = vadd.f32 %v388, %v419
    %v425 = vstv %s114
    %v426 = vmul.f32 %v425, %v137
    %v427 = vmul.f32 %v425, %v138
    %v430 = vrot.slane %v426, 3
    %v431 = vrot.slane %v427, 3
    %v432 = vsel %vm245, %v430, %v431
    %v435 = vadd.f32 %v399, %v432
    %v436 = vadd.f32 %v400, %v431
    %v437 = vstv %s65
    %v438 = vmul.f32 %v437, %v137
    %v439 = vmul.f32 %v437, %v138
    %v442 = vrot.slane %v438, 4
    %v443 = vrot.slane %v439, 4
    %v444 = vsel %vm282, %v442, %v443
    %v447 = vadd.f32 %v411, %v444
    %v448 = vadd.f32 %v412, %v443
    %v449 = vstv %s90
    %v450 = vmul.f32 %v449, %v137
    %v451 = vmul.f32 %v449, %v138
    %v454 = vrot.slane %v450, 4
    %v455 = vrot.slane %v451, 4
    %v456 = vsel %vm282, %v454, %v455
    %v459 = vadd.f32 %v423, %v456
    %v460 = vadd.f32 %v424, %v455
    %v461 = vstv %s115
    %v462 = vmul.f32 %v461, %v137
    %v463 = vmul.f32 %v461, %v138
    %v466 = vrot.slane %v462, 4
    %v467 = vrot.slane %v463, 4
    %v468 = vsel %vm282, %v466, %v467
    %v471 = vadd.f32 %v435, %v468
    %v472 = vadd.f32 %v436, %v467
    %v473 = vstv %s66
    %v474 = vmul.f32 %v473, %v140
    %v475 = vmul.f32 %v473, %v141
    %v476 = vadd.f32 %v447, %v474
    %v477 = vadd.f32 %v448, %v475
    %v478 = vstv %s91
    %v479 = vmul.f32 %v478, %v140
    %v480 = vmul.f32 %v478, %v141
    %v481 = vadd.f32 %v459, %v479
    %v482 = vadd.f32 %v460, %v480
    %v483 = vstv %s116
    %v484 = vmul.f32 %v483, %v140
    %v485 = vmul.f32 %v483, %v141
    %v486 = vadd.f32 %v471, %v484
    %v487 = vadd.f32 %v472, %v485
    %v488 = vstv %s67
    %v489 = vmul.f32 %v488, %v140
    %v490 = vmul.f32 %v488, %v141
    %v493 = vrot.slane %v489, 1
    %v494 = vrot.slane %v490, 1
    %v495 = vsel %vm171, %v493, %v494
    %v498 = vadd.f32 %v476, %v495
    %v499 = vadd.f32 %v477, %v494
    %v500 = vstv %s92
    %v501 = vmul.f32 %v500, %v140
    %v502 = vmul.f32 %v500, %v141
    %v505 = vrot.slane %v501, 1
    %v506 = vrot.slane %v502, 1
    %v507 = vsel %vm171, %v505, %v506
    %v510 = vadd.f32 %v481, %v507
    %v511 = vadd.f32 %v482, %v506
    %v512 = vstv %s117
    %v513 = vmul.f32 %v512, %v140
    %v514 = vmul.f32 %v512, %v141
    %v517 = vrot.slane %v513, 1
    %v518 = vrot.slane %v514, 1
    %v519 = vsel %vm171, %v517, %v518
    %v522 = vadd.f32 %v486, %v519
    %v523 = vadd.f32 %v487, %v518
    %v524 = vstv %s68
    %v525 = vmul.f32 %v524, %v140
    %v526 = vmul.f32 %v524, %v141
    %v529 = vrot.slane %v525, 2
    %v530 = vrot.slane %v526, 2
    %v531 = vsel %vm208, %v529, %v530
    %v534 = vadd.f32 %v498, %v531
    %v535 = vadd.f32 %v499, %v530
    %v536 = vstv %s93
    %v537 = vmul.f32 %v536, %v140
    %v538 = vmul.f32 %v536, %v141
    %v541 = vrot.slane %v537, 2
    %v542 = vrot.slane %v538, 2
    %v543 = vsel %vm208, %v541, %v542
    %v546 = vadd.f32 %v510, %v543
    %v547 = vadd.f32 %v511, %v542
    %v548 = vstv %s118
    %v549 = vmul.f32 %v548, %v140
    %v550 = vmul.f32 %v548, %v141
    %v553 = vrot.slane %v549, 2
    %v554 = vrot.slane %v550, 2
    %v555 = vsel %vm208, %v553, %v554
    %v558 = vadd.f32 %v522, %v555
    %v559 = vadd.f32 %v523, %v554
    %v560 = vstv %s69
    %v561 = vmul.f32 %v560, %v140
    %v562 = vmul.f32 %v560, %v141
    %v565 = vrot.slane %v561, 3
    %v566 = vrot.slane %v562, 3
    %v567 = vsel %vm245, %v565, %v566
    %v570 = vadd.f32 %v534, %v567
    %v571 = vadd.f32 %v535, %v566
    %v572 = vstv %s94
    %v573 = vmul.f32 %v572, %v140
    %v574 = vmul.f32 %v572, %v141
    %v577 = vrot.slane %v573, 3
    %v578 = vrot.slane %v574, 3
    %v579 = vsel %vm245, %v577, %v578
    %v582 = vadd.f32 %v546, %v579
    %v583 = vadd.f32 %v547, %v578
    %v584 = vstv %s119
    %v585 = vmul.f32 %v584, %v140
    %v586 = vmul.f32 %v584, %v141
    %v589 = vrot.slane %v585, 3
    %v590 = vrot.slane %v586, 3
    %v591 = vsel %vm245, %v589, %v590
    %v594 = vadd.f32 %v558, %v591
    %v595 = vadd.f32 %v559, %v590
    %v596 = vstv %s70
    %v597 = vmul.f32 %v596, %v140
    %v598 = vmul.f32 %v596, %v141
    %v601 = vrot.slane %v597, 4
    %v602 = vrot.slane %v598, 4
    %v603 = vsel %vm282, %v601, %v602
    %v606 = vadd.f32 %v570, %v603
    %v607 = vadd.f32 %v571, %v602
    %v608 = vstv %s95
    %v609 = vmul.f32 %v608, %v140
    %v610 = vmul.f32 %v608, %v141
    %v613 = vrot.slane %v609, 4
    %v614 = vrot.slane %v610, 4
    %v615 = vsel %vm282, %v613, %v614
    %v618 = vadd.f32 %v582, %v615
    %v619 = vadd.f32 %v583, %v614
    %v620 = vstv %s120
    %v621 = vmul.f32 %v620, %v140
    %v622 = vmul.f32 %v620, %v141
    %v625 = vrot.slane %v621, 4
    %v626 = vrot.slane %v622, 4
    %v627 = vsel %vm282, %v625, %v626
    %v630 = vadd.f32 %v594, %v627
    %v631 = vadd.f32 %v595, %v626
    %v632 = vstv %s71
    %v633 = vmul.f32 %v632, %v143
    %v634 = vmul.f32 %v632, %v144
    %v635 = vadd.f32 %v606, %v633
    %v636 = vadd.f32 %v607, %v634
    %v637 = vstv %s96
    %v638 = vmul.f32 %v637, %v143
    %v639 = vmul.f32 %v637, %v144
    %v640 = vadd.f32 %v618, %v638
    %v641 = vadd.f32 %v619, %v639
    %v642 = vstv %s121
    %v643 = vmul.f32 %v642, %v143
    %v644 = vmul.f32 %v642, %v144
    %v645 = vadd.f32 %v630, %v643
    %v646 = vadd.f32 %v631, %v644
    %v647 = vstv %s72
    %v648 = vmul.f32 %v647, %v143
    %v649 = vmul.f32 %v647, %v144
    %v652 = vrot.slane %v648, 1
    %v653 = vrot.slane %v649, 1
    %v654 = vsel %vm171, %v652, %v653
    %v657 = vadd.f32 %v635, %v654
    %v658 = vadd.f32 %v636, %v653
    %v659 = vstv %s97
    %v660 = vmul.f32 %v659, %v143
    %v661 = vmul.f32 %v659, %v144
    %v664 = vrot.slane %v660, 1
    %v665 = vrot.slane %v661, 1
    %v666 = vsel %vm171, %v664, %v665
    %v669 = vadd.f32 %v640, %v666
    %v670 = vadd.f32 %v641, %v665
    %v671 = vstv %s122
    %v672 = vmul.f32 %v671, %v143
    %v673 = vmul.f32 %v671, %v144
    %v676 = vrot.slane %v672, 1
    %v677 = vrot.slane %v673, 1
    %v678 = vsel %vm171, %v676, %v677
    %v681 = vadd.f32 %v645, %v678
    %v682 = vadd.f32 %v646, %v677
    %v683 = vstv %s73
    %v684 = vmul.f32 %v683, %v143
    %v685 = vmul.f32 %v683, %v144
    %v688 = vrot.slane %v684, 2
    %v689 = vrot.slane %v685, 2
    %v690 = vsel %vm208, %v688, %v689
    %v693 = vadd.f32 %v657, %v690
    %v694 = vadd.f32 %v658, %v689
    %v695 = vstv %s98
    %v696 = vmul.f32 %v695, %v143
    %v697 = vmul.f32 %v695, %v144
    %v700 = vrot.slane %v696, 2
    %v701 = vrot.slane %v697, 2
    %v702 = vsel %vm208, %v700, %v701
    %v705 = vadd.f32 %v669, %v702
    %v706 = vadd.f32 %v670, %v701
    %v707 = vstv %s123
    %v708 = vmul.f32 %v707, %v143
    %v709 = vmul.f32 %v707, %v144
    %v712 = vrot.slane %v708, 2
    %v713 = vrot.slane %v709, 2
    %v714 = vsel %vm208, %v712, %v713
    %v717 = vadd.f32 %v681, %v714
    %v718 = vadd.f32 %v682, %v713
    %v719 = vstv %s74
    %v720 = vmul.f32 %v719, %v143
    %v721 = vmul.f32 %v719, %v144
    %v724 = vrot.slane %v720, 3
    %v725 = vrot.slane %v721, 3
    %v726 = vsel %vm245, %v724, %v725
    %v729 = vadd.f32 %v693, %v726
    %v730 = vadd.f32 %v694, %v725
    %v731 = vstv %s99
    %v732 = vmul.f32 %v731, %v143
    %v733 = vmul.f32 %v731, %v144
    %v736 = vrot.slane %v732, 3
    %v737 = vrot.slane %v733, 3
    %v738 = vsel %vm245, %v736, %v737
    %v741 = vadd.f32 %v705, %v738
    %v742 = vadd.f32 %v706, %v737
    %v743 = vstv %s124
    %v744 = vmul.f32 %v743, %v143
    %v745 = vmul.f32 %v743, %v144
    %v748 = vrot.slane %v744, 3
    %v749 = vrot.slane %v745, 3
    %v750 = vsel %vm245, %v748, %v749
    %v753 = vadd.f32 %v717, %v750
    %v754 = vadd.f32 %v718, %v749
    %v755 = vstv %s75
    %v756 = vmul.f32 %v755, %v143
    %v757 = vmul.f32 %v755, %v144
    %v760 = vrot.slane %v756, 4
    %v761 = vrot.slane %v757, 4
    %v762 = vsel %vm282, %v760, %v761
    %v765 = vadd.f32 %v729, %v762
    %v766 = vadd.f32 %v730, %v761
    %v767 = vstv %s100
    %v768 = vmul.f32 %v767, %v143
    %v769 = vmul.f32 %v767, %v144
    %v772 = vrot.slane %v768, 4
    %v773 = vrot.slane %v769, 4
    %v774 = vsel %vm282, %v772, %v773
    %v777 = vadd.f32 %v741, %v774
    %v778 = vadd.f32 %v742, %v773
    %v779 = vstv %s125
    %v780 = vmul.f32 %v779, %v143
    %v781 = vmul.f32 %v779, %v144
    %v784 = vrot.slane %v780, 4
    %v785 = vrot.slane %v781, 4
    %v786 = vsel %vm282, %v784, %v785
    %v789 = vadd.f32 %v753, %v786
    %v790 = vadd.f32 %v754, %v785
    %v791 = vstv %s76
    %v792 = vmul.f32 %v791, %v146
    %v793 = vmul.f32 %v791, %v147
    %v794 = vadd.f32 %v765, %v792
    %v795 = vadd.f32 %v766, %v793
    %v796 = vstv %s101
    %v797 = vmul.f32 %v796, %v146
    %v798 = vmul.f32 %v796, %v147
    %v799 = vadd.f32 %v777, %v797
    %v800 = vadd.f32 %v778, %v798
    %v801 = vstv %s126
    %v802 = vmul.f32 %v801, %v146
    %v803 = vmul.f32 %v801, %v147
    %v804 = vadd.f32 %v789, %v802
    %v805 = vadd.f32 %v790, %v803
    %v806 = vstv %s77
    %v807 = vmul.f32 %v806, %v146
    %v808 = vmul.f32 %v806, %v147
    %v811 = vrot.slane %v807, 1
    %v812 = vrot.slane %v808, 1
    %v813 = vsel %vm171, %v811, %v812
    %v816 = vadd.f32 %v794, %v813
    %v817 = vadd.f32 %v795, %v812
    %v818 = vstv %s102
    %v819 = vmul.f32 %v818, %v146
    %v820 = vmul.f32 %v818, %v147
    %v823 = vrot.slane %v819, 1
    %v824 = vrot.slane %v820, 1
    %v825 = vsel %vm171, %v823, %v824
    %v828 = vadd.f32 %v799, %v825
    %v829 = vadd.f32 %v800, %v824
    %v830 = vstv %s127
    %v831 = vmul.f32 %v830, %v146
    %v832 = vmul.f32 %v830, %v147
    %v835 = vrot.slane %v831, 1
    %v836 = vrot.slane %v832, 1
    %v837 = vsel %vm171, %v835, %v836
    %v840 = vadd.f32 %v804, %v837
    %v841 = vadd.f32 %v805, %v836
    %v842 = vstv %s78
    %v843 = vmul.f32 %v842, %v146
    %v844 = vmul.f32 %v842, %v147
    %v847 = vrot.slane %v843, 2
    %v848 = vrot.slane %v844, 2
    %v849 = vsel %vm208, %v847, %v848
    %v852 = vadd.f32 %v816, %v849
    %v853 = vadd.f32 %v817, %v848
    %v854 = vstv %s103
    %v855 = vmul.f32 %v854, %v146
    %v856 = vmul.f32 %v854, %v147
    %v859 = vrot.slane %v855, 2
    %v860 = vrot.slane %v856, 2
    %v861 = vsel %vm208, %v859, %v860
    %v864 = vadd.f32 %v828, %v861
    %v865 = vadd.f32 %v829, %v860
    %v866 = vstv %s128
    %v867 = vmul.f32 %v866, %v146
    %v868 = vmul.f32 %v866, %v147
    %v871 = vrot.slane %v867, 2
    %v872 = vrot.slane %v868, 2
    %v873 = vsel %vm208, %v871, %v872
    %v876 = vadd.f32 %v840, %v873
    %v877 = vadd.f32 %v841, %v872
    %v878 = vstv %s79
    %v879 = vmul.f32 %v878, %v146
    %v880 = vmul.f32 %v878, %v147
    %v883 = vrot.slane %v879, 3
    %v884 = vrot.slane %v880, 3
    %v885 = vsel %vm245, %v883, %v884
    %v888 = vadd.f32 %v852, %v885
    %v889 = vadd.f32 %v853, %v884
    %v890 = vstv %s104
    %v891 = vmul.f32 %v890, %v146
    %v892 = vmul.f32 %v890, %v147
    %v895 = vrot.slane %v891, 3
    %v896 = vrot.slane %v892, 3
    %v897 = vsel %vm245, %v895, %v896
    %v900 = vadd.f32 %v864, %v897
    %v901 = vadd.f32 %v865, %v896
    %v902 = vstv %s129
    %v903 = vmul.f32 %v902, %v146
    %v904 = vmul.f32 %v902, %v147
    %v907 = vrot.slane %v903, 3
    %v908 = vrot.slane %v904, 3
    %v909 = vsel %vm245, %v907, %v908
    %v912 = vadd.f32 %v876, %v909
    %v913 = vadd.f32 %v877, %v908
    %v914 = vstv %s80
    %v915 = vmul.f32 %v914, %v146
    %v916 = vmul.f32 %v914, %v147
    %v919 = vrot.slane %v915, 4
    %v920 = vrot.slane %v916, 4
    %v921 = vsel %vm282, %v919, %v920
    %v924 = vadd.f32 %v888, %v921
    %v925 = vadd.f32 %v889, %v920
    %v926 = vstv %s105
    %v927 = vmul.f32 %v926, %v146
    %v928 = vmul.f32 %v926, %v147
    %v931 = vrot.slane %v927, 4
    %v932 = vrot.slane %v928, 4
    %v933 = vsel %vm282, %v931, %v932
    %v936 = vadd.f32 %v900, %v933
    %v937 = vadd.f32 %v901, %v932
    %v938 = vstv %s130
    %v939 = vmul.f32 %v938, %v146
    %v940 = vmul.f32 %v938, %v147
    %v943 = vrot.slane %v939, 4
    %v944 = vrot.slane %v940, 4
    %v945 = vsel %vm282, %v943, %v944
    %v948 = vadd.f32 %v912, %v945
    %v949 = vadd.f32 %v913, %v944
    %950 = vst [vmem:[#allocation9] sm:$0xff] %v924
    %951 = vst [vmem:[#allocation9 + $0x8] sm:$0xf] %v925
    %s952 = scalar_lea.vmem [#allocation9], 192
    %953 = vst [vmem:[%s952] sm:$0xff] %v936
    %954 = vst [vmem:[%s952 + $0x8] sm:$0xf] %v937
    %s955 = scalar_lea.vmem [#allocation9], 384
    %956 = vst [vmem:[%s955] sm:$0xff] %v948
    %957 = vst [vmem:[%s955 + $0x8] sm:$0xf] %v949
    %v958 = vld [vmem:[%s136] sm:$0xff]
    %v959 = vld [vmem:[%s136 + $0x8] sm:$0xff]
    %v960 = vld [vmem:[%s139] sm:$0xff]
    %v961 = vld [vmem:[%s139 + $0x8] sm:$0xff]
    %v962 = vld [vmem:[%s142] sm:$0xff]
    %v963 = vld [vmem:[%s142 + $0x8] sm:$0xff]
    %v964 = vld [vmem:[%s145] sm:$0xff]
    %v965 = vld [vmem:[%s145 + $0x8] sm:$0xff]
    %s966 = scalar_lea.vmem [#allocation2], 80
    %v967 = vld [vmem:[%s966] sm:$0xff]
    %v968 = vld [vmem:[%s966 + $0x8] sm:$0xff]
    %v969 = vmul.f32 %v151, %v958
    %v970 = vmul.f32 %v151, %v959
    %v971 = vadd.f32 %v148, %v969
    %v972 = vadd.f32 %v148, %v970
    %v973 = vmul.f32 %v156, %v958
    %v974 = vmul.f32 %v156, %v959
    %v975 = vadd.f32 %v149, %v973
    %v976 = vadd.f32 %v149, %v974
    %v977 = vmul.f32 %v161, %v958
    %v978 = vmul.f32 %v161, %v959
    %v979 = vadd.f32 %v150, %v977
    %v980 = vadd.f32 %v150, %v978
    %v981 = vmul.f32 %v166, %v958
    %v982 = vmul.f32 %v166, %v959
    %v985 = vrot.slane %v981, 1
    %v986 = vrot.slane %v982, 1
    %v987 = vsel %vm171, %v985, %v986
    %v990 = vadd.f32 %v971, %v987
    %v991 = vadd.f32 %v972, %v986
    %v992 = vmul.f32 %v179, %v958
    %v993 = vmul.f32 %v179, %v959
    %v996 = vrot.slane %v992, 1
    %v997 = vrot.slane %v993, 1
    %v998 = vsel %vm171, %v996, %v997
    %v1001 = vadd.f32 %v975, %v998
    %v1002 = vadd.f32 %v976, %v997
    %v1003 = vmul.f32 %v191, %v958
    %v1004 = vmul.f32 %v191, %v959
    %v1007 = vrot.slane %v1003, 1
    %v1008 = vrot.slane %v1004, 1
    %v1009 = vsel %vm171, %v1007, %v1008
    %v1012 = vadd.f32 %v979, %v1009
    %v1013 = vadd.f32 %v980, %v1008
    %v1014 = vmul.f32 %v203, %v958
    %v1015 = vmul.f32 %v203, %v959
    %v1018 = vrot.slane %v1014, 2
    %v1019 = vrot.slane %v1015, 2
    %v1020 = vsel %vm208, %v1018, %v1019
    %v1023 = vadd.f32 %v990, %v1020
    %v1024 = vadd.f32 %v991, %v1019
    %v1025 = vmul.f32 %v216, %v958
    %v1026 = vmul.f32 %v216, %v959
    %v1029 = vrot.slane %v1025, 2
    %v1030 = vrot.slane %v1026, 2
    %v1031 = vsel %vm208, %v1029, %v1030
    %v1034 = vadd.f32 %v1001, %v1031
    %v1035 = vadd.f32 %v1002, %v1030
    %v1036 = vmul.f32 %v228, %v958
    %v1037 = vmul.f32 %v228, %v959
    %v1040 = vrot.slane %v1036, 2
    %v1041 = vrot.slane %v1037, 2
    %v1042 = vsel %vm208, %v1040, %v1041
    %v1045 = vadd.f32 %v1012, %v1042
    %v1046 = vadd.f32 %v1013, %v1041
    %v1047 = vmul.f32 %v240, %v958
    %v1048 = vmul.f32 %v240, %v959
    %v1051 = vrot.slane %v1047, 3
    %v1052 = vrot.slane %v1048, 3
    %v1053 = vsel %vm245, %v1051, %v1052
    %v1056 = vadd.f32 %v1023, %v1053
    %v1057 = vadd.f32 %v1024, %v1052
    %v1058 = vmul.f32 %v253, %v958
    %v1059 = vmul.f32 %v253, %v959
    %v1062 = vrot.slane %v1058, 3
    %v1063 = vrot.slane %v1059, 3
    %v1064 = vsel %vm245, %v1062, %v1063
    %v1067 = vadd.f32 %v1034, %v1064
    %v1068 = vadd.f32 %v1035, %v1063
    %v1069 = vmul.f32 %v265, %v958
    %v1070 = vmul.f32 %v265, %v959
    %v1073 = vrot.slane %v1069, 3
    %v1074 = vrot.slane %v1070, 3
    %v1075 = vsel %vm245, %v1073, %v1074
    %v1078 = vadd.f32 %v1045, %v1075
    %v1079 = vadd.f32 %v1046, %v1074
    %v1080 = vmul.f32 %v277, %v958
    %v1081 = vmul.f32 %v277, %v959
    %v1084 = vrot.slane %v1080, 4
    %v1085 = vrot.slane %v1081, 4
    %v1086 = vsel %vm282, %v1084, %v1085
    %v1089 = vadd.f32 %v1056, %v1086
    %v1090 = vadd.f32 %v1057, %v1085
    %v1091 = vmul.f32 %v290, %v958
    %v1092 = vmul.f32 %v290, %v959
    %v1095 = vrot.slane %v1091, 4
    %v1096 = vrot.slane %v1092, 4
    %v1097 = vsel %vm282, %v1095, %v1096
    %v1100 = vadd.f32 %v1067, %v1097
    %v1101 = vadd.f32 %v1068, %v1096
    %v1102 = vmul.f32 %v302, %v958
    %v1103 = vmul.f32 %v302, %v959
    %v1106 = vrot.slane %v1102, 4
    %v1107 = vrot.slane %v1103, 4
    %v1108 = vsel %vm282, %v1106, %v1107
    %v1111 = vadd.f32 %v1078, %v1108
    %v1112 = vadd.f32 %v1079, %v1107
    %v1113 = vmul.f32 %v314, %v960
    %v1114 = vmul.f32 %v314, %v961
    %v1115 = vadd.f32 %v1089, %v1113
    %v1116 = vadd.f32 %v1090, %v1114
    %v1117 = vmul.f32 %v319, %v960
    %v1118 = vmul.f32 %v319, %v961
    %v1119 = vadd.f32 %v1100, %v1117
    %v1120 = vadd.f32 %v1101, %v1118
    %v1121 = vmul.f32 %v324, %v960
    %v1122 = vmul.f32 %v324, %v961
    %v1123 = vadd.f32 %v1111, %v1121
    %v1124 = vadd.f32 %v1112, %v1122
    %v1125 = vmul.f32 %v329, %v960
    %v1126 = vmul.f32 %v329, %v961
    %v1129 = vrot.slane %v1125, 1
    %v1130 = vrot.slane %v1126, 1
    %v1131 = vsel %vm171, %v1129, %v1130
    %v1134 = vadd.f32 %v1115, %v1131
    %v1135 = vadd.f32 %v1116, %v1130
    %v1136 = vmul.f32 %v341, %v960
    %v1137 = vmul.f32 %v341, %v961
    %v1140 = vrot.slane %v1136, 1
    %v1141 = vrot.slane %v1137, 1
    %v1142 = vsel %vm171, %v1140, %v1141
    %v1145 = vadd.f32 %v1119, %v1142
    %v1146 = vadd.f32 %v1120, %v1141
    %v1147 = vmul.f32 %v353, %v960
    %v1148 = vmul.f32 %v353, %v961
    %v1151 = vrot.slane %v1147, 1
    %v1152 = vrot.slane %v1148, 1
    %v1153 = vsel %vm171, %v1151, %v1152
    %v1156 = vadd.f32 %v1123, %v1153
    %v1157 = vadd.f32 %v1124, %v1152
    %v1158 = vmul.f32 %v365, %v960
    %v1159 = vmul.f32 %v365, %v961
    %v1162 = vrot.slane %v1158, 2
    %v1163 = vrot.slane %v1159, 2
    %v1164 = vsel %vm208, %v1162, %v1163
    %v1167 = vadd.f32 %v1134, %v1164
    %v1168 = vadd.f32 %v1135, %v1163
    %v1169 = vmul.f32 %v377, %v960
    %v1170 = vmul.f32 %v377, %v961
    %v1173 = vrot.slane %v1169, 2
    %v1174 = vrot.slane %v1170, 2
    %v1175 = vsel %vm208, %v1173, %v1174
    %v1178 = vadd.f32 %v1145, %v1175
    %v1179 = vadd.f32 %v1146, %v1174
    %v1180 = vmul.f32 %v389, %v960
    %v1181 = vmul.f32 %v389, %v961
    %v1184 = vrot.slane %v1180, 2
    %v1185 = vrot.slane %v1181, 2
    %v1186 = vsel %vm208, %v1184, %v1185
    %v1189 = vadd.f32 %v1156, %v1186
    %v1190 = vadd.f32 %v1157, %v1185
    %v1191 = vmul.f32 %v401, %v960
    %v1192 = vmul.f32 %v401, %v961
    %v1195 = vrot.slane %v1191, 3
    %v1196 = vrot.slane %v1192, 3
    %v1197 = vsel %vm245, %v1195, %v1196
    %v1200 = vadd.f32 %v1167, %v1197
    %v1201 = vadd.f32 %v1168, %v1196
    %v1202 = vmul.f32 %v413, %v960
    %v1203 = vmul.f32 %v413, %v961
    %v1206 = vrot.slane %v1202, 3
    %v1207 = vrot.slane %v1203, 3
    %v1208 = vsel %vm245, %v1206, %v1207
    %v1211 = vadd.f32 %v1178, %v1208
    %v1212 = vadd.f32 %v1179, %v1207
    %v1213 = vmul.f32 %v425, %v960
    %v1214 = vmul.f32 %v425, %v961
    %v1217 = vrot.slane %v1213, 3
    %v1218 = vrot.slane %v1214, 3
    %v1219 = vsel %vm245, %v1217, %v1218
    %v1222 = vadd.f32 %v1189, %v1219
    %v1223 = vadd.f32 %v1190, %v1218
    %v1224 = vmul.f32 %v437, %v960
    %v1225 = vmul.f32 %v437, %v961
    %v1228 = vrot.slane %v1224, 4
    %v1229 = vrot.slane %v1225, 4
    %v1230 = vsel %vm282, %v1228, %v1229
    %v1233 = vadd.f32 %v1200, %v1230
    %v1234 = vadd.f32 %v1201, %v1229
    %v1235 = vmul.f32 %v449, %v960
    %v1236 = vmul.f32 %v449, %v961
    %v1239 = vrot.slane %v1235, 4
    %v1240 = vrot.slane %v1236, 4
    %v1241 = vsel %vm282, %v1239, %v1240
    %v1244 = vadd.f32 %v1211, %v1241
    %v1245 = vadd.f32 %v1212, %v1240
    %v1246 = vmul.f32 %v461, %v960
    %v1247 = vmul.f32 %v461, %v961
    %v1250 = vrot.slane %v1246, 4
    %v1251 = vrot.slane %v1247, 4
    %v1252 = vsel %vm282, %v1250, %v1251
    %v1255 = vadd.f32 %v1222, %v1252
    %v1256 = vadd.f32 %v1223, %v1251
    %v1257 = vmul.f32 %v473, %v962
    %v1258 = vmul.f32 %v473, %v963
    %v1259 = vadd.f32 %v1233, %v1257
    %v1260 = vadd.f32 %v1234, %v1258
    %v1261 = vmul.f32 %v478, %v962
    %v1262 = vmul.f32 %v478, %v963
    %v1263 = vadd.f32 %v1244, %v1261
    %v1264 = vadd.f32 %v1245, %v1262
    %v1265 = vmul.f32 %v483, %v962
    %v1266 = vmul.f32 %v483, %v963
    %v1267 = vadd.f32 %v1255, %v1265
    %v1268 = vadd.f32 %v1256, %v1266
    %v1269 = vmul.f32 %v488, %v962
    %v1270 = vmul.f32 %v488, %v963
    %v1273 = vrot.slane %v1269, 1
    %v1274 = vrot.slane %v1270, 1
    %v1275 = vsel %vm171, %v1273, %v1274
    %v1278 = vadd.f32 %v1259, %v1275
    %v1279 = vadd.f32 %v1260, %v1274
    %v1280 = vmul.f32 %v500, %v962
    %v1281 = vmul.f32 %v500, %v963
    %v1284 = vrot.slane %v1280, 1
    %v1285 = vrot.slane %v1281, 1
    %v1286 = vsel %vm171, %v1284, %v1285
    %v1289 = vadd.f32 %v1263, %v1286
    %v1290 = vadd.f32 %v1264, %v1285
    %v1291 = vmul.f32 %v512, %v962
    %v1292 = vmul.f32 %v512, %v963
    %v1295 = vrot.slane %v1291, 1
    %v1296 = vrot.slane %v1292, 1
    %v1297 = vsel %vm171, %v1295, %v1296
    %v1300 = vadd.f32 %v1267, %v1297
    %v1301 = vadd.f32 %v1268, %v1296
    %v1302 = vmul.f32 %v524, %v962
    %v1303 = vmul.f32 %v524, %v963
    %v1306 = vrot.slane %v1302, 2
    %v1307 = vrot.slane %v1303, 2
    %v1308 = vsel %vm208, %v1306, %v1307
    %v1311 = vadd.f32 %v1278, %v1308
    %v1312 = vadd.f32 %v1279, %v1307
    %v1313 = vmul.f32 %v536, %v962
    %v1314 = vmul.f32 %v536, %v963
    %v1317 = vrot.slane %v1313, 2
    %v1318 = vrot.slane %v1314, 2
    %v1319 = vsel %vm208, %v1317, %v1318
    %v1322 = vadd.f32 %v1289, %v1319
    %v1323 = vadd.f32 %v1290, %v1318
    %v1324 = vmul.f32 %v548, %v962
    %v1325 = vmul.f32 %v548, %v963
    %v1328 = vrot.slane %v1324, 2
    %v1329 = vrot.slane %v1325, 2
    %v1330 = vsel %vm208, %v1328, %v1329
    %v1333 = vadd.f32 %v1300, %v1330
    %v1334 = vadd.f32 %v1301, %v1329
    %v1335 = vmul.f32 %v560, %v962
    %v1336 = vmul.f32 %v560, %v963
    %v1339 = vrot.slane %v1335, 3
    %v1340 = vrot.slane %v1336, 3
    %v1341 = vsel %vm245, %v1339, %v1340
    %v1344 = vadd.f32 %v1311, %v1341
    %v1345 = vadd.f32 %v1312, %v1340
    %v1346 = vmul.f32 %v572, %v962
    %v1347 = vmul.f32 %v572, %v963
    %v1350 = vrot.slane %v1346, 3
    %v1351 = vrot.slane %v1347, 3
    %v1352 = vsel %vm245, %v1350, %v1351
    %v1355 = vadd.f32 %v1322, %v1352
    %v1356 = vadd.f32 %v1323, %v1351
    %v1357 = vmul.f32 %v584, %v962
    %v1358 = vmul.f32 %v584, %v963
    %v1361 = vrot.slane %v1357, 3
    %v1362 = vrot.slane %v1358, 3
    %v1363 = vsel %vm245, %v1361, %v1362
    %v1366 = vadd.f32 %v1333, %v1363
    %v1367 = vadd.f32 %v1334, %v1362
    %v1368 = vmul.f32 %v596, %v962
    %v1369 = vmul.f32 %v596, %v963
    %v1372 = vrot.slane %v1368, 4
    %v1373 = vrot.slane %v1369, 4
    %v1374 = vsel %vm282, %v1372, %v1373
    %v1377 = vadd.f32 %v1344, %v1374
    %v1378 = vadd.f32 %v1345, %v1373
    %v1379 = vmul.f32 %v608, %v962
    %v1380 = vmul.f32 %v608, %v963
    %v1383 = vrot.slane %v1379, 4
    %v1384 = vrot.slane %v1380, 4
    %v1385 = vsel %vm282, %v1383, %v1384
    %v1388 = vadd.f32 %v1355, %v1385
    %v1389 = vadd.f32 %v1356, %v1384
    %v1390 = vmul.f32 %v620, %v962
    %v1391 = vmul.f32 %v620, %v963
    %v1394 = vrot.slane %v1390, 4
    %v1395 = vrot.slane %v1391, 4
    %v1396 = vsel %vm282, %v1394, %v1395
    %v1399 = vadd.f32 %v1366, %v1396
    %v1400 = vadd.f32 %v1367, %v1395
    %v1401 = vmul.f32 %v632, %v964
    %v1402 = vmul.f32 %v632, %v965
    %v1403 = vadd.f32 %v1377, %v1401
    %v1404 = vadd.f32 %v1378, %v1402
    %v1405 = vmul.f32 %v637, %v964
    %v1406 = vmul.f32 %v637, %v965
    %v1407 = vadd.f32 %v1388, %v1405
    %v1408 = vadd.f32 %v1389, %v1406
    %v1409 = vmul.f32 %v642, %v964
    %v1410 = vmul.f32 %v642, %v965
    %v1411 = vadd.f32 %v1399, %v1409
    %v1412 = vadd.f32 %v1400, %v1410
    %v1413 = vmul.f32 %v647, %v964
    %v1414 = vmul.f32 %v647, %v965
    %v1417 = vrot.slane %v1413, 1
    %v1418 = vrot.slane %v1414, 1
    %v1419 = vsel %vm171, %v1417, %v1418
    %v1422 = vadd.f32 %v1403, %v1419
    %v1423 = vadd.f32 %v1404, %v1418
    %v1424 = vmul.f32 %v659, %v964
    %v1425 = vmul.f32 %v659, %v965
    %v1428 = vrot.slane %v1424, 1
    %v1429 = vrot.slane %v1425, 1
    %v1430 = vsel %vm171, %v1428, %v1429
    %v1433 = vadd.f32 %v1407, %v1430
    %v1434 = vadd.f32 %v1408, %v1429
    %v1435 = vmul.f32 %v671, %v964
    %v1436 = vmul.f32 %v671, %v965
    %v1439 = vrot.slane %v1435, 1
    %v1440 = vrot.slane %v1436, 1
    %v1441 = vsel %vm171, %v1439, %v1440
    %v1444 = vadd.f32 %v1411, %v1441
    %v1445 = vadd.f32 %v1412, %v1440
    %v1446 = vmul.f32 %v683, %v964
    %v1447 = vmul.f32 %v683, %v965
    %v1450 = vrot.slane %v1446, 2
    %v1451 = vrot.slane %v1447, 2
    %v1452 = vsel %vm208, %v1450, %v1451
    %v1455 = vadd.f32 %v1422, %v1452
    %v1456 = vadd.f32 %v1423, %v1451
    %v1457 = vmul.f32 %v695, %v964
    %v1458 = vmul.f32 %v695, %v965
    %v1461 = vrot.slane %v1457, 2
    %v1462 = vrot.slane %v1458, 2
    %v1463 = vsel %vm208, %v1461, %v1462
    %v1466 = vadd.f32 %v1433, %v1463
    %v1467 = vadd.f32 %v1434, %v1462
    %v1468 = vmul.f32 %v707, %v964
    %v1469 = vmul.f32 %v707, %v965
    %v1472 = vrot.slane %v1468, 2
    %v1473 = vrot.slane %v1469, 2
    %v1474 = vsel %vm208, %v1472, %v1473
    %v1477 = vadd.f32 %v1444, %v1474
    %v1478 = vadd.f32 %v1445, %v1473
    %v1479 = vmul.f32 %v719, %v964
    %v1480 = vmul.f32 %v719, %v965
    %v1483 = vrot.slane %v1479, 3
    %v1484 = vrot.slane %v1480, 3
    %v1485 = vsel %vm245, %v1483, %v1484
    %v1488 = vadd.f32 %v1455, %v1485
    %v1489 = vadd.f32 %v1456, %v1484
    %v1490 = vmul.f32 %v731, %v964
    %v1491 = vmul.f32 %v731, %v965
    %v1494 = vrot.slane %v1490, 3
    %v1495 = vrot.slane %v1491, 3
    %v1496 = vsel %vm245, %v1494, %v1495
    %v1499 = vadd.f32 %v1466, %v1496
    %v1500 = vadd.f32 %v1467, %v1495
    %v1501 = vmul.f32 %v743, %v964
    %v1502 = vmul.f32 %v743, %v965
    %v1505 = vrot.slane %v1501, 3
    %v1506 = vrot.slane %v1502, 3
    %v1507 = vsel %vm245, %v1505, %v1506
    %v1510 = vadd.f32 %v1477, %v1507
    %v1511 = vadd.f32 %v1478, %v1506
    %v1512 = vmul.f32 %v755, %v964
    %v1513 = vmul.f32 %v755, %v965
    %v1516 = vrot.slane %v1512, 4
    %v1517 = vrot.slane %v1513, 4
    %v1518 = vsel %vm282, %v1516, %v1517
    %v1521 = vadd.f32 %v1488, %v1518
    %v1522 = vadd.f32 %v1489, %v1517
    %v1523 = vmul.f32 %v767, %v964
    %v1524 = vmul.f32 %v767, %v965
    %v1527 = vrot.slane %v1523, 4
    %v1528 = vrot.slane %v1524, 4
    %v1529 = vsel %vm282, %v1527, %v1528
    %v1532 = vadd.f32 %v1499, %v1529
    %v1533 = vadd.f32 %v1500, %v1528
    %v1534 = vmul.f32 %v779, %v964
    %v1535 = vmul.f32 %v779, %v965
    %v1538 = vrot.slane %v1534, 4
    %v1539 = vrot.slane %v1535, 4
    %v1540 = vsel %vm282, %v1538, %v1539
    %v1543 = vadd.f32 %v1510, %v1540
    %v1544 = vadd.f32 %v1511, %v1539
    %v1545 = vmul.f32 %v791, %v967
    %v1546 = vmul.f32 %v791, %v968
    %v1547 = vadd.f32 %v1521, %v1545
    %v1548 = vadd.f32 %v1522, %v1546
    %v1549 = vmul.f32 %v796, %v967
    %v1550 = vmul.f32 %v796, %v968
    %v1551 = vadd.f32 %v1532, %v1549
    %v1552 = vadd.f32 %v1533, %v1550
    %v1553 = vmul.f32 %v801, %v967
    %v1554 = vmul.f32 %v801, %v968
    %v1555 = vadd.f32 %v1543, %v1553
    %v1556 = vadd.f32 %v1544, %v1554
    %v1557 = vmul.f32 %v806, %v967
    %v1558 = vmul.f32 %v806, %v968
    %v1561 = vrot.slane %v1557, 1
    %v1562 = vrot.slane %v1558, 1
    %v1563 = vsel %vm171, %v1561, %v1562
    %v1566 = vadd.f32 %v1547, %v1563
    %v1567 = vadd.f32 %v1548, %v1562
    %v1568 = vmul.f32 %v818, %v967
    %v1569 = vmul.f32 %v818, %v968
    %v1572 = vrot.slane %v1568, 1
    %v1573 = vrot.slane %v1569, 1
    %v1574 = vsel %vm171, %v1572, %v1573
    %v1577 = vadd.f32 %v1551, %v1574
    %v1578 = vadd.f32 %v1552, %v1573
    %v1579 = vmul.f32 %v830, %v967
    %v1580 = vmul.f32 %v830, %v968
    %v1583 = vrot.slane %v1579, 1
    %v1584 = vrot.slane %v1580, 1
    %v1585 = vsel %vm171, %v1583, %v1584
    %v1588 = vadd.f32 %v1555, %v1585
    %v1589 = vadd.f32 %v1556, %v1584
    %v1590 = vmul.f32 %v842, %v967
    %v1591 = vmul.f32 %v842, %v968
    %v1594 = vrot.slane %v1590, 2
    %v1595 = vrot.slane %v1591, 2
    %v1596 = vsel %vm208, %v1594, %v1595
    %v1599 = vadd.f32 %v1566, %v1596
    %v1600 = vadd.f32 %v1567, %v1595
    %v1601 = vmul.f32 %v854, %v967
    %v1602 = vmul.f32 %v854, %v968
    %v1605 = vrot.slane %v1601, 2
    %v1606 = vrot.slane %v1602, 2
    %v1607 = vsel %vm208, %v1605, %v1606
    %v1610 = vadd.f32 %v1577, %v1607
    %v1611 = vadd.f32 %v1578, %v1606
    %v1612 = vmul.f32 %v866, %v967
    %v1613 = vmul.f32 %v866, %v968
    %v1616 = vrot.slane %v1612, 2
    %v1617 = vrot.slane %v1613, 2
    %v1618 = vsel %vm208, %v1616, %v1617
    %v1621 = vadd.f32 %v1588, %v1618
    %v1622 = vadd.f32 %v1589, %v1617
    %v1623 = vmul.f32 %v878, %v967
    %v1624 = vmul.f32 %v878, %v968
    %v1627 = vrot.slane %v1623, 3
    %v1628 = vrot.slane %v1624, 3
    %v1629 = vsel %vm245, %v1627, %v1628
    %v1632 = vadd.f32 %v1599, %v1629
    %v1633 = vadd.f32 %v1600, %v1628
    %v1634 = vmul.f32 %v890, %v967
    %v1635 = vmul.f32 %v890, %v968
    %v1638 = vrot.slane %v1634, 3
    %v1639 = vrot.slane %v1635, 3
    %v1640 = vsel %vm245, %v1638, %v1639
    %v1643 = vadd.f32 %v1610, %v1640
    %v1644 = vadd.f32 %v1611, %v1639
    %v1645 = vmul.f32 %v902, %v967
    %v1646 = vmul.f32 %v902, %v968
    %v1649 = vrot.slane %v1645, 3
    %v1650 = vrot.slane %v1646, 3
    %v1651 = vsel %vm245, %v1649, %v1650
    %v1654 = vadd.f32 %v1621, %v1651
    %v1655 = vadd.f32 %v1622, %v1650
    %v1656 = vmul.f32 %v914, %v967
    %v1657 = vmul.f32 %v914, %v968
    %v1660 = vrot.slane %v1656, 4
    %v1661 = vrot.slane %v1657, 4
    %v1662 = vsel %vm282, %v1660, %v1661
    %v1665 = vadd.f32 %v1632, %v1662
    %v1666 = vadd.f32 %v1633, %v1661
    %v1667 = vmul.f32 %v926, %v967
    %v1668 = vmul.f32 %v926, %v968
    %v1671 = vrot.slane %v1667, 4
    %v1672 = vrot.slane %v1668, 4
    %v1673 = vsel %vm282, %v1671, %v1672
    %v1676 = vadd.f32 %v1643, %v1673
    %v1677 = vadd.f32 %v1644, %v1672
    %v1678 = vmul.f32 %v938, %v967
    %v1679 = vmul.f32 %v938, %v968
    %v1682 = vrot.slane %v1678, 4
    %v1683 = vrot.slane %v1679, 4
    %v1684 = vsel %vm282, %v1682, %v1683
    %v1687 = vadd.f32 %v1654, %v1684
    %v1688 = vadd.f32 %v1655, %v1683
    %s1689 = scalar_lea.vmem [#allocation9], 16
    %1690 = vst [vmem:[%s1689] sm:$0xff] %v1665
    %1691 = vst [vmem:[%s1689 + $0x8] sm:$0xf] %v1666
    %s1692 = scalar_lea.vmem [#allocation9], 208
    %1693 = vst [vmem:[%s1692] sm:$0xff] %v1676
    %1694 = vst [vmem:[%s1692 + $0x8] sm:$0xf] %v1677
    %s1695 = scalar_lea.vmem [#allocation9], 400
    %1696 = vst [vmem:[%s1695] sm:$0xff] %v1687
    %1697 = vst [vmem:[%s1695 + $0x8] sm:$0xf] %v1688
    %v1698 = vld [vmem:[%s139] sm:$0xff]
    %v1699 = vld [vmem:[%s139 + $0x8] sm:$0xff]
    %v1700 = vld [vmem:[%s142] sm:$0xff]
    %v1701 = vld [vmem:[%s142 + $0x8] sm:$0xff]
    %v1702 = vld [vmem:[%s145] sm:$0xff]
    %v1703 = vld [vmem:[%s145 + $0x8] sm:$0xff]
    %v1704 = vld [vmem:[%s966] sm:$0xff]
    %v1705 = vld [vmem:[%s966 + $0x8] sm:$0xff]
    %s1706 = scalar_lea.vmem [#allocation2], 96
    %v1707 = vld [vmem:[%s1706] sm:$0xff]
    %v1708 = vld [vmem:[%s1706 + $0x8] sm:$0xff]
    %v1709 = vmul.f32 %v151, %v1698
    %v1710 = vmul.f32 %v151, %v1699
    %v1711 = vadd.f32 %v148, %v1709
    %v1712 = vadd.f32 %v148, %v1710
    %v1713 = vmul.f32 %v156, %v1698
    %v1714 = vmul.f32 %v156, %v1699
    %v1715 = vadd.f32 %v149, %v1713
    %v1716 = vadd.f32 %v149, %v1714
    %v1717 = vmul.f32 %v161, %v1698
    %v1718 = vmul.f32 %v161, %v1699
    %v1719 = vadd.f32 %v150, %v1717
    %v1720 = vadd.f32 %v150, %v1718
    %v1721 = vmul.f32 %v166, %v1698
    %v1722 = vmul.f32 %v166, %v1699
    %v1725 = vrot.slane %v1721, 1
    %v1726 = vrot.slane %v1722, 1
    %v1727 = vsel %vm171, %v1725, %v1726
    %v1730 = vadd.f32 %v1711, %v1727
    %v1731 = vadd.f32 %v1712, %v1726
    %v1732 = vmul.f32 %v179, %v1698
    %v1733 = vmul.f32 %v179, %v1699
    %v1736 = vrot.slane %v1732, 1
    %v1737 = vrot.slane %v1733, 1
    %v1738 = vsel %vm171, %v1736, %v1737
    %v1741 = vadd.f32 %v1715, %v1738
    %v1742 = vadd.f32 %v1716, %v1737
    %v1743 = vmul.f32 %v191, %v1698
    %v1744 = vmul.f32 %v191, %v1699
    %v1747 = vrot.slane %v1743, 1
    %v1748 = vrot.slane %v1744, 1
    %v1749 = vsel %vm171, %v1747, %v1748
    %v1752 = vadd.f32 %v1719, %v1749
    %v1753 = vadd.f32 %v1720, %v1748
    %v1754 = vmul.f32 %v203, %v1698
    %v1755 = vmul.f32 %v203, %v1699
    %v1758 = vrot.slane %v1754, 2
    %v1759 = vrot.slane %v1755, 2
    %v1760 = vsel %vm208, %v1758, %v1759
    %v1763 = vadd.f32 %v1730, %v1760
    %v1764 = vadd.f32 %v1731, %v1759
    %v1765 = vmul.f32 %v216, %v1698
    %v1766 = vmul.f32 %v216, %v1699
    %v1769 = vrot.slane %v1765, 2
    %v1770 = vrot.slane %v1766, 2
    %v1771 = vsel %vm208, %v1769, %v1770
    %v1774 = vadd.f32 %v1741, %v1771
    %v1775 = vadd.f32 %v1742, %v1770
    %v1776 = vmul.f32 %v228, %v1698
    %v1777 = vmul.f32 %v228, %v1699
    %v1780 = vrot.slane %v1776, 2
    %v1781 = vrot.slane %v1777, 2
    %v1782 = vsel %vm208, %v1780, %v1781
    %v1785 = vadd.f32 %v1752, %v1782
    %v1786 = vadd.f32 %v1753, %v1781
    %v1787 = vmul.f32 %v240, %v1698
    %v1788 = vmul.f32 %v240, %v1699
    %v1791 = vrot.slane %v1787, 3
    %v1792 = vrot.slane %v1788, 3
    %v1793 = vsel %vm245, %v1791, %v1792
    %v1796 = vadd.f32 %v1763, %v1793
    %v1797 = vadd.f32 %v1764, %v1792
    %v1798 = vmul.f32 %v253, %v1698
    %v1799 = vmul.f32 %v253, %v1699
    %v1802 = vrot.slane %v1798, 3
    %v1803 = vrot.slane %v1799, 3
    %v1804 = vsel %vm245, %v1802, %v1803
    %v1807 = vadd.f32 %v1774, %v1804
    %v1808 = vadd.f32 %v1775, %v1803
    %v1809 = vmul.f32 %v265, %v1698
    %v1810 = vmul.f32 %v265, %v1699
    %v1813 = vrot.slane %v1809, 3
    %v1814 = vrot.slane %v1810, 3
    %v1815 = vsel %vm245, %v1813, %v1814
    %v1818 = vadd.f32 %v1785, %v1815
    %v1819 = vadd.f32 %v1786, %v1814
    %v1820 = vmul.f32 %v277, %v1698
    %v1821 = vmul.f32 %v277, %v1699
    %v1824 = vrot.slane %v1820, 4
    %v1825 = vrot.slane %v1821, 4
    %v1826 = vsel %vm282, %v1824, %v1825
    %v1829 = vadd.f32 %v1796, %v1826
    %v1830 = vadd.f32 %v1797, %v1825
    %v1831 = vmul.f32 %v290, %v1698
    %v1832 = vmul.f32 %v290, %v1699
    %v1835 = vrot.slane %v1831, 4
    %v1836 = vrot.slane %v1832, 4
    %v1837 = vsel %vm282, %v1835, %v1836
    %v1840 = vadd.f32 %v1807, %v1837
    %v1841 = vadd.f32 %v1808, %v1836
    %v1842 = vmul.f32 %v302, %v1698
    %v1843 = vmul.f32 %v302, %v1699
    %v1846 = vrot.slane %v1842, 4
    %v1847 = vrot.slane %v1843, 4
    %v1848 = vsel %vm282, %v1846, %v1847
    %v1851 = vadd.f32 %v1818, %v1848
    %v1852 = vadd.f32 %v1819, %v1847
    %v1853 = vmul.f32 %v314, %v1700
    %v1854 = vmul.f32 %v314, %v1701
    %v1855 = vadd.f32 %v1829, %v1853
    %v1856 = vadd.f32 %v1830, %v1854
    %v1857 = vmul.f32 %v319, %v1700
    %v1858 = vmul.f32 %v319, %v1701
    %v1859 = vadd.f32 %v1840, %v1857
    %v1860 = vadd.f32 %v1841, %v1858
    %v1861 = vmul.f32 %v324, %v1700
    %v1862 = vmul.f32 %v324, %v1701
    %v1863 = vadd.f32 %v1851, %v1861
    %v1864 = vadd.f32 %v1852, %v1862
    %v1865 = vmul.f32 %v329, %v1700
    %v1866 = vmul.f32 %v329, %v1701
    %v1869 = vrot.slane %v1865, 1
    %v1870 = vrot.slane %v1866, 1
    %v1871 = vsel %vm171, %v1869, %v1870
    %v1874 = vadd.f32 %v1855, %v1871
    %v1875 = vadd.f32 %v1856, %v1870
    %v1876 = vmul.f32 %v341, %v1700
    %v1877 = vmul.f32 %v341, %v1701
    %v1880 = vrot.slane %v1876, 1
    %v1881 = vrot.slane %v1877, 1
    %v1882 = vsel %vm171, %v1880, %v1881
    %v1885 = vadd.f32 %v1859, %v1882
    %v1886 = vadd.f32 %v1860, %v1881
    %v1887 = vmul.f32 %v353, %v1700
    %v1888 = vmul.f32 %v353, %v1701
    %v1891 = vrot.slane %v1887, 1
    %v1892 = vrot.slane %v1888, 1
    %v1893 = vsel %vm171, %v1891, %v1892
    %v1896 = vadd.f32 %v1863, %v1893
    %v1897 = vadd.f32 %v1864, %v1892
    %v1898 = vmul.f32 %v365, %v1700
    %v1899 = vmul.f32 %v365, %v1701
    %v1902 = vrot.slane %v1898, 2
    %v1903 = vrot.slane %v1899, 2
    %v1904 = vsel %vm208, %v1902, %v1903
    %v1907 = vadd.f32 %v1874, %v1904
    %v1908 = vadd.f32 %v1875, %v1903
    %v1909 = vmul.f32 %v377, %v1700
    %v1910 = vmul.f32 %v377, %v1701
    %v1913 = vrot.slane %v1909, 2
    %v1914 = vrot.slane %v1910, 2
    %v1915 = vsel %vm208, %v1913, %v1914
    %v1918 = vadd.f32 %v1885, %v1915
    %v1919 = vadd.f32 %v1886, %v1914
    %v1920 = vmul.f32 %v389, %v1700
    %v1921 = vmul.f32 %v389, %v1701
    %v1924 = vrot.slane %v1920, 2
    %v1925 = vrot.slane %v1921, 2
    %v1926 = vsel %vm208, %v1924, %v1925
    %v1929 = vadd.f32 %v1896, %v1926
    %v1930 = vadd.f32 %v1897, %v1925
    %v1931 = vmul.f32 %v401, %v1700
    %v1932 = vmul.f32 %v401, %v1701
    %v1935 = vrot.slane %v1931, 3
    %v1936 = vrot.slane %v1932, 3
    %v1937 = vsel %vm245, %v1935, %v1936
    %v1940 = vadd.f32 %v1907, %v1937
    %v1941 = vadd.f32 %v1908, %v1936
    %v1942 = vmul.f32 %v413, %v1700
    %v1943 = vmul.f32 %v413, %v1701
    %v1946 = vrot.slane %v1942, 3
    %v1947 = vrot.slane %v1943, 3
    %v1948 = vsel %vm245, %v1946, %v1947
    %v1951 = vadd.f32 %v1918, %v1948
    %v1952 = vadd.f32 %v1919, %v1947
    %v1953 = vmul.f32 %v425, %v1700
    %v1954 = vmul.f32 %v425, %v1701
    %v1957 = vrot.slane %v1953, 3
    %v1958 = vrot.slane %v1954, 3
    %v1959 = vsel %vm245, %v1957, %v1958
    %v1962 = vadd.f32 %v1929, %v1959
    %v1963 = vadd.f32 %v1930, %v1958
    %v1964 = vmul.f32 %v437, %v1700
    %v1965 = vmul.f32 %v437, %v1701
    %v1968 = vrot.slane %v1964, 4
    %v1969 = vrot.slane %v1965, 4
    %v1970 = vsel %vm282, %v1968, %v1969
    %v1973 = vadd.f32 %v1940, %v1970
    %v1974 = vadd.f32 %v1941, %v1969
    %v1975 = vmul.f32 %v449, %v1700
    %v1976 = vmul.f32 %v449, %v1701
    %v1979 = vrot.slane %v1975, 4
    %v1980 = vrot.slane %v1976, 4
    %v1981 = vsel %vm282, %v1979, %v1980
    %v1984 = vadd.f32 %v1951, %v1981
    %v1985 = vadd.f32 %v1952, %v1980
    %v1986 = vmul.f32 %v461, %v1700
    %v1987 = vmul.f32 %v461, %v1701
    %v1990 = vrot.slane %v1986, 4
    %v1991 = vrot.slane %v1987, 4
    %v1992 = vsel %vm282, %v1990, %v1991
    %v1995 = vadd.f32 %v1962, %v1992
    %v1996 = vadd.f32 %v1963, %v1991
    %v1997 = vmul.f32 %v473, %v1702
    %v1998 = vmul.f32 %v473, %v1703
    %v1999 = vadd.f32 %v1973, %v1997
    %v2000 = vadd.f32 %v1974, %v1998
    %v2001 = vmul.f32 %v478, %v1702
    %v2002 = vmul.f32 %v478, %v1703
    %v2003 = vadd.f32 %v1984, %v2001
    %v2004 = vadd.f32 %v1985, %v2002
    %v2005 = vmul.f32 %v483, %v1702
    %v2006 = vmul.f32 %v483, %v1703
    %v2007 = vadd.f32 %v1995, %v2005
    %v2008 = vadd.f32 %v1996, %v2006
    %v2009 = vmul.f32 %v488, %v1702
    %v2010 = vmul.f32 %v488, %v1703
    %v2013 = vrot.slane %v2009, 1
    %v2014 = vrot.slane %v2010, 1
    %v2015 = vsel %vm171, %v2013, %v2014
    %v2018 = vadd.f32 %v1999, %v2015
    %v2019 = vadd.f32 %v2000, %v2014
    %v2020 = vmul.f32 %v500, %v1702
    %v2021 = vmul.f32 %v500, %v1703
    %v2024 = vrot.slane %v2020, 1
    %v2025 = vrot.slane %v2021, 1
    %v2026 = vsel %vm171, %v2024, %v2025
    %v2029 = vadd.f32 %v2003, %v2026
    %v2030 = vadd.f32 %v2004, %v2025
    %v2031 = vmul.f32 %v512, %v1702
    %v2032 = vmul.f32 %v512, %v1703
    %v2035 = vrot.slane %v2031, 1
    %v2036 = vrot.slane %v2032, 1
    %v2037 = vsel %vm171, %v2035, %v2036
    %v2040 = vadd.f32 %v2007, %v2037
    %v2041 = vadd.f32 %v2008, %v2036
    %v2042 = vmul.f32 %v524, %v1702
    %v2043 = vmul.f32 %v524, %v1703
    %v2046 = vrot.slane %v2042, 2
    %v2047 = vrot.slane %v2043, 2
    %v2048 = vsel %vm208, %v2046, %v2047
    %v2051 = vadd.f32 %v2018, %v2048
    %v2052 = vadd.f32 %v2019, %v2047
    %v2053 = vmul.f32 %v536, %v1702
    %v2054 = vmul.f32 %v536, %v1703
    %v2057 = vrot.slane %v2053, 2
    %v2058 = vrot.slane %v2054, 2
    %v2059 = vsel %vm208, %v2057, %v2058
    %v2062 = vadd.f32 %v2029, %v2059
    %v2063 = vadd.f32 %v2030, %v2058
    %v2064 = vmul.f32 %v548, %v1702
    %v2065 = vmul.f32 %v548, %v1703
    %v2068 = vrot.slane %v2064, 2
    %v2069 = vrot.slane %v2065, 2
    %v2070 = vsel %vm208, %v2068, %v2069
    %v2073 = vadd.f32 %v2040, %v2070
    %v2074 = vadd.f32 %v2041, %v2069
    %v2075 = vmul.f32 %v560, %v1702
    %v2076 = vmul.f32 %v560, %v1703
    %v2079 = vrot.slane %v2075, 3
    %v2080 = vrot.slane %v2076, 3
    %v2081 = vsel %vm245, %v2079, %v2080
    %v2084 = vadd.f32 %v2051, %v2081
    %v2085 = vadd.f32 %v2052, %v2080
    %v2086 = vmul.f32 %v572, %v1702
    %v2087 = vmul.f32 %v572, %v1703
    %v2090 = vrot.slane %v2086, 3
    %v2091 = vrot.slane %v2087, 3
    %v2092 = vsel %vm245, %v2090, %v2091
    %v2095 = vadd.f32 %v2062, %v2092
    %v2096 = vadd.f32 %v2063, %v2091
    %v2097 = vmul.f32 %v584, %v1702
    %v2098 = vmul.f32 %v584, %v1703
    %v2101 = vrot.slane %v2097, 3
    %v2102 = vrot.slane %v2098, 3
    %v2103 = vsel %vm245, %v2101, %v2102
    %v2106 = vadd.f32 %v2073, %v2103
    %v2107 = vadd.f32 %v2074, %v2102
    %v2108 = vmul.f32 %v596, %v1702
    %v2109 = vmul.f32 %v596, %v1703
    %v2112 = vrot.slane %v2108, 4
    %v2113 = vrot.slane %v2109, 4
    %v2114 = vsel %vm282, %v2112, %v2113
    %v2117 = vadd.f32 %v2084, %v2114
    %v2118 = vadd.f32 %v2085, %v2113
    %v2119 = vmul.f32 %v608, %v1702
    %v2120 = vmul.f32 %v608, %v1703
    %v2123 = vrot.slane %v2119, 4
    %v2124 = vrot.slane %v2120, 4
    %v2125 = vsel %vm282, %v2123, %v2124
    %v2128 = vadd.f32 %v2095, %v2125
    %v2129 = vadd.f32 %v2096, %v2124
    %v2130 = vmul.f32 %v620, %v1702
    %v2131 = vmul.f32 %v620, %v1703
    %v2134 = vrot.slane %v2130, 4
    %v2135 = vrot.slane %v2131, 4
    %v2136 = vsel %vm282, %v2134, %v2135
    %v2139 = vadd.f32 %v2106, %v2136
    %v2140 = vadd.f32 %v2107, %v2135
    %v2141 = vmul.f32 %v632, %v1704
    %v2142 = vmul.f32 %v632, %v1705
    %v2143 = vadd.f32 %v2117, %v2141
    %v2144 = vadd.f32 %v2118, %v2142
    %v2145 = vmul.f32 %v637, %v1704
    %v2146 = vmul.f32 %v637, %v1705
    %v2147 = vadd.f32 %v2128, %v2145
    %v2148 = vadd.f32 %v2129, %v2146
    %v2149 = vmul.f32 %v642, %v1704
    %v2150 = vmul.f32 %v642, %v1705
    %v2151 = vadd.f32 %v2139, %v2149
    %v2152 = vadd.f32 %v2140, %v2150
    %v2153 = vmul.f32 %v647, %v1704
    %v2154 = vmul.f32 %v647, %v1705
    %v2157 = vrot.slane %v2153, 1
    %v2158 = vrot.slane %v2154, 1
    %v2159 = vsel %vm171, %v2157, %v2158
    %v2162 = vadd.f32 %v2143, %v2159
    %v2163 = vadd.f32 %v2144, %v2158
    %v2164 = vmul.f32 %v659, %v1704
    %v2165 = vmul.f32 %v659, %v1705
    %v2168 = vrot.slane %v2164, 1
    %v2169 = vrot.slane %v2165, 1
    %v2170 = vsel %vm171, %v2168, %v2169
    %v2173 = vadd.f32 %v2147, %v2170
    %v2174 = vadd.f32 %v2148, %v2169
    %v2175 = vmul.f32 %v671, %v1704
    %v2176 = vmul.f32 %v671, %v1705
    %v2179 = vrot.slane %v2175, 1
    %v2180 = vrot.slane %v2176, 1
    %v2181 = vsel %vm171, %v2179, %v2180
    %v2184 = vadd.f32 %v2151, %v2181
    %v2185 = vadd.f32 %v2152, %v2180
    %v2186 = vmul.f32 %v683, %v1704
    %v2187 = vmul.f32 %v683, %v1705
    %v2190 = vrot.slane %v2186, 2
    %v2191 = vrot.slane %v2187, 2
    %v2192 = vsel %vm208, %v2190, %v2191
    %v2195 = vadd.f32 %v2162, %v2192
    %v2196 = vadd.f32 %v2163, %v2191
    %v2197 = vmul.f32 %v695, %v1704
    %v2198 = vmul.f32 %v695, %v1705
    %v2201 = vrot.slane %v2197, 2
    %v2202 = vrot.slane %v2198, 2
    %v2203 = vsel %vm208, %v2201, %v2202
    %v2206 = vadd.f32 %v2173, %v2203
    %v2207 = vadd.f32 %v2174, %v2202
    %v2208 = vmul.f32 %v707, %v1704
    %v2209 = vmul.f32 %v707, %v1705
    %v2212 = vrot.slane %v2208, 2
    %v2213 = vrot.slane %v2209, 2
    %v2214 = vsel %vm208, %v2212, %v2213
    %v2217 = vadd.f32 %v2184, %v2214
    %v2218 = vadd.f32 %v2185, %v2213
    %v2219 = vmul.f32 %v719, %v1704
    %v2220 = vmul.f32 %v719, %v1705
    %v2223 = vrot.slane %v2219, 3
    %v2224 = vrot.slane %v2220, 3
    %v2225 = vsel %vm245, %v2223, %v2224
    %v2228 = vadd.f32 %v2195, %v2225
    %v2229 = vadd.f32 %v2196, %v2224
    %v2230 = vmul.f32 %v731, %v1704
    %v2231 = vmul.f32 %v731, %v1705
    %v2234 = vrot.slane %v2230, 3
    %v2235 = vrot.slane %v2231, 3
    %v2236 = vsel %vm245, %v2234, %v2235
    %v2239 = vadd.f32 %v2206, %v2236
    %v2240 = vadd.f32 %v2207, %v2235
    %v2241 = vmul.f32 %v743, %v1704
    %v2242 = vmul.f32 %v743, %v1705
    %v2245 = vrot.slane %v2241, 3
    %v2246 = vrot.slane %v2242, 3
    %v2247 = vsel %vm245, %v2245, %v2246
    %v2250 = vadd.f32 %v2217, %v2247
    %v2251 = vadd.f32 %v2218, %v2246
    %v2252 = vmul.f32 %v755, %v1704
    %v2253 = vmul.f32 %v755, %v1705
    %v2256 = vrot.slane %v2252, 4
    %v2257 = vrot.slane %v2253, 4
    %v2258 = vsel %vm282, %v2256, %v2257
    %v2261 = vadd.f32 %v2228, %v2258
    %v2262 = vadd.f32 %v2229, %v2257
    %v2263 = vmul.f32 %v767, %v1704
    %v2264 = vmul.f32 %v767, %v1705
    %v2267 = vrot.slane %v2263, 4
    %v2268 = vrot.slane %v2264, 4
    %v2269 = vsel %vm282, %v2267, %v2268
    %v2272 = vadd.f32 %v2239, %v2269
    %v2273 = vadd.f32 %v2240, %v2268
    %v2274 = vmul.f32 %v779, %v1704
    %v2275 = vmul.f32 %v779, %v1705
    %v2278 = vrot.slane %v2274, 4
    %v2279 = vrot.slane %v2275, 4
    %v2280 = vsel %vm282, %v2278, %v2279
    %v2283 = vadd.f32 %v2250, %v2280
    %v2284 = vadd.f32 %v2251, %v2279
    %v2285 = vmul.f32 %v791, %v1707
    %v2286 = vmul.f32 %v791, %v1708
    %v2287 = vadd.f32 %v2261, %v2285
    %v2288 = vadd.f32 %v2262, %v2286
    %v2289 = vmul.f32 %v796, %v1707
    %v2290 = vmul.f32 %v796, %v1708
    %v2291 = vadd.f32 %v2272, %v2289
    %v2292 = vadd.f32 %v2273, %v2290
    %v2293 = vmul.f32 %v801, %v1707
    %v2294 = vmul.f32 %v801, %v1708
    %v2295 = vadd.f32 %v2283, %v2293
    %v2296 = vadd.f32 %v2284, %v2294
    %v2297 = vmul.f32 %v806, %v1707
    %v2298 = vmul.f32 %v806, %v1708
    %v2301 = vrot.slane %v2297, 1
    %v2302 = vrot.slane %v2298, 1
    %v2303 = vsel %vm171, %v2301, %v2302
    %v2306 = vadd.f32 %v2287, %v2303
    %v2307 = vadd.f32 %v2288, %v2302
    %v2308 = vmul.f32 %v818, %v1707
    %v2309 = vmul.f32 %v818, %v1708
    %v2312 = vrot.slane %v2308, 1
    %v2313 = vrot.slane %v2309, 1
    %v2314 = vsel %vm171, %v2312, %v2313
    %v2317 = vadd.f32 %v2291, %v2314
    %v2318 = vadd.f32 %v2292, %v2313
    %v2319 = vmul.f32 %v830, %v1707
    %v2320 = vmul.f32 %v830, %v1708
    %v2323 = vrot.slane %v2319, 1
    %v2324 = vrot.slane %v2320, 1
    %v2325 = vsel %vm171, %v2323, %v2324
    %v2328 = vadd.f32 %v2295, %v2325
    %v2329 = vadd.f32 %v2296, %v2324
    %v2330 = vmul.f32 %v842, %v1707
    %v2331 = vmul.f32 %v842, %v1708
    %v2334 = vrot.slane %v2330, 2
    %v2335 = vrot.slane %v2331, 2
    %v2336 = vsel %vm208, %v2334, %v2335
    %v2339 = vadd.f32 %v2306, %v2336
    %v2340 = vadd.f32 %v2307, %v2335
    %v2341 = vmul.f32 %v854, %v1707
    %v2342 = vmul.f32 %v854, %v1708
    %v2345 = vrot.slane %v2341, 2
    %v2346 = vrot.slane %v2342, 2
    %v2347 = vsel %vm208, %v2345, %v2346
    %v2350 = vadd.f32 %v2317, %v2347
    %v2351 = vadd.f32 %v2318, %v2346
    %v2352 = vmul.f32 %v866, %v1707
    %v2353 = vmul.f32 %v866, %v1708
    %v2356 = vrot.slane %v2352, 2
    %v2357 = vrot.slane %v2353, 2
    %v2358 = vsel %vm208, %v2356, %v2357
    %v2361 = vadd.f32 %v2328, %v2358
    %v2362 = vadd.f32 %v2329, %v2357
    %v2363 = vmul.f32 %v878, %v1707
    %v2364 = vmul.f32 %v878, %v1708
    %v2367 = vrot.slane %v2363, 3
    %v2368 = vrot.slane %v2364, 3
    %v2369 = vsel %vm245, %v2367, %v2368
    %v2372 = vadd.f32 %v2339, %v2369
    %v2373 = vadd.f32 %v2340, %v2368
    %v2374 = vmul.f32 %v890, %v1707
    %v2375 = vmul.f32 %v890, %v1708
    %v2378 = vrot.slane %v2374, 3
    %v2379 = vrot.slane %v2375, 3
    %v2380 = vsel %vm245, %v2378, %v2379
    %v2383 = vadd.f32 %v2350, %v2380
    %v2384 = vadd.f32 %v2351, %v2379
    %v2385 = vmul.f32 %v902, %v1707
    %v2386 = vmul.f32 %v902, %v1708
    %v2389 = vrot.slane %v2385, 3
    %v2390 = vrot.slane %v2386, 3
    %v2391 = vsel %vm245, %v2389, %v2390
    %v2394 = vadd.f32 %v2361, %v2391
    %v2395 = vadd.f32 %v2362, %v2390
    %v2396 = vmul.f32 %v914, %v1707
    %v2397 = vmul.f32 %v914, %v1708
    %v2400 = vrot.slane %v2396, 4
    %v2401 = vrot.slane %v2397, 4
    %v2402 = vsel %vm282, %v2400, %v2401
    %v2405 = vadd.f32 %v2372, %v2402
    %v2406 = vadd.f32 %v2373, %v2401
    %v2407 = vmul.f32 %v926, %v1707
    %v2408 = vmul.f32 %v926, %v1708
    %v2411 = vrot.slane %v2407, 4
    %v2412 = vrot.slane %v2408, 4
    %v2413 = vsel %vm282, %v2411, %v2412
    %v2416 = vadd.f32 %v2383, %v2413
    %v2417 = vadd.f32 %v2384, %v2412
    %v2418 = vmul.f32 %v938, %v1707
    %v2419 = vmul.f32 %v938, %v1708
    %v2422 = vrot.slane %v2418, 4
    %v2423 = vrot.slane %v2419, 4
    %v2424 = vsel %vm282, %v2422, %v2423
    %v2427 = vadd.f32 %v2394, %v2424
    %v2428 = vadd.f32 %v2395, %v2423
    %s2429 = scalar_lea.vmem [#allocation9], 32
    %2430 = vst [vmem:[%s2429] sm:$0xff] %v2405
    %2431 = vst [vmem:[%s2429 + $0x8] sm:$0xf] %v2406
    %s2432 = scalar_lea.vmem [#allocation9], 224
    %2433 = vst [vmem:[%s2432] sm:$0xff] %v2416
    %2434 = vst [vmem:[%s2432 + $0x8] sm:$0xf] %v2417
    %s2435 = scalar_lea.vmem [#allocation9], 416
    %2436 = vst [vmem:[%s2435] sm:$0xff] %v2427
    %2437 = vst [vmem:[%s2435 + $0x8] sm:$0xf] %v2428
    %v2438 = vld [vmem:[%s142] sm:$0xff]
    %v2439 = vld [vmem:[%s142 + $0x8] sm:$0xff]
    %v2440 = vld [vmem:[%s145] sm:$0xff]
    %v2441 = vld [vmem:[%s145 + $0x8] sm:$0xff]
    %v2442 = vld [vmem:[%s966] sm:$0xff]
    %v2443 = vld [vmem:[%s966 + $0x8] sm:$0xff]
    %v2444 = vld [vmem:[%s1706] sm:$0xff]
    %v2445 = vld [vmem:[%s1706 + $0x8] sm:$0xff]
    %s2446 = scalar_lea.vmem [#allocation2], 112
    %v2447 = vld [vmem:[%s2446] sm:$0xff]
    %v2448 = vld [vmem:[%s2446 + $0x8] sm:$0xff]
    %v2449 = vmul.f32 %v151, %v2438
    %v2450 = vmul.f32 %v151, %v2439
    %v2451 = vadd.f32 %v148, %v2449
    %v2452 = vadd.f32 %v148, %v2450
    %v2453 = vmul.f32 %v156, %v2438
    %v2454 = vmul.f32 %v156, %v2439
    %v2455 = vadd.f32 %v149, %v2453
    %v2456 = vadd.f32 %v149, %v2454
    %v2457 = vmul.f32 %v161, %v2438
    %v2458 = vmul.f32 %v161, %v2439
    %v2459 = vadd.f32 %v150, %v2457
    %v2460 = vadd.f32 %v150, %v2458
    %v2461 = vmul.f32 %v166, %v2438
    %v2462 = vmul.f32 %v166, %v2439
    %v2465 = vrot.slane %v2461, 1
    %v2466 = vrot.slane %v2462, 1
    %v2467 = vsel %vm171, %v2465, %v2466
    %v2470 = vadd.f32 %v2451, %v2467
    %v2471 = vadd.f32 %v2452, %v2466
    %v2472 = vmul.f32 %v179, %v2438
    %v2473 = vmul.f32 %v179, %v2439
    %v2476 = vrot.slane %v2472, 1
    %v2477 = vrot.slane %v2473, 1
    %v2478 = vsel %vm171, %v2476, %v2477
    %v2481 = vadd.f32 %v2455, %v2478
    %v2482 = vadd.f32 %v2456, %v2477
    %v2483 = vmul.f32 %v191, %v2438
    %v2484 = vmul.f32 %v191, %v2439
    %v2487 = vrot.slane %v2483, 1
    %v2488 = vrot.slane %v2484, 1
    %v2489 = vsel %vm171, %v2487, %v2488
    %v2492 = vadd.f32 %v2459, %v2489
    %v2493 = vadd.f32 %v2460, %v2488
    %v2494 = vmul.f32 %v203, %v2438
    %v2495 = vmul.f32 %v203, %v2439
    %v2498 = vrot.slane %v2494, 2
    %v2499 = vrot.slane %v2495, 2
    %v2500 = vsel %vm208, %v2498, %v2499
    %v2503 = vadd.f32 %v2470, %v2500
    %v2504 = vadd.f32 %v2471, %v2499
    %v2505 = vmul.f32 %v216, %v2438
    %v2506 = vmul.f32 %v216, %v2439
    %v2509 = vrot.slane %v2505, 2
    %v2510 = vrot.slane %v2506, 2
    %v2511 = vsel %vm208, %v2509, %v2510
    %v2514 = vadd.f32 %v2481, %v2511
    %v2515 = vadd.f32 %v2482, %v2510
    %v2516 = vmul.f32 %v228, %v2438
    %v2517 = vmul.f32 %v228, %v2439
    %v2520 = vrot.slane %v2516, 2
    %v2521 = vrot.slane %v2517, 2
    %v2522 = vsel %vm208, %v2520, %v2521
    %v2525 = vadd.f32 %v2492, %v2522
    %v2526 = vadd.f32 %v2493, %v2521
    %v2527 = vmul.f32 %v240, %v2438
    %v2528 = vmul.f32 %v240, %v2439
    %v2531 = vrot.slane %v2527, 3
    %v2532 = vrot.slane %v2528, 3
    %v2533 = vsel %vm245, %v2531, %v2532
    %v2536 = vadd.f32 %v2503, %v2533
    %v2537 = vadd.f32 %v2504, %v2532
    %v2538 = vmul.f32 %v253, %v2438
    %v2539 = vmul.f32 %v253, %v2439
    %v2542 = vrot.slane %v2538, 3
    %v2543 = vrot.slane %v2539, 3
    %v2544 = vsel %vm245, %v2542, %v2543
    %v2547 = vadd.f32 %v2514, %v2544
    %v2548 = vadd.f32 %v2515, %v2543
    %v2549 = vmul.f32 %v265, %v2438
    %v2550 = vmul.f32 %v265, %v2439
    %v2553 = vrot.slane %v2549, 3
    %v2554 = vrot.slane %v2550, 3
    %v2555 = vsel %vm245, %v2553, %v2554
    %v2558 = vadd.f32 %v2525, %v2555
    %v2559 = vadd.f32 %v2526, %v2554
    %v2560 = vmul.f32 %v277, %v2438
    %v2561 = vmul.f32 %v277, %v2439
    %v2564 = vrot.slane %v2560, 4
    %v2565 = vrot.slane %v2561, 4
    %v2566 = vsel %vm282, %v2564, %v2565
    %v2569 = vadd.f32 %v2536, %v2566
    %v2570 = vadd.f32 %v2537, %v2565
    %v2571 = vmul.f32 %v290, %v2438
    %v2572 = vmul.f32 %v290, %v2439
    %v2575 = vrot.slane %v2571, 4
    %v2576 = vrot.slane %v2572, 4
    %v2577 = vsel %vm282, %v2575, %v2576
    %v2580 = vadd.f32 %v2547, %v2577
    %v2581 = vadd.f32 %v2548, %v2576
    %v2582 = vmul.f32 %v302, %v2438
    %v2583 = vmul.f32 %v302, %v2439
    %v2586 = vrot.slane %v2582, 4
    %v2587 = vrot.slane %v2583, 4
    %v2588 = vsel %vm282, %v2586, %v2587
    %v2591 = vadd.f32 %v2558, %v2588
    %v2592 = vadd.f32 %v2559, %v2587
    %v2593 = vmul.f32 %v314, %v2440
    %v2594 = vmul.f32 %v314, %v2441
    %v2595 = vadd.f32 %v2569, %v2593
    %v2596 = vadd.f32 %v2570, %v2594
    %v2597 = vmul.f32 %v319, %v2440
    %v2598 = vmul.f32 %v319, %v2441
    %v2599 = vadd.f32 %v2580, %v2597
    %v2600 = vadd.f32 %v2581, %v2598
    %v2601 = vmul.f32 %v324, %v2440
    %v2602 = vmul.f32 %v324, %v2441
    %v2603 = vadd.f32 %v2591, %v2601
    %v2604 = vadd.f32 %v2592, %v2602
    %v2605 = vmul.f32 %v329, %v2440
    %v2606 = vmul.f32 %v329, %v2441
    %v2609 = vrot.slane %v2605, 1
    %v2610 = vrot.slane %v2606, 1
    %v2611 = vsel %vm171, %v2609, %v2610
    %v2614 = vadd.f32 %v2595, %v2611
    %v2615 = vadd.f32 %v2596, %v2610
    %v2616 = vmul.f32 %v341, %v2440
    %v2617 = vmul.f32 %v341, %v2441
    %v2620 = vrot.slane %v2616, 1
    %v2621 = vrot.slane %v2617, 1
    %v2622 = vsel %vm171, %v2620, %v2621
    %v2625 = vadd.f32 %v2599, %v2622
    %v2626 = vadd.f32 %v2600, %v2621
    %v2627 = vmul.f32 %v353, %v2440
    %v2628 = vmul.f32 %v353, %v2441
    %v2631 = vrot.slane %v2627, 1
    %v2632 = vrot.slane %v2628, 1
    %v2633 = vsel %vm171, %v2631, %v2632
    %v2636 = vadd.f32 %v2603, %v2633
    %v2637 = vadd.f32 %v2604, %v2632
    %v2638 = vmul.f32 %v365, %v2440
    %v2639 = vmul.f32 %v365, %v2441
    %v2642 = vrot.slane %v2638, 2
    %v2643 = vrot.slane %v2639, 2
    %v2644 = vsel %vm208, %v2642, %v2643
    %v2647 = vadd.f32 %v2614, %v2644
    %v2648 = vadd.f32 %v2615, %v2643
    %v2649 = vmul.f32 %v377, %v2440
    %v2650 = vmul.f32 %v377, %v2441
    %v2653 = vrot.slane %v2649, 2
    %v2654 = vrot.slane %v2650, 2
    %v2655 = vsel %vm208, %v2653, %v2654
    %v2658 = vadd.f32 %v2625, %v2655
    %v2659 = vadd.f32 %v2626, %v2654
    %v2660 = vmul.f32 %v389, %v2440
    %v2661 = vmul.f32 %v389, %v2441
    %v2664 = vrot.slane %v2660, 2
    %v2665 = vrot.slane %v2661, 2
    %v2666 = vsel %vm208, %v2664, %v2665
    %v2669 = vadd.f32 %v2636, %v2666
    %v2670 = vadd.f32 %v2637, %v2665
    %v2671 = vmul.f32 %v401, %v2440
    %v2672 = vmul.f32 %v401, %v2441
    %v2675 = vrot.slane %v2671, 3
    %v2676 = vrot.slane %v2672, 3
    %v2677 = vsel %vm245, %v2675, %v2676
    %v2680 = vadd.f32 %v2647, %v2677
    %v2681 = vadd.f32 %v2648, %v2676
    %v2682 = vmul.f32 %v413, %v2440
    %v2683 = vmul.f32 %v413, %v2441
    %v2686 = vrot.slane %v2682, 3
    %v2687 = vrot.slane %v2683, 3
    %v2688 = vsel %vm245, %v2686, %v2687
    %v2691 = vadd.f32 %v2658, %v2688
    %v2692 = vadd.f32 %v2659, %v2687
    %v2693 = vmul.f32 %v425, %v2440
    %v2694 = vmul.f32 %v425, %v2441
    %v2697 = vrot.slane %v2693, 3
    %v2698 = vrot.slane %v2694, 3
    %v2699 = vsel %vm245, %v2697, %v2698
    %v2702 = vadd.f32 %v2669, %v2699
    %v2703 = vadd.f32 %v2670, %v2698
    %v2704 = vmul.f32 %v437, %v2440
    %v2705 = vmul.f32 %v437, %v2441
    %v2708 = vrot.slane %v2704, 4
    %v2709 = vrot.slane %v2705, 4
    %v2710 = vsel %vm282, %v2708, %v2709
    %v2713 = vadd.f32 %v2680, %v2710
    %v2714 = vadd.f32 %v2681, %v2709
    %v2715 = vmul.f32 %v449, %v2440
    %v2716 = vmul.f32 %v449, %v2441
    %v2719 = vrot.slane %v2715, 4
    %v2720 = vrot.slane %v2716, 4
    %v2721 = vsel %vm282, %v2719, %v2720
    %v2724 = vadd.f32 %v2691, %v2721
    %v2725 = vadd.f32 %v2692, %v2720
    %v2726 = vmul.f32 %v461, %v2440
    %v2727 = vmul.f32 %v461, %v2441
    %v2730 = vrot.slane %v2726, 4
    %v2731 = vrot.slane %v2727, 4
    %v2732 = vsel %vm282, %v2730, %v2731
    %v2735 = vadd.f32 %v2702, %v2732
    %v2736 = vadd.f32 %v2703, %v2731
    %v2737 = vmul.f32 %v473, %v2442
    %v2738 = vmul.f32 %v473, %v2443
    %v2739 = vadd.f32 %v2713, %v2737
    %v2740 = vadd.f32 %v2714, %v2738
    %v2741 = vmul.f32 %v478, %v2442
    %v2742 = vmul.f32 %v478, %v2443
    %v2743 = vadd.f32 %v2724, %v2741
    %v2744 = vadd.f32 %v2725, %v2742
    %v2745 = vmul.f32 %v483, %v2442
    %v2746 = vmul.f32 %v483, %v2443
    %v2747 = vadd.f32 %v2735, %v2745
    %v2748 = vadd.f32 %v2736, %v2746
    %v2749 = vmul.f32 %v488, %v2442
    %v2750 = vmul.f32 %v488, %v2443
    %v2753 = vrot.slane %v2749, 1
    %v2754 = vrot.slane %v2750, 1
    %v2755 = vsel %vm171, %v2753, %v2754
    %v2758 = vadd.f32 %v2739, %v2755
    %v2759 = vadd.f32 %v2740, %v2754
    %v2760 = vmul.f32 %v500, %v2442
    %v2761 = vmul.f32 %v500, %v2443
    %v2764 = vrot.slane %v2760, 1
    %v2765 = vrot.slane %v2761, 1
    %v2766 = vsel %vm171, %v2764, %v2765
    %v2769 = vadd.f32 %v2743, %v2766
    %v2770 = vadd.f32 %v2744, %v2765
    %v2771 = vmul.f32 %v512, %v2442
    %v2772 = vmul.f32 %v512, %v2443
    %v2775 = vrot.slane %v2771, 1
    %v2776 = vrot.slane %v2772, 1
    %v2777 = vsel %vm171, %v2775, %v2776
    %v2780 = vadd.f32 %v2747, %v2777
    %v2781 = vadd.f32 %v2748, %v2776
    %v2782 = vmul.f32 %v524, %v2442
    %v2783 = vmul.f32 %v524, %v2443
    %v2786 = vrot.slane %v2782, 2
    %v2787 = vrot.slane %v2783, 2
    %v2788 = vsel %vm208, %v2786, %v2787
    %v2791 = vadd.f32 %v2758, %v2788
    %v2792 = vadd.f32 %v2759, %v2787
    %v2793 = vmul.f32 %v536, %v2442
    %v2794 = vmul.f32 %v536, %v2443
    %v2797 = vrot.slane %v2793, 2
    %v2798 = vrot.slane %v2794, 2
    %v2799 = vsel %vm208, %v2797, %v2798
    %v2802 = vadd.f32 %v2769, %v2799
    %v2803 = vadd.f32 %v2770, %v2798
    %v2804 = vmul.f32 %v548, %v2442
    %v2805 = vmul.f32 %v548, %v2443
    %v2808 = vrot.slane %v2804, 2
    %v2809 = vrot.slane %v2805, 2
    %v2810 = vsel %vm208, %v2808, %v2809
    %v2813 = vadd.f32 %v2780, %v2810
    %v2814 = vadd.f32 %v2781, %v2809
    %v2815 = vmul.f32 %v560, %v2442
    %v2816 = vmul.f32 %v560, %v2443
    %v2819 = vrot.slane %v2815, 3
    %v2820 = vrot.slane %v2816, 3
    %v2821 = vsel %vm245, %v2819, %v2820
    %v2824 = vadd.f32 %v2791, %v2821
    %v2825 = vadd.f32 %v2792, %v2820
    %v2826 = vmul.f32 %v572, %v2442
    %v2827 = vmul.f32 %v572, %v2443
    %v2830 = vrot.slane %v2826, 3
    %v2831 = vrot.slane %v2827, 3
    %v2832 = vsel %vm245, %v2830, %v2831
    %v2835 = vadd.f32 %v2802, %v2832
    %v2836 = vadd.f32 %v2803, %v2831
    %v2837 = vmul.f32 %v584, %v2442
    %v2838 = vmul.f32 %v584, %v2443
    %v2841 = vrot.slane %v2837, 3
    %v2842 = vrot.slane %v2838, 3
    %v2843 = vsel %vm245, %v2841, %v2842
    %v2846 = vadd.f32 %v2813, %v2843
    %v2847 = vadd.f32 %v2814, %v2842
    %v2848 = vmul.f32 %v596, %v2442
    %v2849 = vmul.f32 %v596, %v2443
    %v2852 = vrot.slane %v2848, 4
    %v2853 = vrot.slane %v2849, 4
    %v2854 = vsel %vm282, %v2852, %v2853
    %v2857 = vadd.f32 %v2824, %v2854
    %v2858 = vadd.f32 %v2825, %v2853
    %v2859 = vmul.f32 %v608, %v2442
    %v2860 = vmul.f32 %v608, %v2443
    %v2863 = vrot.slane %v2859, 4
    %v2864 = vrot.slane %v2860, 4
    %v2865 = vsel %vm282, %v2863, %v2864
    %v2868 = vadd.f32 %v2835, %v2865
    %v2869 = vadd.f32 %v2836, %v2864
    %v2870 = vmul.f32 %v620, %v2442
    %v2871 = vmul.f32 %v620, %v2443
    %v2874 = vrot.slane %v2870, 4
    %v2875 = vrot.slane %v2871, 4
    %v2876 = vsel %vm282, %v2874, %v2875
    %v2879 = vadd.f32 %v2846, %v2876
    %v2880 = vadd.f32 %v2847, %v2875
    %v2881 = vmul.f32 %v632, %v2444
    %v2882 = vmul.f32 %v632, %v2445
    %v2883 = vadd.f32 %v2857, %v2881
    %v2884 = vadd.f32 %v2858, %v2882
    %v2885 = vmul.f32 %v637, %v2444
    %v2886 = vmul.f32 %v637, %v2445
    %v2887 = vadd.f32 %v2868, %v2885
    %v2888 = vadd.f32 %v2869, %v2886
    %v2889 = vmul.f32 %v642, %v2444
    %v2890 = vmul.f32 %v642, %v2445
    %v2891 = vadd.f32 %v2879, %v2889
    %v2892 = vadd.f32 %v2880, %v2890
    %v2893 = vmul.f32 %v647, %v2444
    %v2894 = vmul.f32 %v647, %v2445
    %v2897 = vrot.slane %v2893, 1
    %v2898 = vrot.slane %v2894, 1
    %v2899 = vsel %vm171, %v2897, %v2898
    %v2902 = vadd.f32 %v2883, %v2899
    %v2903 = vadd.f32 %v2884, %v2898
    %v2904 = vmul.f32 %v659, %v2444
    %v2905 = vmul.f32 %v659, %v2445
    %v2908 = vrot.slane %v2904, 1
    %v2909 = vrot.slane %v2905, 1
    %v2910 = vsel %vm171, %v2908, %v2909
    %v2913 = vadd.f32 %v2887, %v2910
    %v2914 = vadd.f32 %v2888, %v2909
    %v2915 = vmul.f32 %v671, %v2444
    %v2916 = vmul.f32 %v671, %v2445
    %v2919 = vrot.slane %v2915, 1
    %v2920 = vrot.slane %v2916, 1
    %v2921 = vsel %vm171, %v2919, %v2920
    %v2924 = vadd.f32 %v2891, %v2921
    %v2925 = vadd.f32 %v2892, %v2920
    %v2926 = vmul.f32 %v683, %v2444
    %v2927 = vmul.f32 %v683, %v2445
    %v2930 = vrot.slane %v2926, 2
    %v2931 = vrot.slane %v2927, 2
    %v2932 = vsel %vm208, %v2930, %v2931
    %v2935 = vadd.f32 %v2902, %v2932
    %v2936 = vadd.f32 %v2903, %v2931
    %v2937 = vmul.f32 %v695, %v2444
    %v2938 = vmul.f32 %v695, %v2445
    %v2941 = vrot.slane %v2937, 2
    %v2942 = vrot.slane %v2938, 2
    %v2943 = vsel %vm208, %v2941, %v2942
    %v2946 = vadd.f32 %v2913, %v2943
    %v2947 = vadd.f32 %v2914, %v2942
    %v2948 = vmul.f32 %v707, %v2444
    %v2949 = vmul.f32 %v707, %v2445
    %v2952 = vrot.slane %v2948, 2
    %v2953 = vrot.slane %v2949, 2
    %v2954 = vsel %vm208, %v2952, %v2953
    %v2957 = vadd.f32 %v2924, %v2954
    %v2958 = vadd.f32 %v2925, %v2953
    %v2959 = vmul.f32 %v719, %v2444
    %v2960 = vmul.f32 %v719, %v2445
    %v2963 = vrot.slane %v2959, 3
    %v2964 = vrot.slane %v2960, 3
    %v2965 = vsel %vm245, %v2963, %v2964
    %v2968 = vadd.f32 %v2935, %v2965
    %v2969 = vadd.f32 %v2936, %v2964
    %v2970 = vmul.f32 %v731, %v2444
    %v2971 = vmul.f32 %v731, %v2445
    %v2974 = vrot.slane %v2970, 3
    %v2975 = vrot.slane %v2971, 3
    %v2976 = vsel %vm245, %v2974, %v2975
    %v2979 = vadd.f32 %v2946, %v2976
    %v2980 = vadd.f32 %v2947, %v2975
    %v2981 = vmul.f32 %v743, %v2444
    %v2982 = vmul.f32 %v743, %v2445
    %v2985 = vrot.slane %v2981, 3
    %v2986 = vrot.slane %v2982, 3
    %v2987 = vsel %vm245, %v2985, %v2986
    %v2990 = vadd.f32 %v2957, %v2987
    %v2991 = vadd.f32 %v2958, %v2986
    %v2992 = vmul.f32 %v755, %v2444
    %v2993 = vmul.f32 %v755, %v2445
    %v2996 = vrot.slane %v2992, 4
    %v2997 = vrot.slane %v2993, 4
    %v2998 = vsel %vm282, %v2996, %v2997
    %v3001 = vadd.f32 %v2968, %v2998
    %v3002 = vadd.f32 %v2969, %v2997
    %v3003 = vmul.f32 %v767, %v2444
    %v3004 = vmul.f32 %v767, %v2445
    %v3007 = vrot.slane %v3003, 4
    %v3008 = vrot.slane %v3004, 4
    %v3009 = vsel %vm282, %v3007, %v3008
    %v3012 = vadd.f32 %v2979, %v3009
    %v3013 = vadd.f32 %v2980, %v3008
    %v3014 = vmul.f32 %v779, %v2444
    %v3015 = vmul.f32 %v779, %v2445
    %v3018 = vrot.slane %v3014, 4
    %v3019 = vrot.slane %v3015, 4
    %v3020 = vsel %vm282, %v3018, %v3019
    %v3023 = vadd.f32 %v2990, %v3020
    %v3024 = vadd.f32 %v2991, %v3019
    %v3025 = vmul.f32 %v791, %v2447
    %v3026 = vmul.f32 %v791, %v2448
    %v3027 = vadd.f32 %v3001, %v3025
    %v3028 = vadd.f32 %v3002, %v3026
    %v3029 = vmul.f32 %v796, %v2447
    %v3030 = vmul.f32 %v796, %v2448
    %v3031 = vadd.f32 %v3012, %v3029
    %v3032 = vadd.f32 %v3013, %v3030
    %v3033 = vmul.f32 %v801, %v2447
    %v3034 = vmul.f32 %v801, %v2448
    %v3035 = vadd.f32 %v3023, %v3033
    %v3036 = vadd.f32 %v3024, %v3034
    %v3037 = vmul.f32 %v806, %v2447
    %v3038 = vmul.f32 %v806, %v2448
    %v3041 = vrot.slane %v3037, 1
    %v3042 = vrot.slane %v3038, 1
    %v3043 = vsel %vm171, %v3041, %v3042
    %v3046 = vadd.f32 %v3027, %v3043
    %v3047 = vadd.f32 %v3028, %v3042
    %v3048 = vmul.f32 %v818, %v2447
    %v3049 = vmul.f32 %v818, %v2448
    %v3052 = vrot.slane %v3048, 1
    %v3053 = vrot.slane %v3049, 1
    %v3054 = vsel %vm171, %v3052, %v3053
    %v3057 = vadd.f32 %v3031, %v3054
    %v3058 = vadd.f32 %v3032, %v3053
    %v3059 = vmul.f32 %v830, %v2447
    %v3060 = vmul.f32 %v830, %v2448
    %v3063 = vrot.slane %v3059, 1
    %v3064 = vrot.slane %v3060, 1
    %v3065 = vsel %vm171, %v3063, %v3064
    %v3068 = vadd.f32 %v3035, %v3065
    %v3069 = vadd.f32 %v3036, %v3064
    %v3070 = vmul.f32 %v842, %v2447
    %v3071 = vmul.f32 %v842, %v2448
    %v3074 = vrot.slane %v3070, 2
    %v3075 = vrot.slane %v3071, 2
    %v3076 = vsel %vm208, %v3074, %v3075
    %v3079 = vadd.f32 %v3046, %v3076
    %v3080 = vadd.f32 %v3047, %v3075
    %v3081 = vmul.f32 %v854, %v2447
    %v3082 = vmul.f32 %v854, %v2448
    %v3085 = vrot.slane %v3081, 2
    %v3086 = vrot.slane %v3082, 2
    %v3087 = vsel %vm208, %v3085, %v3086
    %v3090 = vadd.f32 %v3057, %v3087
    %v3091 = vadd.f32 %v3058, %v3086
    %v3092 = vmul.f32 %v866, %v2447
    %v3093 = vmul.f32 %v866, %v2448
    %v3096 = vrot.slane %v3092, 2
    %v3097 = vrot.slane %v3093, 2
    %v3098 = vsel %vm208, %v3096, %v3097
    %v3101 = vadd.f32 %v3068, %v3098
    %v3102 = vadd.f32 %v3069, %v3097
    %v3103 = vmul.f32 %v878, %v2447
    %v3104 = vmul.f32 %v878, %v2448
    %v3107 = vrot.slane %v3103, 3
    %v3108 = vrot.slane %v3104, 3
    %v3109 = vsel %vm245, %v3107, %v3108
    %v3112 = vadd.f32 %v3079, %v3109
    %v3113 = vadd.f32 %v3080, %v3108
    %v3114 = vmul.f32 %v890, %v2447
    %v3115 = vmul.f32 %v890, %v2448
    %v3118 = vrot.slane %v3114, 3
    %v3119 = vrot.slane %v3115, 3
    %v3120 = vsel %vm245, %v3118, %v3119
    %v3123 = vadd.f32 %v3090, %v3120
    %v3124 = vadd.f32 %v3091, %v3119
    %v3125 = vmul.f32 %v902, %v2447
    %v3126 = vmul.f32 %v902, %v2448
    %v3129 = vrot.slane %v3125, 3
    %v3130 = vrot.slane %v3126, 3
    %v3131 = vsel %vm245, %v3129, %v3130
    %v3134 = vadd.f32 %v3101, %v3131
    %v3135 = vadd.f32 %v3102, %v3130
    %v3136 = vmul.f32 %v914, %v2447
    %v3137 = vmul.f32 %v914, %v2448
    %v3140 = vrot.slane %v3136, 4
    %v3141 = vrot.slane %v3137, 4
    %v3142 = vsel %vm282, %v3140, %v3141
    %v3145 = vadd.f32 %v3112, %v3142
    %v3146 = vadd.f32 %v3113, %v3141
    %v3147 = vmul.f32 %v926, %v2447
    %v3148 = vmul.f32 %v926, %v2448
    %v3151 = vrot.slane %v3147, 4
    %v3152 = vrot.slane %v3148, 4
    %v3153 = vsel %vm282, %v3151, %v3152
    %v3156 = vadd.f32 %v3123, %v3153
    %v3157 = vadd.f32 %v3124, %v3152
    %v3158 = vmul.f32 %v938, %v2447
    %v3159 = vmul.f32 %v938, %v2448
    %v3162 = vrot.slane %v3158, 4
    %v3163 = vrot.slane %v3159, 4
    %v3164 = vsel %vm282, %v3162, %v3163
    %v3167 = vadd.f32 %v3134, %v3164
    %v3168 = vadd.f32 %v3135, %v3163
    %s3169 = scalar_lea.vmem [#allocation9], 48
    %3170 = vst [vmem:[%s3169] sm:$0xff] %v3145
    %3171 = vst [vmem:[%s3169 + $0x8] sm:$0xf] %v3146
    %s3172 = scalar_lea.vmem [#allocation9], 240
    %3173 = vst [vmem:[%s3172] sm:$0xff] %v3156
    %3174 = vst [vmem:[%s3172 + $0x8] sm:$0xf] %v3157
    %s3175 = scalar_lea.vmem [#allocation9], 432
    %3176 = vst [vmem:[%s3175] sm:$0xff] %v3167
    %3177 = vst [vmem:[%s3175 + $0x8] sm:$0xf] %v3168
    %v3178 = vld [vmem:[%s145] sm:$0xff]
    %v3179 = vld [vmem:[%s145 + $0x8] sm:$0xff]
    %v3180 = vld [vmem:[%s966] sm:$0xff]
    %v3181 = vld [vmem:[%s966 + $0x8] sm:$0xff]
    %v3182 = vld [vmem:[%s1706] sm:$0xff]
    %v3183 = vld [vmem:[%s1706 + $0x8] sm:$0xff]
    %v3184 = vld [vmem:[%s2446] sm:$0xff]
    %v3185 = vld [vmem:[%s2446 + $0x8] sm:$0xff]
    %s3186 = scalar_lea.vmem [#allocation2], 128
    %v3187 = vld [vmem:[%s3186] sm:$0xff]
    %v3188 = vld [vmem:[%s3186 + $0x8] sm:$0xff]
    %v3189 = vmul.f32 %v151, %v3178
    %v3190 = vmul.f32 %v151, %v3179
    %v3191 = vadd.f32 %v148, %v3189
    %v3192 = vadd.f32 %v148, %v3190
    %v3193 = vmul.f32 %v156, %v3178
    %v3194 = vmul.f32 %v156, %v3179
    %v3195 = vadd.f32 %v149, %v3193
    %v3196 = vadd.f32 %v149, %v3194
    %v3197 = vmul.f32 %v161, %v3178
    %v3198 = vmul.f32 %v161, %v3179
    %v3199 = vadd.f32 %v150, %v3197
    %v3200 = vadd.f32 %v150, %v3198
    %v3201 = vmul.f32 %v166, %v3178
    %v3202 = vmul.f32 %v166, %v3179
    %v3205 = vrot.slane %v3201, 1
    %v3206 = vrot.slane %v3202, 1
    %v3207 = vsel %vm171, %v3205, %v3206
    %v3210 = vadd.f32 %v3191, %v3207
    %v3211 = vadd.f32 %v3192, %v3206
    %v3212 = vmul.f32 %v179, %v3178
    %v3213 = vmul.f32 %v179, %v3179
    %v3216 = vrot.slane %v3212, 1
    %v3217 = vrot.slane %v3213, 1
    %v3218 = vsel %vm171, %v3216, %v3217
    %v3221 = vadd.f32 %v3195, %v3218
    %v3222 = vadd.f32 %v3196, %v3217
    %v3223 = vmul.f32 %v191, %v3178
    %v3224 = vmul.f32 %v191, %v3179
    %v3227 = vrot.slane %v3223, 1
    %v3228 = vrot.slane %v3224, 1
    %v3229 = vsel %vm171, %v3227, %v3228
    %v3232 = vadd.f32 %v3199, %v3229
    %v3233 = vadd.f32 %v3200, %v3228
    %v3234 = vmul.f32 %v203, %v3178
    %v3235 = vmul.f32 %v203, %v3179
    %v3238 = vrot.slane %v3234, 2
    %v3239 = vrot.slane %v3235, 2
    %v3240 = vsel %vm208, %v3238, %v3239
    %v3243 = vadd.f32 %v3210, %v3240
    %v3244 = vadd.f32 %v3211, %v3239
    %v3245 = vmul.f32 %v216, %v3178
    %v3246 = vmul.f32 %v216, %v3179
    %v3249 = vrot.slane %v3245, 2
    %v3250 = vrot.slane %v3246, 2
    %v3251 = vsel %vm208, %v3249, %v3250
    %v3254 = vadd.f32 %v3221, %v3251
    %v3255 = vadd.f32 %v3222, %v3250
    %v3256 = vmul.f32 %v228, %v3178
    %v3257 = vmul.f32 %v228, %v3179
    %v3260 = vrot.slane %v3256, 2
    %v3261 = vrot.slane %v3257, 2
    %v3262 = vsel %vm208, %v3260, %v3261
    %v3265 = vadd.f32 %v3232, %v3262
    %v3266 = vadd.f32 %v3233, %v3261
    %v3267 = vmul.f32 %v240, %v3178
    %v3268 = vmul.f32 %v240, %v3179
    %v3271 = vrot.slane %v3267, 3
    %v3272 = vrot.slane %v3268, 3
    %v3273 = vsel %vm245, %v3271, %v3272
    %v3276 = vadd.f32 %v3243, %v3273
    %v3277 = vadd.f32 %v3244, %v3272
    %v3278 = vmul.f32 %v253, %v3178
    %v3279 = vmul.f32 %v253, %v3179
    %v3282 = vrot.slane %v3278, 3
    %v3283 = vrot.slane %v3279, 3
    %v3284 = vsel %vm245, %v3282, %v3283
    %v3287 = vadd.f32 %v3254, %v3284
    %v3288 = vadd.f32 %v3255, %v3283
    %v3289 = vmul.f32 %v265, %v3178
    %v3290 = vmul.f32 %v265, %v3179
    %v3293 = vrot.slane %v3289, 3
    %v3294 = vrot.slane %v3290, 3
    %v3295 = vsel %vm245, %v3293, %v3294
    %v3298 = vadd.f32 %v3265, %v3295
    %v3299 = vadd.f32 %v3266, %v3294
    %v3300 = vmul.f32 %v277, %v3178
    %v3301 = vmul.f32 %v277, %v3179
    %v3304 = vrot.slane %v3300, 4
    %v3305 = vrot.slane %v3301, 4
    %v3306 = vsel %vm282, %v3304, %v3305
    %v3309 = vadd.f32 %v3276, %v3306
    %v3310 = vadd.f32 %v3277, %v3305
    %v3311 = vmul.f32 %v290, %v3178
    %v3312 = vmul.f32 %v290, %v3179
    %v3315 = vrot.slane %v3311, 4
    %v3316 = vrot.slane %v3312, 4
    %v3317 = vsel %vm282, %v3315, %v3316
    %v3320 = vadd.f32 %v3287, %v3317
    %v3321 = vadd.f32 %v3288, %v3316
    %v3322 = vmul.f32 %v302, %v3178
    %v3323 = vmul.f32 %v302, %v3179
    %v3326 = vrot.slane %v3322, 4
    %v3327 = vrot.slane %v3323, 4
    %v3328 = vsel %vm282, %v3326, %v3327
    %v3331 = vadd.f32 %v3298, %v3328
    %v3332 = vadd.f32 %v3299, %v3327
    %v3333 = vmul.f32 %v314, %v3180
    %v3334 = vmul.f32 %v314, %v3181
    %v3335 = vadd.f32 %v3309, %v3333
    %v3336 = vadd.f32 %v3310, %v3334
    %v3337 = vmul.f32 %v319, %v3180
    %v3338 = vmul.f32 %v319, %v3181
    %v3339 = vadd.f32 %v3320, %v3337
    %v3340 = vadd.f32 %v3321, %v3338
    %v3341 = vmul.f32 %v324, %v3180
    %v3342 = vmul.f32 %v324, %v3181
    %v3343 = vadd.f32 %v3331, %v3341
    %v3344 = vadd.f32 %v3332, %v3342
    %v3345 = vmul.f32 %v329, %v3180
    %v3346 = vmul.f32 %v329, %v3181
    %v3349 = vrot.slane %v3345, 1
    %v3350 = vrot.slane %v3346, 1
    %v3351 = vsel %vm171, %v3349, %v3350
    %v3354 = vadd.f32 %v3335, %v3351
    %v3355 = vadd.f32 %v3336, %v3350
    %v3356 = vmul.f32 %v341, %v3180
    %v3357 = vmul.f32 %v341, %v3181
    %v3360 = vrot.slane %v3356, 1
    %v3361 = vrot.slane %v3357, 1
    %v3362 = vsel %vm171, %v3360, %v3361
    %v3365 = vadd.f32 %v3339, %v3362
    %v3366 = vadd.f32 %v3340, %v3361
    %v3367 = vmul.f32 %v353, %v3180
    %v3368 = vmul.f32 %v353, %v3181
    %v3371 = vrot.slane %v3367, 1
    %v3372 = vrot.slane %v3368, 1
    %v3373 = vsel %vm171, %v3371, %v3372
    %v3376 = vadd.f32 %v3343, %v3373
    %v3377 = vadd.f32 %v3344, %v3372
    %v3378 = vmul.f32 %v365, %v3180
    %v3379 = vmul.f32 %v365, %v3181
    %v3382 = vrot.slane %v3378, 2
    %v3383 = vrot.slane %v3379, 2
    %v3384 = vsel %vm208, %v3382, %v3383
    %v3387 = vadd.f32 %v3354, %v3384
    %v3388 = vadd.f32 %v3355, %v3383
    %v3389 = vmul.f32 %v377, %v3180
    %v3390 = vmul.f32 %v377, %v3181
    %v3393 = vrot.slane %v3389, 2
    %v3394 = vrot.slane %v3390, 2
    %v3395 = vsel %vm208, %v3393, %v3394
    %v3398 = vadd.f32 %v3365, %v3395
    %v3399 = vadd.f32 %v3366, %v3394
    %v3400 = vmul.f32 %v389, %v3180
    %v3401 = vmul.f32 %v389, %v3181
    %v3404 = vrot.slane %v3400, 2
    %v3405 = vrot.slane %v3401, 2
    %v3406 = vsel %vm208, %v3404, %v3405
    %v3409 = vadd.f32 %v3376, %v3406
    %v3410 = vadd.f32 %v3377, %v3405
    %v3411 = vmul.f32 %v401, %v3180
    %v3412 = vmul.f32 %v401, %v3181
    %v3415 = vrot.slane %v3411, 3
    %v3416 = vrot.slane %v3412, 3
    %v3417 = vsel %vm245, %v3415, %v3416
    %v3420 = vadd.f32 %v3387, %v3417
    %v3421 = vadd.f32 %v3388, %v3416
    %v3422 = vmul.f32 %v413, %v3180
    %v3423 = vmul.f32 %v413, %v3181
    %v3426 = vrot.slane %v3422, 3
    %v3427 = vrot.slane %v3423, 3
    %v3428 = vsel %vm245, %v3426, %v3427
    %v3431 = vadd.f32 %v3398, %v3428
    %v3432 = vadd.f32 %v3399, %v3427
    %v3433 = vmul.f32 %v425, %v3180
    %v3434 = vmul.f32 %v425, %v3181
    %v3437 = vrot.slane %v3433, 3
    %v3438 = vrot.slane %v3434, 3
    %v3439 = vsel %vm245, %v3437, %v3438
    %v3442 = vadd.f32 %v3409, %v3439
    %v3443 = vadd.f32 %v3410, %v3438
    %v3444 = vmul.f32 %v437, %v3180
    %v3445 = vmul.f32 %v437, %v3181
    %v3448 = vrot.slane %v3444, 4
    %v3449 = vrot.slane %v3445, 4
    %v3450 = vsel %vm282, %v3448, %v3449
    %v3453 = vadd.f32 %v3420, %v3450
    %v3454 = vadd.f32 %v3421, %v3449
    %v3455 = vmul.f32 %v449, %v3180
    %v3456 = vmul.f32 %v449, %v3181
    %v3459 = vrot.slane %v3455, 4
    %v3460 = vrot.slane %v3456, 4
    %v3461 = vsel %vm282, %v3459, %v3460
    %v3464 = vadd.f32 %v3431, %v3461
    %v3465 = vadd.f32 %v3432, %v3460
    %v3466 = vmul.f32 %v461, %v3180
    %v3467 = vmul.f32 %v461, %v3181
    %v3470 = vrot.slane %v3466, 4
    %v3471 = vrot.slane %v3467, 4
    %v3472 = vsel %vm282, %v3470, %v3471
    %v3475 = vadd.f32 %v3442, %v3472
    %v3476 = vadd.f32 %v3443, %v3471
    %v3477 = vmul.f32 %v473, %v3182
    %v3478 = vmul.f32 %v473, %v3183
    %v3479 = vadd.f32 %v3453, %v3477
    %v3480 = vadd.f32 %v3454, %v3478
    %v3481 = vmul.f32 %v478, %v3182
    %v3482 = vmul.f32 %v478, %v3183
    %v3483 = vadd.f32 %v3464, %v3481
    %v3484 = vadd.f32 %v3465, %v3482
    %v3485 = vmul.f32 %v483, %v3182
    %v3486 = vmul.f32 %v483, %v3183
    %v3487 = vadd.f32 %v3475, %v3485
    %v3488 = vadd.f32 %v3476, %v3486
    %v3489 = vmul.f32 %v488, %v3182
    %v3490 = vmul.f32 %v488, %v3183
    %v3493 = vrot.slane %v3489, 1
    %v3494 = vrot.slane %v3490, 1
    %v3495 = vsel %vm171, %v3493, %v3494
    %v3498 = vadd.f32 %v3479, %v3495
    %v3499 = vadd.f32 %v3480, %v3494
    %v3500 = vmul.f32 %v500, %v3182
    %v3501 = vmul.f32 %v500, %v3183
    %v3504 = vrot.slane %v3500, 1
    %v3505 = vrot.slane %v3501, 1
    %v3506 = vsel %vm171, %v3504, %v3505
    %v3509 = vadd.f32 %v3483, %v3506
    %v3510 = vadd.f32 %v3484, %v3505
    %v3511 = vmul.f32 %v512, %v3182
    %v3512 = vmul.f32 %v512, %v3183
    %v3515 = vrot.slane %v3511, 1
    %v3516 = vrot.slane %v3512, 1
    %v3517 = vsel %vm171, %v3515, %v3516
    %v3520 = vadd.f32 %v3487, %v3517
    %v3521 = vadd.f32 %v3488, %v3516
    %v3522 = vmul.f32 %v524, %v3182
    %v3523 = vmul.f32 %v524, %v3183
    %v3526 = vrot.slane %v3522, 2
    %v3527 = vrot.slane %v3523, 2
    %v3528 = vsel %vm208, %v3526, %v3527
    %v3531 = vadd.f32 %v3498, %v3528
    %v3532 = vadd.f32 %v3499, %v3527
    %v3533 = vmul.f32 %v536, %v3182
    %v3534 = vmul.f32 %v536, %v3183
    %v3537 = vrot.slane %v3533, 2
    %v3538 = vrot.slane %v3534, 2
    %v3539 = vsel %vm208, %v3537, %v3538
    %v3542 = vadd.f32 %v3509, %v3539
    %v3543 = vadd.f32 %v3510, %v3538
    %v3544 = vmul.f32 %v548, %v3182
    %v3545 = vmul.f32 %v548, %v3183
    %v3548 = vrot.slane %v3544, 2
    %v3549 = vrot.slane %v3545, 2
    %v3550 = vsel %vm208, %v3548, %v3549
    %v3553 = vadd.f32 %v3520, %v3550
    %v3554 = vadd.f32 %v3521, %v3549
    %v3555 = vmul.f32 %v560, %v3182
    %v3556 = vmul.f32 %v560, %v3183
    %v3559 = vrot.slane %v3555, 3
    %v3560 = vrot.slane %v3556, 3
    %v3561 = vsel %vm245, %v3559, %v3560
    %v3564 = vadd.f32 %v3531, %v3561
    %v3565 = vadd.f32 %v3532, %v3560
    %v3566 = vmul.f32 %v572, %v3182
    %v3567 = vmul.f32 %v572, %v3183
    %v3570 = vrot.slane %v3566, 3
    %v3571 = vrot.slane %v3567, 3
    %v3572 = vsel %vm245, %v3570, %v3571
    %v3575 = vadd.f32 %v3542, %v3572
    %v3576 = vadd.f32 %v3543, %v3571
    %v3577 = vmul.f32 %v584, %v3182
    %v3578 = vmul.f32 %v584, %v3183
    %v3581 = vrot.slane %v3577, 3
    %v3582 = vrot.slane %v3578, 3
    %v3583 = vsel %vm245, %v3581, %v3582
    %v3586 = vadd.f32 %v3553, %v3583
    %v3587 = vadd.f32 %v3554, %v3582
    %v3588 = vmul.f32 %v596, %v3182
    %v3589 = vmul.f32 %v596, %v3183
    %v3592 = vrot.slane %v3588, 4
    %v3593 = vrot.slane %v3589, 4
    %v3594 = vsel %vm282, %v3592, %v3593
    %v3597 = vadd.f32 %v3564, %v3594
    %v3598 = vadd.f32 %v3565, %v3593
    %v3599 = vmul.f32 %v608, %v3182
    %v3600 = vmul.f32 %v608, %v3183
    %v3603 = vrot.slane %v3599, 4
    %v3604 = vrot.slane %v3600, 4
    %v3605 = vsel %vm282, %v3603, %v3604
    %v3608 = vadd.f32 %v3575, %v3605
    %v3609 = vadd.f32 %v3576, %v3604
    %v3610 = vmul.f32 %v620, %v3182
    %v3611 = vmul.f32 %v620, %v3183
    %v3614 = vrot.slane %v3610, 4
    %v3615 = vrot.slane %v3611, 4
    %v3616 = vsel %vm282, %v3614, %v3615
    %v3619 = vadd.f32 %v3586, %v3616
    %v3620 = vadd.f32 %v3587, %v3615
    %v3621 = vmul.f32 %v632, %v3184
    %v3622 = vmul.f32 %v632, %v3185
    %v3623 = vadd.f32 %v3597, %v3621
    %v3624 = vadd.f32 %v3598, %v3622
    %v3625 = vmul.f32 %v637, %v3184
    %v3626 = vmul.f32 %v637, %v3185
    %v3627 = vadd.f32 %v3608, %v3625
    %v3628 = vadd.f32 %v3609, %v3626
    %v3629 = vmul.f32 %v642, %v3184
    %v3630 = vmul.f32 %v642, %v3185
    %v3631 = vadd.f32 %v3619, %v3629
    %v3632 = vadd.f32 %v3620, %v3630
    %v3633 = vmul.f32 %v647, %v3184
    %v3634 = vmul.f32 %v647, %v3185
    %v3637 = vrot.slane %v3633, 1
    %v3638 = vrot.slane %v3634, 1
    %v3639 = vsel %vm171, %v3637, %v3638
    %v3642 = vadd.f32 %v3623, %v3639
    %v3643 = vadd.f32 %v3624, %v3638
    %v3644 = vmul.f32 %v659, %v3184
    %v3645 = vmul.f32 %v659, %v3185
    %v3648 = vrot.slane %v3644, 1
    %v3649 = vrot.slane %v3645, 1
    %v3650 = vsel %vm171, %v3648, %v3649
    %v3653 = vadd.f32 %v3627, %v3650
    %v3654 = vadd.f32 %v3628, %v3649
    %v3655 = vmul.f32 %v671, %v3184
    %v3656 = vmul.f32 %v671, %v3185
    %v3659 = vrot.slane %v3655, 1
    %v3660 = vrot.slane %v3656, 1
    %v3661 = vsel %vm171, %v3659, %v3660
    %v3664 = vadd.f32 %v3631, %v3661
    %v3665 = vadd.f32 %v3632, %v3660
    %v3666 = vmul.f32 %v683, %v3184
    %v3667 = vmul.f32 %v683, %v3185
    %v3670 = vrot.slane %v3666, 2
    %v3671 = vrot.slane %v3667, 2
    %v3672 = vsel %vm208, %v3670, %v3671
    %v3675 = vadd.f32 %v3642, %v3672
    %v3676 = vadd.f32 %v3643, %v3671
    %v3677 = vmul.f32 %v695, %v3184
    %v3678 = vmul.f32 %v695, %v3185
    %v3681 = vrot.slane %v3677, 2
    %v3682 = vrot.slane %v3678, 2
    %v3683 = vsel %vm208, %v3681, %v3682
    %v3686 = vadd.f32 %v3653, %v3683
    %v3687 = vadd.f32 %v3654, %v3682
    %v3688 = vmul.f32 %v707, %v3184
    %v3689 = vmul.f32 %v707, %v3185
    %v3692 = vrot.slane %v3688, 2
    %v3693 = vrot.slane %v3689, 2
    %v3694 = vsel %vm208, %v3692, %v3693
    %v3697 = vadd.f32 %v3664, %v3694
    %v3698 = vadd.f32 %v3665, %v3693
    %v3699 = vmul.f32 %v719, %v3184
    %v3700 = vmul.f32 %v719, %v3185
    %v3703 = vrot.slane %v3699, 3
    %v3704 = vrot.slane %v3700, 3
    %v3705 = vsel %vm245, %v3703, %v3704
    %v3708 = vadd.f32 %v3675, %v3705
    %v3709 = vadd.f32 %v3676, %v3704
    %v3710 = vmul.f32 %v731, %v3184
    %v3711 = vmul.f32 %v731, %v3185
    %v3714 = vrot.slane %v3710, 3
    %v3715 = vrot.slane %v3711, 3
    %v3716 = vsel %vm245, %v3714, %v3715
    %v3719 = vadd.f32 %v3686, %v3716
    %v3720 = vadd.f32 %v3687, %v3715
    %v3721 = vmul.f32 %v743, %v3184
    %v3722 = vmul.f32 %v743, %v3185
    %v3725 = vrot.slane %v3721, 3
    %v3726 = vrot.slane %v3722, 3
    %v3727 = vsel %vm245, %v3725, %v3726
    %v3730 = vadd.f32 %v3697, %v3727
    %v3731 = vadd.f32 %v3698, %v3726
    %v3732 = vmul.f32 %v755, %v3184
    %v3733 = vmul.f32 %v755, %v3185
    %v3736 = vrot.slane %v3732, 4
    %v3737 = vrot.slane %v3733, 4
    %v3738 = vsel %vm282, %v3736, %v3737
    %v3741 = vadd.f32 %v3708, %v3738
    %v3742 = vadd.f32 %v3709, %v3737
    %v3743 = vmul.f32 %v767, %v3184
    %v3744 = vmul.f32 %v767, %v3185
    %v3747 = vrot.slane %v3743, 4
    %v3748 = vrot.slane %v3744, 4
    %v3749 = vsel %vm282, %v3747, %v3748
    %v3752 = vadd.f32 %v3719, %v3749
    %v3753 = vadd.f32 %v3720, %v3748
    %v3754 = vmul.f32 %v779, %v3184
    %v3755 = vmul.f32 %v779, %v3185
    %v3758 = vrot.slane %v3754, 4
    %v3759 = vrot.slane %v3755, 4
    %v3760 = vsel %vm282, %v3758, %v3759
    %v3763 = vadd.f32 %v3730, %v3760
    %v3764 = vadd.f32 %v3731, %v3759
    %v3765 = vmul.f32 %v791, %v3187
    %v3766 = vmul.f32 %v791, %v3188
    %v3767 = vadd.f32 %v3741, %v3765
    %v3768 = vadd.f32 %v3742, %v3766
    %v3769 = vmul.f32 %v796, %v3187
    %v3770 = vmul.f32 %v796, %v3188
    %v3771 = vadd.f32 %v3752, %v3769
    %v3772 = vadd.f32 %v3753, %v3770
    %v3773 = vmul.f32 %v801, %v3187
    %v3774 = vmul.f32 %v801, %v3188
    %v3775 = vadd.f32 %v3763, %v3773
    %v3776 = vadd.f32 %v3764, %v3774
    %v3777 = vmul.f32 %v806, %v3187
    %v3778 = vmul.f32 %v806, %v3188
    %v3781 = vrot.slane %v3777, 1
    %v3782 = vrot.slane %v3778, 1
    %v3783 = vsel %vm171, %v3781, %v3782
    %v3786 = vadd.f32 %v3767, %v3783
    %v3787 = vadd.f32 %v3768, %v3782
    %v3788 = vmul.f32 %v818, %v3187
    %v3789 = vmul.f32 %v818, %v3188
    %v3792 = vrot.slane %v3788, 1
    %v3793 = vrot.slane %v3789, 1
    %v3794 = vsel %vm171, %v3792, %v3793
    %v3797 = vadd.f32 %v3771, %v3794
    %v3798 = vadd.f32 %v3772, %v3793
    %v3799 = vmul.f32 %v830, %v3187
    %v3800 = vmul.f32 %v830, %v3188
    %v3803 = vrot.slane %v3799, 1
    %v3804 = vrot.slane %v3800, 1
    %v3805 = vsel %vm171, %v3803, %v3804
    %v3808 = vadd.f32 %v3775, %v3805
    %v3809 = vadd.f32 %v3776, %v3804
    %v3810 = vmul.f32 %v842, %v3187
    %v3811 = vmul.f32 %v842, %v3188
    %v3814 = vrot.slane %v3810, 2
    %v3815 = vrot.slane %v3811, 2
    %v3816 = vsel %vm208, %v3814, %v3815
    %v3819 = vadd.f32 %v3786, %v3816
    %v3820 = vadd.f32 %v3787, %v3815
    %v3821 = vmul.f32 %v854, %v3187
    %v3822 = vmul.f32 %v854, %v3188
    %v3825 = vrot.slane %v3821, 2
    %v3826 = vrot.slane %v3822, 2
    %v3827 = vsel %vm208, %v3825, %v3826
    %v3830 = vadd.f32 %v3797, %v3827
    %v3831 = vadd.f32 %v3798, %v3826
    %v3832 = vmul.f32 %v866, %v3187
    %v3833 = vmul.f32 %v866, %v3188
    %v3836 = vrot.slane %v3832, 2
    %v3837 = vrot.slane %v3833, 2
    %v3838 = vsel %vm208, %v3836, %v3837
    %v3841 = vadd.f32 %v3808, %v3838
    %v3842 = vadd.f32 %v3809, %v3837
    %v3843 = vmul.f32 %v878, %v3187
    %v3844 = vmul.f32 %v878, %v3188
    %v3847 = vrot.slane %v3843, 3
    %v3848 = vrot.slane %v3844, 3
    %v3849 = vsel %vm245, %v3847, %v3848
    %v3852 = vadd.f32 %v3819, %v3849
    %v3853 = vadd.f32 %v3820, %v3848
    %v3854 = vmul.f32 %v890, %v3187
    %v3855 = vmul.f32 %v890, %v3188
    %v3858 = vrot.slane %v3854, 3
    %v3859 = vrot.slane %v3855, 3
    %v3860 = vsel %vm245, %v3858, %v3859
    %v3863 = vadd.f32 %v3830, %v3860
    %v3864 = vadd.f32 %v3831, %v3859
    %v3865 = vmul.f32 %v902, %v3187
    %v3866 = vmul.f32 %v902, %v3188
    %v3869 = vrot.slane %v3865, 3
    %v3870 = vrot.slane %v3866, 3
    %v3871 = vsel %vm245, %v3869, %v3870
    %v3874 = vadd.f32 %v3841, %v3871
    %v3875 = vadd.f32 %v3842, %v3870
    %v3876 = vmul.f32 %v914, %v3187
    %v3877 = vmul.f32 %v914, %v3188
    %v3880 = vrot.slane %v3876, 4
    %v3881 = vrot.slane %v3877, 4
    %v3882 = vsel %vm282, %v3880, %v3881
    %v3885 = vadd.f32 %v3852, %v3882
    %v3886 = vadd.f32 %v3853, %v3881
    %v3887 = vmul.f32 %v926, %v3187
    %v3888 = vmul.f32 %v926, %v3188
    %v3891 = vrot.slane %v3887, 4
    %v3892 = vrot.slane %v3888, 4
    %v3893 = vsel %vm282, %v3891, %v3892
    %v3896 = vadd.f32 %v3863, %v3893
    %v3897 = vadd.f32 %v3864, %v3892
    %v3898 = vmul.f32 %v938, %v3187
    %v3899 = vmul.f32 %v938, %v3188
    %v3902 = vrot.slane %v3898, 4
    %v3903 = vrot.slane %v3899, 4
    %v3904 = vsel %vm282, %v3902, %v3903
    %v3907 = vadd.f32 %v3874, %v3904
    %v3908 = vadd.f32 %v3875, %v3903
    %s3909 = scalar_lea.vmem [#allocation9], 64
    %3910 = vst [vmem:[%s3909] sm:$0xff] %v3885
    %3911 = vst [vmem:[%s3909 + $0x8] sm:$0xf] %v3886
    %s3912 = scalar_lea.vmem [#allocation9], 256
    %3913 = vst [vmem:[%s3912] sm:$0xff] %v3896
    %3914 = vst [vmem:[%s3912 + $0x8] sm:$0xf] %v3897
    %s3915 = scalar_lea.vmem [#allocation9], 448
    %3916 = vst [vmem:[%s3915] sm:$0xff] %v3907
    %3917 = vst [vmem:[%s3915 + $0x8] sm:$0xf] %v3908
    %v3918 = vld [vmem:[%s966] sm:$0xff]
    %v3919 = vld [vmem:[%s966 + $0x8] sm:$0xff]
    %v3920 = vld [vmem:[%s1706] sm:$0xff]
    %v3921 = vld [vmem:[%s1706 + $0x8] sm:$0xff]
    %v3922 = vld [vmem:[%s2446] sm:$0xff]
    %v3923 = vld [vmem:[%s2446 + $0x8] sm:$0xff]
    %v3924 = vld [vmem:[%s3186] sm:$0xff]
    %v3925 = vld [vmem:[%s3186 + $0x8] sm:$0xff]
    %s3926 = scalar_lea.vmem [#allocation2], 144
    %v3927 = vld [vmem:[%s3926] sm:$0xff]
    %v3928 = vld [vmem:[%s3926 + $0x8] sm:$0xff]
    %v3929 = vmul.f32 %v151, %v3918
    %v3930 = vmul.f32 %v151, %v3919
    %v3931 = vadd.f32 %v148, %v3929
    %v3932 = vadd.f32 %v148, %v3930
    %v3933 = vmul.f32 %v156, %v3918
    %v3934 = vmul.f32 %v156, %v3919
    %v3935 = vadd.f32 %v149, %v3933
    %v3936 = vadd.f32 %v149, %v3934
    %v3937 = vmul.f32 %v161, %v3918
    %v3938 = vmul.f32 %v161, %v3919
    %v3939 = vadd.f32 %v150, %v3937
    %v3940 = vadd.f32 %v150, %v3938
    %v3941 = vmul.f32 %v166, %v3918
    %v3942 = vmul.f32 %v166, %v3919
    %v3945 = vrot.slane %v3941, 1
    %v3946 = vrot.slane %v3942, 1
    %v3947 = vsel %vm171, %v3945, %v3946
    %v3950 = vadd.f32 %v3931, %v3947
    %v3951 = vadd.f32 %v3932, %v3946
    %v3952 = vmul.f32 %v179, %v3918
    %v3953 = vmul.f32 %v179, %v3919
    %v3956 = vrot.slane %v3952, 1
    %v3957 = vrot.slane %v3953, 1
    %v3958 = vsel %vm171, %v3956, %v3957
    %v3961 = vadd.f32 %v3935, %v3958
    %v3962 = vadd.f32 %v3936, %v3957
    %v3963 = vmul.f32 %v191, %v3918
    %v3964 = vmul.f32 %v191, %v3919
    %v3967 = vrot.slane %v3963, 1
    %v3968 = vrot.slane %v3964, 1
    %v3969 = vsel %vm171, %v3967, %v3968
    %v3972 = vadd.f32 %v3939, %v3969
    %v3973 = vadd.f32 %v3940, %v3968
    %v3974 = vmul.f32 %v203, %v3918
    %v3975 = vmul.f32 %v203, %v3919
    %v3978 = vrot.slane %v3974, 2
    %v3979 = vrot.slane %v3975, 2
    %v3980 = vsel %vm208, %v3978, %v3979
    %v3983 = vadd.f32 %v3950, %v3980
    %v3984 = vadd.f32 %v3951, %v3979
    %v3985 = vmul.f32 %v216, %v3918
    %v3986 = vmul.f32 %v216, %v3919
    %v3989 = vrot.slane %v3985, 2
    %v3990 = vrot.slane %v3986, 2
    %v3991 = vsel %vm208, %v3989, %v3990
    %v3994 = vadd.f32 %v3961, %v3991
    %v3995 = vadd.f32 %v3962, %v3990
    %v3996 = vmul.f32 %v228, %v3918
    %v3997 = vmul.f32 %v228, %v3919
    %v4000 = vrot.slane %v3996, 2
    %v4001 = vrot.slane %v3997, 2
    %v4002 = vsel %vm208, %v4000, %v4001
    %v4005 = vadd.f32 %v3972, %v4002
    %v4006 = vadd.f32 %v3973, %v4001
    %v4007 = vmul.f32 %v240, %v3918
    %v4008 = vmul.f32 %v240, %v3919
    %v4011 = vrot.slane %v4007, 3
    %v4012 = vrot.slane %v4008, 3
    %v4013 = vsel %vm245, %v4011, %v4012
    %v4016 = vadd.f32 %v3983, %v4013
    %v4017 = vadd.f32 %v3984, %v4012
    %v4018 = vmul.f32 %v253, %v3918
    %v4019 = vmul.f32 %v253, %v3919
    %v4022 = vrot.slane %v4018, 3
    %v4023 = vrot.slane %v4019, 3
    %v4024 = vsel %vm245, %v4022, %v4023
    %v4027 = vadd.f32 %v3994, %v4024
    %v4028 = vadd.f32 %v3995, %v4023
    %v4029 = vmul.f32 %v265, %v3918
    %v4030 = vmul.f32 %v265, %v3919
    %v4033 = vrot.slane %v4029, 3
    %v4034 = vrot.slane %v4030, 3
    %v4035 = vsel %vm245, %v4033, %v4034
    %v4038 = vadd.f32 %v4005, %v4035
    %v4039 = vadd.f32 %v4006, %v4034
    %v4040 = vmul.f32 %v277, %v3918
    %v4041 = vmul.f32 %v277, %v3919
    %v4044 = vrot.slane %v4040, 4
    %v4045 = vrot.slane %v4041, 4
    %v4046 = vsel %vm282, %v4044, %v4045
    %v4049 = vadd.f32 %v4016, %v4046
    %v4050 = vadd.f32 %v4017, %v4045
    %v4051 = vmul.f32 %v290, %v3918
    %v4052 = vmul.f32 %v290, %v3919
    %v4055 = vrot.slane %v4051, 4
    %v4056 = vrot.slane %v4052, 4
    %v4057 = vsel %vm282, %v4055, %v4056
    %v4060 = vadd.f32 %v4027, %v4057
    %v4061 = vadd.f32 %v4028, %v4056
    %v4062 = vmul.f32 %v302, %v3918
    %v4063 = vmul.f32 %v302, %v3919
    %v4066 = vrot.slane %v4062, 4
    %v4067 = vrot.slane %v4063, 4
    %v4068 = vsel %vm282, %v4066, %v4067
    %v4071 = vadd.f32 %v4038, %v4068
    %v4072 = vadd.f32 %v4039, %v4067
    %v4073 = vmul.f32 %v314, %v3920
    %v4074 = vmul.f32 %v314, %v3921
    %v4075 = vadd.f32 %v4049, %v4073
    %v4076 = vadd.f32 %v4050, %v4074
    %v4077 = vmul.f32 %v319, %v3920
    %v4078 = vmul.f32 %v319, %v3921
    %v4079 = vadd.f32 %v4060, %v4077
    %v4080 = vadd.f32 %v4061, %v4078
    %v4081 = vmul.f32 %v324, %v3920
    %v4082 = vmul.f32 %v324, %v3921
    %v4083 = vadd.f32 %v4071, %v4081
    %v4084 = vadd.f32 %v4072, %v4082
    %v4085 = vmul.f32 %v329, %v3920
    %v4086 = vmul.f32 %v329, %v3921
    %v4089 = vrot.slane %v4085, 1
    %v4090 = vrot.slane %v4086, 1
    %v4091 = vsel %vm171, %v4089, %v4090
    %v4094 = vadd.f32 %v4075, %v4091
    %v4095 = vadd.f32 %v4076, %v4090
    %v4096 = vmul.f32 %v341, %v3920
    %v4097 = vmul.f32 %v341, %v3921
    %v4100 = vrot.slane %v4096, 1
    %v4101 = vrot.slane %v4097, 1
    %v4102 = vsel %vm171, %v4100, %v4101
    %v4105 = vadd.f32 %v4079, %v4102
    %v4106 = vadd.f32 %v4080, %v4101
    %v4107 = vmul.f32 %v353, %v3920
    %v4108 = vmul.f32 %v353, %v3921
    %v4111 = vrot.slane %v4107, 1
    %v4112 = vrot.slane %v4108, 1
    %v4113 = vsel %vm171, %v4111, %v4112
    %v4116 = vadd.f32 %v4083, %v4113
    %v4117 = vadd.f32 %v4084, %v4112
    %v4118 = vmul.f32 %v365, %v3920
    %v4119 = vmul.f32 %v365, %v3921
    %v4122 = vrot.slane %v4118, 2
    %v4123 = vrot.slane %v4119, 2
    %v4124 = vsel %vm208, %v4122, %v4123
    %v4127 = vadd.f32 %v4094, %v4124
    %v4128 = vadd.f32 %v4095, %v4123
    %v4129 = vmul.f32 %v377, %v3920
    %v4130 = vmul.f32 %v377, %v3921
    %v4133 = vrot.slane %v4129, 2
    %v4134 = vrot.slane %v4130, 2
    %v4135 = vsel %vm208, %v4133, %v4134
    %v4138 = vadd.f32 %v4105, %v4135
    %v4139 = vadd.f32 %v4106, %v4134
    %v4140 = vmul.f32 %v389, %v3920
    %v4141 = vmul.f32 %v389, %v3921
    %v4144 = vrot.slane %v4140, 2
    %v4145 = vrot.slane %v4141, 2
    %v4146 = vsel %vm208, %v4144, %v4145
    %v4149 = vadd.f32 %v4116, %v4146
    %v4150 = vadd.f32 %v4117, %v4145
    %v4151 = vmul.f32 %v401, %v3920
    %v4152 = vmul.f32 %v401, %v3921
    %v4155 = vrot.slane %v4151, 3
    %v4156 = vrot.slane %v4152, 3
    %v4157 = vsel %vm245, %v4155, %v4156
    %v4160 = vadd.f32 %v4127, %v4157
    %v4161 = vadd.f32 %v4128, %v4156
    %v4162 = vmul.f32 %v413, %v3920
    %v4163 = vmul.f32 %v413, %v3921
    %v4166 = vrot.slane %v4162, 3
    %v4167 = vrot.slane %v4163, 3
    %v4168 = vsel %vm245, %v4166, %v4167
    %v4171 = vadd.f32 %v4138, %v4168
    %v4172 = vadd.f32 %v4139, %v4167
    %v4173 = vmul.f32 %v425, %v3920
    %v4174 = vmul.f32 %v425, %v3921
    %v4177 = vrot.slane %v4173, 3
    %v4178 = vrot.slane %v4174, 3
    %v4179 = vsel %vm245, %v4177, %v4178
    %v4182 = vadd.f32 %v4149, %v4179
    %v4183 = vadd.f32 %v4150, %v4178
    %v4184 = vmul.f32 %v437, %v3920
    %v4185 = vmul.f32 %v437, %v3921
    %v4188 = vrot.slane %v4184, 4
    %v4189 = vrot.slane %v4185, 4
    %v4190 = vsel %vm282, %v4188, %v4189
    %v4193 = vadd.f32 %v4160, %v4190
    %v4194 = vadd.f32 %v4161, %v4189
    %v4195 = vmul.f32 %v449, %v3920
    %v4196 = vmul.f32 %v449, %v3921
    %v4199 = vrot.slane %v4195, 4
    %v4200 = vrot.slane %v4196, 4
    %v4201 = vsel %vm282, %v4199, %v4200
    %v4204 = vadd.f32 %v4171, %v4201
    %v4205 = vadd.f32 %v4172, %v4200
    %v4206 = vmul.f32 %v461, %v3920
    %v4207 = vmul.f32 %v461, %v3921
    %v4210 = vrot.slane %v4206, 4
    %v4211 = vrot.slane %v4207, 4
    %v4212 = vsel %vm282, %v4210, %v4211
    %v4215 = vadd.f32 %v4182, %v4212
    %v4216 = vadd.f32 %v4183, %v4211
    %v4217 = vmul.f32 %v473, %v3922
    %v4218 = vmul.f32 %v473, %v3923
    %v4219 = vadd.f32 %v4193, %v4217
    %v4220 = vadd.f32 %v4194, %v4218
    %v4221 = vmul.f32 %v478, %v3922
    %v4222 = vmul.f32 %v478, %v3923
    %v4223 = vadd.f32 %v4204, %v4221
    %v4224 = vadd.f32 %v4205, %v4222
    %v4225 = vmul.f32 %v483, %v3922
    %v4226 = vmul.f32 %v483, %v3923
    %v4227 = vadd.f32 %v4215, %v4225
    %v4228 = vadd.f32 %v4216, %v4226
    %v4229 = vmul.f32 %v488, %v3922
    %v4230 = vmul.f32 %v488, %v3923
    %v4233 = vrot.slane %v4229, 1
    %v4234 = vrot.slane %v4230, 1
    %v4235 = vsel %vm171, %v4233, %v4234
    %v4238 = vadd.f32 %v4219, %v4235
    %v4239 = vadd.f32 %v4220, %v4234
    %v4240 = vmul.f32 %v500, %v3922
    %v4241 = vmul.f32 %v500, %v3923
    %v4244 = vrot.slane %v4240, 1
    %v4245 = vrot.slane %v4241, 1
    %v4246 = vsel %vm171, %v4244, %v4245
    %v4249 = vadd.f32 %v4223, %v4246
    %v4250 = vadd.f32 %v4224, %v4245
    %v4251 = vmul.f32 %v512, %v3922
    %v4252 = vmul.f32 %v512, %v3923
    %v4255 = vrot.slane %v4251, 1
    %v4256 = vrot.slane %v4252, 1
    %v4257 = vsel %vm171, %v4255, %v4256
    %v4260 = vadd.f32 %v4227, %v4257
    %v4261 = vadd.f32 %v4228, %v4256
    %v4262 = vmul.f32 %v524, %v3922
    %v4263 = vmul.f32 %v524, %v3923
    %v4266 = vrot.slane %v4262, 2
    %v4267 = vrot.slane %v4263, 2
    %v4268 = vsel %vm208, %v4266, %v4267
    %v4271 = vadd.f32 %v4238, %v4268
    %v4272 = vadd.f32 %v4239, %v4267
    %v4273 = vmul.f32 %v536, %v3922
    %v4274 = vmul.f32 %v536, %v3923
    %v4277 = vrot.slane %v4273, 2
    %v4278 = vrot.slane %v4274, 2
    %v4279 = vsel %vm208, %v4277, %v4278
    %v4282 = vadd.f32 %v4249, %v4279
    %v4283 = vadd.f32 %v4250, %v4278
    %v4284 = vmul.f32 %v548, %v3922
    %v4285 = vmul.f32 %v548, %v3923
    %v4288 = vrot.slane %v4284, 2
    %v4289 = vrot.slane %v4285, 2
    %v4290 = vsel %vm208, %v4288, %v4289
    %v4293 = vadd.f32 %v4260, %v4290
    %v4294 = vadd.f32 %v4261, %v4289
    %v4295 = vmul.f32 %v560, %v3922
    %v4296 = vmul.f32 %v560, %v3923
    %v4299 = vrot.slane %v4295, 3
    %v4300 = vrot.slane %v4296, 3
    %v4301 = vsel %vm245, %v4299, %v4300
    %v4304 = vadd.f32 %v4271, %v4301
    %v4305 = vadd.f32 %v4272, %v4300
    %v4306 = vmul.f32 %v572, %v3922
    %v4307 = vmul.f32 %v572, %v3923
    %v4310 = vrot.slane %v4306, 3
    %v4311 = vrot.slane %v4307, 3
    %v4312 = vsel %vm245, %v4310, %v4311
    %v4315 = vadd.f32 %v4282, %v4312
    %v4316 = vadd.f32 %v4283, %v4311
    %v4317 = vmul.f32 %v584, %v3922
    %v4318 = vmul.f32 %v584, %v3923
    %v4321 = vrot.slane %v4317, 3
    %v4322 = vrot.slane %v4318, 3
    %v4323 = vsel %vm245, %v4321, %v4322
    %v4326 = vadd.f32 %v4293, %v4323
    %v4327 = vadd.f32 %v4294, %v4322
    %v4328 = vmul.f32 %v596, %v3922
    %v4329 = vmul.f32 %v596, %v3923
    %v4332 = vrot.slane %v4328, 4
    %v4333 = vrot.slane %v4329, 4
    %v4334 = vsel %vm282, %v4332, %v4333
    %v4337 = vadd.f32 %v4304, %v4334
    %v4338 = vadd.f32 %v4305, %v4333
    %v4339 = vmul.f32 %v608, %v3922
    %v4340 = vmul.f32 %v608, %v3923
    %v4343 = vrot.slane %v4339, 4
    %v4344 = vrot.slane %v4340, 4
    %v4345 = vsel %vm282, %v4343, %v4344
    %v4348 = vadd.f32 %v4315, %v4345
    %v4349 = vadd.f32 %v4316, %v4344
    %v4350 = vmul.f32 %v620, %v3922
    %v4351 = vmul.f32 %v620, %v3923
    %v4354 = vrot.slane %v4350, 4
    %v4355 = vrot.slane %v4351, 4
    %v4356 = vsel %vm282, %v4354, %v4355
    %v4359 = vadd.f32 %v4326, %v4356
    %v4360 = vadd.f32 %v4327, %v4355
    %v4361 = vmul.f32 %v632, %v3924
    %v4362 = vmul.f32 %v632, %v3925
    %v4363 = vadd.f32 %v4337, %v4361
    %v4364 = vadd.f32 %v4338, %v4362
    %v4365 = vmul.f32 %v637, %v3924
    %v4366 = vmul.f32 %v637, %v3925
    %v4367 = vadd.f32 %v4348, %v4365
    %v4368 = vadd.f32 %v4349, %v4366
    %v4369 = vmul.f32 %v642, %v3924
    %v4370 = vmul.f32 %v642, %v3925
    %v4371 = vadd.f32 %v4359, %v4369
    %v4372 = vadd.f32 %v4360, %v4370
    %v4373 = vmul.f32 %v647, %v3924
    %v4374 = vmul.f32 %v647, %v3925
    %v4377 = vrot.slane %v4373, 1
    %v4378 = vrot.slane %v4374, 1
    %v4379 = vsel %vm171, %v4377, %v4378
    %v4382 = vadd.f32 %v4363, %v4379
    %v4383 = vadd.f32 %v4364, %v4378
    %v4384 = vmul.f32 %v659, %v3924
    %v4385 = vmul.f32 %v659, %v3925
    %v4388 = vrot.slane %v4384, 1
    %v4389 = vrot.slane %v4385, 1
    %v4390 = vsel %vm171, %v4388, %v4389
    %v4393 = vadd.f32 %v4367, %v4390
    %v4394 = vadd.f32 %v4368, %v4389
    %v4395 = vmul.f32 %v671, %v3924
    %v4396 = vmul.f32 %v671, %v3925
    %v4399 = vrot.slane %v4395, 1
    %v4400 = vrot.slane %v4396, 1
    %v4401 = vsel %vm171, %v4399, %v4400
    %v4404 = vadd.f32 %v4371, %v4401
    %v4405 = vadd.f32 %v4372, %v4400
    %v4406 = vmul.f32 %v683, %v3924
    %v4407 = vmul.f32 %v683, %v3925
    %v4410 = vrot.slane %v4406, 2
    %v4411 = vrot.slane %v4407, 2
    %v4412 = vsel %vm208, %v4410, %v4411
    %v4415 = vadd.f32 %v4382, %v4412
    %v4416 = vadd.f32 %v4383, %v4411
    %v4417 = vmul.f32 %v695, %v3924
    %v4418 = vmul.f32 %v695, %v3925
    %v4421 = vrot.slane %v4417, 2
    %v4422 = vrot.slane %v4418, 2
    %v4423 = vsel %vm208, %v4421, %v4422
    %v4426 = vadd.f32 %v4393, %v4423
    %v4427 = vadd.f32 %v4394, %v4422
    %v4428 = vmul.f32 %v707, %v3924
    %v4429 = vmul.f32 %v707, %v3925
    %v4432 = vrot.slane %v4428, 2
    %v4433 = vrot.slane %v4429, 2
    %v4434 = vsel %vm208, %v4432, %v4433
    %v4437 = vadd.f32 %v4404, %v4434
    %v4438 = vadd.f32 %v4405, %v4433
    %v4439 = vmul.f32 %v719, %v3924
    %v4440 = vmul.f32 %v719, %v3925
    %v4443 = vrot.slane %v4439, 3
    %v4444 = vrot.slane %v4440, 3
    %v4445 = vsel %vm245, %v4443, %v4444
    %v4448 = vadd.f32 %v4415, %v4445
    %v4449 = vadd.f32 %v4416, %v4444
    %v4450 = vmul.f32 %v731, %v3924
    %v4451 = vmul.f32 %v731, %v3925
    %v4454 = vrot.slane %v4450, 3
    %v4455 = vrot.slane %v4451, 3
    %v4456 = vsel %vm245, %v4454, %v4455
    %v4459 = vadd.f32 %v4426, %v4456
    %v4460 = vadd.f32 %v4427, %v4455
    %v4461 = vmul.f32 %v743, %v3924
    %v4462 = vmul.f32 %v743, %v3925
    %v4465 = vrot.slane %v4461, 3
    %v4466 = vrot.slane %v4462, 3
    %v4467 = vsel %vm245, %v4465, %v4466
    %v4470 = vadd.f32 %v4437, %v4467
    %v4471 = vadd.f32 %v4438, %v4466
    %v4472 = vmul.f32 %v755, %v3924
    %v4473 = vmul.f32 %v755, %v3925
    %v4476 = vrot.slane %v4472, 4
    %v4477 = vrot.slane %v4473, 4
    %v4478 = vsel %vm282, %v4476, %v4477
    %v4481 = vadd.f32 %v4448, %v4478
    %v4482 = vadd.f32 %v4449, %v4477
    %v4483 = vmul.f32 %v767, %v3924
    %v4484 = vmul.f32 %v767, %v3925
    %v4487 = vrot.slane %v4483, 4
    %v4488 = vrot.slane %v4484, 4
    %v4489 = vsel %vm282, %v4487, %v4488
    %v4492 = vadd.f32 %v4459, %v4489
    %v4493 = vadd.f32 %v4460, %v4488
    %v4494 = vmul.f32 %v779, %v3924
    %v4495 = vmul.f32 %v779, %v3925
    %v4498 = vrot.slane %v4494, 4
    %v4499 = vrot.slane %v4495, 4
    %v4500 = vsel %vm282, %v4498, %v4499
    %v4503 = vadd.f32 %v4470, %v4500
    %v4504 = vadd.f32 %v4471, %v4499
    %v4505 = vmul.f32 %v791, %v3927
    %v4506 = vmul.f32 %v791, %v3928
    %v4507 = vadd.f32 %v4481, %v4505
    %v4508 = vadd.f32 %v4482, %v4506
    %v4509 = vmul.f32 %v796, %v3927
    %v4510 = vmul.f32 %v796, %v3928
    %v4511 = vadd.f32 %v4492, %v4509
    %v4512 = vadd.f32 %v4493, %v4510
    %v4513 = vmul.f32 %v801, %v3927
    %v4514 = vmul.f32 %v801, %v3928
    %v4515 = vadd.f32 %v4503, %v4513
    %v4516 = vadd.f32 %v4504, %v4514
    %v4517 = vmul.f32 %v806, %v3927
    %v4518 = vmul.f32 %v806, %v3928
    %v4521 = vrot.slane %v4517, 1
    %v4522 = vrot.slane %v4518, 1
    %v4523 = vsel %vm171, %v4521, %v4522
    %v4526 = vadd.f32 %v4507, %v4523
    %v4527 = vadd.f32 %v4508, %v4522
    %v4528 = vmul.f32 %v818, %v3927
    %v4529 = vmul.f32 %v818, %v3928
    %v4532 = vrot.slane %v4528, 1
    %v4533 = vrot.slane %v4529, 1
    %v4534 = vsel %vm171, %v4532, %v4533
    %v4537 = vadd.f32 %v4511, %v4534
    %v4538 = vadd.f32 %v4512, %v4533
    %v4539 = vmul.f32 %v830, %v3927
    %v4540 = vmul.f32 %v830, %v3928
    %v4543 = vrot.slane %v4539, 1
    %v4544 = vrot.slane %v4540, 1
    %v4545 = vsel %vm171, %v4543, %v4544
    %v4548 = vadd.f32 %v4515, %v4545
    %v4549 = vadd.f32 %v4516, %v4544
    %v4550 = vmul.f32 %v842, %v3927
    %v4551 = vmul.f32 %v842, %v3928
    %v4554 = vrot.slane %v4550, 2
    %v4555 = vrot.slane %v4551, 2
    %v4556 = vsel %vm208, %v4554, %v4555
    %v4559 = vadd.f32 %v4526, %v4556
    %v4560 = vadd.f32 %v4527, %v4555
    %v4561 = vmul.f32 %v854, %v3927
    %v4562 = vmul.f32 %v854, %v3928
    %v4565 = vrot.slane %v4561, 2
    %v4566 = vrot.slane %v4562, 2
    %v4567 = vsel %vm208, %v4565, %v4566
    %v4570 = vadd.f32 %v4537, %v4567
    %v4571 = vadd.f32 %v4538, %v4566
    %v4572 = vmul.f32 %v866, %v3927
    %v4573 = vmul.f32 %v866, %v3928
    %v4576 = vrot.slane %v4572, 2
    %v4577 = vrot.slane %v4573, 2
    %v4578 = vsel %vm208, %v4576, %v4577
    %v4581 = vadd.f32 %v4548, %v4578
    %v4582 = vadd.f32 %v4549, %v4577
    %v4583 = vmul.f32 %v878, %v3927
    %v4584 = vmul.f32 %v878, %v3928
    %v4587 = vrot.slane %v4583, 3
    %v4588 = vrot.slane %v4584, 3
    %v4589 = vsel %vm245, %v4587, %v4588
    %v4592 = vadd.f32 %v4559, %v4589
    %v4593 = vadd.f32 %v4560, %v4588
    %v4594 = vmul.f32 %v890, %v3927
    %v4595 = vmul.f32 %v890, %v3928
    %v4598 = vrot.slane %v4594, 3
    %v4599 = vrot.slane %v4595, 3
    %v4600 = vsel %vm245, %v4598, %v4599
    %v4603 = vadd.f32 %v4570, %v4600
    %v4604 = vadd.f32 %v4571, %v4599
    %v4605 = vmul.f32 %v902, %v3927
    %v4606 = vmul.f32 %v902, %v3928
    %v4609 = vrot.slane %v4605, 3
    %v4610 = vrot.slane %v4606, 3
    %v4611 = vsel %vm245, %v4609, %v4610
    %v4614 = vadd.f32 %v4581, %v4611
    %v4615 = vadd.f32 %v4582, %v4610
    %v4616 = vmul.f32 %v914, %v3927
    %v4617 = vmul.f32 %v914, %v3928
    %v4620 = vrot.slane %v4616, 4
    %v4621 = vrot.slane %v4617, 4
    %v4622 = vsel %vm282, %v4620, %v4621
    %v4625 = vadd.f32 %v4592, %v4622
    %v4626 = vadd.f32 %v4593, %v4621
    %v4627 = vmul.f32 %v926, %v3927
    %v4628 = vmul.f32 %v926, %v3928
    %v4631 = vrot.slane %v4627, 4
    %v4632 = vrot.slane %v4628, 4
    %v4633 = vsel %vm282, %v4631, %v4632
    %v4636 = vadd.f32 %v4603, %v4633
    %v4637 = vadd.f32 %v4604, %v4632
    %v4638 = vmul.f32 %v938, %v3927
    %v4639 = vmul.f32 %v938, %v3928
    %v4642 = vrot.slane %v4638, 4
    %v4643 = vrot.slane %v4639, 4
    %v4644 = vsel %vm282, %v4642, %v4643
    %v4647 = vadd.f32 %v4614, %v4644
    %v4648 = vadd.f32 %v4615, %v4643
    %s4649 = scalar_lea.vmem [#allocation9], 80
    %4650 = vst [vmem:[%s4649] sm:$0xff] %v4625
    %4651 = vst [vmem:[%s4649 + $0x8] sm:$0xf] %v4626
    %s4652 = scalar_lea.vmem [#allocation9], 272
    %4653 = vst [vmem:[%s4652] sm:$0xff] %v4636
    %4654 = vst [vmem:[%s4652 + $0x8] sm:$0xf] %v4637
    %s4655 = scalar_lea.vmem [#allocation9], 464
    %4656 = vst [vmem:[%s4655] sm:$0xff] %v4647
    %4657 = vst [vmem:[%s4655 + $0x8] sm:$0xf] %v4648
    %v4658 = vld [vmem:[%s1706] sm:$0xff]
    %v4659 = vld [vmem:[%s1706 + $0x8] sm:$0xff]
    %v4660 = vld [vmem:[%s2446] sm:$0xff]
    %v4661 = vld [vmem:[%s2446 + $0x8] sm:$0xff]
    %v4662 = vld [vmem:[%s3186] sm:$0xff]
    %v4663 = vld [vmem:[%s3186 + $0x8] sm:$0xff]
    %v4664 = vld [vmem:[%s3926] sm:$0xff]
    %v4665 = vld [vmem:[%s3926 + $0x8] sm:$0xff]
    %s4666 = scalar_lea.vmem [#allocation2], 160
    %v4667 = vld [vmem:[%s4666] sm:$0xff]
    %v4668 = vld [vmem:[%s4666 + $0x8] sm:$0xff]
    %v4669 = vmul.f32 %v151, %v4658
    %v4670 = vmul.f32 %v151, %v4659
    %v4671 = vadd.f32 %v148, %v4669
    %v4672 = vadd.f32 %v148, %v4670
    %v4673 = vmul.f32 %v156, %v4658
    %v4674 = vmul.f32 %v156, %v4659
    %v4675 = vadd.f32 %v149, %v4673
    %v4676 = vadd.f32 %v149, %v4674
    %v4677 = vmul.f32 %v161, %v4658
    %v4678 = vmul.f32 %v161, %v4659
    %v4679 = vadd.f32 %v150, %v4677
    %v4680 = vadd.f32 %v150, %v4678
    %v4681 = vmul.f32 %v166, %v4658
    %v4682 = vmul.f32 %v166, %v4659
    %v4685 = vrot.slane %v4681, 1
    %v4686 = vrot.slane %v4682, 1
    %v4687 = vsel %vm171, %v4685, %v4686
    %v4690 = vadd.f32 %v4671, %v4687
    %v4691 = vadd.f32 %v4672, %v4686
    %v4692 = vmul.f32 %v179, %v4658
    %v4693 = vmul.f32 %v179, %v4659
    %v4696 = vrot.slane %v4692, 1
    %v4697 = vrot.slane %v4693, 1
    %v4698 = vsel %vm171, %v4696, %v4697
    %v4701 = vadd.f32 %v4675, %v4698
    %v4702 = vadd.f32 %v4676, %v4697
    %v4703 = vmul.f32 %v191, %v4658
    %v4704 = vmul.f32 %v191, %v4659
    %v4707 = vrot.slane %v4703, 1
    %v4708 = vrot.slane %v4704, 1
    %v4709 = vsel %vm171, %v4707, %v4708
    %v4712 = vadd.f32 %v4679, %v4709
    %v4713 = vadd.f32 %v4680, %v4708
    %v4714 = vmul.f32 %v203, %v4658
    %v4715 = vmul.f32 %v203, %v4659
    %v4718 = vrot.slane %v4714, 2
    %v4719 = vrot.slane %v4715, 2
    %v4720 = vsel %vm208, %v4718, %v4719
    %v4723 = vadd.f32 %v4690, %v4720
    %v4724 = vadd.f32 %v4691, %v4719
    %v4725 = vmul.f32 %v216, %v4658
    %v4726 = vmul.f32 %v216, %v4659
    %v4729 = vrot.slane %v4725, 2
    %v4730 = vrot.slane %v4726, 2
    %v4731 = vsel %vm208, %v4729, %v4730
    %v4734 = vadd.f32 %v4701, %v4731
    %v4735 = vadd.f32 %v4702, %v4730
    %v4736 = vmul.f32 %v228, %v4658
    %v4737 = vmul.f32 %v228, %v4659
    %v4740 = vrot.slane %v4736, 2
    %v4741 = vrot.slane %v4737, 2
    %v4742 = vsel %vm208, %v4740, %v4741
    %v4745 = vadd.f32 %v4712, %v4742
    %v4746 = vadd.f32 %v4713, %v4741
    %v4747 = vmul.f32 %v240, %v4658
    %v4748 = vmul.f32 %v240, %v4659
    %v4751 = vrot.slane %v4747, 3
    %v4752 = vrot.slane %v4748, 3
    %v4753 = vsel %vm245, %v4751, %v4752
    %v4756 = vadd.f32 %v4723, %v4753
    %v4757 = vadd.f32 %v4724, %v4752
    %v4758 = vmul.f32 %v253, %v4658
    %v4759 = vmul.f32 %v253, %v4659
    %v4762 = vrot.slane %v4758, 3
    %v4763 = vrot.slane %v4759, 3
    %v4764 = vsel %vm245, %v4762, %v4763
    %v4767 = vadd.f32 %v4734, %v4764
    %v4768 = vadd.f32 %v4735, %v4763
    %v4769 = vmul.f32 %v265, %v4658
    %v4770 = vmul.f32 %v265, %v4659
    %v4773 = vrot.slane %v4769, 3
    %v4774 = vrot.slane %v4770, 3
    %v4775 = vsel %vm245, %v4773, %v4774
    %v4778 = vadd.f32 %v4745, %v4775
    %v4779 = vadd.f32 %v4746, %v4774
    %v4780 = vmul.f32 %v277, %v4658
    %v4781 = vmul.f32 %v277, %v4659
    %v4784 = vrot.slane %v4780, 4
    %v4785 = vrot.slane %v4781, 4
    %v4786 = vsel %vm282, %v4784, %v4785
    %v4789 = vadd.f32 %v4756, %v4786
    %v4790 = vadd.f32 %v4757, %v4785
    %v4791 = vmul.f32 %v290, %v4658
    %v4792 = vmul.f32 %v290, %v4659
    %v4795 = vrot.slane %v4791, 4
    %v4796 = vrot.slane %v4792, 4
    %v4797 = vsel %vm282, %v4795, %v4796
    %v4800 = vadd.f32 %v4767, %v4797
    %v4801 = vadd.f32 %v4768, %v4796
    %v4802 = vmul.f32 %v302, %v4658
    %v4803 = vmul.f32 %v302, %v4659
    %v4806 = vrot.slane %v4802, 4
    %v4807 = vrot.slane %v4803, 4
    %v4808 = vsel %vm282, %v4806, %v4807
    %v4811 = vadd.f32 %v4778, %v4808
    %v4812 = vadd.f32 %v4779, %v4807
    %v4813 = vmul.f32 %v314, %v4660
    %v4814 = vmul.f32 %v314, %v4661
    %v4815 = vadd.f32 %v4789, %v4813
    %v4816 = vadd.f32 %v4790, %v4814
    %v4817 = vmul.f32 %v319, %v4660
    %v4818 = vmul.f32 %v319, %v4661
    %v4819 = vadd.f32 %v4800, %v4817
    %v4820 = vadd.f32 %v4801, %v4818
    %v4821 = vmul.f32 %v324, %v4660
    %v4822 = vmul.f32 %v324, %v4661
    %v4823 = vadd.f32 %v4811, %v4821
    %v4824 = vadd.f32 %v4812, %v4822
    %v4825 = vmul.f32 %v329, %v4660
    %v4826 = vmul.f32 %v329, %v4661
    %v4829 = vrot.slane %v4825, 1
    %v4830 = vrot.slane %v4826, 1
    %v4831 = vsel %vm171, %v4829, %v4830
    %v4834 = vadd.f32 %v4815, %v4831
    %v4835 = vadd.f32 %v4816, %v4830
    %v4836 = vmul.f32 %v341, %v4660
    %v4837 = vmul.f32 %v341, %v4661
    %v4840 = vrot.slane %v4836, 1
    %v4841 = vrot.slane %v4837, 1
    %v4842 = vsel %vm171, %v4840, %v4841
    %v4845 = vadd.f32 %v4819, %v4842
    %v4846 = vadd.f32 %v4820, %v4841
    %v4847 = vmul.f32 %v353, %v4660
    %v4848 = vmul.f32 %v353, %v4661
    %v4851 = vrot.slane %v4847, 1
    %v4852 = vrot.slane %v4848, 1
    %v4853 = vsel %vm171, %v4851, %v4852
    %v4856 = vadd.f32 %v4823, %v4853
    %v4857 = vadd.f32 %v4824, %v4852
    %v4858 = vmul.f32 %v365, %v4660
    %v4859 = vmul.f32 %v365, %v4661
    %v4862 = vrot.slane %v4858, 2
    %v4863 = vrot.slane %v4859, 2
    %v4864 = vsel %vm208, %v4862, %v4863
    %v4867 = vadd.f32 %v4834, %v4864
    %v4868 = vadd.f32 %v4835, %v4863
    %v4869 = vmul.f32 %v377, %v4660
    %v4870 = vmul.f32 %v377, %v4661
    %v4873 = vrot.slane %v4869, 2
    %v4874 = vrot.slane %v4870, 2
    %v4875 = vsel %vm208, %v4873, %v4874
    %v4878 = vadd.f32 %v4845, %v4875
    %v4879 = vadd.f32 %v4846, %v4874
    %v4880 = vmul.f32 %v389, %v4660
    %v4881 = vmul.f32 %v389, %v4661
    %v4884 = vrot.slane %v4880, 2
    %v4885 = vrot.slane %v4881, 2
    %v4886 = vsel %vm208, %v4884, %v4885
    %v4889 = vadd.f32 %v4856, %v4886
    %v4890 = vadd.f32 %v4857, %v4885
    %v4891 = vmul.f32 %v401, %v4660
    %v4892 = vmul.f32 %v401, %v4661
    %v4895 = vrot.slane %v4891, 3
    %v4896 = vrot.slane %v4892, 3
    %v4897 = vsel %vm245, %v4895, %v4896
    %v4900 = vadd.f32 %v4867, %v4897
    %v4901 = vadd.f32 %v4868, %v4896
    %v4902 = vmul.f32 %v413, %v4660
    %v4903 = vmul.f32 %v413, %v4661
    %v4906 = vrot.slane %v4902, 3
    %v4907 = vrot.slane %v4903, 3
    %v4908 = vsel %vm245, %v4906, %v4907
    %v4911 = vadd.f32 %v4878, %v4908
    %v4912 = vadd.f32 %v4879, %v4907
    %v4913 = vmul.f32 %v425, %v4660
    %v4914 = vmul.f32 %v425, %v4661
    %v4917 = vrot.slane %v4913, 3
    %v4918 = vrot.slane %v4914, 3
    %v4919 = vsel %vm245, %v4917, %v4918
    %v4922 = vadd.f32 %v4889, %v4919
    %v4923 = vadd.f32 %v4890, %v4918
    %v4924 = vmul.f32 %v437, %v4660
    %v4925 = vmul.f32 %v437, %v4661
    %v4928 = vrot.slane %v4924, 4
    %v4929 = vrot.slane %v4925, 4
    %v4930 = vsel %vm282, %v4928, %v4929
    %v4933 = vadd.f32 %v4900, %v4930
    %v4934 = vadd.f32 %v4901, %v4929
    %v4935 = vmul.f32 %v449, %v4660
    %v4936 = vmul.f32 %v449, %v4661
    %v4939 = vrot.slane %v4935, 4
    %v4940 = vrot.slane %v4936, 4
    %v4941 = vsel %vm282, %v4939, %v4940
    %v4944 = vadd.f32 %v4911, %v4941
    %v4945 = vadd.f32 %v4912, %v4940
    %v4946 = vmul.f32 %v461, %v4660
    %v4947 = vmul.f32 %v461, %v4661
    %v4950 = vrot.slane %v4946, 4
    %v4951 = vrot.slane %v4947, 4
    %v4952 = vsel %vm282, %v4950, %v4951
    %v4955 = vadd.f32 %v4922, %v4952
    %v4956 = vadd.f32 %v4923, %v4951
    %v4957 = vmul.f32 %v473, %v4662
    %v4958 = vmul.f32 %v473, %v4663
    %v4959 = vadd.f32 %v4933, %v4957
    %v4960 = vadd.f32 %v4934, %v4958
    %v4961 = vmul.f32 %v478, %v4662
    %v4962 = vmul.f32 %v478, %v4663
    %v4963 = vadd.f32 %v4944, %v4961
    %v4964 = vadd.f32 %v4945, %v4962
    %v4965 = vmul.f32 %v483, %v4662
    %v4966 = vmul.f32 %v483, %v4663
    %v4967 = vadd.f32 %v4955, %v4965
    %v4968 = vadd.f32 %v4956, %v4966
    %v4969 = vmul.f32 %v488, %v4662
    %v4970 = vmul.f32 %v488, %v4663
    %v4973 = vrot.slane %v4969, 1
    %v4974 = vrot.slane %v4970, 1
    %v4975 = vsel %vm171, %v4973, %v4974
    %v4978 = vadd.f32 %v4959, %v4975
    %v4979 = vadd.f32 %v4960, %v4974
    %v4980 = vmul.f32 %v500, %v4662
    %v4981 = vmul.f32 %v500, %v4663
    %v4984 = vrot.slane %v4980, 1
    %v4985 = vrot.slane %v4981, 1
    %v4986 = vsel %vm171, %v4984, %v4985
    %v4989 = vadd.f32 %v4963, %v4986
    %v4990 = vadd.f32 %v4964, %v4985
    %v4991 = vmul.f32 %v512, %v4662
    %v4992 = vmul.f32 %v512, %v4663
    %v4995 = vrot.slane %v4991, 1
    %v4996 = vrot.slane %v4992, 1
    %v4997 = vsel %vm171, %v4995, %v4996
    %v5000 = vadd.f32 %v4967, %v4997
    %v5001 = vadd.f32 %v4968, %v4996
    %v5002 = vmul.f32 %v524, %v4662
    %v5003 = vmul.f32 %v524, %v4663
    %v5006 = vrot.slane %v5002, 2
    %v5007 = vrot.slane %v5003, 2
    %v5008 = vsel %vm208, %v5006, %v5007
    %v5011 = vadd.f32 %v4978, %v5008
    %v5012 = vadd.f32 %v4979, %v5007
    %v5013 = vmul.f32 %v536, %v4662
    %v5014 = vmul.f32 %v536, %v4663
    %v5017 = vrot.slane %v5013, 2
    %v5018 = vrot.slane %v5014, 2
    %v5019 = vsel %vm208, %v5017, %v5018
    %v5022 = vadd.f32 %v4989, %v5019
    %v5023 = vadd.f32 %v4990, %v5018
    %v5024 = vmul.f32 %v548, %v4662
    %v5025 = vmul.f32 %v548, %v4663
    %v5028 = vrot.slane %v5024, 2
    %v5029 = vrot.slane %v5025, 2
    %v5030 = vsel %vm208, %v5028, %v5029
    %v5033 = vadd.f32 %v5000, %v5030
    %v5034 = vadd.f32 %v5001, %v5029
    %v5035 = vmul.f32 %v560, %v4662
    %v5036 = vmul.f32 %v560, %v4663
    %v5039 = vrot.slane %v5035, 3
    %v5040 = vrot.slane %v5036, 3
    %v5041 = vsel %vm245, %v5039, %v5040
    %v5044 = vadd.f32 %v5011, %v5041
    %v5045 = vadd.f32 %v5012, %v5040
    %v5046 = vmul.f32 %v572, %v4662
    %v5047 = vmul.f32 %v572, %v4663
    %v5050 = vrot.slane %v5046, 3
    %v5051 = vrot.slane %v5047, 3
    %v5052 = vsel %vm245, %v5050, %v5051
    %v5055 = vadd.f32 %v5022, %v5052
    %v5056 = vadd.f32 %v5023, %v5051
    %v5057 = vmul.f32 %v584, %v4662
    %v5058 = vmul.f32 %v584, %v4663
    %v5061 = vrot.slane %v5057, 3
    %v5062 = vrot.slane %v5058, 3
    %v5063 = vsel %vm245, %v5061, %v5062
    %v5066 = vadd.f32 %v5033, %v5063
    %v5067 = vadd.f32 %v5034, %v5062
    %v5068 = vmul.f32 %v596, %v4662
    %v5069 = vmul.f32 %v596, %v4663
    %v5072 = vrot.slane %v5068, 4
    %v5073 = vrot.slane %v5069, 4
    %v5074 = vsel %vm282, %v5072, %v5073
    %v5077 = vadd.f32 %v5044, %v5074
    %v5078 = vadd.f32 %v5045, %v5073
    %v5079 = vmul.f32 %v608, %v4662
    %v5080 = vmul.f32 %v608, %v4663
    %v5083 = vrot.slane %v5079, 4
    %v5084 = vrot.slane %v5080, 4
    %v5085 = vsel %vm282, %v5083, %v5084
    %v5088 = vadd.f32 %v5055, %v5085
    %v5089 = vadd.f32 %v5056, %v5084
    %v5090 = vmul.f32 %v620, %v4662
    %v5091 = vmul.f32 %v620, %v4663
    %v5094 = vrot.slane %v5090, 4
    %v5095 = vrot.slane %v5091, 4
    %v5096 = vsel %vm282, %v5094, %v5095
    %v5099 = vadd.f32 %v5066, %v5096
    %v5100 = vadd.f32 %v5067, %v5095
    %v5101 = vmul.f32 %v632, %v4664
    %v5102 = vmul.f32 %v632, %v4665
    %v5103 = vadd.f32 %v5077, %v5101
    %v5104 = vadd.f32 %v5078, %v5102
    %v5105 = vmul.f32 %v637, %v4664
    %v5106 = vmul.f32 %v637, %v4665
    %v5107 = vadd.f32 %v5088, %v5105
    %v5108 = vadd.f32 %v5089, %v5106
    %v5109 = vmul.f32 %v642, %v4664
    %v5110 = vmul.f32 %v642, %v4665
    %v5111 = vadd.f32 %v5099, %v5109
    %v5112 = vadd.f32 %v5100, %v5110
    %v5113 = vmul.f32 %v647, %v4664
    %v5114 = vmul.f32 %v647, %v4665
    %v5117 = vrot.slane %v5113, 1
    %v5118 = vrot.slane %v5114, 1
    %v5119 = vsel %vm171, %v5117, %v5118
    %v5122 = vadd.f32 %v5103, %v5119
    %v5123 = vadd.f32 %v5104, %v5118
    %v5124 = vmul.f32 %v659, %v4664
    %v5125 = vmul.f32 %v659, %v4665
    %v5128 = vrot.slane %v5124, 1
    %v5129 = vrot.slane %v5125, 1
    %v5130 = vsel %vm171, %v5128, %v5129
    %v5133 = vadd.f32 %v5107, %v5130
    %v5134 = vadd.f32 %v5108, %v5129
    %v5135 = vmul.f32 %v671, %v4664
    %v5136 = vmul.f32 %v671, %v4665
    %v5139 = vrot.slane %v5135, 1
    %v5140 = vrot.slane %v5136, 1
    %v5141 = vsel %vm171, %v5139, %v5140
    %v5144 = vadd.f32 %v5111, %v5141
    %v5145 = vadd.f32 %v5112, %v5140
    %v5146 = vmul.f32 %v683, %v4664
    %v5147 = vmul.f32 %v683, %v4665
    %v5150 = vrot.slane %v5146, 2
    %v5151 = vrot.slane %v5147, 2
    %v5152 = vsel %vm208, %v5150, %v5151
    %v5155 = vadd.f32 %v5122, %v5152
    %v5156 = vadd.f32 %v5123, %v5151
    %v5157 = vmul.f32 %v695, %v4664
    %v5158 = vmul.f32 %v695, %v4665
    %v5161 = vrot.slane %v5157, 2
    %v5162 = vrot.slane %v5158, 2
    %v5163 = vsel %vm208, %v5161, %v5162
    %v5166 = vadd.f32 %v5133, %v5163
    %v5167 = vadd.f32 %v5134, %v5162
    %v5168 = vmul.f32 %v707, %v4664
    %v5169 = vmul.f32 %v707, %v4665
    %v5172 = vrot.slane %v5168, 2
    %v5173 = vrot.slane %v5169, 2
    %v5174 = vsel %vm208, %v5172, %v5173
    %v5177 = vadd.f32 %v5144, %v5174
    %v5178 = vadd.f32 %v5145, %v5173
    %v5179 = vmul.f32 %v719, %v4664
    %v5180 = vmul.f32 %v719, %v4665
    %v5183 = vrot.slane %v5179, 3
    %v5184 = vrot.slane %v5180, 3
    %v5185 = vsel %vm245, %v5183, %v5184
    %v5188 = vadd.f32 %v5155, %v5185
    %v5189 = vadd.f32 %v5156, %v5184
    %v5190 = vmul.f32 %v731, %v4664
    %v5191 = vmul.f32 %v731, %v4665
    %v5194 = vrot.slane %v5190, 3
    %v5195 = vrot.slane %v5191, 3
    %v5196 = vsel %vm245, %v5194, %v5195
    %v5199 = vadd.f32 %v5166, %v5196
    %v5200 = vadd.f32 %v5167, %v5195
    %v5201 = vmul.f32 %v743, %v4664
    %v5202 = vmul.f32 %v743, %v4665
    %v5205 = vrot.slane %v5201, 3
    %v5206 = vrot.slane %v5202, 3
    %v5207 = vsel %vm245, %v5205, %v5206
    %v5210 = vadd.f32 %v5177, %v5207
    %v5211 = vadd.f32 %v5178, %v5206
    %v5212 = vmul.f32 %v755, %v4664
    %v5213 = vmul.f32 %v755, %v4665
    %v5216 = vrot.slane %v5212, 4
    %v5217 = vrot.slane %v5213, 4
    %v5218 = vsel %vm282, %v5216, %v5217
    %v5221 = vadd.f32 %v5188, %v5218
    %v5222 = vadd.f32 %v5189, %v5217
    %v5223 = vmul.f32 %v767, %v4664
    %v5224 = vmul.f32 %v767, %v4665
    %v5227 = vrot.slane %v5223, 4
    %v5228 = vrot.slane %v5224, 4
    %v5229 = vsel %vm282, %v5227, %v5228
    %v5232 = vadd.f32 %v5199, %v5229
    %v5233 = vadd.f32 %v5200, %v5228
    %v5234 = vmul.f32 %v779, %v4664
    %v5235 = vmul.f32 %v779, %v4665
    %v5238 = vrot.slane %v5234, 4
    %v5239 = vrot.slane %v5235, 4
    %v5240 = vsel %vm282, %v5238, %v5239
    %v5243 = vadd.f32 %v5210, %v5240
    %v5244 = vadd.f32 %v5211, %v5239
    %v5245 = vmul.f32 %v791, %v4667
    %v5246 = vmul.f32 %v791, %v4668
    %v5247 = vadd.f32 %v5221, %v5245
    %v5248 = vadd.f32 %v5222, %v5246
    %v5249 = vmul.f32 %v796, %v4667
    %v5250 = vmul.f32 %v796, %v4668
    %v5251 = vadd.f32 %v5232, %v5249
    %v5252 = vadd.f32 %v5233, %v5250
    %v5253 = vmul.f32 %v801, %v4667
    %v5254 = vmul.f32 %v801, %v4668
    %v5255 = vadd.f32 %v5243, %v5253
    %v5256 = vadd.f32 %v5244, %v5254
    %v5257 = vmul.f32 %v806, %v4667
    %v5258 = vmul.f32 %v806, %v4668
    %v5261 = vrot.slane %v5257, 1
    %v5262 = vrot.slane %v5258, 1
    %v5263 = vsel %vm171, %v5261, %v5262
    %v5266 = vadd.f32 %v5247, %v5263
    %v5267 = vadd.f32 %v5248, %v5262
    %v5268 = vmul.f32 %v818, %v4667
    %v5269 = vmul.f32 %v818, %v4668
    %v5272 = vrot.slane %v5268, 1
    %v5273 = vrot.slane %v5269, 1
    %v5274 = vsel %vm171, %v5272, %v5273
    %v5277 = vadd.f32 %v5251, %v5274
    %v5278 = vadd.f32 %v5252, %v5273
    %v5279 = vmul.f32 %v830, %v4667
    %v5280 = vmul.f32 %v830, %v4668
    %v5283 = vrot.slane %v5279, 1
    %v5284 = vrot.slane %v5280, 1
    %v5285 = vsel %vm171, %v5283, %v5284
    %v5288 = vadd.f32 %v5255, %v5285
    %v5289 = vadd.f32 %v5256, %v5284
    %v5290 = vmul.f32 %v842, %v4667
    %v5291 = vmul.f32 %v842, %v4668
    %v5294 = vrot.slane %v5290, 2
    %v5295 = vrot.slane %v5291, 2
    %v5296 = vsel %vm208, %v5294, %v5295
    %v5299 = vadd.f32 %v5266, %v5296
    %v5300 = vadd.f32 %v5267, %v5295
    %v5301 = vmul.f32 %v854, %v4667
    %v5302 = vmul.f32 %v854, %v4668
    %v5305 = vrot.slane %v5301, 2
    %v5306 = vrot.slane %v5302, 2
    %v5307 = vsel %vm208, %v5305, %v5306
    %v5310 = vadd.f32 %v5277, %v5307
    %v5311 = vadd.f32 %v5278, %v5306
    %v5312 = vmul.f32 %v866, %v4667
    %v5313 = vmul.f32 %v866, %v4668
    %v5316 = vrot.slane %v5312, 2
    %v5317 = vrot.slane %v5313, 2
    %v5318 = vsel %vm208, %v5316, %v5317
    %v5321 = vadd.f32 %v5288, %v5318
    %v5322 = vadd.f32 %v5289, %v5317
    %v5323 = vmul.f32 %v878, %v4667
    %v5324 = vmul.f32 %v878, %v4668
    %v5327 = vrot.slane %v5323, 3
    %v5328 = vrot.slane %v5324, 3
    %v5329 = vsel %vm245, %v5327, %v5328
    %v5332 = vadd.f32 %v5299, %v5329
    %v5333 = vadd.f32 %v5300, %v5328
    %v5334 = vmul.f32 %v890, %v4667
    %v5335 = vmul.f32 %v890, %v4668
    %v5338 = vrot.slane %v5334, 3
    %v5339 = vrot.slane %v5335, 3
    %v5340 = vsel %vm245, %v5338, %v5339
    %v5343 = vadd.f32 %v5310, %v5340
    %v5344 = vadd.f32 %v5311, %v5339
    %v5345 = vmul.f32 %v902, %v4667
    %v5346 = vmul.f32 %v902, %v4668
    %v5349 = vrot.slane %v5345, 3
    %v5350 = vrot.slane %v5346, 3
    %v5351 = vsel %vm245, %v5349, %v5350
    %v5354 = vadd.f32 %v5321, %v5351
    %v5355 = vadd.f32 %v5322, %v5350
    %v5356 = vmul.f32 %v914, %v4667
    %v5357 = vmul.f32 %v914, %v4668
    %v5360 = vrot.slane %v5356, 4
    %v5361 = vrot.slane %v5357, 4
    %v5362 = vsel %vm282, %v5360, %v5361
    %v5365 = vadd.f32 %v5332, %v5362
    %v5366 = vadd.f32 %v5333, %v5361
    %v5367 = vmul.f32 %v926, %v4667
    %v5368 = vmul.f32 %v926, %v4668
    %v5371 = vrot.slane %v5367, 4
    %v5372 = vrot.slane %v5368, 4
    %v5373 = vsel %vm282, %v5371, %v5372
    %v5376 = vadd.f32 %v5343, %v5373
    %v5377 = vadd.f32 %v5344, %v5372
    %v5378 = vmul.f32 %v938, %v4667
    %v5379 = vmul.f32 %v938, %v4668
    %v5382 = vrot.slane %v5378, 4
    %v5383 = vrot.slane %v5379, 4
    %v5384 = vsel %vm282, %v5382, %v5383
    %v5387 = vadd.f32 %v5354, %v5384
    %v5388 = vadd.f32 %v5355, %v5383
    %s5389 = scalar_lea.vmem [#allocation9], 96
    %5390 = vst [vmem:[%s5389] sm:$0xff] %v5365
    %5391 = vst [vmem:[%s5389 + $0x8] sm:$0xf] %v5366
    %s5392 = scalar_lea.vmem [#allocation9], 288
    %5393 = vst [vmem:[%s5392] sm:$0xff] %v5376
    %5394 = vst [vmem:[%s5392 + $0x8] sm:$0xf] %v5377
    %s5395 = scalar_lea.vmem [#allocation9], 480
    %5396 = vst [vmem:[%s5395] sm:$0xff] %v5387
    %5397 = vst [vmem:[%s5395 + $0x8] sm:$0xf] %v5388
    %v5398 = vld [vmem:[%s2446] sm:$0xff]
    %v5399 = vld [vmem:[%s2446 + $0x8] sm:$0xff]
    %v5400 = vld [vmem:[%s3186] sm:$0xff]
    %v5401 = vld [vmem:[%s3186 + $0x8] sm:$0xff]
    %v5402 = vld [vmem:[%s3926] sm:$0xff]
    %v5403 = vld [vmem:[%s3926 + $0x8] sm:$0xff]
    %v5404 = vld [vmem:[%s4666] sm:$0xff]
    %v5405 = vld [vmem:[%s4666 + $0x8] sm:$0xff]
    %s5406 = scalar_lea.vmem [#allocation2], 176
    %v5407 = vld [vmem:[%s5406] sm:$0xff]
    %v5408 = vld [vmem:[%s5406 + $0x8] sm:$0xff]
    %v5409 = vmul.f32 %v151, %v5398
    %v5410 = vmul.f32 %v151, %v5399
    %v5411 = vadd.f32 %v148, %v5409
    %v5412 = vadd.f32 %v148, %v5410
    %v5413 = vmul.f32 %v156, %v5398
    %v5414 = vmul.f32 %v156, %v5399
    %v5415 = vadd.f32 %v149, %v5413
    %v5416 = vadd.f32 %v149, %v5414
    %v5417 = vmul.f32 %v161, %v5398
    %v5418 = vmul.f32 %v161, %v5399
    %v5419 = vadd.f32 %v150, %v5417
    %v5420 = vadd.f32 %v150, %v5418
    %v5421 = vmul.f32 %v166, %v5398
    %v5422 = vmul.f32 %v166, %v5399
    %v5425 = vrot.slane %v5421, 1
    %v5426 = vrot.slane %v5422, 1
    %v5427 = vsel %vm171, %v5425, %v5426
    %v5430 = vadd.f32 %v5411, %v5427
    %v5431 = vadd.f32 %v5412, %v5426
    %v5432 = vmul.f32 %v179, %v5398
    %v5433 = vmul.f32 %v179, %v5399
    %v5436 = vrot.slane %v5432, 1
    %v5437 = vrot.slane %v5433, 1
    %v5438 = vsel %vm171, %v5436, %v5437
    %v5441 = vadd.f32 %v5415, %v5438
    %v5442 = vadd.f32 %v5416, %v5437
    %v5443 = vmul.f32 %v191, %v5398
    %v5444 = vmul.f32 %v191, %v5399
    %v5447 = vrot.slane %v5443, 1
    %v5448 = vrot.slane %v5444, 1
    %v5449 = vsel %vm171, %v5447, %v5448
    %v5452 = vadd.f32 %v5419, %v5449
    %v5453 = vadd.f32 %v5420, %v5448
    %v5454 = vmul.f32 %v203, %v5398
    %v5455 = vmul.f32 %v203, %v5399
    %v5458 = vrot.slane %v5454, 2
    %v5459 = vrot.slane %v5455, 2
    %v5460 = vsel %vm208, %v5458, %v5459
    %v5463 = vadd.f32 %v5430, %v5460
    %v5464 = vadd.f32 %v5431, %v5459
    %v5465 = vmul.f32 %v216, %v5398
    %v5466 = vmul.f32 %v216, %v5399
    %v5469 = vrot.slane %v5465, 2
    %v5470 = vrot.slane %v5466, 2
    %v5471 = vsel %vm208, %v5469, %v5470
    %v5474 = vadd.f32 %v5441, %v5471
    %v5475 = vadd.f32 %v5442, %v5470
    %v5476 = vmul.f32 %v228, %v5398
    %v5477 = vmul.f32 %v228, %v5399
    %v5480 = vrot.slane %v5476, 2
    %v5481 = vrot.slane %v5477, 2
    %v5482 = vsel %vm208, %v5480, %v5481
    %v5485 = vadd.f32 %v5452, %v5482
    %v5486 = vadd.f32 %v5453, %v5481
    %v5487 = vmul.f32 %v240, %v5398
    %v5488 = vmul.f32 %v240, %v5399
    %v5491 = vrot.slane %v5487, 3
    %v5492 = vrot.slane %v5488, 3
    %v5493 = vsel %vm245, %v5491, %v5492
    %v5496 = vadd.f32 %v5463, %v5493
    %v5497 = vadd.f32 %v5464, %v5492
    %v5498 = vmul.f32 %v253, %v5398
    %v5499 = vmul.f32 %v253, %v5399
    %v5502 = vrot.slane %v5498, 3
    %v5503 = vrot.slane %v5499, 3
    %v5504 = vsel %vm245, %v5502, %v5503
    %v5507 = vadd.f32 %v5474, %v5504
    %v5508 = vadd.f32 %v5475, %v5503
    %v5509 = vmul.f32 %v265, %v5398
    %v5510 = vmul.f32 %v265, %v5399
    %v5513 = vrot.slane %v5509, 3
    %v5514 = vrot.slane %v5510, 3
    %v5515 = vsel %vm245, %v5513, %v5514
    %v5518 = vadd.f32 %v5485, %v5515
    %v5519 = vadd.f32 %v5486, %v5514
    %v5520 = vmul.f32 %v277, %v5398
    %v5521 = vmul.f32 %v277, %v5399
    %v5524 = vrot.slane %v5520, 4
    %v5525 = vrot.slane %v5521, 4
    %v5526 = vsel %vm282, %v5524, %v5525
    %v5529 = vadd.f32 %v5496, %v5526
    %v5530 = vadd.f32 %v5497, %v5525
    %v5531 = vmul.f32 %v290, %v5398
    %v5532 = vmul.f32 %v290, %v5399
    %v5535 = vrot.slane %v5531, 4
    %v5536 = vrot.slane %v5532, 4
    %v5537 = vsel %vm282, %v5535, %v5536
    %v5540 = vadd.f32 %v5507, %v5537
    %v5541 = vadd.f32 %v5508, %v5536
    %v5542 = vmul.f32 %v302, %v5398
    %v5543 = vmul.f32 %v302, %v5399
    %v5546 = vrot.slane %v5542, 4
    %v5547 = vrot.slane %v5543, 4
    %v5548 = vsel %vm282, %v5546, %v5547
    %v5551 = vadd.f32 %v5518, %v5548
    %v5552 = vadd.f32 %v5519, %v5547
    %v5553 = vmul.f32 %v314, %v5400
    %v5554 = vmul.f32 %v314, %v5401
    %v5555 = vadd.f32 %v5529, %v5553
    %v5556 = vadd.f32 %v5530, %v5554
    %v5557 = vmul.f32 %v319, %v5400
    %v5558 = vmul.f32 %v319, %v5401
    %v5559 = vadd.f32 %v5540, %v5557
    %v5560 = vadd.f32 %v5541, %v5558
    %v5561 = vmul.f32 %v324, %v5400
    %v5562 = vmul.f32 %v324, %v5401
    %v5563 = vadd.f32 %v5551, %v5561
    %v5564 = vadd.f32 %v5552, %v5562
    %v5565 = vmul.f32 %v329, %v5400
    %v5566 = vmul.f32 %v329, %v5401
    %v5569 = vrot.slane %v5565, 1
    %v5570 = vrot.slane %v5566, 1
    %v5571 = vsel %vm171, %v5569, %v5570
    %v5574 = vadd.f32 %v5555, %v5571
    %v5575 = vadd.f32 %v5556, %v5570
    %v5576 = vmul.f32 %v341, %v5400
    %v5577 = vmul.f32 %v341, %v5401
    %v5580 = vrot.slane %v5576, 1
    %v5581 = vrot.slane %v5577, 1
    %v5582 = vsel %vm171, %v5580, %v5581
    %v5585 = vadd.f32 %v5559, %v5582
    %v5586 = vadd.f32 %v5560, %v5581
    %v5587 = vmul.f32 %v353, %v5400
    %v5588 = vmul.f32 %v353, %v5401
    %v5591 = vrot.slane %v5587, 1
    %v5592 = vrot.slane %v5588, 1
    %v5593 = vsel %vm171, %v5591, %v5592
    %v5596 = vadd.f32 %v5563, %v5593
    %v5597 = vadd.f32 %v5564, %v5592
    %v5598 = vmul.f32 %v365, %v5400
    %v5599 = vmul.f32 %v365, %v5401
    %v5602 = vrot.slane %v5598, 2
    %v5603 = vrot.slane %v5599, 2
    %v5604 = vsel %vm208, %v5602, %v5603
    %v5607 = vadd.f32 %v5574, %v5604
    %v5608 = vadd.f32 %v5575, %v5603
    %v5609 = vmul.f32 %v377, %v5400
    %v5610 = vmul.f32 %v377, %v5401
    %v5613 = vrot.slane %v5609, 2
    %v5614 = vrot.slane %v5610, 2
    %v5615 = vsel %vm208, %v5613, %v5614
    %v5618 = vadd.f32 %v5585, %v5615
    %v5619 = vadd.f32 %v5586, %v5614
    %v5620 = vmul.f32 %v389, %v5400
    %v5621 = vmul.f32 %v389, %v5401
    %v5624 = vrot.slane %v5620, 2
    %v5625 = vrot.slane %v5621, 2
    %v5626 = vsel %vm208, %v5624, %v5625
    %v5629 = vadd.f32 %v5596, %v5626
    %v5630 = vadd.f32 %v5597, %v5625
    %v5631 = vmul.f32 %v401, %v5400
    %v5632 = vmul.f32 %v401, %v5401
    %v5635 = vrot.slane %v5631, 3
    %v5636 = vrot.slane %v5632, 3
    %v5637 = vsel %vm245, %v5635, %v5636
    %v5640 = vadd.f32 %v5607, %v5637
    %v5641 = vadd.f32 %v5608, %v5636
    %v5642 = vmul.f32 %v413, %v5400
    %v5643 = vmul.f32 %v413, %v5401
    %v5646 = vrot.slane %v5642, 3
    %v5647 = vrot.slane %v5643, 3
    %v5648 = vsel %vm245, %v5646, %v5647
    %v5651 = vadd.f32 %v5618, %v5648
    %v5652 = vadd.f32 %v5619, %v5647
    %v5653 = vmul.f32 %v425, %v5400
    %v5654 = vmul.f32 %v425, %v5401
    %v5657 = vrot.slane %v5653, 3
    %v5658 = vrot.slane %v5654, 3
    %v5659 = vsel %vm245, %v5657, %v5658
    %v5662 = vadd.f32 %v5629, %v5659
    %v5663 = vadd.f32 %v5630, %v5658
    %v5664 = vmul.f32 %v437, %v5400
    %v5665 = vmul.f32 %v437, %v5401
    %v5668 = vrot.slane %v5664, 4
    %v5669 = vrot.slane %v5665, 4
    %v5670 = vsel %vm282, %v5668, %v5669
    %v5673 = vadd.f32 %v5640, %v5670
    %v5674 = vadd.f32 %v5641, %v5669
    %v5675 = vmul.f32 %v449, %v5400
    %v5676 = vmul.f32 %v449, %v5401
    %v5679 = vrot.slane %v5675, 4
    %v5680 = vrot.slane %v5676, 4
    %v5681 = vsel %vm282, %v5679, %v5680
    %v5684 = vadd.f32 %v5651, %v5681
    %v5685 = vadd.f32 %v5652, %v5680
    %v5686 = vmul.f32 %v461, %v5400
    %v5687 = vmul.f32 %v461, %v5401
    %v5690 = vrot.slane %v5686, 4
    %v5691 = vrot.slane %v5687, 4
    %v5692 = vsel %vm282, %v5690, %v5691
    %v5695 = vadd.f32 %v5662, %v5692
    %v5696 = vadd.f32 %v5663, %v5691
    %v5697 = vmul.f32 %v473, %v5402
    %v5698 = vmul.f32 %v473, %v5403
    %v5699 = vadd.f32 %v5673, %v5697
    %v5700 = vadd.f32 %v5674, %v5698
    %v5701 = vmul.f32 %v478, %v5402
    %v5702 = vmul.f32 %v478, %v5403
    %v5703 = vadd.f32 %v5684, %v5701
    %v5704 = vadd.f32 %v5685, %v5702
    %v5705 = vmul.f32 %v483, %v5402
    %v5706 = vmul.f32 %v483, %v5403
    %v5707 = vadd.f32 %v5695, %v5705
    %v5708 = vadd.f32 %v5696, %v5706
    %v5709 = vmul.f32 %v488, %v5402
    %v5710 = vmul.f32 %v488, %v5403
    %v5713 = vrot.slane %v5709, 1
    %v5714 = vrot.slane %v5710, 1
    %v5715 = vsel %vm171, %v5713, %v5714
    %v5718 = vadd.f32 %v5699, %v5715
    %v5719 = vadd.f32 %v5700, %v5714
    %v5720 = vmul.f32 %v500, %v5402
    %v5721 = vmul.f32 %v500, %v5403
    %v5724 = vrot.slane %v5720, 1
    %v5725 = vrot.slane %v5721, 1
    %v5726 = vsel %vm171, %v5724, %v5725
    %v5729 = vadd.f32 %v5703, %v5726
    %v5730 = vadd.f32 %v5704, %v5725
    %v5731 = vmul.f32 %v512, %v5402
    %v5732 = vmul.f32 %v512, %v5403
    %v5735 = vrot.slane %v5731, 1
    %v5736 = vrot.slane %v5732, 1
    %v5737 = vsel %vm171, %v5735, %v5736
    %v5740 = vadd.f32 %v5707, %v5737
    %v5741 = vadd.f32 %v5708, %v5736
    %v5742 = vmul.f32 %v524, %v5402
    %v5743 = vmul.f32 %v524, %v5403
    %v5746 = vrot.slane %v5742, 2
    %v5747 = vrot.slane %v5743, 2
    %v5748 = vsel %vm208, %v5746, %v5747
    %v5751 = vadd.f32 %v5718, %v5748
    %v5752 = vadd.f32 %v5719, %v5747
    %v5753 = vmul.f32 %v536, %v5402
    %v5754 = vmul.f32 %v536, %v5403
    %v5757 = vrot.slane %v5753, 2
    %v5758 = vrot.slane %v5754, 2
    %v5759 = vsel %vm208, %v5757, %v5758
    %v5762 = vadd.f32 %v5729, %v5759
    %v5763 = vadd.f32 %v5730, %v5758
    %v5764 = vmul.f32 %v548, %v5402
    %v5765 = vmul.f32 %v548, %v5403
    %v5768 = vrot.slane %v5764, 2
    %v5769 = vrot.slane %v5765, 2
    %v5770 = vsel %vm208, %v5768, %v5769
    %v5773 = vadd.f32 %v5740, %v5770
    %v5774 = vadd.f32 %v5741, %v5769
    %v5775 = vmul.f32 %v560, %v5402
    %v5776 = vmul.f32 %v560, %v5403
    %v5779 = vrot.slane %v5775, 3
    %v5780 = vrot.slane %v5776, 3
    %v5781 = vsel %vm245, %v5779, %v5780
    %v5784 = vadd.f32 %v5751, %v5781
    %v5785 = vadd.f32 %v5752, %v5780
    %v5786 = vmul.f32 %v572, %v5402
    %v5787 = vmul.f32 %v572, %v5403
    %v5790 = vrot.slane %v5786, 3
    %v5791 = vrot.slane %v5787, 3
    %v5792 = vsel %vm245, %v5790, %v5791
    %v5795 = vadd.f32 %v5762, %v5792
    %v5796 = vadd.f32 %v5763, %v5791
    %v5797 = vmul.f32 %v584, %v5402
    %v5798 = vmul.f32 %v584, %v5403
    %v5801 = vrot.slane %v5797, 3
    %v5802 = vrot.slane %v5798, 3
    %v5803 = vsel %vm245, %v5801, %v5802
    %v5806 = vadd.f32 %v5773, %v5803
    %v5807 = vadd.f32 %v5774, %v5802
    %v5808 = vmul.f32 %v596, %v5402
    %v5809 = vmul.f32 %v596, %v5403
    %v5812 = vrot.slane %v5808, 4
    %v5813 = vrot.slane %v5809, 4
    %v5814 = vsel %vm282, %v5812, %v5813
    %v5817 = vadd.f32 %v5784, %v5814
    %v5818 = vadd.f32 %v5785, %v5813
    %v5819 = vmul.f32 %v608, %v5402
    %v5820 = vmul.f32 %v608, %v5403
    %v5823 = vrot.slane %v5819, 4
    %v5824 = vrot.slane %v5820, 4
    %v5825 = vsel %vm282, %v5823, %v5824
    %v5828 = vadd.f32 %v5795, %v5825
    %v5829 = vadd.f32 %v5796, %v5824
    %v5830 = vmul.f32 %v620, %v5402
    %v5831 = vmul.f32 %v620, %v5403
    %v5834 = vrot.slane %v5830, 4
    %v5835 = vrot.slane %v5831, 4
    %v5836 = vsel %vm282, %v5834, %v5835
    %v5839 = vadd.f32 %v5806, %v5836
    %v5840 = vadd.f32 %v5807, %v5835
    %v5841 = vmul.f32 %v632, %v5404
    %v5842 = vmul.f32 %v632, %v5405
    %v5843 = vadd.f32 %v5817, %v5841
    %v5844 = vadd.f32 %v5818, %v5842
    %v5845 = vmul.f32 %v637, %v5404
    %v5846 = vmul.f32 %v637, %v5405
    %v5847 = vadd.f32 %v5828, %v5845
    %v5848 = vadd.f32 %v5829, %v5846
    %v5849 = vmul.f32 %v642, %v5404
    %v5850 = vmul.f32 %v642, %v5405
    %v5851 = vadd.f32 %v5839, %v5849
    %v5852 = vadd.f32 %v5840, %v5850
    %v5853 = vmul.f32 %v647, %v5404
    %v5854 = vmul.f32 %v647, %v5405
    %v5857 = vrot.slane %v5853, 1
    %v5858 = vrot.slane %v5854, 1
    %v5859 = vsel %vm171, %v5857, %v5858
    %v5862 = vadd.f32 %v5843, %v5859
    %v5863 = vadd.f32 %v5844, %v5858
    %v5864 = vmul.f32 %v659, %v5404
    %v5865 = vmul.f32 %v659, %v5405
    %v5868 = vrot.slane %v5864, 1
    %v5869 = vrot.slane %v5865, 1
    %v5870 = vsel %vm171, %v5868, %v5869
    %v5873 = vadd.f32 %v5847, %v5870
    %v5874 = vadd.f32 %v5848, %v5869
    %v5875 = vmul.f32 %v671, %v5404
    %v5876 = vmul.f32 %v671, %v5405
    %v5879 = vrot.slane %v5875, 1
    %v5880 = vrot.slane %v5876, 1
    %v5881 = vsel %vm171, %v5879, %v5880
    %v5884 = vadd.f32 %v5851, %v5881
    %v5885 = vadd.f32 %v5852, %v5880
    %v5886 = vmul.f32 %v683, %v5404
    %v5887 = vmul.f32 %v683, %v5405
    %v5890 = vrot.slane %v5886, 2
    %v5891 = vrot.slane %v5887, 2
    %v5892 = vsel %vm208, %v5890, %v5891
    %v5895 = vadd.f32 %v5862, %v5892
    %v5896 = vadd.f32 %v5863, %v5891
    %v5897 = vmul.f32 %v695, %v5404
    %v5898 = vmul.f32 %v695, %v5405
    %v5901 = vrot.slane %v5897, 2
    %v5902 = vrot.slane %v5898, 2
    %v5903 = vsel %vm208, %v5901, %v5902
    %v5906 = vadd.f32 %v5873, %v5903
    %v5907 = vadd.f32 %v5874, %v5902
    %v5908 = vmul.f32 %v707, %v5404
    %v5909 = vmul.f32 %v707, %v5405
    %v5912 = vrot.slane %v5908, 2
    %v5913 = vrot.slane %v5909, 2
    %v5914 = vsel %vm208, %v5912, %v5913
    %v5917 = vadd.f32 %v5884, %v5914
    %v5918 = vadd.f32 %v5885, %v5913
    %v5919 = vmul.f32 %v719, %v5404
    %v5920 = vmul.f32 %v719, %v5405
    %v5923 = vrot.slane %v5919, 3
    %v5924 = vrot.slane %v5920, 3
    %v5925 = vsel %vm245, %v5923, %v5924
    %v5928 = vadd.f32 %v5895, %v5925
    %v5929 = vadd.f32 %v5896, %v5924
    %v5930 = vmul.f32 %v731, %v5404
    %v5931 = vmul.f32 %v731, %v5405
    %v5934 = vrot.slane %v5930, 3
    %v5935 = vrot.slane %v5931, 3
    %v5936 = vsel %vm245, %v5934, %v5935
    %v5939 = vadd.f32 %v5906, %v5936
    %v5940 = vadd.f32 %v5907, %v5935
    %v5941 = vmul.f32 %v743, %v5404
    %v5942 = vmul.f32 %v743, %v5405
    %v5945 = vrot.slane %v5941, 3
    %v5946 = vrot.slane %v5942, 3
    %v5947 = vsel %vm245, %v5945, %v5946
    %v5950 = vadd.f32 %v5917, %v5947
    %v5951 = vadd.f32 %v5918, %v5946
    %v5952 = vmul.f32 %v755, %v5404
    %v5953 = vmul.f32 %v755, %v5405
    %v5956 = vrot.slane %v5952, 4
    %v5957 = vrot.slane %v5953, 4
    %v5958 = vsel %vm282, %v5956, %v5957
    %v5961 = vadd.f32 %v5928, %v5958
    %v5962 = vadd.f32 %v5929, %v5957
    %v5963 = vmul.f32 %v767, %v5404
    %v5964 = vmul.f32 %v767, %v5405
    %v5967 = vrot.slane %v5963, 4
    %v5968 = vrot.slane %v5964, 4
    %v5969 = vsel %vm282, %v5967, %v5968
    %v5972 = vadd.f32 %v5939, %v5969
    %v5973 = vadd.f32 %v5940, %v5968
    %v5974 = vmul.f32 %v779, %v5404
    %v5975 = vmul.f32 %v779, %v5405
    %v5978 = vrot.slane %v5974, 4
    %v5979 = vrot.slane %v5975, 4
    %v5980 = vsel %vm282, %v5978, %v5979
    %v5983 = vadd.f32 %v5950, %v5980
    %v5984 = vadd.f32 %v5951, %v5979
    %v5985 = vmul.f32 %v791, %v5407
    %v5986 = vmul.f32 %v791, %v5408
    %v5987 = vadd.f32 %v5961, %v5985
    %v5988 = vadd.f32 %v5962, %v5986
    %v5989 = vmul.f32 %v796, %v5407
    %v5990 = vmul.f32 %v796, %v5408
    %v5991 = vadd.f32 %v5972, %v5989
    %v5992 = vadd.f32 %v5973, %v5990
    %v5993 = vmul.f32 %v801, %v5407
    %v5994 = vmul.f32 %v801, %v5408
    %v5995 = vadd.f32 %v5983, %v5993
    %v5996 = vadd.f32 %v5984, %v5994
    %v5997 = vmul.f32 %v806, %v5407
    %v5998 = vmul.f32 %v806, %v5408
    %v6001 = vrot.slane %v5997, 1
    %v6002 = vrot.slane %v5998, 1
    %v6003 = vsel %vm171, %v6001, %v6002
    %v6006 = vadd.f32 %v5987, %v6003
    %v6007 = vadd.f32 %v5988, %v6002
    %v6008 = vmul.f32 %v818, %v5407
    %v6009 = vmul.f32 %v818, %v5408
    %v6012 = vrot.slane %v6008, 1
    %v6013 = vrot.slane %v6009, 1
    %v6014 = vsel %vm171, %v6012, %v6013
    %v6017 = vadd.f32 %v5991, %v6014
    %v6018 = vadd.f32 %v5992, %v6013
    %v6019 = vmul.f32 %v830, %v5407
    %v6020 = vmul.f32 %v830, %v5408
    %v6023 = vrot.slane %v6019, 1
    %v6024 = vrot.slane %v6020, 1
    %v6025 = vsel %vm171, %v6023, %v6024
    %v6028 = vadd.f32 %v5995, %v6025
    %v6029 = vadd.f32 %v5996, %v6024
    %v6030 = vmul.f32 %v842, %v5407
    %v6031 = vmul.f32 %v842, %v5408
    %v6034 = vrot.slane %v6030, 2
    %v6035 = vrot.slane %v6031, 2
    %v6036 = vsel %vm208, %v6034, %v6035
    %v6039 = vadd.f32 %v6006, %v6036
    %v6040 = vadd.f32 %v6007, %v6035
    %v6041 = vmul.f32 %v854, %v5407
    %v6042 = vmul.f32 %v854, %v5408
    %v6045 = vrot.slane %v6041, 2
    %v6046 = vrot.slane %v6042, 2
    %v6047 = vsel %vm208, %v6045, %v6046
    %v6050 = vadd.f32 %v6017, %v6047
    %v6051 = vadd.f32 %v6018, %v6046
    %v6052 = vmul.f32 %v866, %v5407
    %v6053 = vmul.f32 %v866, %v5408
    %v6056 = vrot.slane %v6052, 2
    %v6057 = vrot.slane %v6053, 2
    %v6058 = vsel %vm208, %v6056, %v6057
    %v6061 = vadd.f32 %v6028, %v6058
    %v6062 = vadd.f32 %v6029, %v6057
    %v6063 = vmul.f32 %v878, %v5407
    %v6064 = vmul.f32 %v878, %v5408
    %v6067 = vrot.slane %v6063, 3
    %v6068 = vrot.slane %v6064, 3
    %v6069 = vsel %vm245, %v6067, %v6068
    %v6072 = vadd.f32 %v6039, %v6069
    %v6073 = vadd.f32 %v6040, %v6068
    %v6074 = vmul.f32 %v890, %v5407
    %v6075 = vmul.f32 %v890, %v5408
    %v6078 = vrot.slane %v6074, 3
    %v6079 = vrot.slane %v6075, 3
    %v6080 = vsel %vm245, %v6078, %v6079
    %v6083 = vadd.f32 %v6050, %v6080
    %v6084 = vadd.f32 %v6051, %v6079
    %v6085 = vmul.f32 %v902, %v5407
    %v6086 = vmul.f32 %v902, %v5408
    %v6089 = vrot.slane %v6085, 3
    %v6090 = vrot.slane %v6086, 3
    %v6091 = vsel %vm245, %v6089, %v6090
    %v6094 = vadd.f32 %v6061, %v6091
    %v6095 = vadd.f32 %v6062, %v6090
    %v6096 = vmul.f32 %v914, %v5407
    %v6097 = vmul.f32 %v914, %v5408
    %v6100 = vrot.slane %v6096, 4
    %v6101 = vrot.slane %v6097, 4
    %v6102 = vsel %vm282, %v6100, %v6101
    %v6105 = vadd.f32 %v6072, %v6102
    %v6106 = vadd.f32 %v6073, %v6101
    %v6107 = vmul.f32 %v926, %v5407
    %v6108 = vmul.f32 %v926, %v5408
    %v6111 = vrot.slane %v6107, 4
    %v6112 = vrot.slane %v6108, 4
    %v6113 = vsel %vm282, %v6111, %v6112
    %v6116 = vadd.f32 %v6083, %v6113
    %v6117 = vadd.f32 %v6084, %v6112
    %v6118 = vmul.f32 %v938, %v5407
    %v6119 = vmul.f32 %v938, %v5408
    %v6122 = vrot.slane %v6118, 4
    %v6123 = vrot.slane %v6119, 4
    %v6124 = vsel %vm282, %v6122, %v6123
    %v6127 = vadd.f32 %v6094, %v6124
    %v6128 = vadd.f32 %v6095, %v6123
    %s6129 = scalar_lea.vmem [#allocation9], 112
    %6130 = vst [vmem:[%s6129] sm:$0xff] %v6105
    %6131 = vst [vmem:[%s6129 + $0x8] sm:$0xf] %v6106
    %s6132 = scalar_lea.vmem [#allocation9], 304
    %6133 = vst [vmem:[%s6132] sm:$0xff] %v6116
    %6134 = vst [vmem:[%s6132 + $0x8] sm:$0xf] %v6117
    %s6135 = scalar_lea.vmem [#allocation9], 496
    %6136 = vst [vmem:[%s6135] sm:$0xff] %v6127
    %6137 = vst [vmem:[%s6135 + $0x8] sm:$0xf] %v6128
    %v6138 = vld [vmem:[%s3186] sm:$0xff]
    %v6139 = vld [vmem:[%s3186 + $0x8] sm:$0xff]
    %v6140 = vld [vmem:[%s3926] sm:$0xff]
    %v6141 = vld [vmem:[%s3926 + $0x8] sm:$0xff]
    %v6142 = vld [vmem:[%s4666] sm:$0xff]
    %v6143 = vld [vmem:[%s4666 + $0x8] sm:$0xff]
    %v6144 = vld [vmem:[%s5406] sm:$0xff]
    %v6145 = vld [vmem:[%s5406 + $0x8] sm:$0xff]
    %s6146 = scalar_lea.vmem [#allocation2], 192
    %v6147 = vld [vmem:[%s6146] sm:$0xff]
    %v6148 = vld [vmem:[%s6146 + $0x8] sm:$0xff]
    %v6149 = vmul.f32 %v151, %v6138
    %v6150 = vmul.f32 %v151, %v6139
    %v6151 = vadd.f32 %v148, %v6149
    %v6152 = vadd.f32 %v148, %v6150
    %v6153 = vmul.f32 %v156, %v6138
    %v6154 = vmul.f32 %v156, %v6139
    %v6155 = vadd.f32 %v149, %v6153
    %v6156 = vadd.f32 %v149, %v6154
    %v6157 = vmul.f32 %v161, %v6138
    %v6158 = vmul.f32 %v161, %v6139
    %v6159 = vadd.f32 %v150, %v6157
    %v6160 = vadd.f32 %v150, %v6158
    %v6161 = vmul.f32 %v166, %v6138
    %v6162 = vmul.f32 %v166, %v6139
    %v6165 = vrot.slane %v6161, 1
    %v6166 = vrot.slane %v6162, 1
    %v6167 = vsel %vm171, %v6165, %v6166
    %v6170 = vadd.f32 %v6151, %v6167
    %v6171 = vadd.f32 %v6152, %v6166
    %v6172 = vmul.f32 %v179, %v6138
    %v6173 = vmul.f32 %v179, %v6139
    %v6176 = vrot.slane %v6172, 1
    %v6177 = vrot.slane %v6173, 1
    %v6178 = vsel %vm171, %v6176, %v6177
    %v6181 = vadd.f32 %v6155, %v6178
    %v6182 = vadd.f32 %v6156, %v6177
    %v6183 = vmul.f32 %v191, %v6138
    %v6184 = vmul.f32 %v191, %v6139
    %v6187 = vrot.slane %v6183, 1
    %v6188 = vrot.slane %v6184, 1
    %v6189 = vsel %vm171, %v6187, %v6188
    %v6192 = vadd.f32 %v6159, %v6189
    %v6193 = vadd.f32 %v6160, %v6188
    %v6194 = vmul.f32 %v203, %v6138
    %v6195 = vmul.f32 %v203, %v6139
    %v6198 = vrot.slane %v6194, 2
    %v6199 = vrot.slane %v6195, 2
    %v6200 = vsel %vm208, %v6198, %v6199
    %v6203 = vadd.f32 %v6170, %v6200
    %v6204 = vadd.f32 %v6171, %v6199
    %v6205 = vmul.f32 %v216, %v6138
    %v6206 = vmul.f32 %v216, %v6139
    %v6209 = vrot.slane %v6205, 2
    %v6210 = vrot.slane %v6206, 2
    %v6211 = vsel %vm208, %v6209, %v6210
    %v6214 = vadd.f32 %v6181, %v6211
    %v6215 = vadd.f32 %v6182, %v6210
    %v6216 = vmul.f32 %v228, %v6138
    %v6217 = vmul.f32 %v228, %v6139
    %v6220 = vrot.slane %v6216, 2
    %v6221 = vrot.slane %v6217, 2
    %v6222 = vsel %vm208, %v6220, %v6221
    %v6225 = vadd.f32 %v6192, %v6222
    %v6226 = vadd.f32 %v6193, %v6221
    %v6227 = vmul.f32 %v240, %v6138
    %v6228 = vmul.f32 %v240, %v6139
    %v6231 = vrot.slane %v6227, 3
    %v6232 = vrot.slane %v6228, 3
    %v6233 = vsel %vm245, %v6231, %v6232
    %v6236 = vadd.f32 %v6203, %v6233
    %v6237 = vadd.f32 %v6204, %v6232
    %v6238 = vmul.f32 %v253, %v6138
    %v6239 = vmul.f32 %v253, %v6139
    %v6242 = vrot.slane %v6238, 3
    %v6243 = vrot.slane %v6239, 3
    %v6244 = vsel %vm245, %v6242, %v6243
    %v6247 = vadd.f32 %v6214, %v6244
    %v6248 = vadd.f32 %v6215, %v6243
    %v6249 = vmul.f32 %v265, %v6138
    %v6250 = vmul.f32 %v265, %v6139
    %v6253 = vrot.slane %v6249, 3
    %v6254 = vrot.slane %v6250, 3
    %v6255 = vsel %vm245, %v6253, %v6254
    %v6258 = vadd.f32 %v6225, %v6255
    %v6259 = vadd.f32 %v6226, %v6254
    %v6260 = vmul.f32 %v277, %v6138
    %v6261 = vmul.f32 %v277, %v6139
    %v6264 = vrot.slane %v6260, 4
    %v6265 = vrot.slane %v6261, 4
    %v6266 = vsel %vm282, %v6264, %v6265
    %v6269 = vadd.f32 %v6236, %v6266
    %v6270 = vadd.f32 %v6237, %v6265
    %v6271 = vmul.f32 %v290, %v6138
    %v6272 = vmul.f32 %v290, %v6139
    %v6275 = vrot.slane %v6271, 4
    %v6276 = vrot.slane %v6272, 4
    %v6277 = vsel %vm282, %v6275, %v6276
    %v6280 = vadd.f32 %v6247, %v6277
    %v6281 = vadd.f32 %v6248, %v6276
    %v6282 = vmul.f32 %v302, %v6138
    %v6283 = vmul.f32 %v302, %v6139
    %v6286 = vrot.slane %v6282, 4
    %v6287 = vrot.slane %v6283, 4
    %v6288 = vsel %vm282, %v6286, %v6287
    %v6291 = vadd.f32 %v6258, %v6288
    %v6292 = vadd.f32 %v6259, %v6287
    %v6293 = vmul.f32 %v314, %v6140
    %v6294 = vmul.f32 %v314, %v6141
    %v6295 = vadd.f32 %v6269, %v6293
    %v6296 = vadd.f32 %v6270, %v6294
    %v6297 = vmul.f32 %v319, %v6140
    %v6298 = vmul.f32 %v319, %v6141
    %v6299 = vadd.f32 %v6280, %v6297
    %v6300 = vadd.f32 %v6281, %v6298
    %v6301 = vmul.f32 %v324, %v6140
    %v6302 = vmul.f32 %v324, %v6141
    %v6303 = vadd.f32 %v6291, %v6301
    %v6304 = vadd.f32 %v6292, %v6302
    %v6305 = vmul.f32 %v329, %v6140
    %v6306 = vmul.f32 %v329, %v6141
    %v6309 = vrot.slane %v6305, 1
    %v6310 = vrot.slane %v6306, 1
    %v6311 = vsel %vm171, %v6309, %v6310
    %v6314 = vadd.f32 %v6295, %v6311
    %v6315 = vadd.f32 %v6296, %v6310
    %v6316 = vmul.f32 %v341, %v6140
    %v6317 = vmul.f32 %v341, %v6141
    %v6320 = vrot.slane %v6316, 1
    %v6321 = vrot.slane %v6317, 1
    %v6322 = vsel %vm171, %v6320, %v6321
    %v6325 = vadd.f32 %v6299, %v6322
    %v6326 = vadd.f32 %v6300, %v6321
    %v6327 = vmul.f32 %v353, %v6140
    %v6328 = vmul.f32 %v353, %v6141
    %v6331 = vrot.slane %v6327, 1
    %v6332 = vrot.slane %v6328, 1
    %v6333 = vsel %vm171, %v6331, %v6332
    %v6336 = vadd.f32 %v6303, %v6333
    %v6337 = vadd.f32 %v6304, %v6332
    %v6338 = vmul.f32 %v365, %v6140
    %v6339 = vmul.f32 %v365, %v6141
    %v6342 = vrot.slane %v6338, 2
    %v6343 = vrot.slane %v6339, 2
    %v6344 = vsel %vm208, %v6342, %v6343
    %v6347 = vadd.f32 %v6314, %v6344
    %v6348 = vadd.f32 %v6315, %v6343
    %v6349 = vmul.f32 %v377, %v6140
    %v6350 = vmul.f32 %v377, %v6141
    %v6353 = vrot.slane %v6349, 2
    %v6354 = vrot.slane %v6350, 2
    %v6355 = vsel %vm208, %v6353, %v6354
    %v6358 = vadd.f32 %v6325, %v6355
    %v6359 = vadd.f32 %v6326, %v6354
    %v6360 = vmul.f32 %v389, %v6140
    %v6361 = vmul.f32 %v389, %v6141
    %v6364 = vrot.slane %v6360, 2
    %v6365 = vrot.slane %v6361, 2
    %v6366 = vsel %vm208, %v6364, %v6365
    %v6369 = vadd.f32 %v6336, %v6366
    %v6370 = vadd.f32 %v6337, %v6365
    %v6371 = vmul.f32 %v401, %v6140
    %v6372 = vmul.f32 %v401, %v6141
    %v6375 = vrot.slane %v6371, 3
    %v6376 = vrot.slane %v6372, 3
    %v6377 = vsel %vm245, %v6375, %v6376
    %v6380 = vadd.f32 %v6347, %v6377
    %v6381 = vadd.f32 %v6348, %v6376
    %v6382 = vmul.f32 %v413, %v6140
    %v6383 = vmul.f32 %v413, %v6141
    %v6386 = vrot.slane %v6382, 3
    %v6387 = vrot.slane %v6383, 3
    %v6388 = vsel %vm245, %v6386, %v6387
    %v6391 = vadd.f32 %v6358, %v6388
    %v6392 = vadd.f32 %v6359, %v6387
    %v6393 = vmul.f32 %v425, %v6140
    %v6394 = vmul.f32 %v425, %v6141
    %v6397 = vrot.slane %v6393, 3
    %v6398 = vrot.slane %v6394, 3
    %v6399 = vsel %vm245, %v6397, %v6398
    %v6402 = vadd.f32 %v6369, %v6399
    %v6403 = vadd.f32 %v6370, %v6398
    %v6404 = vmul.f32 %v437, %v6140
    %v6405 = vmul.f32 %v437, %v6141
    %v6408 = vrot.slane %v6404, 4
    %v6409 = vrot.slane %v6405, 4
    %v6410 = vsel %vm282, %v6408, %v6409
    %v6413 = vadd.f32 %v6380, %v6410
    %v6414 = vadd.f32 %v6381, %v6409
    %v6415 = vmul.f32 %v449, %v6140
    %v6416 = vmul.f32 %v449, %v6141
    %v6419 = vrot.slane %v6415, 4
    %v6420 = vrot.slane %v6416, 4
    %v6421 = vsel %vm282, %v6419, %v6420
    %v6424 = vadd.f32 %v6391, %v6421
    %v6425 = vadd.f32 %v6392, %v6420
    %v6426 = vmul.f32 %v461, %v6140
    %v6427 = vmul.f32 %v461, %v6141
    %v6430 = vrot.slane %v6426, 4
    %v6431 = vrot.slane %v6427, 4
    %v6432 = vsel %vm282, %v6430, %v6431
    %v6435 = vadd.f32 %v6402, %v6432
    %v6436 = vadd.f32 %v6403, %v6431
    %v6437 = vmul.f32 %v473, %v6142
    %v6438 = vmul.f32 %v473, %v6143
    %v6439 = vadd.f32 %v6413, %v6437
    %v6440 = vadd.f32 %v6414, %v6438
    %v6441 = vmul.f32 %v478, %v6142
    %v6442 = vmul.f32 %v478, %v6143
    %v6443 = vadd.f32 %v6424, %v6441
    %v6444 = vadd.f32 %v6425, %v6442
    %v6445 = vmul.f32 %v483, %v6142
    %v6446 = vmul.f32 %v483, %v6143
    %v6447 = vadd.f32 %v6435, %v6445
    %v6448 = vadd.f32 %v6436, %v6446
    %v6449 = vmul.f32 %v488, %v6142
    %v6450 = vmul.f32 %v488, %v6143
    %v6453 = vrot.slane %v6449, 1
    %v6454 = vrot.slane %v6450, 1
    %v6455 = vsel %vm171, %v6453, %v6454
    %v6458 = vadd.f32 %v6439, %v6455
    %v6459 = vadd.f32 %v6440, %v6454
    %v6460 = vmul.f32 %v500, %v6142
    %v6461 = vmul.f32 %v500, %v6143
    %v6464 = vrot.slane %v6460, 1
    %v6465 = vrot.slane %v6461, 1
    %v6466 = vsel %vm171, %v6464, %v6465
    %v6469 = vadd.f32 %v6443, %v6466
    %v6470 = vadd.f32 %v6444, %v6465
    %v6471 = vmul.f32 %v512, %v6142
    %v6472 = vmul.f32 %v512, %v6143
    %v6475 = vrot.slane %v6471, 1
    %v6476 = vrot.slane %v6472, 1
    %v6477 = vsel %vm171, %v6475, %v6476
    %v6480 = vadd.f32 %v6447, %v6477
    %v6481 = vadd.f32 %v6448, %v6476
    %v6482 = vmul.f32 %v524, %v6142
    %v6483 = vmul.f32 %v524, %v6143
    %v6486 = vrot.slane %v6482, 2
    %v6487 = vrot.slane %v6483, 2
    %v6488 = vsel %vm208, %v6486, %v6487
    %v6491 = vadd.f32 %v6458, %v6488
    %v6492 = vadd.f32 %v6459, %v6487
    %v6493 = vmul.f32 %v536, %v6142
    %v6494 = vmul.f32 %v536, %v6143
    %v6497 = vrot.slane %v6493, 2
    %v6498 = vrot.slane %v6494, 2
    %v6499 = vsel %vm208, %v6497, %v6498
    %v6502 = vadd.f32 %v6469, %v6499
    %v6503 = vadd.f32 %v6470, %v6498
    %v6504 = vmul.f32 %v548, %v6142
    %v6505 = vmul.f32 %v548, %v6143
    %v6508 = vrot.slane %v6504, 2
    %v6509 = vrot.slane %v6505, 2
    %v6510 = vsel %vm208, %v6508, %v6509
    %v6513 = vadd.f32 %v6480, %v6510
    %v6514 = vadd.f32 %v6481, %v6509
    %v6515 = vmul.f32 %v560, %v6142
    %v6516 = vmul.f32 %v560, %v6143
    %v6519 = vrot.slane %v6515, 3
    %v6520 = vrot.slane %v6516, 3
    %v6521 = vsel %vm245, %v6519, %v6520
    %v6524 = vadd.f32 %v6491, %v6521
    %v6525 = vadd.f32 %v6492, %v6520
    %v6526 = vmul.f32 %v572, %v6142
    %v6527 = vmul.f32 %v572, %v6143
    %v6530 = vrot.slane %v6526, 3
    %v6531 = vrot.slane %v6527, 3
    %v6532 = vsel %vm245, %v6530, %v6531
    %v6535 = vadd.f32 %v6502, %v6532
    %v6536 = vadd.f32 %v6503, %v6531
    %v6537 = vmul.f32 %v584, %v6142
    %v6538 = vmul.f32 %v584, %v6143
    %v6541 = vrot.slane %v6537, 3
    %v6542 = vrot.slane %v6538, 3
    %v6543 = vsel %vm245, %v6541, %v6542
    %v6546 = vadd.f32 %v6513, %v6543
    %v6547 = vadd.f32 %v6514, %v6542
    %v6548 = vmul.f32 %v596, %v6142
    %v6549 = vmul.f32 %v596, %v6143
    %v6552 = vrot.slane %v6548, 4
    %v6553 = vrot.slane %v6549, 4
    %v6554 = vsel %vm282, %v6552, %v6553
    %v6557 = vadd.f32 %v6524, %v6554
    %v6558 = vadd.f32 %v6525, %v6553
    %v6559 = vmul.f32 %v608, %v6142
    %v6560 = vmul.f32 %v608, %v6143
    %v6563 = vrot.slane %v6559, 4
    %v6564 = vrot.slane %v6560, 4
    %v6565 = vsel %vm282, %v6563, %v6564
    %v6568 = vadd.f32 %v6535, %v6565
    %v6569 = vadd.f32 %v6536, %v6564
    %v6570 = vmul.f32 %v620, %v6142
    %v6571 = vmul.f32 %v620, %v6143
    %v6574 = vrot.slane %v6570, 4
    %v6575 = vrot.slane %v6571, 4
    %v6576 = vsel %vm282, %v6574, %v6575
    %v6579 = vadd.f32 %v6546, %v6576
    %v6580 = vadd.f32 %v6547, %v6575
    %v6581 = vmul.f32 %v632, %v6144
    %v6582 = vmul.f32 %v632, %v6145
    %v6583 = vadd.f32 %v6557, %v6581
    %v6584 = vadd.f32 %v6558, %v6582
    %v6585 = vmul.f32 %v637, %v6144
    %v6586 = vmul.f32 %v637, %v6145
    %v6587 = vadd.f32 %v6568, %v6585
    %v6588 = vadd.f32 %v6569, %v6586
    %v6589 = vmul.f32 %v642, %v6144
    %v6590 = vmul.f32 %v642, %v6145
    %v6591 = vadd.f32 %v6579, %v6589
    %v6592 = vadd.f32 %v6580, %v6590
    %v6593 = vmul.f32 %v647, %v6144
    %v6594 = vmul.f32 %v647, %v6145
    %v6597 = vrot.slane %v6593, 1
    %v6598 = vrot.slane %v6594, 1
    %v6599 = vsel %vm171, %v6597, %v6598
    %v6602 = vadd.f32 %v6583, %v6599
    %v6603 = vadd.f32 %v6584, %v6598
    %v6604 = vmul.f32 %v659, %v6144
    %v6605 = vmul.f32 %v659, %v6145
    %v6608 = vrot.slane %v6604, 1
    %v6609 = vrot.slane %v6605, 1
    %v6610 = vsel %vm171, %v6608, %v6609
    %v6613 = vadd.f32 %v6587, %v6610
    %v6614 = vadd.f32 %v6588, %v6609
    %v6615 = vmul.f32 %v671, %v6144
    %v6616 = vmul.f32 %v671, %v6145
    %v6619 = vrot.slane %v6615, 1
    %v6620 = vrot.slane %v6616, 1
    %v6621 = vsel %vm171, %v6619, %v6620
    %v6624 = vadd.f32 %v6591, %v6621
    %v6625 = vadd.f32 %v6592, %v6620
    %v6626 = vmul.f32 %v683, %v6144
    %v6627 = vmul.f32 %v683, %v6145
    %v6630 = vrot.slane %v6626, 2
    %v6631 = vrot.slane %v6627, 2
    %v6632 = vsel %vm208, %v6630, %v6631
    %v6635 = vadd.f32 %v6602, %v6632
    %v6636 = vadd.f32 %v6603, %v6631
    %v6637 = vmul.f32 %v695, %v6144
    %v6638 = vmul.f32 %v695, %v6145
    %v6641 = vrot.slane %v6637, 2
    %v6642 = vrot.slane %v6638, 2
    %v6643 = vsel %vm208, %v6641, %v6642
    %v6646 = vadd.f32 %v6613, %v6643
    %v6647 = vadd.f32 %v6614, %v6642
    %v6648 = vmul.f32 %v707, %v6144
    %v6649 = vmul.f32 %v707, %v6145
    %v6652 = vrot.slane %v6648, 2
    %v6653 = vrot.slane %v6649, 2
    %v6654 = vsel %vm208, %v6652, %v6653
    %v6657 = vadd.f32 %v6624, %v6654
    %v6658 = vadd.f32 %v6625, %v6653
    %v6659 = vmul.f32 %v719, %v6144
    %v6660 = vmul.f32 %v719, %v6145
    %v6663 = vrot.slane %v6659, 3
    %v6664 = vrot.slane %v6660, 3
    %v6665 = vsel %vm245, %v6663, %v6664
    %v6668 = vadd.f32 %v6635, %v6665
    %v6669 = vadd.f32 %v6636, %v6664
    %v6670 = vmul.f32 %v731, %v6144
    %v6671 = vmul.f32 %v731, %v6145
    %v6674 = vrot.slane %v6670, 3
    %v6675 = vrot.slane %v6671, 3
    %v6676 = vsel %vm245, %v6674, %v6675
    %v6679 = vadd.f32 %v6646, %v6676
    %v6680 = vadd.f32 %v6647, %v6675
    %v6681 = vmul.f32 %v743, %v6144
    %v6682 = vmul.f32 %v743, %v6145
    %v6685 = vrot.slane %v6681, 3
    %v6686 = vrot.slane %v6682, 3
    %v6687 = vsel %vm245, %v6685, %v6686
    %v6690 = vadd.f32 %v6657, %v6687
    %v6691 = vadd.f32 %v6658, %v6686
    %v6692 = vmul.f32 %v755, %v6144
    %v6693 = vmul.f32 %v755, %v6145
    %v6696 = vrot.slane %v6692, 4
    %v6697 = vrot.slane %v6693, 4
    %v6698 = vsel %vm282, %v6696, %v6697
    %v6701 = vadd.f32 %v6668, %v6698
    %v6702 = vadd.f32 %v6669, %v6697
    %v6703 = vmul.f32 %v767, %v6144
    %v6704 = vmul.f32 %v767, %v6145
    %v6707 = vrot.slane %v6703, 4
    %v6708 = vrot.slane %v6704, 4
    %v6709 = vsel %vm282, %v6707, %v6708
    %v6712 = vadd.f32 %v6679, %v6709
    %v6713 = vadd.f32 %v6680, %v6708
    %v6714 = vmul.f32 %v779, %v6144
    %v6715 = vmul.f32 %v779, %v6145
    %v6718 = vrot.slane %v6714, 4
    %v6719 = vrot.slane %v6715, 4
    %v6720 = vsel %vm282, %v6718, %v6719
    %v6723 = vadd.f32 %v6690, %v6720
    %v6724 = vadd.f32 %v6691, %v6719
    %v6725 = vmul.f32 %v791, %v6147
    %v6726 = vmul.f32 %v791, %v6148
    %v6727 = vadd.f32 %v6701, %v6725
    %v6728 = vadd.f32 %v6702, %v6726
    %v6729 = vmul.f32 %v796, %v6147
    %v6730 = vmul.f32 %v796, %v6148
    %v6731 = vadd.f32 %v6712, %v6729
    %v6732 = vadd.f32 %v6713, %v6730
    %v6733 = vmul.f32 %v801, %v6147
    %v6734 = vmul.f32 %v801, %v6148
    %v6735 = vadd.f32 %v6723, %v6733
    %v6736 = vadd.f32 %v6724, %v6734
    %v6737 = vmul.f32 %v806, %v6147
    %v6738 = vmul.f32 %v806, %v6148
    %v6741 = vrot.slane %v6737, 1
    %v6742 = vrot.slane %v6738, 1
    %v6743 = vsel %vm171, %v6741, %v6742
    %v6746 = vadd.f32 %v6727, %v6743
    %v6747 = vadd.f32 %v6728, %v6742
    %v6748 = vmul.f32 %v818, %v6147
    %v6749 = vmul.f32 %v818, %v6148
    %v6752 = vrot.slane %v6748, 1
    %v6753 = vrot.slane %v6749, 1
    %v6754 = vsel %vm171, %v6752, %v6753
    %v6757 = vadd.f32 %v6731, %v6754
    %v6758 = vadd.f32 %v6732, %v6753
    %v6759 = vmul.f32 %v830, %v6147
    %v6760 = vmul.f32 %v830, %v6148
    %v6763 = vrot.slane %v6759, 1
    %v6764 = vrot.slane %v6760, 1
    %v6765 = vsel %vm171, %v6763, %v6764
    %v6768 = vadd.f32 %v6735, %v6765
    %v6769 = vadd.f32 %v6736, %v6764
    %v6770 = vmul.f32 %v842, %v6147
    %v6771 = vmul.f32 %v842, %v6148
    %v6774 = vrot.slane %v6770, 2
    %v6775 = vrot.slane %v6771, 2
    %v6776 = vsel %vm208, %v6774, %v6775
    %v6779 = vadd.f32 %v6746, %v6776
    %v6780 = vadd.f32 %v6747, %v6775
    %v6781 = vmul.f32 %v854, %v6147
    %v6782 = vmul.f32 %v854, %v6148
    %v6785 = vrot.slane %v6781, 2
    %v6786 = vrot.slane %v6782, 2
    %v6787 = vsel %vm208, %v6785, %v6786
    %v6790 = vadd.f32 %v6757, %v6787
    %v6791 = vadd.f32 %v6758, %v6786
    %v6792 = vmul.f32 %v866, %v6147
    %v6793 = vmul.f32 %v866, %v6148
    %v6796 = vrot.slane %v6792, 2
    %v6797 = vrot.slane %v6793, 2
    %v6798 = vsel %vm208, %v6796, %v6797
    %v6801 = vadd.f32 %v6768, %v6798
    %v6802 = vadd.f32 %v6769, %v6797
    %v6803 = vmul.f32 %v878, %v6147
    %v6804 = vmul.f32 %v878, %v6148
    %v6807 = vrot.slane %v6803, 3
    %v6808 = vrot.slane %v6804, 3
    %v6809 = vsel %vm245, %v6807, %v6808
    %v6812 = vadd.f32 %v6779, %v6809
    %v6813 = vadd.f32 %v6780, %v6808
    %v6814 = vmul.f32 %v890, %v6147
    %v6815 = vmul.f32 %v890, %v6148
    %v6818 = vrot.slane %v6814, 3
    %v6819 = vrot.slane %v6815, 3
    %v6820 = vsel %vm245, %v6818, %v6819
    %v6823 = vadd.f32 %v6790, %v6820
    %v6824 = vadd.f32 %v6791, %v6819
    %v6825 = vmul.f32 %v902, %v6147
    %v6826 = vmul.f32 %v902, %v6148
    %v6829 = vrot.slane %v6825, 3
    %v6830 = vrot.slane %v6826, 3
    %v6831 = vsel %vm245, %v6829, %v6830
    %v6834 = vadd.f32 %v6801, %v6831
    %v6835 = vadd.f32 %v6802, %v6830
    %v6836 = vmul.f32 %v914, %v6147
    %v6837 = vmul.f32 %v914, %v6148
    %v6840 = vrot.slane %v6836, 4
    %v6841 = vrot.slane %v6837, 4
    %v6842 = vsel %vm282, %v6840, %v6841
    %v6845 = vadd.f32 %v6812, %v6842
    %v6846 = vadd.f32 %v6813, %v6841
    %v6847 = vmul.f32 %v926, %v6147
    %v6848 = vmul.f32 %v926, %v6148
    %v6851 = vrot.slane %v6847, 4
    %v6852 = vrot.slane %v6848, 4
    %v6853 = vsel %vm282, %v6851, %v6852
    %v6856 = vadd.f32 %v6823, %v6853
    %v6857 = vadd.f32 %v6824, %v6852
    %v6858 = vmul.f32 %v938, %v6147
    %v6859 = vmul.f32 %v938, %v6148
    %v6862 = vrot.slane %v6858, 4
    %v6863 = vrot.slane %v6859, 4
    %v6864 = vsel %vm282, %v6862, %v6863
    %v6867 = vadd.f32 %v6834, %v6864
    %v6868 = vadd.f32 %v6835, %v6863
    %s6869 = scalar_lea.vmem [#allocation9], 128
    %6870 = vst [vmem:[%s6869] sm:$0xff] %v6845
    %6871 = vst [vmem:[%s6869 + $0x8] sm:$0xf] %v6846
    %s6872 = scalar_lea.vmem [#allocation9], 320
    %6873 = vst [vmem:[%s6872] sm:$0xff] %v6856
    %6874 = vst [vmem:[%s6872 + $0x8] sm:$0xf] %v6857
    %s6875 = scalar_lea.vmem [#allocation9], 512
    %6876 = vst [vmem:[%s6875] sm:$0xff] %v6867
    %6877 = vst [vmem:[%s6875 + $0x8] sm:$0xf] %v6868
    %v6878 = vld [vmem:[%s3926] sm:$0xff]
    %v6879 = vld [vmem:[%s3926 + $0x8] sm:$0xff]
    %v6880 = vld [vmem:[%s4666] sm:$0xff]
    %v6881 = vld [vmem:[%s4666 + $0x8] sm:$0xff]
    %v6882 = vld [vmem:[%s5406] sm:$0xff]
    %v6883 = vld [vmem:[%s5406 + $0x8] sm:$0xff]
    %v6884 = vld [vmem:[%s6146] sm:$0xff]
    %v6885 = vld [vmem:[%s6146 + $0x8] sm:$0xff]
    %s6886 = scalar_lea.vmem [#allocation2], 208
    %v6887 = vld [vmem:[%s6886] sm:$0xff]
    %v6888 = vld [vmem:[%s6886 + $0x8] sm:$0xff]
    %v6889 = vmul.f32 %v151, %v6878
    %v6890 = vmul.f32 %v151, %v6879
    %v6891 = vadd.f32 %v148, %v6889
    %v6892 = vadd.f32 %v148, %v6890
    %v6893 = vmul.f32 %v156, %v6878
    %v6894 = vmul.f32 %v156, %v6879
    %v6895 = vadd.f32 %v149, %v6893
    %v6896 = vadd.f32 %v149, %v6894
    %v6897 = vmul.f32 %v161, %v6878
    %v6898 = vmul.f32 %v161, %v6879
    %v6899 = vadd.f32 %v150, %v6897
    %v6900 = vadd.f32 %v150, %v6898
    %v6901 = vmul.f32 %v166, %v6878
    %v6902 = vmul.f32 %v166, %v6879
    %v6905 = vrot.slane %v6901, 1
    %v6906 = vrot.slane %v6902, 1
    %v6907 = vsel %vm171, %v6905, %v6906
    %v6910 = vadd.f32 %v6891, %v6907
    %v6911 = vadd.f32 %v6892, %v6906
    %v6912 = vmul.f32 %v179, %v6878
    %v6913 = vmul.f32 %v179, %v6879
    %v6916 = vrot.slane %v6912, 1
    %v6917 = vrot.slane %v6913, 1
    %v6918 = vsel %vm171, %v6916, %v6917
    %v6921 = vadd.f32 %v6895, %v6918
    %v6922 = vadd.f32 %v6896, %v6917
    %v6923 = vmul.f32 %v191, %v6878
    %v6924 = vmul.f32 %v191, %v6879
    %v6927 = vrot.slane %v6923, 1
    %v6928 = vrot.slane %v6924, 1
    %v6929 = vsel %vm171, %v6927, %v6928
    %v6932 = vadd.f32 %v6899, %v6929
    %v6933 = vadd.f32 %v6900, %v6928
    %v6934 = vmul.f32 %v203, %v6878
    %v6935 = vmul.f32 %v203, %v6879
    %v6938 = vrot.slane %v6934, 2
    %v6939 = vrot.slane %v6935, 2
    %v6940 = vsel %vm208, %v6938, %v6939
    %v6943 = vadd.f32 %v6910, %v6940
    %v6944 = vadd.f32 %v6911, %v6939
    %v6945 = vmul.f32 %v216, %v6878
    %v6946 = vmul.f32 %v216, %v6879
    %v6949 = vrot.slane %v6945, 2
    %v6950 = vrot.slane %v6946, 2
    %v6951 = vsel %vm208, %v6949, %v6950
    %v6954 = vadd.f32 %v6921, %v6951
    %v6955 = vadd.f32 %v6922, %v6950
    %v6956 = vmul.f32 %v228, %v6878
    %v6957 = vmul.f32 %v228, %v6879
    %v6960 = vrot.slane %v6956, 2
    %v6961 = vrot.slane %v6957, 2
    %v6962 = vsel %vm208, %v6960, %v6961
    %v6965 = vadd.f32 %v6932, %v6962
    %v6966 = vadd.f32 %v6933, %v6961
    %v6967 = vmul.f32 %v240, %v6878
    %v6968 = vmul.f32 %v240, %v6879
    %v6971 = vrot.slane %v6967, 3
    %v6972 = vrot.slane %v6968, 3
    %v6973 = vsel %vm245, %v6971, %v6972
    %v6976 = vadd.f32 %v6943, %v6973
    %v6977 = vadd.f32 %v6944, %v6972
    %v6978 = vmul.f32 %v253, %v6878
    %v6979 = vmul.f32 %v253, %v6879
    %v6982 = vrot.slane %v6978, 3
    %v6983 = vrot.slane %v6979, 3
    %v6984 = vsel %vm245, %v6982, %v6983
    %v6987 = vadd.f32 %v6954, %v6984
    %v6988 = vadd.f32 %v6955, %v6983
    %v6989 = vmul.f32 %v265, %v6878
    %v6990 = vmul.f32 %v265, %v6879
    %v6993 = vrot.slane %v6989, 3
    %v6994 = vrot.slane %v6990, 3
    %v6995 = vsel %vm245, %v6993, %v6994
    %v6998 = vadd.f32 %v6965, %v6995
    %v6999 = vadd.f32 %v6966, %v6994
    %v7000 = vmul.f32 %v277, %v6878
    %v7001 = vmul.f32 %v277, %v6879
    %v7004 = vrot.slane %v7000, 4
    %v7005 = vrot.slane %v7001, 4
    %v7006 = vsel %vm282, %v7004, %v7005
    %v7009 = vadd.f32 %v6976, %v7006
    %v7010 = vadd.f32 %v6977, %v7005
    %v7011 = vmul.f32 %v290, %v6878
    %v7012 = vmul.f32 %v290, %v6879
    %v7015 = vrot.slane %v7011, 4
    %v7016 = vrot.slane %v7012, 4
    %v7017 = vsel %vm282, %v7015, %v7016
    %v7020 = vadd.f32 %v6987, %v7017
    %v7021 = vadd.f32 %v6988, %v7016
    %v7022 = vmul.f32 %v302, %v6878
    %v7023 = vmul.f32 %v302, %v6879
    %v7026 = vrot.slane %v7022, 4
    %v7027 = vrot.slane %v7023, 4
    %v7028 = vsel %vm282, %v7026, %v7027
    %v7031 = vadd.f32 %v6998, %v7028
    %v7032 = vadd.f32 %v6999, %v7027
    %v7033 = vmul.f32 %v314, %v6880
    %v7034 = vmul.f32 %v314, %v6881
    %v7035 = vadd.f32 %v7009, %v7033
    %v7036 = vadd.f32 %v7010, %v7034
    %v7037 = vmul.f32 %v319, %v6880
    %v7038 = vmul.f32 %v319, %v6881
    %v7039 = vadd.f32 %v7020, %v7037
    %v7040 = vadd.f32 %v7021, %v7038
    %v7041 = vmul.f32 %v324, %v6880
    %v7042 = vmul.f32 %v324, %v6881
    %v7043 = vadd.f32 %v7031, %v7041
    %v7044 = vadd.f32 %v7032, %v7042
    %v7045 = vmul.f32 %v329, %v6880
    %v7046 = vmul.f32 %v329, %v6881
    %v7049 = vrot.slane %v7045, 1
    %v7050 = vrot.slane %v7046, 1
    %v7051 = vsel %vm171, %v7049, %v7050
    %v7054 = vadd.f32 %v7035, %v7051
    %v7055 = vadd.f32 %v7036, %v7050
    %v7056 = vmul.f32 %v341, %v6880
    %v7057 = vmul.f32 %v341, %v6881
    %v7060 = vrot.slane %v7056, 1
    %v7061 = vrot.slane %v7057, 1
    %v7062 = vsel %vm171, %v7060, %v7061
    %v7065 = vadd.f32 %v7039, %v7062
    %v7066 = vadd.f32 %v7040, %v7061
    %v7067 = vmul.f32 %v353, %v6880
    %v7068 = vmul.f32 %v353, %v6881
    %v7071 = vrot.slane %v7067, 1
    %v7072 = vrot.slane %v7068, 1
    %v7073 = vsel %vm171, %v7071, %v7072
    %v7076 = vadd.f32 %v7043, %v7073
    %v7077 = vadd.f32 %v7044, %v7072
    %v7078 = vmul.f32 %v365, %v6880
    %v7079 = vmul.f32 %v365, %v6881
    %v7082 = vrot.slane %v7078, 2
    %v7083 = vrot.slane %v7079, 2
    %v7084 = vsel %vm208, %v7082, %v7083
    %v7087 = vadd.f32 %v7054, %v7084
    %v7088 = vadd.f32 %v7055, %v7083
    %v7089 = vmul.f32 %v377, %v6880
    %v7090 = vmul.f32 %v377, %v6881
    %v7093 = vrot.slane %v7089, 2
    %v7094 = vrot.slane %v7090, 2
    %v7095 = vsel %vm208, %v7093, %v7094
    %v7098 = vadd.f32 %v7065, %v7095
    %v7099 = vadd.f32 %v7066, %v7094
    %v7100 = vmul.f32 %v389, %v6880
    %v7101 = vmul.f32 %v389, %v6881
    %v7104 = vrot.slane %v7100, 2
    %v7105 = vrot.slane %v7101, 2
    %v7106 = vsel %vm208, %v7104, %v7105
    %v7109 = vadd.f32 %v7076, %v7106
    %v7110 = vadd.f32 %v7077, %v7105
    %v7111 = vmul.f32 %v401, %v6880
    %v7112 = vmul.f32 %v401, %v6881
    %v7115 = vrot.slane %v7111, 3
    %v7116 = vrot.slane %v7112, 3
    %v7117 = vsel %vm245, %v7115, %v7116
    %v7120 = vadd.f32 %v7087, %v7117
    %v7121 = vadd.f32 %v7088, %v7116
    %v7122 = vmul.f32 %v413, %v6880
    %v7123 = vmul.f32 %v413, %v6881
    %v7126 = vrot.slane %v7122, 3
    %v7127 = vrot.slane %v7123, 3
    %v7128 = vsel %vm245, %v7126, %v7127
    %v7131 = vadd.f32 %v7098, %v7128
    %v7132 = vadd.f32 %v7099, %v7127
    %v7133 = vmul.f32 %v425, %v6880
    %v7134 = vmul.f32 %v425, %v6881
    %v7137 = vrot.slane %v7133, 3
    %v7138 = vrot.slane %v7134, 3
    %v7139 = vsel %vm245, %v7137, %v7138
    %v7142 = vadd.f32 %v7109, %v7139
    %v7143 = vadd.f32 %v7110, %v7138
    %v7144 = vmul.f32 %v437, %v6880
    %v7145 = vmul.f32 %v437, %v6881
    %v7148 = vrot.slane %v7144, 4
    %v7149 = vrot.slane %v7145, 4
    %v7150 = vsel %vm282, %v7148, %v7149
    %v7153 = vadd.f32 %v7120, %v7150
    %v7154 = vadd.f32 %v7121, %v7149
    %v7155 = vmul.f32 %v449, %v6880
    %v7156 = vmul.f32 %v449, %v6881
    %v7159 = vrot.slane %v7155, 4
    %v7160 = vrot.slane %v7156, 4
    %v7161 = vsel %vm282, %v7159, %v7160
    %v7164 = vadd.f32 %v7131, %v7161
    %v7165 = vadd.f32 %v7132, %v7160
    %v7166 = vmul.f32 %v461, %v6880
    %v7167 = vmul.f32 %v461, %v6881
    %v7170 = vrot.slane %v7166, 4
    %v7171 = vrot.slane %v7167, 4
    %v7172 = vsel %vm282, %v7170, %v7171
    %v7175 = vadd.f32 %v7142, %v7172
    %v7176 = vadd.f32 %v7143, %v7171
    %v7177 = vmul.f32 %v473, %v6882
    %v7178 = vmul.f32 %v473, %v6883
    %v7179 = vadd.f32 %v7153, %v7177
    %v7180 = vadd.f32 %v7154, %v7178
    %v7181 = vmul.f32 %v478, %v6882
    %v7182 = vmul.f32 %v478, %v6883
    %v7183 = vadd.f32 %v7164, %v7181
    %v7184 = vadd.f32 %v7165, %v7182
    %v7185 = vmul.f32 %v483, %v6882
    %v7186 = vmul.f32 %v483, %v6883
    %v7187 = vadd.f32 %v7175, %v7185
    %v7188 = vadd.f32 %v7176, %v7186
    %v7189 = vmul.f32 %v488, %v6882
    %v7190 = vmul.f32 %v488, %v6883
    %v7193 = vrot.slane %v7189, 1
    %v7194 = vrot.slane %v7190, 1
    %v7195 = vsel %vm171, %v7193, %v7194
    %v7198 = vadd.f32 %v7179, %v7195
    %v7199 = vadd.f32 %v7180, %v7194
    %v7200 = vmul.f32 %v500, %v6882
    %v7201 = vmul.f32 %v500, %v6883
    %v7204 = vrot.slane %v7200, 1
    %v7205 = vrot.slane %v7201, 1
    %v7206 = vsel %vm171, %v7204, %v7205
    %v7209 = vadd.f32 %v7183, %v7206
    %v7210 = vadd.f32 %v7184, %v7205
    %v7211 = vmul.f32 %v512, %v6882
    %v7212 = vmul.f32 %v512, %v6883
    %v7215 = vrot.slane %v7211, 1
    %v7216 = vrot.slane %v7212, 1
    %v7217 = vsel %vm171, %v7215, %v7216
    %v7220 = vadd.f32 %v7187, %v7217
    %v7221 = vadd.f32 %v7188, %v7216
    %v7222 = vmul.f32 %v524, %v6882
    %v7223 = vmul.f32 %v524, %v6883
    %v7226 = vrot.slane %v7222, 2
    %v7227 = vrot.slane %v7223, 2
    %v7228 = vsel %vm208, %v7226, %v7227
    %v7231 = vadd.f32 %v7198, %v7228
    %v7232 = vadd.f32 %v7199, %v7227
    %v7233 = vmul.f32 %v536, %v6882
    %v7234 = vmul.f32 %v536, %v6883
    %v7237 = vrot.slane %v7233, 2
    %v7238 = vrot.slane %v7234, 2
    %v7239 = vsel %vm208, %v7237, %v7238
    %v7242 = vadd.f32 %v7209, %v7239
    %v7243 = vadd.f32 %v7210, %v7238
    %v7244 = vmul.f32 %v548, %v6882
    %v7245 = vmul.f32 %v548, %v6883
    %v7248 = vrot.slane %v7244, 2
    %v7249 = vrot.slane %v7245, 2
    %v7250 = vsel %vm208, %v7248, %v7249
    %v7253 = vadd.f32 %v7220, %v7250
    %v7254 = vadd.f32 %v7221, %v7249
    %v7255 = vmul.f32 %v560, %v6882
    %v7256 = vmul.f32 %v560, %v6883
    %v7259 = vrot.slane %v7255, 3
    %v7260 = vrot.slane %v7256, 3
    %v7261 = vsel %vm245, %v7259, %v7260
    %v7264 = vadd.f32 %v7231, %v7261
    %v7265 = vadd.f32 %v7232, %v7260
    %v7266 = vmul.f32 %v572, %v6882
    %v7267 = vmul.f32 %v572, %v6883
    %v7270 = vrot.slane %v7266, 3
    %v7271 = vrot.slane %v7267, 3
    %v7272 = vsel %vm245, %v7270, %v7271
    %v7275 = vadd.f32 %v7242, %v7272
    %v7276 = vadd.f32 %v7243, %v7271
    %v7277 = vmul.f32 %v584, %v6882
    %v7278 = vmul.f32 %v584, %v6883
    %v7281 = vrot.slane %v7277, 3
    %v7282 = vrot.slane %v7278, 3
    %v7283 = vsel %vm245, %v7281, %v7282
    %v7286 = vadd.f32 %v7253, %v7283
    %v7287 = vadd.f32 %v7254, %v7282
    %v7288 = vmul.f32 %v596, %v6882
    %v7289 = vmul.f32 %v596, %v6883
    %v7292 = vrot.slane %v7288, 4
    %v7293 = vrot.slane %v7289, 4
    %v7294 = vsel %vm282, %v7292, %v7293
    %v7297 = vadd.f32 %v7264, %v7294
    %v7298 = vadd.f32 %v7265, %v7293
    %v7299 = vmul.f32 %v608, %v6882
    %v7300 = vmul.f32 %v608, %v6883
    %v7303 = vrot.slane %v7299, 4
    %v7304 = vrot.slane %v7300, 4
    %v7305 = vsel %vm282, %v7303, %v7304
    %v7308 = vadd.f32 %v7275, %v7305
    %v7309 = vadd.f32 %v7276, %v7304
    %v7310 = vmul.f32 %v620, %v6882
    %v7311 = vmul.f32 %v620, %v6883
    %v7314 = vrot.slane %v7310, 4
    %v7315 = vrot.slane %v7311, 4
    %v7316 = vsel %vm282, %v7314, %v7315
    %v7319 = vadd.f32 %v7286, %v7316
    %v7320 = vadd.f32 %v7287, %v7315
    %v7321 = vmul.f32 %v632, %v6884
    %v7322 = vmul.f32 %v632, %v6885
    %v7323 = vadd.f32 %v7297, %v7321
    %v7324 = vadd.f32 %v7298, %v7322
    %v7325 = vmul.f32 %v637, %v6884
    %v7326 = vmul.f32 %v637, %v6885
    %v7327 = vadd.f32 %v7308, %v7325
    %v7328 = vadd.f32 %v7309, %v7326
    %v7329 = vmul.f32 %v642, %v6884
    %v7330 = vmul.f32 %v642, %v6885
    %v7331 = vadd.f32 %v7319, %v7329
    %v7332 = vadd.f32 %v7320, %v7330
    %v7333 = vmul.f32 %v647, %v6884
    %v7334 = vmul.f32 %v647, %v6885
    %v7337 = vrot.slane %v7333, 1
    %v7338 = vrot.slane %v7334, 1
    %v7339 = vsel %vm171, %v7337, %v7338
    %v7342 = vadd.f32 %v7323, %v7339
    %v7343 = vadd.f32 %v7324, %v7338
    %v7344 = vmul.f32 %v659, %v6884
    %v7345 = vmul.f32 %v659, %v6885
    %v7348 = vrot.slane %v7344, 1
    %v7349 = vrot.slane %v7345, 1
    %v7350 = vsel %vm171, %v7348, %v7349
    %v7353 = vadd.f32 %v7327, %v7350
    %v7354 = vadd.f32 %v7328, %v7349
    %v7355 = vmul.f32 %v671, %v6884
    %v7356 = vmul.f32 %v671, %v6885
    %v7359 = vrot.slane %v7355, 1
    %v7360 = vrot.slane %v7356, 1
    %v7361 = vsel %vm171, %v7359, %v7360
    %v7364 = vadd.f32 %v7331, %v7361
    %v7365 = vadd.f32 %v7332, %v7360
    %v7366 = vmul.f32 %v683, %v6884
    %v7367 = vmul.f32 %v683, %v6885
    %v7370 = vrot.slane %v7366, 2
    %v7371 = vrot.slane %v7367, 2
    %v7372 = vsel %vm208, %v7370, %v7371
    %v7375 = vadd.f32 %v7342, %v7372
    %v7376 = vadd.f32 %v7343, %v7371
    %v7377 = vmul.f32 %v695, %v6884
    %v7378 = vmul.f32 %v695, %v6885
    %v7381 = vrot.slane %v7377, 2
    %v7382 = vrot.slane %v7378, 2
    %v7383 = vsel %vm208, %v7381, %v7382
    %v7386 = vadd.f32 %v7353, %v7383
    %v7387 = vadd.f32 %v7354, %v7382
    %v7388 = vmul.f32 %v707, %v6884
    %v7389 = vmul.f32 %v707, %v6885
    %v7392 = vrot.slane %v7388, 2
    %v7393 = vrot.slane %v7389, 2
    %v7394 = vsel %vm208, %v7392, %v7393
    %v7397 = vadd.f32 %v7364, %v7394
    %v7398 = vadd.f32 %v7365, %v7393
    %v7399 = vmul.f32 %v719, %v6884
    %v7400 = vmul.f32 %v719, %v6885
    %v7403 = vrot.slane %v7399, 3
    %v7404 = vrot.slane %v7400, 3
    %v7405 = vsel %vm245, %v7403, %v7404
    %v7408 = vadd.f32 %v7375, %v7405
    %v7409 = vadd.f32 %v7376, %v7404
    %v7410 = vmul.f32 %v731, %v6884
    %v7411 = vmul.f32 %v731, %v6885
    %v7414 = vrot.slane %v7410, 3
    %v7415 = vrot.slane %v7411, 3
    %v7416 = vsel %vm245, %v7414, %v7415
    %v7419 = vadd.f32 %v7386, %v7416
    %v7420 = vadd.f32 %v7387, %v7415
    %v7421 = vmul.f32 %v743, %v6884
    %v7422 = vmul.f32 %v743, %v6885
    %v7425 = vrot.slane %v7421, 3
    %v7426 = vrot.slane %v7422, 3
    %v7427 = vsel %vm245, %v7425, %v7426
    %v7430 = vadd.f32 %v7397, %v7427
    %v7431 = vadd.f32 %v7398, %v7426
    %v7432 = vmul.f32 %v755, %v6884
    %v7433 = vmul.f32 %v755, %v6885
    %v7436 = vrot.slane %v7432, 4
    %v7437 = vrot.slane %v7433, 4
    %v7438 = vsel %vm282, %v7436, %v7437
    %v7441 = vadd.f32 %v7408, %v7438
    %v7442 = vadd.f32 %v7409, %v7437
    %v7443 = vmul.f32 %v767, %v6884
    %v7444 = vmul.f32 %v767, %v6885
    %v7447 = vrot.slane %v7443, 4
    %v7448 = vrot.slane %v7444, 4
    %v7449 = vsel %vm282, %v7447, %v7448
    %v7452 = vadd.f32 %v7419, %v7449
    %v7453 = vadd.f32 %v7420, %v7448
    %v7454 = vmul.f32 %v779, %v6884
    %v7455 = vmul.f32 %v779, %v6885
    %v7458 = vrot.slane %v7454, 4
    %v7459 = vrot.slane %v7455, 4
    %v7460 = vsel %vm282, %v7458, %v7459
    %v7463 = vadd.f32 %v7430, %v7460
    %v7464 = vadd.f32 %v7431, %v7459
    %v7465 = vmul.f32 %v791, %v6887
    %v7466 = vmul.f32 %v791, %v6888
    %v7467 = vadd.f32 %v7441, %v7465
    %v7468 = vadd.f32 %v7442, %v7466
    %v7469 = vmul.f32 %v796, %v6887
    %v7470 = vmul.f32 %v796, %v6888
    %v7471 = vadd.f32 %v7452, %v7469
    %v7472 = vadd.f32 %v7453, %v7470
    %v7473 = vmul.f32 %v801, %v6887
    %v7474 = vmul.f32 %v801, %v6888
    %v7475 = vadd.f32 %v7463, %v7473
    %v7476 = vadd.f32 %v7464, %v7474
    %v7477 = vmul.f32 %v806, %v6887
    %v7478 = vmul.f32 %v806, %v6888
    %v7481 = vrot.slane %v7477, 1
    %v7482 = vrot.slane %v7478, 1
    %v7483 = vsel %vm171, %v7481, %v7482
    %v7486 = vadd.f32 %v7467, %v7483
    %v7487 = vadd.f32 %v7468, %v7482
    %v7488 = vmul.f32 %v818, %v6887
    %v7489 = vmul.f32 %v818, %v6888
    %v7492 = vrot.slane %v7488, 1
    %v7493 = vrot.slane %v7489, 1
    %v7494 = vsel %vm171, %v7492, %v7493
    %v7497 = vadd.f32 %v7471, %v7494
    %v7498 = vadd.f32 %v7472, %v7493
    %v7499 = vmul.f32 %v830, %v6887
    %v7500 = vmul.f32 %v830, %v6888
    %v7503 = vrot.slane %v7499, 1
    %v7504 = vrot.slane %v7500, 1
    %v7505 = vsel %vm171, %v7503, %v7504
    %v7508 = vadd.f32 %v7475, %v7505
    %v7509 = vadd.f32 %v7476, %v7504
    %v7510 = vmul.f32 %v842, %v6887
    %v7511 = vmul.f32 %v842, %v6888
    %v7514 = vrot.slane %v7510, 2
    %v7515 = vrot.slane %v7511, 2
    %v7516 = vsel %vm208, %v7514, %v7515
    %v7519 = vadd.f32 %v7486, %v7516
    %v7520 = vadd.f32 %v7487, %v7515
    %v7521 = vmul.f32 %v854, %v6887
    %v7522 = vmul.f32 %v854, %v6888
    %v7525 = vrot.slane %v7521, 2
    %v7526 = vrot.slane %v7522, 2
    %v7527 = vsel %vm208, %v7525, %v7526
    %v7530 = vadd.f32 %v7497, %v7527
    %v7531 = vadd.f32 %v7498, %v7526
    %v7532 = vmul.f32 %v866, %v6887
    %v7533 = vmul.f32 %v866, %v6888
    %v7536 = vrot.slane %v7532, 2
    %v7537 = vrot.slane %v7533, 2
    %v7538 = vsel %vm208, %v7536, %v7537
    %v7541 = vadd.f32 %v7508, %v7538
    %v7542 = vadd.f32 %v7509, %v7537
    %v7543 = vmul.f32 %v878, %v6887
    %v7544 = vmul.f32 %v878, %v6888
    %v7547 = vrot.slane %v7543, 3
    %v7548 = vrot.slane %v7544, 3
    %v7549 = vsel %vm245, %v7547, %v7548
    %v7552 = vadd.f32 %v7519, %v7549
    %v7553 = vadd.f32 %v7520, %v7548
    %v7554 = vmul.f32 %v890, %v6887
    %v7555 = vmul.f32 %v890, %v6888
    %v7558 = vrot.slane %v7554, 3
    %v7559 = vrot.slane %v7555, 3
    %v7560 = vsel %vm245, %v7558, %v7559
    %v7563 = vadd.f32 %v7530, %v7560
    %v7564 = vadd.f32 %v7531, %v7559
    %v7565 = vmul.f32 %v902, %v6887
    %v7566 = vmul.f32 %v902, %v6888
    %v7569 = vrot.slane %v7565, 3
    %v7570 = vrot.slane %v7566, 3
    %v7571 = vsel %vm245, %v7569, %v7570
    %v7574 = vadd.f32 %v7541, %v7571
    %v7575 = vadd.f32 %v7542, %v7570
    %v7576 = vmul.f32 %v914, %v6887
    %v7577 = vmul.f32 %v914, %v6888
    %v7580 = vrot.slane %v7576, 4
    %v7581 = vrot.slane %v7577, 4
    %v7582 = vsel %vm282, %v7580, %v7581
    %v7585 = vadd.f32 %v7552, %v7582
    %v7586 = vadd.f32 %v7553, %v7581
    %v7587 = vmul.f32 %v926, %v6887
    %v7588 = vmul.f32 %v926, %v6888
    %v7591 = vrot.slane %v7587, 4
    %v7592 = vrot.slane %v7588, 4
    %v7593 = vsel %vm282, %v7591, %v7592
    %v7596 = vadd.f32 %v7563, %v7593
    %v7597 = vadd.f32 %v7564, %v7592
    %v7598 = vmul.f32 %v938, %v6887
    %v7599 = vmul.f32 %v938, %v6888
    %v7602 = vrot.slane %v7598, 4
    %v7603 = vrot.slane %v7599, 4
    %v7604 = vsel %vm282, %v7602, %v7603
    %v7607 = vadd.f32 %v7574, %v7604
    %v7608 = vadd.f32 %v7575, %v7603
    %s7609 = scalar_lea.vmem [#allocation9], 144
    %7610 = vst [vmem:[%s7609] sm:$0xff] %v7585
    %7611 = vst [vmem:[%s7609 + $0x8] sm:$0xf] %v7586
    %s7612 = scalar_lea.vmem [#allocation9], 336
    %7613 = vst [vmem:[%s7612] sm:$0xff] %v7596
    %7614 = vst [vmem:[%s7612 + $0x8] sm:$0xf] %v7597
    %s7615 = scalar_lea.vmem [#allocation9], 528
    %7616 = vst [vmem:[%s7615] sm:$0xff] %v7607
    %7617 = vst [vmem:[%s7615 + $0x8] sm:$0xf] %v7608
    %v7618 = vld [vmem:[%s4666] sm:$0xff]
    %v7619 = vld [vmem:[%s4666 + $0x8] sm:$0xff]
    %v7620 = vld [vmem:[%s5406] sm:$0xff]
    %v7621 = vld [vmem:[%s5406 + $0x8] sm:$0xff]
    %v7622 = vld [vmem:[%s6146] sm:$0xff]
    %v7623 = vld [vmem:[%s6146 + $0x8] sm:$0xff]
    %v7624 = vld [vmem:[%s6886] sm:$0xff]
    %v7625 = vld [vmem:[%s6886 + $0x8] sm:$0xff]
    %s7626 = scalar_lea.vmem [#allocation2], 224
    %v7627 = vld [vmem:[%s7626] sm:$0xff]
    %v7628 = vld [vmem:[%s7626 + $0x8] sm:$0xff]
    %v7629 = vmul.f32 %v151, %v7618
    %v7630 = vmul.f32 %v151, %v7619
    %v7631 = vadd.f32 %v148, %v7629
    %v7632 = vadd.f32 %v148, %v7630
    %v7633 = vmul.f32 %v156, %v7618
    %v7634 = vmul.f32 %v156, %v7619
    %v7635 = vadd.f32 %v149, %v7633
    %v7636 = vadd.f32 %v149, %v7634
    %v7637 = vmul.f32 %v161, %v7618
    %v7638 = vmul.f32 %v161, %v7619
    %v7639 = vadd.f32 %v150, %v7637
    %v7640 = vadd.f32 %v150, %v7638
    %v7641 = vmul.f32 %v166, %v7618
    %v7642 = vmul.f32 %v166, %v7619
    %v7645 = vrot.slane %v7641, 1
    %v7646 = vrot.slane %v7642, 1
    %v7647 = vsel %vm171, %v7645, %v7646
    %v7650 = vadd.f32 %v7631, %v7647
    %v7651 = vadd.f32 %v7632, %v7646
    %v7652 = vmul.f32 %v179, %v7618
    %v7653 = vmul.f32 %v179, %v7619
    %v7656 = vrot.slane %v7652, 1
    %v7657 = vrot.slane %v7653, 1
    %v7658 = vsel %vm171, %v7656, %v7657
    %v7661 = vadd.f32 %v7635, %v7658
    %v7662 = vadd.f32 %v7636, %v7657
    %v7663 = vmul.f32 %v191, %v7618
    %v7664 = vmul.f32 %v191, %v7619
    %v7667 = vrot.slane %v7663, 1
    %v7668 = vrot.slane %v7664, 1
    %v7669 = vsel %vm171, %v7667, %v7668
    %v7672 = vadd.f32 %v7639, %v7669
    %v7673 = vadd.f32 %v7640, %v7668
    %v7674 = vmul.f32 %v203, %v7618
    %v7675 = vmul.f32 %v203, %v7619
    %v7678 = vrot.slane %v7674, 2
    %v7679 = vrot.slane %v7675, 2
    %v7680 = vsel %vm208, %v7678, %v7679
    %v7683 = vadd.f32 %v7650, %v7680
    %v7684 = vadd.f32 %v7651, %v7679
    %v7685 = vmul.f32 %v216, %v7618
    %v7686 = vmul.f32 %v216, %v7619
    %v7689 = vrot.slane %v7685, 2
    %v7690 = vrot.slane %v7686, 2
    %v7691 = vsel %vm208, %v7689, %v7690
    %v7694 = vadd.f32 %v7661, %v7691
    %v7695 = vadd.f32 %v7662, %v7690
    %v7696 = vmul.f32 %v228, %v7618
    %v7697 = vmul.f32 %v228, %v7619
    %v7700 = vrot.slane %v7696, 2
    %v7701 = vrot.slane %v7697, 2
    %v7702 = vsel %vm208, %v7700, %v7701
    %v7705 = vadd.f32 %v7672, %v7702
    %v7706 = vadd.f32 %v7673, %v7701
    %v7707 = vmul.f32 %v240, %v7618
    %v7708 = vmul.f32 %v240, %v7619
    %v7711 = vrot.slane %v7707, 3
    %v7712 = vrot.slane %v7708, 3
    %v7713 = vsel %vm245, %v7711, %v7712
    %v7716 = vadd.f32 %v7683, %v7713
    %v7717 = vadd.f32 %v7684, %v7712
    %v7718 = vmul.f32 %v253, %v7618
    %v7719 = vmul.f32 %v253, %v7619
    %v7722 = vrot.slane %v7718, 3
    %v7723 = vrot.slane %v7719, 3
    %v7724 = vsel %vm245, %v7722, %v7723
    %v7727 = vadd.f32 %v7694, %v7724
    %v7728 = vadd.f32 %v7695, %v7723
    %v7729 = vmul.f32 %v265, %v7618
    %v7730 = vmul.f32 %v265, %v7619
    %v7733 = vrot.slane %v7729, 3
    %v7734 = vrot.slane %v7730, 3
    %v7735 = vsel %vm245, %v7733, %v7734
    %v7738 = vadd.f32 %v7705, %v7735
    %v7739 = vadd.f32 %v7706, %v7734
    %v7740 = vmul.f32 %v277, %v7618
    %v7741 = vmul.f32 %v277, %v7619
    %v7744 = vrot.slane %v7740, 4
    %v7745 = vrot.slane %v7741, 4
    %v7746 = vsel %vm282, %v7744, %v7745
    %v7749 = vadd.f32 %v7716, %v7746
    %v7750 = vadd.f32 %v7717, %v7745
    %v7751 = vmul.f32 %v290, %v7618
    %v7752 = vmul.f32 %v290, %v7619
    %v7755 = vrot.slane %v7751, 4
    %v7756 = vrot.slane %v7752, 4
    %v7757 = vsel %vm282, %v7755, %v7756
    %v7760 = vadd.f32 %v7727, %v7757
    %v7761 = vadd.f32 %v7728, %v7756
    %v7762 = vmul.f32 %v302, %v7618
    %v7763 = vmul.f32 %v302, %v7619
    %v7766 = vrot.slane %v7762, 4
    %v7767 = vrot.slane %v7763, 4
    %v7768 = vsel %vm282, %v7766, %v7767
    %v7771 = vadd.f32 %v7738, %v7768
    %v7772 = vadd.f32 %v7739, %v7767
    %v7773 = vmul.f32 %v314, %v7620
    %v7774 = vmul.f32 %v314, %v7621
    %v7775 = vadd.f32 %v7749, %v7773
    %v7776 = vadd.f32 %v7750, %v7774
    %v7777 = vmul.f32 %v319, %v7620
    %v7778 = vmul.f32 %v319, %v7621
    %v7779 = vadd.f32 %v7760, %v7777
    %v7780 = vadd.f32 %v7761, %v7778
    %v7781 = vmul.f32 %v324, %v7620
    %v7782 = vmul.f32 %v324, %v7621
    %v7783 = vadd.f32 %v7771, %v7781
    %v7784 = vadd.f32 %v7772, %v7782
    %v7785 = vmul.f32 %v329, %v7620
    %v7786 = vmul.f32 %v329, %v7621
    %v7789 = vrot.slane %v7785, 1
    %v7790 = vrot.slane %v7786, 1
    %v7791 = vsel %vm171, %v7789, %v7790
    %v7794 = vadd.f32 %v7775, %v7791
    %v7795 = vadd.f32 %v7776, %v7790
    %v7796 = vmul.f32 %v341, %v7620
    %v7797 = vmul.f32 %v341, %v7621
    %v7800 = vrot.slane %v7796, 1
    %v7801 = vrot.slane %v7797, 1
    %v7802 = vsel %vm171, %v7800, %v7801
    %v7805 = vadd.f32 %v7779, %v7802
    %v7806 = vadd.f32 %v7780, %v7801
    %v7807 = vmul.f32 %v353, %v7620
    %v7808 = vmul.f32 %v353, %v7621
    %v7811 = vrot.slane %v7807, 1
    %v7812 = vrot.slane %v7808, 1
    %v7813 = vsel %vm171, %v7811, %v7812
    %v7816 = vadd.f32 %v7783, %v7813
    %v7817 = vadd.f32 %v7784, %v7812
    %v7818 = vmul.f32 %v365, %v7620
    %v7819 = vmul.f32 %v365, %v7621
    %v7822 = vrot.slane %v7818, 2
    %v7823 = vrot.slane %v7819, 2
    %v7824 = vsel %vm208, %v7822, %v7823
    %v7827 = vadd.f32 %v7794, %v7824
    %v7828 = vadd.f32 %v7795, %v7823
    %v7829 = vmul.f32 %v377, %v7620
    %v7830 = vmul.f32 %v377, %v7621
    %v7833 = vrot.slane %v7829, 2
    %v7834 = vrot.slane %v7830, 2
    %v7835 = vsel %vm208, %v7833, %v7834
    %v7838 = vadd.f32 %v7805, %v7835
    %v7839 = vadd.f32 %v7806, %v7834
    %v7840 = vmul.f32 %v389, %v7620
    %v7841 = vmul.f32 %v389, %v7621
    %v7844 = vrot.slane %v7840, 2
    %v7845 = vrot.slane %v7841, 2
    %v7846 = vsel %vm208, %v7844, %v7845
    %v7849 = vadd.f32 %v7816, %v7846
    %v7850 = vadd.f32 %v7817, %v7845
    %v7851 = vmul.f32 %v401, %v7620
    %v7852 = vmul.f32 %v401, %v7621
    %v7855 = vrot.slane %v7851, 3
    %v7856 = vrot.slane %v7852, 3
    %v7857 = vsel %vm245, %v7855, %v7856
    %v7860 = vadd.f32 %v7827, %v7857
    %v7861 = vadd.f32 %v7828, %v7856
    %v7862 = vmul.f32 %v413, %v7620
    %v7863 = vmul.f32 %v413, %v7621
    %v7866 = vrot.slane %v7862, 3
    %v7867 = vrot.slane %v7863, 3
    %v7868 = vsel %vm245, %v7866, %v7867
    %v7871 = vadd.f32 %v7838, %v7868
    %v7872 = vadd.f32 %v7839, %v7867
    %v7873 = vmul.f32 %v425, %v7620
    %v7874 = vmul.f32 %v425, %v7621
    %v7877 = vrot.slane %v7873, 3
    %v7878 = vrot.slane %v7874, 3
    %v7879 = vsel %vm245, %v7877, %v7878
    %v7882 = vadd.f32 %v7849, %v7879
    %v7883 = vadd.f32 %v7850, %v7878
    %v7884 = vmul.f32 %v437, %v7620
    %v7885 = vmul.f32 %v437, %v7621
    %v7888 = vrot.slane %v7884, 4
    %v7889 = vrot.slane %v7885, 4
    %v7890 = vsel %vm282, %v7888, %v7889
    %v7893 = vadd.f32 %v7860, %v7890
    %v7894 = vadd.f32 %v7861, %v7889
    %v7895 = vmul.f32 %v449, %v7620
    %v7896 = vmul.f32 %v449, %v7621
    %v7899 = vrot.slane %v7895, 4
    %v7900 = vrot.slane %v7896, 4
    %v7901 = vsel %vm282, %v7899, %v7900
    %v7904 = vadd.f32 %v7871, %v7901
    %v7905 = vadd.f32 %v7872, %v7900
    %v7906 = vmul.f32 %v461, %v7620
    %v7907 = vmul.f32 %v461, %v7621
    %v7910 = vrot.slane %v7906, 4
    %v7911 = vrot.slane %v7907, 4
    %v7912 = vsel %vm282, %v7910, %v7911
    %v7915 = vadd.f32 %v7882, %v7912
    %v7916 = vadd.f32 %v7883, %v7911
    %v7917 = vmul.f32 %v473, %v7622
    %v7918 = vmul.f32 %v473, %v7623
    %v7919 = vadd.f32 %v7893, %v7917
    %v7920 = vadd.f32 %v7894, %v7918
    %v7921 = vmul.f32 %v478, %v7622
    %v7922 = vmul.f32 %v478, %v7623
    %v7923 = vadd.f32 %v7904, %v7921
    %v7924 = vadd.f32 %v7905, %v7922
    %v7925 = vmul.f32 %v483, %v7622
    %v7926 = vmul.f32 %v483, %v7623
    %v7927 = vadd.f32 %v7915, %v7925
    %v7928 = vadd.f32 %v7916, %v7926
    %v7929 = vmul.f32 %v488, %v7622
    %v7930 = vmul.f32 %v488, %v7623
    %v7933 = vrot.slane %v7929, 1
    %v7934 = vrot.slane %v7930, 1
    %v7935 = vsel %vm171, %v7933, %v7934
    %v7938 = vadd.f32 %v7919, %v7935
    %v7939 = vadd.f32 %v7920, %v7934
    %v7940 = vmul.f32 %v500, %v7622
    %v7941 = vmul.f32 %v500, %v7623
    %v7944 = vrot.slane %v7940, 1
    %v7945 = vrot.slane %v7941, 1
    %v7946 = vsel %vm171, %v7944, %v7945
    %v7949 = vadd.f32 %v7923, %v7946
    %v7950 = vadd.f32 %v7924, %v7945
    %v7951 = vmul.f32 %v512, %v7622
    %v7952 = vmul.f32 %v512, %v7623
    %v7955 = vrot.slane %v7951, 1
    %v7956 = vrot.slane %v7952, 1
    %v7957 = vsel %vm171, %v7955, %v7956
    %v7960 = vadd.f32 %v7927, %v7957
    %v7961 = vadd.f32 %v7928, %v7956
    %v7962 = vmul.f32 %v524, %v7622
    %v7963 = vmul.f32 %v524, %v7623
    %v7966 = vrot.slane %v7962, 2
    %v7967 = vrot.slane %v7963, 2
    %v7968 = vsel %vm208, %v7966, %v7967
    %v7971 = vadd.f32 %v7938, %v7968
    %v7972 = vadd.f32 %v7939, %v7967
    %v7973 = vmul.f32 %v536, %v7622
    %v7974 = vmul.f32 %v536, %v7623
    %v7977 = vrot.slane %v7973, 2
    %v7978 = vrot.slane %v7974, 2
    %v7979 = vsel %vm208, %v7977, %v7978
    %v7982 = vadd.f32 %v7949, %v7979
    %v7983 = vadd.f32 %v7950, %v7978
    %v7984 = vmul.f32 %v548, %v7622
    %v7985 = vmul.f32 %v548, %v7623
    %v7988 = vrot.slane %v7984, 2
    %v7989 = vrot.slane %v7985, 2
    %v7990 = vsel %vm208, %v7988, %v7989
    %v7993 = vadd.f32 %v7960, %v7990
    %v7994 = vadd.f32 %v7961, %v7989
    %v7995 = vmul.f32 %v560, %v7622
    %v7996 = vmul.f32 %v560, %v7623
    %v7999 = vrot.slane %v7995, 3
    %v8000 = vrot.slane %v7996, 3
    %v8001 = vsel %vm245, %v7999, %v8000
    %v8004 = vadd.f32 %v7971, %v8001
    %v8005 = vadd.f32 %v7972, %v8000
    %v8006 = vmul.f32 %v572, %v7622
    %v8007 = vmul.f32 %v572, %v7623
    %v8010 = vrot.slane %v8006, 3
    %v8011 = vrot.slane %v8007, 3
    %v8012 = vsel %vm245, %v8010, %v8011
    %v8015 = vadd.f32 %v7982, %v8012
    %v8016 = vadd.f32 %v7983, %v8011
    %v8017 = vmul.f32 %v584, %v7622
    %v8018 = vmul.f32 %v584, %v7623
    %v8021 = vrot.slane %v8017, 3
    %v8022 = vrot.slane %v8018, 3
    %v8023 = vsel %vm245, %v8021, %v8022
    %v8026 = vadd.f32 %v7993, %v8023
    %v8027 = vadd.f32 %v7994, %v8022
    %v8028 = vmul.f32 %v596, %v7622
    %v8029 = vmul.f32 %v596, %v7623
    %v8032 = vrot.slane %v8028, 4
    %v8033 = vrot.slane %v8029, 4
    %v8034 = vsel %vm282, %v8032, %v8033
    %v8037 = vadd.f32 %v8004, %v8034
    %v8038 = vadd.f32 %v8005, %v8033
    %v8039 = vmul.f32 %v608, %v7622
    %v8040 = vmul.f32 %v608, %v7623
    %v8043 = vrot.slane %v8039, 4
    %v8044 = vrot.slane %v8040, 4
    %v8045 = vsel %vm282, %v8043, %v8044
    %v8048 = vadd.f32 %v8015, %v8045
    %v8049 = vadd.f32 %v8016, %v8044
    %v8050 = vmul.f32 %v620, %v7622
    %v8051 = vmul.f32 %v620, %v7623
    %v8054 = vrot.slane %v8050, 4
    %v8055 = vrot.slane %v8051, 4
    %v8056 = vsel %vm282, %v8054, %v8055
    %v8059 = vadd.f32 %v8026, %v8056
    %v8060 = vadd.f32 %v8027, %v8055
    %v8061 = vmul.f32 %v632, %v7624
    %v8062 = vmul.f32 %v632, %v7625
    %v8063 = vadd.f32 %v8037, %v8061
    %v8064 = vadd.f32 %v8038, %v8062
    %v8065 = vmul.f32 %v637, %v7624
    %v8066 = vmul.f32 %v637, %v7625
    %v8067 = vadd.f32 %v8048, %v8065
    %v8068 = vadd.f32 %v8049, %v8066
    %v8069 = vmul.f32 %v642, %v7624
    %v8070 = vmul.f32 %v642, %v7625
    %v8071 = vadd.f32 %v8059, %v8069
    %v8072 = vadd.f32 %v8060, %v8070
    %v8073 = vmul.f32 %v647, %v7624
    %v8074 = vmul.f32 %v647, %v7625
    %v8077 = vrot.slane %v8073, 1
    %v8078 = vrot.slane %v8074, 1
    %v8079 = vsel %vm171, %v8077, %v8078
    %v8082 = vadd.f32 %v8063, %v8079
    %v8083 = vadd.f32 %v8064, %v8078
    %v8084 = vmul.f32 %v659, %v7624
    %v8085 = vmul.f32 %v659, %v7625
    %v8088 = vrot.slane %v8084, 1
    %v8089 = vrot.slane %v8085, 1
    %v8090 = vsel %vm171, %v8088, %v8089
    %v8093 = vadd.f32 %v8067, %v8090
    %v8094 = vadd.f32 %v8068, %v8089
    %v8095 = vmul.f32 %v671, %v7624
    %v8096 = vmul.f32 %v671, %v7625
    %v8099 = vrot.slane %v8095, 1
    %v8100 = vrot.slane %v8096, 1
    %v8101 = vsel %vm171, %v8099, %v8100
    %v8104 = vadd.f32 %v8071, %v8101
    %v8105 = vadd.f32 %v8072, %v8100
    %v8106 = vmul.f32 %v683, %v7624
    %v8107 = vmul.f32 %v683, %v7625
    %v8110 = vrot.slane %v8106, 2
    %v8111 = vrot.slane %v8107, 2
    %v8112 = vsel %vm208, %v8110, %v8111
    %v8115 = vadd.f32 %v8082, %v8112
    %v8116 = vadd.f32 %v8083, %v8111
    %v8117 = vmul.f32 %v695, %v7624
    %v8118 = vmul.f32 %v695, %v7625
    %v8121 = vrot.slane %v8117, 2
    %v8122 = vrot.slane %v8118, 2
    %v8123 = vsel %vm208, %v8121, %v8122
    %v8126 = vadd.f32 %v8093, %v8123
    %v8127 = vadd.f32 %v8094, %v8122
    %v8128 = vmul.f32 %v707, %v7624
    %v8129 = vmul.f32 %v707, %v7625
    %v8132 = vrot.slane %v8128, 2
    %v8133 = vrot.slane %v8129, 2
    %v8134 = vsel %vm208, %v8132, %v8133
    %v8137 = vadd.f32 %v8104, %v8134
    %v8138 = vadd.f32 %v8105, %v8133
    %v8139 = vmul.f32 %v719, %v7624
    %v8140 = vmul.f32 %v719, %v7625
    %v8143 = vrot.slane %v8139, 3
    %v8144 = vrot.slane %v8140, 3
    %v8145 = vsel %vm245, %v8143, %v8144
    %v8148 = vadd.f32 %v8115, %v8145
    %v8149 = vadd.f32 %v8116, %v8144
    %v8150 = vmul.f32 %v731, %v7624
    %v8151 = vmul.f32 %v731, %v7625
    %v8154 = vrot.slane %v8150, 3
    %v8155 = vrot.slane %v8151, 3
    %v8156 = vsel %vm245, %v8154, %v8155
    %v8159 = vadd.f32 %v8126, %v8156
    %v8160 = vadd.f32 %v8127, %v8155
    %v8161 = vmul.f32 %v743, %v7624
    %v8162 = vmul.f32 %v743, %v7625
    %v8165 = vrot.slane %v8161, 3
    %v8166 = vrot.slane %v8162, 3
    %v8167 = vsel %vm245, %v8165, %v8166
    %v8170 = vadd.f32 %v8137, %v8167
    %v8171 = vadd.f32 %v8138, %v8166
    %v8172 = vmul.f32 %v755, %v7624
    %v8173 = vmul.f32 %v755, %v7625
    %v8176 = vrot.slane %v8172, 4
    %v8177 = vrot.slane %v8173, 4
    %v8178 = vsel %vm282, %v8176, %v8177
    %v8181 = vadd.f32 %v8148, %v8178
    %v8182 = vadd.f32 %v8149, %v8177
    %v8183 = vmul.f32 %v767, %v7624
    %v8184 = vmul.f32 %v767, %v7625
    %v8187 = vrot.slane %v8183, 4
    %v8188 = vrot.slane %v8184, 4
    %v8189 = vsel %vm282, %v8187, %v8188
    %v8192 = vadd.f32 %v8159, %v8189
    %v8193 = vadd.f32 %v8160, %v8188
    %v8194 = vmul.f32 %v779, %v7624
    %v8195 = vmul.f32 %v779, %v7625
    %v8198 = vrot.slane %v8194, 4
    %v8199 = vrot.slane %v8195, 4
    %v8200 = vsel %vm282, %v8198, %v8199
    %v8203 = vadd.f32 %v8170, %v8200
    %v8204 = vadd.f32 %v8171, %v8199
    %v8205 = vmul.f32 %v791, %v7627
    %v8206 = vmul.f32 %v791, %v7628
    %v8207 = vadd.f32 %v8181, %v8205
    %v8208 = vadd.f32 %v8182, %v8206
    %v8209 = vmul.f32 %v796, %v7627
    %v8210 = vmul.f32 %v796, %v7628
    %v8211 = vadd.f32 %v8192, %v8209
    %v8212 = vadd.f32 %v8193, %v8210
    %v8213 = vmul.f32 %v801, %v7627
    %v8214 = vmul.f32 %v801, %v7628
    %v8215 = vadd.f32 %v8203, %v8213
    %v8216 = vadd.f32 %v8204, %v8214
    %v8217 = vmul.f32 %v806, %v7627
    %v8218 = vmul.f32 %v806, %v7628
    %v8221 = vrot.slane %v8217, 1
    %v8222 = vrot.slane %v8218, 1
    %v8223 = vsel %vm171, %v8221, %v8222
    %v8226 = vadd.f32 %v8207, %v8223
    %v8227 = vadd.f32 %v8208, %v8222
    %v8228 = vmul.f32 %v818, %v7627
    %v8229 = vmul.f32 %v818, %v7628
    %v8232 = vrot.slane %v8228, 1
    %v8233 = vrot.slane %v8229, 1
    %v8234 = vsel %vm171, %v8232, %v8233
    %v8237 = vadd.f32 %v8211, %v8234
    %v8238 = vadd.f32 %v8212, %v8233
    %v8239 = vmul.f32 %v830, %v7627
    %v8240 = vmul.f32 %v830, %v7628
    %v8243 = vrot.slane %v8239, 1
    %v8244 = vrot.slane %v8240, 1
    %v8245 = vsel %vm171, %v8243, %v8244
    %v8248 = vadd.f32 %v8215, %v8245
    %v8249 = vadd.f32 %v8216, %v8244
    %v8250 = vmul.f32 %v842, %v7627
    %v8251 = vmul.f32 %v842, %v7628
    %v8254 = vrot.slane %v8250, 2
    %v8255 = vrot.slane %v8251, 2
    %v8256 = vsel %vm208, %v8254, %v8255
    %v8259 = vadd.f32 %v8226, %v8256
    %v8260 = vadd.f32 %v8227, %v8255
    %v8261 = vmul.f32 %v854, %v7627
    %v8262 = vmul.f32 %v854, %v7628
    %v8265 = vrot.slane %v8261, 2
    %v8266 = vrot.slane %v8262, 2
    %v8267 = vsel %vm208, %v8265, %v8266
    %v8270 = vadd.f32 %v8237, %v8267
    %v8271 = vadd.f32 %v8238, %v8266
    %v8272 = vmul.f32 %v866, %v7627
    %v8273 = vmul.f32 %v866, %v7628
    %v8276 = vrot.slane %v8272, 2
    %v8277 = vrot.slane %v8273, 2
    %v8278 = vsel %vm208, %v8276, %v8277
    %v8281 = vadd.f32 %v8248, %v8278
    %v8282 = vadd.f32 %v8249, %v8277
    %v8283 = vmul.f32 %v878, %v7627
    %v8284 = vmul.f32 %v878, %v7628
    %v8287 = vrot.slane %v8283, 3
    %v8288 = vrot.slane %v8284, 3
    %v8289 = vsel %vm245, %v8287, %v8288
    %v8292 = vadd.f32 %v8259, %v8289
    %v8293 = vadd.f32 %v8260, %v8288
    %v8294 = vmul.f32 %v890, %v7627
    %v8295 = vmul.f32 %v890, %v7628
    %v8298 = vrot.slane %v8294, 3
    %v8299 = vrot.slane %v8295, 3
    %v8300 = vsel %vm245, %v8298, %v8299
    %v8303 = vadd.f32 %v8270, %v8300
    %v8304 = vadd.f32 %v8271, %v8299
    %v8305 = vmul.f32 %v902, %v7627
    %v8306 = vmul.f32 %v902, %v7628
    %v8309 = vrot.slane %v8305, 3
    %v8310 = vrot.slane %v8306, 3
    %v8311 = vsel %vm245, %v8309, %v8310
    %v8314 = vadd.f32 %v8281, %v8311
    %v8315 = vadd.f32 %v8282, %v8310
    %v8316 = vmul.f32 %v914, %v7627
    %v8317 = vmul.f32 %v914, %v7628
    %v8320 = vrot.slane %v8316, 4
    %v8321 = vrot.slane %v8317, 4
    %v8322 = vsel %vm282, %v8320, %v8321
    %v8325 = vadd.f32 %v8292, %v8322
    %v8326 = vadd.f32 %v8293, %v8321
    %v8327 = vmul.f32 %v926, %v7627
    %v8328 = vmul.f32 %v926, %v7628
    %v8331 = vrot.slane %v8327, 4
    %v8332 = vrot.slane %v8328, 4
    %v8333 = vsel %vm282, %v8331, %v8332
    %v8336 = vadd.f32 %v8303, %v8333
    %v8337 = vadd.f32 %v8304, %v8332
    %v8338 = vmul.f32 %v938, %v7627
    %v8339 = vmul.f32 %v938, %v7628
    %v8342 = vrot.slane %v8338, 4
    %v8343 = vrot.slane %v8339, 4
    %v8344 = vsel %vm282, %v8342, %v8343
    %v8347 = vadd.f32 %v8314, %v8344
    %v8348 = vadd.f32 %v8315, %v8343
    %s8349 = scalar_lea.vmem [#allocation9], 160
    %8350 = vst [vmem:[%s8349] sm:$0xff] %v8325
    %8351 = vst [vmem:[%s8349 + $0x8] sm:$0xf] %v8326
    %s8352 = scalar_lea.vmem [#allocation9], 352
    %8353 = vst [vmem:[%s8352] sm:$0xff] %v8336
    %8354 = vst [vmem:[%s8352 + $0x8] sm:$0xf] %v8337
    %s8355 = scalar_lea.vmem [#allocation9], 544
    %8356 = vst [vmem:[%s8355] sm:$0xff] %v8347
    %8357 = vst [vmem:[%s8355 + $0x8] sm:$0xf] %v8348
    %v8358 = vld [vmem:[%s5406] sm:$0xff]
    %v8359 = vld [vmem:[%s5406 + $0x8] sm:$0xff]
    %v8360 = vld [vmem:[%s6146] sm:$0xff]
    %v8361 = vld [vmem:[%s6146 + $0x8] sm:$0xff]
    %v8362 = vld [vmem:[%s6886] sm:$0xff]
    %v8363 = vld [vmem:[%s6886 + $0x8] sm:$0xff]
    %v8364 = vld [vmem:[%s7626] sm:$0xff]
    %v8365 = vld [vmem:[%s7626 + $0x8] sm:$0xff]
    %s8366 = scalar_lea.vmem [#allocation2], 240
    %v8367 = vld [vmem:[%s8366] sm:$0xff]
    %v8368 = vld [vmem:[%s8366 + $0x8] sm:$0xff]
    %v8369 = vmul.f32 %v151, %v8358
    %v8370 = vmul.f32 %v151, %v8359
    %v8371 = vadd.f32 %v148, %v8369
    %v8372 = vadd.f32 %v148, %v8370
    %v8373 = vmul.f32 %v156, %v8358
    %v8374 = vmul.f32 %v156, %v8359
    %v8375 = vadd.f32 %v149, %v8373
    %v8376 = vadd.f32 %v149, %v8374
    %v8377 = vmul.f32 %v161, %v8358
    %v8378 = vmul.f32 %v161, %v8359
    %v8379 = vadd.f32 %v150, %v8377
    %v8380 = vadd.f32 %v150, %v8378
    %v8381 = vmul.f32 %v166, %v8358
    %v8382 = vmul.f32 %v166, %v8359
    %v8385 = vrot.slane %v8381, 1
    %v8386 = vrot.slane %v8382, 1
    %v8387 = vsel %vm171, %v8385, %v8386
    %v8390 = vadd.f32 %v8371, %v8387
    %v8391 = vadd.f32 %v8372, %v8386
    %v8392 = vmul.f32 %v179, %v8358
    %v8393 = vmul.f32 %v179, %v8359
    %v8396 = vrot.slane %v8392, 1
    %v8397 = vrot.slane %v8393, 1
    %v8398 = vsel %vm171, %v8396, %v8397
    %v8401 = vadd.f32 %v8375, %v8398
    %v8402 = vadd.f32 %v8376, %v8397
    %v8403 = vmul.f32 %v191, %v8358
    %v8404 = vmul.f32 %v191, %v8359
    %v8407 = vrot.slane %v8403, 1
    %v8408 = vrot.slane %v8404, 1
    %v8409 = vsel %vm171, %v8407, %v8408
    %v8412 = vadd.f32 %v8379, %v8409
    %v8413 = vadd.f32 %v8380, %v8408
    %v8414 = vmul.f32 %v203, %v8358
    %v8415 = vmul.f32 %v203, %v8359
    %v8418 = vrot.slane %v8414, 2
    %v8419 = vrot.slane %v8415, 2
    %v8420 = vsel %vm208, %v8418, %v8419
    %v8423 = vadd.f32 %v8390, %v8420
    %v8424 = vadd.f32 %v8391, %v8419
    %v8425 = vmul.f32 %v216, %v8358
    %v8426 = vmul.f32 %v216, %v8359
    %v8429 = vrot.slane %v8425, 2
    %v8430 = vrot.slane %v8426, 2
    %v8431 = vsel %vm208, %v8429, %v8430
    %v8434 = vadd.f32 %v8401, %v8431
    %v8435 = vadd.f32 %v8402, %v8430
    %v8436 = vmul.f32 %v228, %v8358
    %v8437 = vmul.f32 %v228, %v8359
    %v8440 = vrot.slane %v8436, 2
    %v8441 = vrot.slane %v8437, 2
    %v8442 = vsel %vm208, %v8440, %v8441
    %v8445 = vadd.f32 %v8412, %v8442
    %v8446 = vadd.f32 %v8413, %v8441
    %v8447 = vmul.f32 %v240, %v8358
    %v8448 = vmul.f32 %v240, %v8359
    %v8451 = vrot.slane %v8447, 3
    %v8452 = vrot.slane %v8448, 3
    %v8453 = vsel %vm245, %v8451, %v8452
    %v8456 = vadd.f32 %v8423, %v8453
    %v8457 = vadd.f32 %v8424, %v8452
    %v8458 = vmul.f32 %v253, %v8358
    %v8459 = vmul.f32 %v253, %v8359
    %v8462 = vrot.slane %v8458, 3
    %v8463 = vrot.slane %v8459, 3
    %v8464 = vsel %vm245, %v8462, %v8463
    %v8467 = vadd.f32 %v8434, %v8464
    %v8468 = vadd.f32 %v8435, %v8463
    %v8469 = vmul.f32 %v265, %v8358
    %v8470 = vmul.f32 %v265, %v8359
    %v8473 = vrot.slane %v8469, 3
    %v8474 = vrot.slane %v8470, 3
    %v8475 = vsel %vm245, %v8473, %v8474
    %v8478 = vadd.f32 %v8445, %v8475
    %v8479 = vadd.f32 %v8446, %v8474
    %v8480 = vmul.f32 %v277, %v8358
    %v8481 = vmul.f32 %v277, %v8359
    %v8484 = vrot.slane %v8480, 4
    %v8485 = vrot.slane %v8481, 4
    %v8486 = vsel %vm282, %v8484, %v8485
    %v8489 = vadd.f32 %v8456, %v8486
    %v8490 = vadd.f32 %v8457, %v8485
    %v8491 = vmul.f32 %v290, %v8358
    %v8492 = vmul.f32 %v290, %v8359
    %v8495 = vrot.slane %v8491, 4
    %v8496 = vrot.slane %v8492, 4
    %v8497 = vsel %vm282, %v8495, %v8496
    %v8500 = vadd.f32 %v8467, %v8497
    %v8501 = vadd.f32 %v8468, %v8496
    %v8502 = vmul.f32 %v302, %v8358
    %v8503 = vmul.f32 %v302, %v8359
    %v8506 = vrot.slane %v8502, 4
    %v8507 = vrot.slane %v8503, 4
    %v8508 = vsel %vm282, %v8506, %v8507
    %v8511 = vadd.f32 %v8478, %v8508
    %v8512 = vadd.f32 %v8479, %v8507
    %v8513 = vmul.f32 %v314, %v8360
    %v8514 = vmul.f32 %v314, %v8361
    %v8515 = vadd.f32 %v8489, %v8513
    %v8516 = vadd.f32 %v8490, %v8514
    %v8517 = vmul.f32 %v319, %v8360
    %v8518 = vmul.f32 %v319, %v8361
    %v8519 = vadd.f32 %v8500, %v8517
    %v8520 = vadd.f32 %v8501, %v8518
    %v8521 = vmul.f32 %v324, %v8360
    %v8522 = vmul.f32 %v324, %v8361
    %v8523 = vadd.f32 %v8511, %v8521
    %v8524 = vadd.f32 %v8512, %v8522
    %v8525 = vmul.f32 %v329, %v8360
    %v8526 = vmul.f32 %v329, %v8361
    %v8529 = vrot.slane %v8525, 1
    %v8530 = vrot.slane %v8526, 1
    %v8531 = vsel %vm171, %v8529, %v8530
    %v8534 = vadd.f32 %v8515, %v8531
    %v8535 = vadd.f32 %v8516, %v8530
    %v8536 = vmul.f32 %v341, %v8360
    %v8537 = vmul.f32 %v341, %v8361
    %v8540 = vrot.slane %v8536, 1
    %v8541 = vrot.slane %v8537, 1
    %v8542 = vsel %vm171, %v8540, %v8541
    %v8545 = vadd.f32 %v8519, %v8542
    %v8546 = vadd.f32 %v8520, %v8541
    %v8547 = vmul.f32 %v353, %v8360
    %v8548 = vmul.f32 %v353, %v8361
    %v8551 = vrot.slane %v8547, 1
    %v8552 = vrot.slane %v8548, 1
    %v8553 = vsel %vm171, %v8551, %v8552
    %v8556 = vadd.f32 %v8523, %v8553
    %v8557 = vadd.f32 %v8524, %v8552
    %v8558 = vmul.f32 %v365, %v8360
    %v8559 = vmul.f32 %v365, %v8361
    %v8562 = vrot.slane %v8558, 2
    %v8563 = vrot.slane %v8559, 2
    %v8564 = vsel %vm208, %v8562, %v8563
    %v8567 = vadd.f32 %v8534, %v8564
    %v8568 = vadd.f32 %v8535, %v8563
    %v8569 = vmul.f32 %v377, %v8360
    %v8570 = vmul.f32 %v377, %v8361
    %v8573 = vrot.slane %v8569, 2
    %v8574 = vrot.slane %v8570, 2
    %v8575 = vsel %vm208, %v8573, %v8574
    %v8578 = vadd.f32 %v8545, %v8575
    %v8579 = vadd.f32 %v8546, %v8574
    %v8580 = vmul.f32 %v389, %v8360
    %v8581 = vmul.f32 %v389, %v8361
    %v8584 = vrot.slane %v8580, 2
    %v8585 = vrot.slane %v8581, 2
    %v8586 = vsel %vm208, %v8584, %v8585
    %v8589 = vadd.f32 %v8556, %v8586
    %v8590 = vadd.f32 %v8557, %v8585
    %v8591 = vmul.f32 %v401, %v8360
    %v8592 = vmul.f32 %v401, %v8361
    %v8595 = vrot.slane %v8591, 3
    %v8596 = vrot.slane %v8592, 3
    %v8597 = vsel %vm245, %v8595, %v8596
    %v8600 = vadd.f32 %v8567, %v8597
    %v8601 = vadd.f32 %v8568, %v8596
    %v8602 = vmul.f32 %v413, %v8360
    %v8603 = vmul.f32 %v413, %v8361
    %v8606 = vrot.slane %v8602, 3
    %v8607 = vrot.slane %v8603, 3
    %v8608 = vsel %vm245, %v8606, %v8607
    %v8611 = vadd.f32 %v8578, %v8608
    %v8612 = vadd.f32 %v8579, %v8607
    %v8613 = vmul.f32 %v425, %v8360
    %v8614 = vmul.f32 %v425, %v8361
    %v8617 = vrot.slane %v8613, 3
    %v8618 = vrot.slane %v8614, 3
    %v8619 = vsel %vm245, %v8617, %v8618
    %v8622 = vadd.f32 %v8589, %v8619
    %v8623 = vadd.f32 %v8590, %v8618
    %v8624 = vmul.f32 %v437, %v8360
    %v8625 = vmul.f32 %v437, %v8361
    %v8628 = vrot.slane %v8624, 4
    %v8629 = vrot.slane %v8625, 4
    %v8630 = vsel %vm282, %v8628, %v8629
    %v8633 = vadd.f32 %v8600, %v8630
    %v8634 = vadd.f32 %v8601, %v8629
    %v8635 = vmul.f32 %v449, %v8360
    %v8636 = vmul.f32 %v449, %v8361
    %v8639 = vrot.slane %v8635, 4
    %v8640 = vrot.slane %v8636, 4
    %v8641 = vsel %vm282, %v8639, %v8640
    %v8644 = vadd.f32 %v8611, %v8641
    %v8645 = vadd.f32 %v8612, %v8640
    %v8646 = vmul.f32 %v461, %v8360
    %v8647 = vmul.f32 %v461, %v8361
    %v8650 = vrot.slane %v8646, 4
    %v8651 = vrot.slane %v8647, 4
    %v8652 = vsel %vm282, %v8650, %v8651
    %v8655 = vadd.f32 %v8622, %v8652
    %v8656 = vadd.f32 %v8623, %v8651
    %v8657 = vmul.f32 %v473, %v8362
    %v8658 = vmul.f32 %v473, %v8363
    %v8659 = vadd.f32 %v8633, %v8657
    %v8660 = vadd.f32 %v8634, %v8658
    %v8661 = vmul.f32 %v478, %v8362
    %v8662 = vmul.f32 %v478, %v8363
    %v8663 = vadd.f32 %v8644, %v8661
    %v8664 = vadd.f32 %v8645, %v8662
    %v8665 = vmul.f32 %v483, %v8362
    %v8666 = vmul.f32 %v483, %v8363
    %v8667 = vadd.f32 %v8655, %v8665
    %v8668 = vadd.f32 %v8656, %v8666
    %v8669 = vmul.f32 %v488, %v8362
    %v8670 = vmul.f32 %v488, %v8363
    %v8673 = vrot.slane %v8669, 1
    %v8674 = vrot.slane %v8670, 1
    %v8675 = vsel %vm171, %v8673, %v8674
    %v8678 = vadd.f32 %v8659, %v8675
    %v8679 = vadd.f32 %v8660, %v8674
    %v8680 = vmul.f32 %v500, %v8362
    %v8681 = vmul.f32 %v500, %v8363
    %v8684 = vrot.slane %v8680, 1
    %v8685 = vrot.slane %v8681, 1
    %v8686 = vsel %vm171, %v8684, %v8685
    %v8689 = vadd.f32 %v8663, %v8686
    %v8690 = vadd.f32 %v8664, %v8685
    %v8691 = vmul.f32 %v512, %v8362
    %v8692 = vmul.f32 %v512, %v8363
    %v8695 = vrot.slane %v8691, 1
    %v8696 = vrot.slane %v8692, 1
    %v8697 = vsel %vm171, %v8695, %v8696
    %v8700 = vadd.f32 %v8667, %v8697
    %v8701 = vadd.f32 %v8668, %v8696
    %v8702 = vmul.f32 %v524, %v8362
    %v8703 = vmul.f32 %v524, %v8363
    %v8706 = vrot.slane %v8702, 2
    %v8707 = vrot.slane %v8703, 2
    %v8708 = vsel %vm208, %v8706, %v8707
    %v8711 = vadd.f32 %v8678, %v8708
    %v8712 = vadd.f32 %v8679, %v8707
    %v8713 = vmul.f32 %v536, %v8362
    %v8714 = vmul.f32 %v536, %v8363
    %v8717 = vrot.slane %v8713, 2
    %v8718 = vrot.slane %v8714, 2
    %v8719 = vsel %vm208, %v8717, %v8718
    %v8722 = vadd.f32 %v8689, %v8719
    %v8723 = vadd.f32 %v8690, %v8718
    %v8724 = vmul.f32 %v548, %v8362
    %v8725 = vmul.f32 %v548, %v8363
    %v8728 = vrot.slane %v8724, 2
    %v8729 = vrot.slane %v8725, 2
    %v8730 = vsel %vm208, %v8728, %v8729
    %v8733 = vadd.f32 %v8700, %v8730
    %v8734 = vadd.f32 %v8701, %v8729
    %v8735 = vmul.f32 %v560, %v8362
    %v8736 = vmul.f32 %v560, %v8363
    %v8739 = vrot.slane %v8735, 3
    %v8740 = vrot.slane %v8736, 3
    %v8741 = vsel %vm245, %v8739, %v8740
    %v8744 = vadd.f32 %v8711, %v8741
    %v8745 = vadd.f32 %v8712, %v8740
    %v8746 = vmul.f32 %v572, %v8362
    %v8747 = vmul.f32 %v572, %v8363
    %v8750 = vrot.slane %v8746, 3
    %v8751 = vrot.slane %v8747, 3
    %v8752 = vsel %vm245, %v8750, %v8751
    %v8755 = vadd.f32 %v8722, %v8752
    %v8756 = vadd.f32 %v8723, %v8751
    %v8757 = vmul.f32 %v584, %v8362
    %v8758 = vmul.f32 %v584, %v8363
    %v8761 = vrot.slane %v8757, 3
    %v8762 = vrot.slane %v8758, 3
    %v8763 = vsel %vm245, %v8761, %v8762
    %v8766 = vadd.f32 %v8733, %v8763
    %v8767 = vadd.f32 %v8734, %v8762
    %v8768 = vmul.f32 %v596, %v8362
    %v8769 = vmul.f32 %v596, %v8363
    %v8772 = vrot.slane %v8768, 4
    %v8773 = vrot.slane %v8769, 4
    %v8774 = vsel %vm282, %v8772, %v8773
    %v8777 = vadd.f32 %v8744, %v8774
    %v8778 = vadd.f32 %v8745, %v8773
    %v8779 = vmul.f32 %v608, %v8362
    %v8780 = vmul.f32 %v608, %v8363
    %v8783 = vrot.slane %v8779, 4
    %v8784 = vrot.slane %v8780, 4
    %v8785 = vsel %vm282, %v8783, %v8784
    %v8788 = vadd.f32 %v8755, %v8785
    %v8789 = vadd.f32 %v8756, %v8784
    %v8790 = vmul.f32 %v620, %v8362
    %v8791 = vmul.f32 %v620, %v8363
    %v8794 = vrot.slane %v8790, 4
    %v8795 = vrot.slane %v8791, 4
    %v8796 = vsel %vm282, %v8794, %v8795
    %v8799 = vadd.f32 %v8766, %v8796
    %v8800 = vadd.f32 %v8767, %v8795
    %v8801 = vmul.f32 %v632, %v8364
    %v8802 = vmul.f32 %v632, %v8365
    %v8803 = vadd.f32 %v8777, %v8801
    %v8804 = vadd.f32 %v8778, %v8802
    %v8805 = vmul.f32 %v637, %v8364
    %v8806 = vmul.f32 %v637, %v8365
    %v8807 = vadd.f32 %v8788, %v8805
    %v8808 = vadd.f32 %v8789, %v8806
    %v8809 = vmul.f32 %v642, %v8364
    %v8810 = vmul.f32 %v642, %v8365
    %v8811 = vadd.f32 %v8799, %v8809
    %v8812 = vadd.f32 %v8800, %v8810
    %v8813 = vmul.f32 %v647, %v8364
    %v8814 = vmul.f32 %v647, %v8365
    %v8817 = vrot.slane %v8813, 1
    %v8818 = vrot.slane %v8814, 1
    %v8819 = vsel %vm171, %v8817, %v8818
    %v8822 = vadd.f32 %v8803, %v8819
    %v8823 = vadd.f32 %v8804, %v8818
    %v8824 = vmul.f32 %v659, %v8364
    %v8825 = vmul.f32 %v659, %v8365
    %v8828 = vrot.slane %v8824, 1
    %v8829 = vrot.slane %v8825, 1
    %v8830 = vsel %vm171, %v8828, %v8829
    %v8833 = vadd.f32 %v8807, %v8830
    %v8834 = vadd.f32 %v8808, %v8829
    %v8835 = vmul.f32 %v671, %v8364
    %v8836 = vmul.f32 %v671, %v8365
    %v8839 = vrot.slane %v8835, 1
    %v8840 = vrot.slane %v8836, 1
    %v8841 = vsel %vm171, %v8839, %v8840
    %v8844 = vadd.f32 %v8811, %v8841
    %v8845 = vadd.f32 %v8812, %v8840
    %v8846 = vmul.f32 %v683, %v8364
    %v8847 = vmul.f32 %v683, %v8365
    %v8850 = vrot.slane %v8846, 2
    %v8851 = vrot.slane %v8847, 2
    %v8852 = vsel %vm208, %v8850, %v8851
    %v8855 = vadd.f32 %v8822, %v8852
    %v8856 = vadd.f32 %v8823, %v8851
    %v8857 = vmul.f32 %v695, %v8364
    %v8858 = vmul.f32 %v695, %v8365
    %v8861 = vrot.slane %v8857, 2
    %v8862 = vrot.slane %v8858, 2
    %v8863 = vsel %vm208, %v8861, %v8862
    %v8866 = vadd.f32 %v8833, %v8863
    %v8867 = vadd.f32 %v8834, %v8862
    %v8868 = vmul.f32 %v707, %v8364
    %v8869 = vmul.f32 %v707, %v8365
    %v8872 = vrot.slane %v8868, 2
    %v8873 = vrot.slane %v8869, 2
    %v8874 = vsel %vm208, %v8872, %v8873
    %v8877 = vadd.f32 %v8844, %v8874
    %v8878 = vadd.f32 %v8845, %v8873
    %v8879 = vmul.f32 %v719, %v8364
    %v8880 = vmul.f32 %v719, %v8365
    %v8883 = vrot.slane %v8879, 3
    %v8884 = vrot.slane %v8880, 3
    %v8885 = vsel %vm245, %v8883, %v8884
    %v8888 = vadd.f32 %v8855, %v8885
    %v8889 = vadd.f32 %v8856, %v8884
    %v8890 = vmul.f32 %v731, %v8364
    %v8891 = vmul.f32 %v731, %v8365
    %v8894 = vrot.slane %v8890, 3
    %v8895 = vrot.slane %v8891, 3
    %v8896 = vsel %vm245, %v8894, %v8895
    %v8899 = vadd.f32 %v8866, %v8896
    %v8900 = vadd.f32 %v8867, %v8895
    %v8901 = vmul.f32 %v743, %v8364
    %v8902 = vmul.f32 %v743, %v8365
    %v8905 = vrot.slane %v8901, 3
    %v8906 = vrot.slane %v8902, 3
    %v8907 = vsel %vm245, %v8905, %v8906
    %v8910 = vadd.f32 %v8877, %v8907
    %v8911 = vadd.f32 %v8878, %v8906
    %v8912 = vmul.f32 %v755, %v8364
    %v8913 = vmul.f32 %v755, %v8365
    %v8916 = vrot.slane %v8912, 4
    %v8917 = vrot.slane %v8913, 4
    %v8918 = vsel %vm282, %v8916, %v8917
    %v8921 = vadd.f32 %v8888, %v8918
    %v8922 = vadd.f32 %v8889, %v8917
    %v8923 = vmul.f32 %v767, %v8364
    %v8924 = vmul.f32 %v767, %v8365
    %v8927 = vrot.slane %v8923, 4
    %v8928 = vrot.slane %v8924, 4
    %v8929 = vsel %vm282, %v8927, %v8928
    %v8932 = vadd.f32 %v8899, %v8929
    %v8933 = vadd.f32 %v8900, %v8928
    %v8934 = vmul.f32 %v779, %v8364
    %v8935 = vmul.f32 %v779, %v8365
    %v8938 = vrot.slane %v8934, 4
    %v8939 = vrot.slane %v8935, 4
    %v8940 = vsel %vm282, %v8938, %v8939
    %v8943 = vadd.f32 %v8910, %v8940
    %v8944 = vadd.f32 %v8911, %v8939
    %v8945 = vmul.f32 %v791, %v8367
    %v8946 = vmul.f32 %v791, %v8368
    %v8947 = vadd.f32 %v8921, %v8945
    %v8948 = vadd.f32 %v8922, %v8946
    %v8949 = vmul.f32 %v796, %v8367
    %v8950 = vmul.f32 %v796, %v8368
    %v8951 = vadd.f32 %v8932, %v8949
    %v8952 = vadd.f32 %v8933, %v8950
    %v8953 = vmul.f32 %v801, %v8367
    %v8954 = vmul.f32 %v801, %v8368
    %v8955 = vadd.f32 %v8943, %v8953
    %v8956 = vadd.f32 %v8944, %v8954
    %v8957 = vmul.f32 %v806, %v8367
    %v8958 = vmul.f32 %v806, %v8368
    %v8961 = vrot.slane %v8957, 1
    %v8962 = vrot.slane %v8958, 1
    %v8963 = vsel %vm171, %v8961, %v8962
    %v8966 = vadd.f32 %v8947, %v8963
    %v8967 = vadd.f32 %v8948, %v8962
    %v8968 = vmul.f32 %v818, %v8367
    %v8969 = vmul.f32 %v818, %v8368
    %v8972 = vrot.slane %v8968, 1
    %v8973 = vrot.slane %v8969, 1
    %v8974 = vsel %vm171, %v8972, %v8973
    %v8977 = vadd.f32 %v8951, %v8974
    %v8978 = vadd.f32 %v8952, %v8973
    %v8979 = vmul.f32 %v830, %v8367
    %v8980 = vmul.f32 %v830, %v8368
    %v8983 = vrot.slane %v8979, 1
    %v8984 = vrot.slane %v8980, 1
    %v8985 = vsel %vm171, %v8983, %v8984
    %v8988 = vadd.f32 %v8955, %v8985
    %v8989 = vadd.f32 %v8956, %v8984
    %v8990 = vmul.f32 %v842, %v8367
    %v8991 = vmul.f32 %v842, %v8368
    %v8994 = vrot.slane %v8990, 2
    %v8995 = vrot.slane %v8991, 2
    %v8996 = vsel %vm208, %v8994, %v8995
    %v8999 = vadd.f32 %v8966, %v8996
    %v9000 = vadd.f32 %v8967, %v8995
    %v9001 = vmul.f32 %v854, %v8367
    %v9002 = vmul.f32 %v854, %v8368
    %v9005 = vrot.slane %v9001, 2
    %v9006 = vrot.slane %v9002, 2
    %v9007 = vsel %vm208, %v9005, %v9006
    %v9010 = vadd.f32 %v8977, %v9007
    %v9011 = vadd.f32 %v8978, %v9006
    %v9012 = vmul.f32 %v866, %v8367
    %v9013 = vmul.f32 %v866, %v8368
    %v9016 = vrot.slane %v9012, 2
    %v9017 = vrot.slane %v9013, 2
    %v9018 = vsel %vm208, %v9016, %v9017
    %v9021 = vadd.f32 %v8988, %v9018
    %v9022 = vadd.f32 %v8989, %v9017
    %v9023 = vmul.f32 %v878, %v8367
    %v9024 = vmul.f32 %v878, %v8368
    %v9027 = vrot.slane %v9023, 3
    %v9028 = vrot.slane %v9024, 3
    %v9029 = vsel %vm245, %v9027, %v9028
    %v9032 = vadd.f32 %v8999, %v9029
    %v9033 = vadd.f32 %v9000, %v9028
    %v9034 = vmul.f32 %v890, %v8367
    %v9035 = vmul.f32 %v890, %v8368
    %v9038 = vrot.slane %v9034, 3
    %v9039 = vrot.slane %v9035, 3
    %v9040 = vsel %vm245, %v9038, %v9039
    %v9043 = vadd.f32 %v9010, %v9040
    %v9044 = vadd.f32 %v9011, %v9039
    %v9045 = vmul.f32 %v902, %v8367
    %v9046 = vmul.f32 %v902, %v8368
    %v9049 = vrot.slane %v9045, 3
    %v9050 = vrot.slane %v9046, 3
    %v9051 = vsel %vm245, %v9049, %v9050
    %v9054 = vadd.f32 %v9021, %v9051
    %v9055 = vadd.f32 %v9022, %v9050
    %v9056 = vmul.f32 %v914, %v8367
    %v9057 = vmul.f32 %v914, %v8368
    %v9060 = vrot.slane %v9056, 4
    %v9061 = vrot.slane %v9057, 4
    %v9062 = vsel %vm282, %v9060, %v9061
    %v9065 = vadd.f32 %v9032, %v9062
    %v9066 = vadd.f32 %v9033, %v9061
    %v9067 = vmul.f32 %v926, %v8367
    %v9068 = vmul.f32 %v926, %v8368
    %v9071 = vrot.slane %v9067, 4
    %v9072 = vrot.slane %v9068, 4
    %v9073 = vsel %vm282, %v9071, %v9072
    %v9076 = vadd.f32 %v9043, %v9073
    %v9077 = vadd.f32 %v9044, %v9072
    %v9078 = vmul.f32 %v938, %v8367
    %v9079 = vmul.f32 %v938, %v8368
    %v9082 = vrot.slane %v9078, 4
    %v9083 = vrot.slane %v9079, 4
    %v9084 = vsel %vm282, %v9082, %v9083
    %v9087 = vadd.f32 %v9054, %v9084
    %v9088 = vadd.f32 %v9055, %v9083
    %s9089 = scalar_lea.vmem [#allocation9], 176
    %9090 = vst [vmem:[%s9089] sm:$0xff] %v9065
    %9091 = vst [vmem:[%s9089 + $0x8] sm:$0xf] %v9066
    %s9092 = scalar_lea.vmem [#allocation9], 368
    %9093 = vst [vmem:[%s9092] sm:$0xff] %v9076
    %9094 = vst [vmem:[%s9092 + $0x8] sm:$0xf] %v9077
    %s9095 = scalar_lea.vmem [#allocation9], 560
    %9096 = vst [vmem:[%s9095] sm:$0xff] %v9087
    %9097 = vst [vmem:[%s9095 + $0x8] sm:$0xf] %v9088
    // Predicated region
    $region26: #{tpu_custom_call.1} parent=1 // pred_check
      _
    $region27: #{tpu_custom_call.1} parent=1 // pred_check_branch
      %9099 = sbr.rel (0) target = $region29
    $region28: #{tpu_custom_call.1} parent=1 // pred_region
      %9101 = vsyncadd [#allocation4], 0
      %s9102 = sshll.u32 [#allocation9], 4
      %s9103 = int_to_ptr.vmem [resolvable:$true] %s9102
      %s9104 = sshll.u32 %s3, 4
      %s9105 = int_to_ptr.hbm [resolvable:$true] %s9104
      %9110 = dma.vmem_to_hbm [thread:$0]  %s9103, 9216, %s9105, [#allocation4], 128, 128, 8
    $region29: #{tpu_custom_call.1} parent=1 // pred_fallthru
      _
    // Predicated region
    $region30: #{tpu_custom_call.1} parent=1 // pred_check
      _
    $region31: #{tpu_custom_call.1} parent=1 // pred_check_branch
      %9112 = sbr.rel (0) target = $region33
    $region32: #{tpu_custom_call.1} parent=1 // pred_region
      %9114 = dma.done [#allocation4], 9216
    $region33: #{tpu_custom_call.1} parent=1 // pred_fallthru
      _
    %9115 = vsyncpa [#allocation3], 1
    %9116 = vsyncpa [#allocation4], 1
    %9117 = vsyncpa [#allocation5], 1
    %9118 = vsyncpa [#allocation6], 1

</llo_original>
